<compile_context>
chip_gen: v6e
topology: v6e:2x2x1
jax: 0.10.0
libtpu: 0.0.40
codegen_flags: <defaults>
</compile_context>

<pallas_src>
import jax
import jax.numpy as jnp
from jax import lax
from jax.experimental import pallas as pl
from jax.experimental.pallas import tpu as pltpu

T, B = 8, 8          # seq_len, batch
IN, H = 768, 256     # LSTM input / hidden size (fixed by the module)
NCLS = 2             # output classes
NPAD = 128           # lane-padded class dim used inside the kernel for the MXU


def finetune_kernel(seq_ref, wih_ref, bias_ref, whh_hbm, wout_hbm, bout_ref,
                    o_ref, whh_vmem, wout_vmem, xg_ref, sem):
    """Fused input projection + LSTM recurrence (gate layout i|f|o|g) +
    running max over time + 256->NPAD projection + masked log_softmax.
    Writes a lane-dense (B, NPAD) block; wrapper slices the 2 real classes."""

    # Kick off Whh / Wout HBM->VMEM copies; they overlap with the fused input
    # projection matmul below.
    whh_cp = pltpu.make_async_copy(whh_hbm, whh_vmem, sem.at[0])
    wout_cp = pltpu.make_async_copy(wout_hbm, wout_vmem, sem.at[1])
    whh_cp.start()
    wout_cp.start()

    # Fused input projection (full f32): (T*B, IN) @ (IN, 4H) + (b_ih + b_hh).
    xg_ref[...] = (jnp.dot(seq_ref[...], wih_ref[...],
                           preferred_element_type=jnp.float32)
                   + bias_ref[...])                                   # (T*B, 4H)

    whh_cp.wait()   # Whh needed from step 0; its copy was hidden under the matmul

    def step(t, carry):
        h, c, mp = carry
        # Only the recurrent matmul remains on the sequential path.
        gates = (xg_ref[pl.ds(t * B, B), :]
                 + jnp.dot(h, whh_vmem[...],
                           preferred_element_type=jnp.float32))       # (B, 4H)
        # Gate columns were permuted in the wrapper to [ i | f | o | g ]:
        # one sigmoid over the first 3H lanes, one tanh over the last H.
        sig = jax.nn.sigmoid(gates[:, :3 * H])
        i = sig[:, 0 * H:1 * H]
        f = sig[:, 1 * H:2 * H]
        o = sig[:, 2 * H:3 * H]
        g = jnp.tanh(gates[:, 3 * H:])
        c_new = f * c + i * g
        h_new = o * jnp.tanh(c_new)
        return h_new, c_new, jnp.maximum(mp, h_new)

    zeros = jnp.zeros((B, H), jnp.float32)
    neg_inf = jnp.full((B, H), -jnp.inf, jnp.float32)
    # T=8 fixed trip count: unroll so adjacent steps' MXU/EUP/VPU work interleave.
    _, _, mp = lax.fori_loop(0, T, step, (zeros, zeros, neg_inf), unroll=True)

    wout_cp.wait()
    # Linear 256 -> 2 (columns 2..127 of wout/bout are zero padding).
    logits_pad = (jnp.dot(mp, wout_vmem[...], preferred_element_type=jnp.float32)
                  + bout_ref[...])                                    # (B, NPAD)

    # log_softmax over the first NCLS columns only (pad lanes masked out of
    # both the max and the sum).
    col = lax.broadcasted_iota(jnp.int32, (B, NPAD), 1)
    valid = col < NCLS
    masked = jnp.where(valid, logits_pad, -jnp.inf)
    m = jnp.max(masked, axis=-1, keepdims=True)
    z = logits_pad - m
    lse = jnp.log(jnp.sum(jnp.where(valid, jnp.exp(z), 0.0),
                          axis=-1, keepdims=True))
    o_ref[...] = z - lse                                              # lane-dense store


def finetune_forward(seq, w_ih, w_hh, b_ih, b_hh, w_out, b_out, permutation=None):
    """seq: (T, B, IN) f32.  PyTorch-layout weights:
       w_ih (4H, IN), w_hh (4H, H), b_ih/b_hh (4H,), w_out (2, H), b_out (2,)."""
    del permutation  # permute_seq is an identity in the reference module
    Tn, Bn, _ = seq.shape

    # Reorder PyTorch gate rows i,f,g,o -> i,f,o,g (sigmoid gates contiguous);
    # trace-time weight shuffle only.
    def gate_perm(w):
        w = jnp.asarray(w, jnp.float32)
        return jnp.concatenate([w[:2 * H], w[3 * H:4 * H], w[2 * H:3 * H]], axis=0)

    w_ih_p = gate_perm(w_ih)                                          # (4H, IN)
    w_hh_p = gate_perm(w_hh)                                          # (4H, H)
    bias_p = gate_perm(jnp.asarray(b_ih, jnp.float32)
                       + jnp.asarray(b_hh, jnp.float32)).reshape(1, 4 * H)

    seq2d = jnp.asarray(seq, jnp.float32).reshape(Tn * Bn, IN)        # free reshape
    wih_t = w_ih_p.T                                                  # (IN, 4H)
    whh_t = w_hh_p.T                                                  # (H, 4H)
    wout_pad = jnp.zeros((H, NPAD), jnp.float32).at[:, :NCLS].set(
        jnp.asarray(w_out, jnp.float32).T)
    bout_pad = jnp.zeros((1, NPAD), jnp.float32).at[:, :NCLS].set(
        jnp.asarray(b_out, jnp.float32))

    vmem = lambda: pl.BlockSpec(memory_space=pltpu.MemorySpace.VMEM)
    hbm = lambda: pl.BlockSpec(memory_space=pl.ANY)

    out_pad = pl.pallas_call(
        finetune_kernel,
        out_shape=jax.ShapeDtypeStruct((Bn, NPAD), jnp.float32),
        in_specs=[vmem(),   # seq2d  (T*B, IN)
                  vmem(),   # Wih^T  (IN, 4H)
                  vmem(),   # bias   (1, 4H)
                  hbm(),    # Whh^T  (H, 4H)  -> manual DMA
                  hbm(),    # Wout   (H, NPAD) -> manual DMA
                  vmem()],  # bout   (1, NPAD)
        out_specs=vmem(),
        scratch_shapes=[
            pltpu.VMEM((H, 4 * H), jnp.float32),        # Whh^T resident copy
            pltpu.VMEM((H, NPAD), jnp.float32),         # padded Wout resident copy
            pltpu.VMEM((Tn * Bn, 4 * H), jnp.float32),  # precomputed input gates
            pltpu.SemaphoreType.DMA((2,)),
        ],
    )(seq2d, wih_t, bias_p, whh_t, wout_pad, bout_pad)
    return out_pad[:, :NCLS]                                          # (B, 2)


def ref_forward(x, w_ih, w_hh, b_ih, b_hh, w_out, b_out):
    """Pure-JAX reference (mirrors PyTorch LSTM + adaptive_max_pool1d + Linear)."""
    def step(carry, x_t):
        h, c = carry
        gates = x_t @ w_ih.T + b_ih + h @ w_hh.T + b_hh
        i, f, g, o = jnp.split(gates, 4, axis=-1)
        i, f, g, o = jax.nn.sigmoid(i), jax.nn.sigmoid(f), jnp.tanh(g), jax.nn.sigmoid(o)
        c = f * c + i * g
        h = o * jnp.tanh(c)
        return (h, c), h

    h0 = jnp.zeros((x.shape[1], H), jnp.float32)
    _, hs = lax.scan(step, (h0, h0), x)                               # (T, B, H)
    mp = jnp.max(hs, axis=0)                                          # (B, H)
    logits = mp @ w_out.T + b_out                                     # (B, 2)
    return jax.nn.log_softmax(logits, axis=-1)


if __name__ == "__main__":
    key = jax.random.PRNGKey(0)
    ks = jax.random.split(key, 7)
    k_lstm = 1.0 / jnp.sqrt(jnp.float32(H))
    w_ih = jax.random.uniform(ks[0], (4 * H, IN), jnp.float32, -k_lstm, k_lstm)
    w_hh = jax.random.uniform(ks[1], (4 * H, H), jnp.float32, -k_lstm, k_lstm)
    b_ih = jax.random.uniform(ks[2], (4 * H,), jnp.float32, -k_lstm, k_lstm)
    b_hh = jax.random.uniform(ks[3], (4 * H,), jnp.float32, -k_lstm, k_lstm)
    w_out = jax.random.uniform(ks[4], (NCLS, H), jnp.float32, -k_lstm, k_lstm)
    b_out = jax.random.uniform(ks[5], (NCLS,), jnp.float32, -k_lstm, k_lstm)

    seq = jax.random.normal(ks[6], (T, B, IN), jnp.float32)
    permutation = jnp.arange(T)  # unused (permute_seq is identity)

    out = finetune_forward(seq, w_ih, w_hh, b_ih, b_hh, w_out, b_out, permutation)
    out = jax.block_until_ready(out)

    # Full-f32 reference (kernel matmuls are full f32 inside Mosaic).
    with jax.default_matmul_precision("highest"):
        ref = ref_forward(seq, w_ih, w_hh, b_ih, b_hh, w_out, b_out)
        ref = jax.block_until_ready(ref)

    assert out.shape == (B, NCLS), out.shape
    assert jnp.allclose(out, ref, atol=1e-4, rtol=1e-4), (out, ref)
    print("KERNEL_OK")
</pallas_src>

<mosaic_0001>
module attributes {stable_mosaic.version = 11 : i64} {
  func.func @finetune_kernel(%arg0: memref<64x768xf32, #tpu.memory_space<vmem>>, %arg1: memref<768x1024xf32, #tpu.memory_space<vmem>>, %arg2: memref<1x1024xf32, #tpu.memory_space<vmem>>, %arg3: memref<256x1024xf32, #tpu.memory_space<any>>, %arg4: memref<256x128xf32, #tpu.memory_space<any>>, %arg5: memref<1x128xf32, #tpu.memory_space<vmem>>, %arg6: memref<8x128xf32, #tpu.memory_space<vmem>>, %arg7: memref<256x1024xf32, #tpu.memory_space<vmem>>, %arg8: memref<256x128xf32, #tpu.memory_space<vmem>>, %arg9: memref<64x1024xf32, #tpu.memory_space<vmem>>, %arg10: memref<2x!tpu.dma_semaphore, #tpu.memory_space<semaphore_mem>>) attributes {dimension_semantics = [], scalar_prefetch = 0 : i64, scratch_operands = 4 : i64, tpu.core_type = #tpu.core_type<tc>} {
    %c0_i32 = arith.constant 0 : i32
    %0 = tpu.memref_slice %arg10[%c0_i32] : memref<2x!tpu.dma_semaphore, #tpu.memory_space<semaphore_mem>> -> memref<1x!tpu.dma_semaphore, #tpu.memory_space<semaphore_mem>>
    %1 = tpu.memref_squeeze %0 : memref<1x!tpu.dma_semaphore, #tpu.memory_space<semaphore_mem>> -> memref<!tpu.dma_semaphore, #tpu.memory_space<semaphore_mem>>
    tpu.enqueue_dma source(%arg3 : memref<256x1024xf32, #tpu.memory_space<any>>) target(%arg7 : memref<256x1024xf32, #tpu.memory_space<vmem>>) target_semaphore(%1 : memref<!tpu.dma_semaphore, #tpu.memory_space<semaphore_mem>>)
    %c1_i32 = arith.constant 1 : i32
    %2 = tpu.memref_slice %arg10[%c1_i32] : memref<2x!tpu.dma_semaphore, #tpu.memory_space<semaphore_mem>> -> memref<1x!tpu.dma_semaphore, #tpu.memory_space<semaphore_mem>>
    %3 = tpu.memref_squeeze %2 : memref<1x!tpu.dma_semaphore, #tpu.memory_space<semaphore_mem>> -> memref<!tpu.dma_semaphore, #tpu.memory_space<semaphore_mem>>
    tpu.enqueue_dma source(%arg4 : memref<256x128xf32, #tpu.memory_space<any>>) target(%arg8 : memref<256x128xf32, #tpu.memory_space<vmem>>) target_semaphore(%3 : memref<!tpu.dma_semaphore, #tpu.memory_space<semaphore_mem>>)
    %c0 = arith.constant 0 : index
    %c0_0 = arith.constant 0 : index
    %4 = vector.load %arg0[%c0, %c0_0] : memref<64x768xf32, #tpu.memory_space<vmem>>, vector<64x768xf32>
    %c0_1 = arith.constant 0 : index
    %c0_2 = arith.constant 0 : index
    %5 = vector.load %arg1[%c0_1, %c0_2] : memref<768x1024xf32, #tpu.memory_space<vmem>>, vector<768x1024xf32>
    %cst = arith.constant dense<0.000000e+00> : vector<64x1024xf32>
    %6 = tpu.matmul %4, %5, %cst {dimension_numbers = #tpu.dot_dimension_numbers<[1], [0], [0], [1], [0, 0, 1, 1], [], []>} : vector<64x768xf32>, vector<768x1024xf32>, vector<64x1024xf32> -> vector<64x1024xf32>
    %c0_3 = arith.constant 0 : index
    %c0_4 = arith.constant 0 : index
    %7 = vector.load %arg2[%c0_3, %c0_4] : memref<1x1024xf32, #tpu.memory_space<vmem>>, vector<1x1024xf32>
    %8 = vector.broadcast %7 : vector<1x1024xf32> to vector<64x1024xf32>
    %9 = arith.addf %6, %8 : vector<64x1024xf32>
    %c0_5 = arith.constant 0 : index
    %c0_6 = arith.constant 0 : index
    %10 = vector.load %arg9[%c0_5, %c0_6] : memref<64x1024xf32, #tpu.memory_space<vmem>>, vector<64x1024xf32>
    tpu.vector_store %arg9[%c0_5, %c0_6], %9 {strides = array<i32>} : memref<64x1024xf32, #tpu.memory_space<vmem>>, vector<64x1024xf32>,
    %c0_i32_7 = arith.constant 0 : i32
    %11 = tpu.memref_slice %arg10[%c0_i32_7] : memref<2x!tpu.dma_semaphore, #tpu.memory_space<semaphore_mem>> -> memref<1x!tpu.dma_semaphore, #tpu.memory_space<semaphore_mem>>
    %12 = tpu.memref_squeeze %11 : memref<1x!tpu.dma_semaphore, #tpu.memory_space<semaphore_mem>> -> memref<!tpu.dma_semaphore, #tpu.memory_space<semaphore_mem>>
    tpu.wait_dma2 semaphore(%12 : memref<!tpu.dma_semaphore, #tpu.memory_space<semaphore_mem>>) src(%arg3 : memref<256x1024xf32, #tpu.memory_space<any>>) dst(%arg7 : memref<256x1024xf32, #tpu.memory_space<vmem>>)
    %cst_8 = arith.constant 0.000000e+00 : f32
    %13 = vector.broadcast %cst_8 : f32 to vector<8x256xf32>
    %cst_9 = arith.constant 0xFF800000 : f32
    %14 = vector.broadcast %cst_9 : f32 to vector<8x256xf32>
    %c0_i32_10 = arith.constant 0 : i32
    %c8_i32 = arith.constant 8 : i32
    %15 = arith.muli %c0_i32_10, %c8_i32 : i32
    %16 = arith.index_cast %15 : i32 to index
    %c0_11 = arith.constant 0 : index
    %17 = vector.load %arg9[%16, %c0_11] : memref<64x1024xf32, #tpu.memory_space<vmem>>, vector<8x1024xf32>
    %c0_12 = arith.constant 0 : index
    %c0_13 = arith.constant 0 : index
    %18 = vector.load %arg7[%c0_12, %c0_13] : memref<256x1024xf32, #tpu.memory_space<vmem>>, vector<256x1024xf32>
    %cst_14 = arith.constant dense<0.000000e+00> : vector<8x1024xf32>
    %19 = tpu.matmul %13, %18, %cst_14 {dimension_numbers = #tpu.dot_dimension_numbers<[1], [0], [0], [1], [0, 0, 1, 1], [], []>} : vector<8x256xf32>, vector<256x1024xf32>, vector<8x1024xf32> -> vector<8x1024xf32>
    %20 = arith.addf %17, %19 : vector<8x1024xf32>
    %21 = vector.extract_strided_slice %20 {offsets = [0, 0], sizes = [8, 768], strides = [1, 1]} : vector<8x1024xf32> to vector<8x768xf32>
    %22 = arith.negf %21 : vector<8x768xf32>
    %23 = math.exp %22 : vector<8x768xf32>
    %cst_15 = arith.constant 1.000000e+00 : f32
    %24 = vector.broadcast %cst_15 : f32 to vector<8x768xf32>
    %25 = arith.addf %24, %23 : vector<8x768xf32>
    %26 = arith.divf %24, %25 : vector<8x768xf32>
    %27 = vector.extract_strided_slice %26 {offsets = [0, 0], sizes = [8, 256], strides = [1, 1]} : vector<8x768xf32> to vector<8x256xf32>
    %28 = vector.extract_strided_slice %26 {offsets = [0, 256], sizes = [8, 256], strides = [1, 1]} : vector<8x768xf32> to vector<8x256xf32>
    %29 = vector.extract_strided_slice %26 {offsets = [0, 512], sizes = [8, 256], strides = [1, 1]} : vector<8x768xf32> to vector<8x256xf32>
    %30 = vector.extract_strided_slice %20 {offsets = [0, 768], sizes = [8, 256], strides = [1, 1]} : vector<8x1024xf32> to vector<8x256xf32>
    %31 = math.tanh %30 : vector<8x256xf32>
    %32 = arith.mulf %28, %13 : vector<8x256xf32>
    %33 = arith.mulf %27, %31 : vector<8x256xf32>
    %34 = arith.addf %32, %33 : vector<8x256xf32>
    %35 = math.tanh %34 : vector<8x256xf32>
    %36 = arith.mulf %29, %35 : vector<8x256xf32>
    %37 = arith.maximumf %14, %36 : vector<8x256xf32>
    %c1_i32_16 = arith.constant 1 : i32
    %c8_i32_17 = arith.constant 8 : i32
    %38 = arith.muli %c1_i32_16, %c8_i32_17 : i32
    %39 = arith.index_cast %38 : i32 to index
    %c0_18 = arith.constant 0 : index
    %40 = vector.load %arg9[%39, %c0_18] : memref<64x1024xf32, #tpu.memory_space<vmem>>, vector<8x1024xf32>
    %c0_19 = arith.constant 0 : index
    %c0_20 = arith.constant 0 : index
    %41 = vector.load %arg7[%c0_19, %c0_20] : memref<256x1024xf32, #tpu.memory_space<vmem>>, vector<256x1024xf32>
    %cst_21 = arith.constant dense<0.000000e+00> : vector<8x1024xf32>
    %42 = tpu.matmul %36, %41, %cst_21 {dimension_numbers = #tpu.dot_dimension_numbers<[1], [0], [0], [1], [0, 0, 1, 1], [], []>} : vector<8x256xf32>, vector<256x1024xf32>, vector<8x1024xf32> -> vector<8x1024xf32>
    %43 = arith.addf %40, %42 : vector<8x1024xf32>
    %44 = vector.extract_strided_slice %43 {offsets = [0, 0], sizes = [8, 768], strides = [1, 1]} : vector<8x1024xf32> to vector<8x768xf32>
    %45 = arith.negf %44 : vector<8x768xf32>
    %46 = math.exp %45 : vector<8x768xf32>
    %cst_22 = arith.constant 1.000000e+00 : f32
    %47 = vector.broadcast %cst_22 : f32 to vector<8x768xf32>
    %48 = arith.addf %47, %46 : vector<8x768xf32>
    %49 = arith.divf %47, %48 : vector<8x768xf32>
    %50 = vector.extract_strided_slice %49 {offsets = [0, 0], sizes = [8, 256], strides = [1, 1]} : vector<8x768xf32> to vector<8x256xf32>
    %51 = vector.extract_strided_slice %49 {offsets = [0, 256], sizes = [8, 256], strides = [1, 1]} : vector<8x768xf32> to vector<8x256xf32>
    %52 = vector.extract_strided_slice %49 {offsets = [0, 512], sizes = [8, 256], strides = [1, 1]} : vector<8x768xf32> to vector<8x256xf32>
    %53 = vector.extract_strided_slice %43 {offsets = [0, 768], sizes = [8, 256], strides = [1, 1]} : vector<8x1024xf32> to vector<8x256xf32>
    %54 = math.tanh %53 : vector<8x256xf32>
    %55 = arith.mulf %51, %34 : vector<8x256xf32>
    %56 = arith.mulf %50, %54 : vector<8x256xf32>
    %57 = arith.addf %55, %56 : vector<8x256xf32>
    %58 = math.tanh %57 : vector<8x256xf32>
    %59 = arith.mulf %52, %58 : vector<8x256xf32>
    %60 = arith.maximumf %37, %59 : vector<8x256xf32>
    %c2_i32 = arith.constant 2 : i32
    %c8_i32_23 = arith.constant 8 : i32
    %61 = arith.muli %c2_i32, %c8_i32_23 : i32
    %62 = arith.index_cast %61 : i32 to index
    %c0_24 = arith.constant 0 : index
    %63 = vector.load %arg9[%62, %c0_24] : memref<64x1024xf32, #tpu.memory_space<vmem>>, vector<8x1024xf32>
    %c0_25 = arith.constant 0 : index
    %c0_26 = arith.constant 0 : index
    %64 = vector.load %arg7[%c0_25, %c0_26] : memref<256x1024xf32, #tpu.memory_space<vmem>>, vector<256x1024xf32>
    %cst_27 = arith.constant dense<0.000000e+00> : vector<8x1024xf32>
    %65 = tpu.matmul %59, %64, %cst_27 {dimension_numbers = #tpu.dot_dimension_numbers<[1], [0], [0], [1], [0, 0, 1, 1], [], []>} : vector<8x256xf32>, vector<256x1024xf32>, vector<8x1024xf32> -> vector<8x1024xf32>
    %66 = arith.addf %63, %65 : vector<8x1024xf32>
    %67 = vector.extract_strided_slice %66 {offsets = [0, 0], sizes = [8, 768], strides = [1, 1]} : vector<8x1024xf32> to vector<8x768xf32>
    %68 = arith.negf %67 : vector<8x768xf32>
    %69 = math.exp %68 : vector<8x768xf32>
    %cst_28 = arith.constant 1.000000e+00 : f32
    %70 = vector.broadcast %cst_28 : f32 to vector<8x768xf32>
    %71 = arith.addf %70, %69 : vector<8x768xf32>
    %72 = arith.divf %70, %71 : vector<8x768xf32>
    %73 = vector.extract_strided_slice %72 {offsets = [0, 0], sizes = [8, 256], strides = [1, 1]} : vector<8x768xf32> to vector<8x256xf32>
    %74 = vector.extract_strided_slice %72 {offsets = [0, 256], sizes = [8, 256], strides = [1, 1]} : vector<8x768xf32> to vector<8x256xf32>
    %75 = vector.extract_strided_slice %72 {offsets = [0, 512], sizes = [8, 256], strides = [1, 1]} : vector<8x768xf32> to vector<8x256xf32>
    %76 = vector.extract_strided_slice %66 {offsets = [0, 768], sizes = [8, 256], strides = [1, 1]} : vector<8x1024xf32> to vector<8x256xf32>
    %77 = math.tanh %76 : vector<8x256xf32>
    %78 = arith.mulf %74, %57 : vector<8x256xf32>
    %79 = arith.mulf %73, %77 : vector<8x256xf32>
    %80 = arith.addf %78, %79 : vector<8x256xf32>
    %81 = math.tanh %80 : vector<8x256xf32>
    %82 = arith.mulf %75, %81 : vector<8x256xf32>
    %83 = arith.maximumf %60, %82 : vector<8x256xf32>
    %c3_i32 = arith.constant 3 : i32
    %c8_i32_29 = arith.constant 8 : i32
    %84 = arith.muli %c3_i32, %c8_i32_29 : i32
    %85 = arith.index_cast %84 : i32 to index
    %c0_30 = arith.constant 0 : index
    %86 = vector.load %arg9[%85, %c0_30] : memref<64x1024xf32, #tpu.memory_space<vmem>>, vector<8x1024xf32>
    %c0_31 = arith.constant 0 : index
    %c0_32 = arith.constant 0 : index
    %87 = vector.load %arg7[%c0_31, %c0_32] : memref<256x1024xf32, #tpu.memory_space<vmem>>, vector<256x1024xf32>
    %cst_33 = arith.constant dense<0.000000e+00> : vector<8x1024xf32>
    %88 = tpu.matmul %82, %87, %cst_33 {dimension_numbers = #tpu.dot_dimension_numbers<[1], [0], [0], [1], [0, 0, 1, 1], [], []>} : vector<8x256xf32>, vector<256x1024xf32>, vector<8x1024xf32> -> vector<8x1024xf32>
    %89 = arith.addf %86, %88 : vector<8x1024xf32>
    %90 = vector.extract_strided_slice %89 {offsets = [0, 0], sizes = [8, 768], strides = [1, 1]} : vector<8x1024xf32> to vector<8x768xf32>
    %91 = arith.negf %90 : vector<8x768xf32>
    %92 = math.exp %91 : vector<8x768xf32>
    %cst_34 = arith.constant 1.000000e+00 : f32
    %93 = vector.broadcast %cst_34 : f32 to vector<8x768xf32>
    %94 = arith.addf %93, %92 : vector<8x768xf32>
    %95 = arith.divf %93, %94 : vector<8x768xf32>
    %96 = vector.extract_strided_slice %95 {offsets = [0, 0], sizes = [8, 256], strides = [1, 1]} : vector<8x768xf32> to vector<8x256xf32>
    %97 = vector.extract_strided_slice %95 {offsets = [0, 256], sizes = [8, 256], strides = [1, 1]} : vector<8x768xf32> to vector<8x256xf32>
    %98 = vector.extract_strided_slice %95 {offsets = [0, 512], sizes = [8, 256], strides = [1, 1]} : vector<8x768xf32> to vector<8x256xf32>
    %99 = vector.extract_strided_slice %89 {offsets = [0, 768], sizes = [8, 256], strides = [1, 1]} : vector<8x1024xf32> to vector<8x256xf32>
    %100 = math.tanh %99 : vector<8x256xf32>
    %101 = arith.mulf %97, %80 : vector<8x256xf32>
    %102 = arith.mulf %96, %100 : vector<8x256xf32>
    %103 = arith.addf %101, %102 : vector<8x256xf32>
    %104 = math.tanh %103 : vector<8x256xf32>
    %105 = arith.mulf %98, %104 : vector<8x256xf32>
    %106 = arith.maximumf %83, %105 : vector<8x256xf32>
    %c4_i32 = arith.constant 4 : i32
    %c8_i32_35 = arith.constant 8 : i32
    %107 = arith.muli %c4_i32, %c8_i32_35 : i32
    %108 = arith.index_cast %107 : i32 to index
    %c0_36 = arith.constant 0 : index
    %109 = vector.load %arg9[%108, %c0_36] : memref<64x1024xf32, #tpu.memory_space<vmem>>, vector<8x1024xf32>
    %c0_37 = arith.constant 0 : index
    %c0_38 = arith.constant 0 : index
    %110 = vector.load %arg7[%c0_37, %c0_38] : memref<256x1024xf32, #tpu.memory_space<vmem>>, vector<256x1024xf32>
    %cst_39 = arith.constant dense<0.000000e+00> : vector<8x1024xf32>
    %111 = tpu.matmul %105, %110, %cst_39 {dimension_numbers = #tpu.dot_dimension_numbers<[1], [0], [0], [1], [0, 0, 1, 1], [], []>} : vector<8x256xf32>, vector<256x1024xf32>, vector<8x1024xf32> -> vector<8x1024xf32>
    %112 = arith.addf %109, %111 : vector<8x1024xf32>
    %113 = vector.extract_strided_slice %112 {offsets = [0, 0], sizes = [8, 768], strides = [1, 1]} : vector<8x1024xf32> to vector<8x768xf32>
    %114 = arith.negf %113 : vector<8x768xf32>
    %115 = math.exp %114 : vector<8x768xf32>
    %cst_40 = arith.constant 1.000000e+00 : f32
    %116 = vector.broadcast %cst_40 : f32 to vector<8x768xf32>
    %117 = arith.addf %116, %115 : vector<8x768xf32>
    %118 = arith.divf %116, %117 : vector<8x768xf32>
    %119 = vector.extract_strided_slice %118 {offsets = [0, 0], sizes = [8, 256], strides = [1, 1]} : vector<8x768xf32> to vector<8x256xf32>
    %120 = vector.extract_strided_slice %118 {offsets = [0, 256], sizes = [8, 256], strides = [1, 1]} : vector<8x768xf32> to vector<8x256xf32>
    %121 = vector.extract_strided_slice %118 {offsets = [0, 512], sizes = [8, 256], strides = [1, 1]} : vector<8x768xf32> to vector<8x256xf32>
    %122 = vector.extract_strided_slice %112 {offsets = [0, 768], sizes = [8, 256], strides = [1, 1]} : vector<8x1024xf32> to vector<8x256xf32>
    %123 = math.tanh %122 : vector<8x256xf32>
    %124 = arith.mulf %120, %103 : vector<8x256xf32>
    %125 = arith.mulf %119, %123 : vector<8x256xf32>
    %126 = arith.addf %124, %125 : vector<8x256xf32>
    %127 = math.tanh %126 : vector<8x256xf32>
    %128 = arith.mulf %121, %127 : vector<8x256xf32>
    %129 = arith.maximumf %106, %128 : vector<8x256xf32>
    %c5_i32 = arith.constant 5 : i32
    %c8_i32_41 = arith.constant 8 : i32
    %130 = arith.muli %c5_i32, %c8_i32_41 : i32
    %131 = arith.index_cast %130 : i32 to index
    %c0_42 = arith.constant 0 : index
    %132 = vector.load %arg9[%131, %c0_42] : memref<64x1024xf32, #tpu.memory_space<vmem>>, vector<8x1024xf32>
    %c0_43 = arith.constant 0 : index
    %c0_44 = arith.constant 0 : index
    %133 = vector.load %arg7[%c0_43, %c0_44] : memref<256x1024xf32, #tpu.memory_space<vmem>>, vector<256x1024xf32>
    %cst_45 = arith.constant dense<0.000000e+00> : vector<8x1024xf32>
    %134 = tpu.matmul %128, %133, %cst_45 {dimension_numbers = #tpu.dot_dimension_numbers<[1], [0], [0], [1], [0, 0, 1, 1], [], []>} : vector<8x256xf32>, vector<256x1024xf32>, vector<8x1024xf32> -> vector<8x1024xf32>
    %135 = arith.addf %132, %134 : vector<8x1024xf32>
    %136 = vector.extract_strided_slice %135 {offsets = [0, 0], sizes = [8, 768], strides = [1, 1]} : vector<8x1024xf32> to vector<8x768xf32>
    %137 = arith.negf %136 : vector<8x768xf32>
    %138 = math.exp %137 : vector<8x768xf32>
    %cst_46 = arith.constant 1.000000e+00 : f32
    %139 = vector.broadcast %cst_46 : f32 to vector<8x768xf32>
    %140 = arith.addf %139, %138 : vector<8x768xf32>
    %141 = arith.divf %139, %140 : vector<8x768xf32>
    %142 = vector.extract_strided_slice %141 {offsets = [0, 0], sizes = [8, 256], strides = [1, 1]} : vector<8x768xf32> to vector<8x256xf32>
    %143 = vector.extract_strided_slice %141 {offsets = [0, 256], sizes = [8, 256], strides = [1, 1]} : vector<8x768xf32> to vector<8x256xf32>
    %144 = vector.extract_strided_slice %141 {offsets = [0, 512], sizes = [8, 256], strides = [1, 1]} : vector<8x768xf32> to vector<8x256xf32>
    %145 = vector.extract_strided_slice %135 {offsets = [0, 768], sizes = [8, 256], strides = [1, 1]} : vector<8x1024xf32> to vector<8x256xf32>
    %146 = math.tanh %145 : vector<8x256xf32>
    %147 = arith.mulf %143, %126 : vector<8x256xf32>
    %148 = arith.mulf %142, %146 : vector<8x256xf32>
    %149 = arith.addf %147, %148 : vector<8x256xf32>
    %150 = math.tanh %149 : vector<8x256xf32>
    %151 = arith.mulf %144, %150 : vector<8x256xf32>
    %152 = arith.maximumf %129, %151 : vector<8x256xf32>
    %c6_i32 = arith.constant 6 : i32
    %c8_i32_47 = arith.constant 8 : i32
    %153 = arith.muli %c6_i32, %c8_i32_47 : i32
    %154 = arith.index_cast %153 : i32 to index
    %c0_48 = arith.constant 0 : index
    %155 = vector.load %arg9[%154, %c0_48] : memref<64x1024xf32, #tpu.memory_space<vmem>>, vector<8x1024xf32>
    %c0_49 = arith.constant 0 : index
    %c0_50 = arith.constant 0 : index
    %156 = vector.load %arg7[%c0_49, %c0_50] : memref<256x1024xf32, #tpu.memory_space<vmem>>, vector<256x1024xf32>
    %cst_51 = arith.constant dense<0.000000e+00> : vector<8x1024xf32>
    %157 = tpu.matmul %151, %156, %cst_51 {dimension_numbers = #tpu.dot_dimension_numbers<[1], [0], [0], [1], [0, 0, 1, 1], [], []>} : vector<8x256xf32>, vector<256x1024xf32>, vector<8x1024xf32> -> vector<8x1024xf32>
    %158 = arith.addf %155, %157 : vector<8x1024xf32>
    %159 = vector.extract_strided_slice %158 {offsets = [0, 0], sizes = [8, 768], strides = [1, 1]} : vector<8x1024xf32> to vector<8x768xf32>
    %160 = arith.negf %159 : vector<8x768xf32>
    %161 = math.exp %160 : vector<8x768xf32>
    %cst_52 = arith.constant 1.000000e+00 : f32
    %162 = vector.broadcast %cst_52 : f32 to vector<8x768xf32>
    %163 = arith.addf %162, %161 : vector<8x768xf32>
    %164 = arith.divf %162, %163 : vector<8x768xf32>
    %165 = vector.extract_strided_slice %164 {offsets = [0, 0], sizes = [8, 256], strides = [1, 1]} : vector<8x768xf32> to vector<8x256xf32>
    %166 = vector.extract_strided_slice %164 {offsets = [0, 256], sizes = [8, 256], strides = [1, 1]} : vector<8x768xf32> to vector<8x256xf32>
    %167 = vector.extract_strided_slice %164 {offsets = [0, 512], sizes = [8, 256], strides = [1, 1]} : vector<8x768xf32> to vector<8x256xf32>
    %168 = vector.extract_strided_slice %158 {offsets = [0, 768], sizes = [8, 256], strides = [1, 1]} : vector<8x1024xf32> to vector<8x256xf32>
    %169 = math.tanh %168 : vector<8x256xf32>
    %170 = arith.mulf %166, %149 : vector<8x256xf32>
    %171 = arith.mulf %165, %169 : vector<8x256xf32>
    %172 = arith.addf %170, %171 : vector<8x256xf32>
    %173 = math.tanh %172 : vector<8x256xf32>
    %174 = arith.mulf %167, %173 : vector<8x256xf32>
    %175 = arith.maximumf %152, %174 : vector<8x256xf32>
    %c7_i32 = arith.constant 7 : i32
    %c8_i32_53 = arith.constant 8 : i32
    %176 = arith.muli %c7_i32, %c8_i32_53 : i32
    %177 = arith.index_cast %176 : i32 to index
    %c0_54 = arith.constant 0 : index
    %178 = vector.load %arg9[%177, %c0_54] : memref<64x1024xf32, #tpu.memory_space<vmem>>, vector<8x1024xf32>
    %c0_55 = arith.constant 0 : index
    %c0_56 = arith.constant 0 : index
    %179 = vector.load %arg7[%c0_55, %c0_56] : memref<256x1024xf32, #tpu.memory_space<vmem>>, vector<256x1024xf32>
    %cst_57 = arith.constant dense<0.000000e+00> : vector<8x1024xf32>
    %180 = tpu.matmul %174, %179, %cst_57 {dimension_numbers = #tpu.dot_dimension_numbers<[1], [0], [0], [1], [0, 0, 1, 1], [], []>} : vector<8x256xf32>, vector<256x1024xf32>, vector<8x1024xf32> -> vector<8x1024xf32>
    %181 = arith.addf %178, %180 : vector<8x1024xf32>
    %182 = vector.extract_strided_slice %181 {offsets = [0, 0], sizes = [8, 768], strides = [1, 1]} : vector<8x1024xf32> to vector<8x768xf32>
    %183 = arith.negf %182 : vector<8x768xf32>
    %184 = math.exp %183 : vector<8x768xf32>
    %cst_58 = arith.constant 1.000000e+00 : f32
    %185 = vector.broadcast %cst_58 : f32 to vector<8x768xf32>
    %186 = arith.addf %185, %184 : vector<8x768xf32>
    %187 = arith.divf %185, %186 : vector<8x768xf32>
    %188 = vector.extract_strided_slice %187 {offsets = [0, 0], sizes = [8, 256], strides = [1, 1]} : vector<8x768xf32> to vector<8x256xf32>
    %189 = vector.extract_strided_slice %187 {offsets = [0, 256], sizes = [8, 256], strides = [1, 1]} : vector<8x768xf32> to vector<8x256xf32>
    %190 = vector.extract_strided_slice %187 {offsets = [0, 512], sizes = [8, 256], strides = [1, 1]} : vector<8x768xf32> to vector<8x256xf32>
    %191 = vector.extract_strided_slice %181 {offsets = [0, 768], sizes = [8, 256], strides = [1, 1]} : vector<8x1024xf32> to vector<8x256xf32>
    %192 = math.tanh %191 : vector<8x256xf32>
    %193 = arith.mulf %189, %172 : vector<8x256xf32>
    %194 = arith.mulf %188, %192 : vector<8x256xf32>
    %195 = arith.addf %193, %194 : vector<8x256xf32>
    %196 = math.tanh %195 : vector<8x256xf32>
    %197 = arith.mulf %190, %196 : vector<8x256xf32>
    %198 = arith.maximumf %175, %197 : vector<8x256xf32>
    %c8_i32_59 = arith.constant 8 : i32
    %c1_i32_60 = arith.constant 1 : i32
    %199 = tpu.memref_slice %arg10[%c1_i32_60] : memref<2x!tpu.dma_semaphore, #tpu.memory_space<semaphore_mem>> -> memref<1x!tpu.dma_semaphore, #tpu.memory_space<semaphore_mem>>
    %200 = tpu.memref_squeeze %199 : memref<1x!tpu.dma_semaphore, #tpu.memory_space<semaphore_mem>> -> memref<!tpu.dma_semaphore, #tpu.memory_space<semaphore_mem>>
    tpu.wait_dma2 semaphore(%200 : memref<!tpu.dma_semaphore, #tpu.memory_space<semaphore_mem>>) src(%arg4 : memref<256x128xf32, #tpu.memory_space<any>>) dst(%arg8 : memref<256x128xf32, #tpu.memory_space<vmem>>)
    %c0_61 = arith.constant 0 : index
    %c0_62 = arith.constant 0 : index
    %201 = vector.load %arg8[%c0_61, %c0_62] : memref<256x128xf32, #tpu.memory_space<vmem>>, vector<256x128xf32>
    %cst_63 = arith.constant dense<0.000000e+00> : vector<8x128xf32>
    %202 = tpu.matmul %198, %201, %cst_63 {dimension_numbers = #tpu.dot_dimension_numbers<[1], [0], [0], [1], [0, 0, 1, 1], [], []>} : vector<8x256xf32>, vector<256x128xf32>, vector<8x128xf32> -> vector<8x128xf32>
    %c0_64 = arith.constant 0 : index
    %c0_65 = arith.constant 0 : index
    %203 = vector.load %arg5[%c0_64, %c0_65] : memref<1x128xf32, #tpu.memory_space<vmem>>, vector<1x128xf32>
    %204 = vector.broadcast %203 : vector<1x128xf32> to vector<8x128xf32>
    %205 = arith.addf %202, %204 : vector<8x128xf32>
    %206 = tpu.iota {dimensions = array<i32: 1>} : vector<8x128xi32>
    %c2_i32_66 = arith.constant 2 : i32
    %207 = vector.broadcast %c2_i32_66 : i32 to vector<8x128xi32>
    %208 = arith.cmpi slt, %206, %207 : vector<8x128xi32>
    %cst_67 = arith.constant 0xFF800000 : f32
    %209 = vector.broadcast %cst_67 : f32 to vector<8x128xf32>
    %210 = arith.select %208, %205, %209 : vector<8x128xi1>, vector<8x128xf32>
    %cst_68 = arith.constant dense<0xFF800000> : vector<8xf32>
    %211 = vector.multi_reduction <maximumf>, %210, %cst_68 [1] : vector<8x128xf32> to vector<8xf32>
    %212 = vector.shape_cast %211 : vector<8xf32> to vector<8x1xf32>
    %213 = vector.broadcast %212 : vector<8x1xf32> to vector<8x128xf32>
    %214 = arith.subf %205, %213 : vector<8x128xf32>
    %215 = math.exp %214 : vector<8x128xf32>
    %cst_69 = arith.constant 0.000000e+00 : f32
    %216 = vector.broadcast %cst_69 : f32 to vector<8x128xf32>
    %217 = arith.select %208, %215, %216 : vector<8x128xi1>, vector<8x128xf32>
    %cst_70 = arith.constant dense<0.000000e+00> : vector<8xf32>
    %218 = vector.multi_reduction <add>, %217, %cst_70 [1] : vector<8x128xf32> to vector<8xf32>
    %219 = vector.shape_cast %218 : vector<8xf32> to vector<8x1xf32>
    %220 = math.log %219 : vector<8x1xf32>
    %221 = vector.broadcast %220 : vector<8x1xf32> to vector<8x128xf32>
    %222 = arith.subf %214, %221 : vector<8x128xf32>
    %c0_71 = arith.constant 0 : index
    %c0_72 = arith.constant 0 : index
    %223 = vector.load %arg6[%c0_71, %c0_72] : memref<8x128xf32, #tpu.memory_space<vmem>>, vector<8x128xf32>
    tpu.vector_store %arg6[%c0_71, %c0_72], %222 {strides = array<i32>} : memref<8x128xf32, #tpu.memory_space<vmem>>, vector<8x128xf32>,
    return
  }
}

</mosaic_0001>

<llo_original>
// kernel: tpu_custom_call.1
$region0: #{tpu_custom_call.1}
  #allocation0 [shape = 'u32[]', space=smem, size = 0x4, offset = 0x4, fixed_abs, tag = 'smem constant byte address 0x4 - core index']
  #allocation1 [shape = 'u32[144,128]{1,0:T(1,128)}', space=vmem, size = 0x12000, scoped, tag = 'internal scratch']
  #allocation2 [shape = 'f32[256,1024]{1,0:T(8,128)}', space=vmem, size = 0x100000, scoped, tag = 'scratch operand']
  #allocation3 [shape = 'f32[256,128]{1,0:T(8,128)}', space=vmem, size = 0x20000, scoped, tag = 'scratch operand']
  #allocation4 [shape = 'f32[64,1024]{1,0:T(8,128)}', space=vmem, size = 0x40000, scoped, tag = 'scratch operand']
  #allocation5 [shape = 's32[2]{0}', space=sflag, size = 0x8, scoped, tag = 'scratch operand']
  #allocation15 [shape = 's32[]', space=sflag, size = 0x4, offset = 0, fixed_abs, tag = 'sflag constant byte address 0x0 - dummy sync flag']
  #allocation16 [shape = 's32[]', space=sflag, size = 0x4, offset = 0, fixed_abs, tag = 'sflag constant byte address 0x0 - dummy sync flag']
  #allocation17 [shape = 'u32[]', space=smem, size = 0x4, offset = 0x44, fixed_abs, tag = 'smem constant byte address 0x44 - assertion arg 0']
  #allocation18 [shape = 'u32[]', space=smem, size = 0x4, offset = 0x48, fixed_abs, tag = 'smem constant byte address 0x48 - assertion arg 1']
  #allocation19 [shape = 's32[]', space=sflag, size = 0x4, offset = 0, fixed_abs, tag = 'sflag constant byte address 0x0 - dummy sync flag']
  #allocation20 [shape = 's32[]', space=sflag, size = 0x4, offset = 0, fixed_abs, tag = 'sflag constant byte address 0x0 - dummy sync flag']
  %s0 = inlined_call_operand.hbm [shape: f32[64,768], index: 0, kind: input, shape index: {}]
  %s1 = inlined_call_operand.hbm [shape: f32[768,1024], index: 1, kind: input, shape index: {}]
  %s2 = inlined_call_operand.hbm [shape: f32[1,1024], index: 2, kind: input, shape index: {}]
  %s3 = inlined_call_operand.hbm [shape: f32[256,1024], index: 3, kind: input, shape index: {}]
  %s4 = inlined_call_operand.hbm [shape: f32[256,128], index: 4, kind: input, shape index: {}]
  %s5 = inlined_call_operand.hbm [shape: f32[1,128], index: 5, kind: input, shape index: {}]
  %s6 = inlined_call_operand.hbm [shape: f32[8,128], index: 6, kind: output, shape index: {}]
  %s7 = sld [smem:[#allocation0]]
  $region50: #{tpu_custom_call.1} parent=0
    _
  %s9 = ssub.s32 1, %s7
  %s10 = scalar_select 0, %s9, %s7
  $region1: #{tpu_custom_call.1} parent=0
    #allocation6 [shape = 'u8[196608]{0}', space=vmem, size = 0x30000, scoped, tag = 'input window, operand 0, single buffered']
    #allocation7 [shape = 's32[1]{0}', space=sflag, size = 0x4, scoped, tag = 'scoped memory for tpu_custom_call.1']
    #allocation8 [shape = 's32[1]{0}', space=sflag, size = 0x4, scoped, tag = 'scoped memory for tpu_custom_call.1']
    #allocation9 [shape = 'u8[3145728]{0}', space=vmem, size = 0x300000, scoped, tag = 'input window, operand 1, single buffered']
    #allocation10 [shape = 's32[1]{0}', space=sflag, size = 0x4, scoped, tag = 'scoped memory for tpu_custom_call.1']
    #allocation11 [shape = 'u8[4096]{0}', space=vmem, size = 0x1000, scoped, tag = 'input window, operand 2, single buffered']
    #allocation12 [shape = 'u8[512]{0}', space=vmem, size = 0x400, scoped, tag = 'input window, operand 5, single buffered']
    #allocation13 [shape = 's32[1]{0}', space=sflag, size = 0x4, scoped, tag = 'scoped memory for tpu_custom_call.1']
    #allocation14 [shape = 'u8[4096]{0}', space=vmem, size = 0x1000, scoped, tag = 'output window, operand 0, single buffered']
    %11 = vsyncpa [#allocation7], 0
    %12 = vsyncpa [#allocation10], 0
    %13 = vsyncpa [#allocation13], 0
    %14 = vsyncpa [#allocation8], 0
    // Predicated region
    $region2: #{tpu_custom_call.1} parent=1 // pred_check
      _
    $region3: #{tpu_custom_call.1} parent=1 // pred_check_branch
      %16 = sbr.rel (0) target = $region5
    $region4: #{tpu_custom_call.1} parent=1 // pred_region
      %s18 = ssub.s32 6144, 6144
      %19 = vsyncadd [#allocation7], %s18
      %s20 = sshll.u32 [#allocation6], 4
      %s21 = int_to_ptr.vmem [resolvable:$true] %s20
      %26 = dma.hbm_to_vmem [thread:$0]  %s0, 6144, %s21, [#allocation7], 768, 768, 48
    $region5: #{tpu_custom_call.1} parent=1 // pred_fallthru
      _
    // Predicated region
    $region6: #{tpu_custom_call.1} parent=1 // pred_check
      _
    $region7: #{tpu_custom_call.1} parent=1 // pred_check_branch
      %28 = sbr.rel (0) target = $region9
    $region8: #{tpu_custom_call.1} parent=1 // pred_region
      %s30 = ssub.s32 98304, 98304
      %31 = vsyncadd [#allocation10], %s30
      %s32 = sshll.u32 [#allocation9], 4
      %s33 = int_to_ptr.vmem [resolvable:$true] %s32
      %38 = dma.hbm_to_vmem [thread:$0]  %s1, 98304, %s33, [#allocation10], 1024, 1024, 64
    $region9: #{tpu_custom_call.1} parent=1 // pred_fallthru
      _
    // Predicated region
    $region10: #{tpu_custom_call.1} parent=1 // pred_check
      _
    $region11: #{tpu_custom_call.1} parent=1 // pred_check_branch
      %40 = sbr.rel (0) target = $region13
    $region12: #{tpu_custom_call.1} parent=1 // pred_region
      %s42 = ssub.s32 128, 128
      %43 = vsyncadd [#allocation10], %s42
      %s45 = sshll.u32 [#allocation11], 4
      %s46 = int_to_ptr.vmem [resolvable:$true] %s45
      %48 = dma.hbm_to_vmem [thread:$0]  %s2, 128, %s46, [#allocation10]
    $region13: #{tpu_custom_call.1} parent=1 // pred_fallthru
      _
    // Predicated region
    $region14: #{tpu_custom_call.1} parent=1 // pred_check
      _
    $region15: #{tpu_custom_call.1} parent=1 // pred_check_branch
      %50 = sbr.rel (0) target = $region17
    $region16: #{tpu_custom_call.1} parent=1 // pred_region
      %s52 = ssub.s32 16, 16
      %53 = vsyncadd [#allocation13], %s52
      %s55 = sshll.u32 [#allocation12], 4
      %s56 = int_to_ptr.vmem [resolvable:$true] %s55
      %58 = dma.hbm_to_vmem [thread:$0]  %s5, 16, %s56, [#allocation13]
    $region17: #{tpu_custom_call.1} parent=1 // pred_fallthru
      _
    // Predicated region
    $region18: #{tpu_custom_call.1} parent=1 // pred_check
      _
    $region19: #{tpu_custom_call.1} parent=1 // pred_check_branch
      %60 = sbr.rel (0) target = $region21
    $region20: #{tpu_custom_call.1} parent=1 // pred_region
      %61 = dma.done [#allocation7], 6144
    $region21: #{tpu_custom_call.1} parent=1 // pred_fallthru
      _
    // Predicated region
    $region22: #{tpu_custom_call.1} parent=1 // pred_check
      _
    $region23: #{tpu_custom_call.1} parent=1 // pred_check_branch
      %63 = sbr.rel (0) target = $region25
    $region24: #{tpu_custom_call.1} parent=1 // pred_region
      %64 = dma.done [#allocation10], 98304
    $region25: #{tpu_custom_call.1} parent=1 // pred_fallthru
      _
    // Predicated region
    $region26: #{tpu_custom_call.1} parent=1 // pred_check
      _
    $region27: #{tpu_custom_call.1} parent=1 // pred_check_branch
      %66 = sbr.rel (0) target = $region29
    $region28: #{tpu_custom_call.1} parent=1 // pred_region
      %67 = dma.done [#allocation10], 128
    $region29: #{tpu_custom_call.1} parent=1 // pred_fallthru
      _
    // Predicated region
    $region30: #{tpu_custom_call.1} parent=1 // pred_check
      _
    $region31: #{tpu_custom_call.1} parent=1 // pred_check_branch
      %69 = sbr.rel (0) target = $region33
    $region32: #{tpu_custom_call.1} parent=1 // pred_region
      %70 = dma.done [#allocation13], 16
    $region33: #{tpu_custom_call.1} parent=1 // pred_fallthru
      _
    // Predicated region
    $region34: #{tpu_custom_call.1} parent=1 // pred_check
      _
    $region35: #{tpu_custom_call.1} parent=1 // pred_check_branch
      %72 = sbr.rel target = $region37
    $region36: #{tpu_custom_call.1} parent=1 // pred_region
      %73 = sst [smem:[#allocation17]] [#allocation16]
      %74 = sst [smem:[#allocation18]] [#allocation15]
    $region37: #{tpu_custom_call.1} parent=1 // pred_fallthru
      _
    %76 = shalt.err (0)
    %s78 = sshll.u32 [#allocation2], 4
    %s79 = int_to_ptr.vmem [resolvable:$true] %s78
    %81 = dma.hbm_to_vmem [thread:$0]  %s3, 32768, %s79, [#allocation5]
    %s82 = scalar_lea.sflag [#allocation5], 1
    // Predicated region
    $region38: #{tpu_custom_call.1} parent=1 // pred_check
      _
    $region39: #{tpu_custom_call.1} parent=1 // pred_check_branch
      %84 = sbr.rel target = $region41
    $region40: #{tpu_custom_call.1} parent=1 // pred_region
      %85 = sst [smem:[#allocation17]] [#allocation20]
      %86 = sst [smem:[#allocation18]] [#allocation19]
    $region41: #{tpu_custom_call.1} parent=1 // pred_fallthru
      _
    %88 = shalt.err (0)
    %s90 = sshll.u32 [#allocation3], 4
    %s91 = int_to_ptr.vmem [resolvable:$true] %s90
    %93 = dma.hbm_to_vmem [thread:$0]  %s4, 4096, %s91, %s82
    %v94 = vld [vmem:[#allocation6] sm:$0xff]
    %v95 = vld [vmem:[#allocation6 + $0x8] sm:$0xff]
    %v96 = vld [vmem:[#allocation6 + $0x10] sm:$0xff]
    %v97 = vld [vmem:[#allocation6 + $0x18] sm:$0xff]
    %v98 = vld [vmem:[#allocation6 + $0x20] sm:$0xff]
    %v99 = vld [vmem:[#allocation6 + $0x28] sm:$0xff]
    %v100 = vld [vmem:[#allocation6 + $0x30] sm:$0xff]
    %v101 = vld [vmem:[#allocation6 + $0x38] sm:$0xff]
    %v102 = vld [vmem:[#allocation6 + $0x40] sm:$0xff]
    %v103 = vld [vmem:[#allocation6 + $0x48] sm:$0xff]
    %v104 = vld [vmem:[#allocation6 + $0x50] sm:$0xff]
    %v105 = vld [vmem:[#allocation6 + $0x58] sm:$0xff]
    %v106 = vld [vmem:[#allocation6 + $0x60] sm:$0xff]
    %v107 = vld [vmem:[#allocation6 + $0x68] sm:$0xff]
    %v108 = vld [vmem:[#allocation6 + $0x70] sm:$0xff]
    %v109 = vld [vmem:[#allocation6 + $0x78] sm:$0xff]
    %v110 = vld [vmem:[#allocation6 + $0x80] sm:$0xff]
    %v111 = vld [vmem:[#allocation6 + $0x88] sm:$0xff]
    %v112 = vld [vmem:[#allocation6 + $0x90] sm:$0xff]
    %v113 = vld [vmem:[#allocation6 + $0x98] sm:$0xff]
    %v114 = vld [vmem:[#allocation6 + $0xa0] sm:$0xff]
    %v115 = vld [vmem:[#allocation6 + $0xa8] sm:$0xff]
    %v116 = vld [vmem:[#allocation6 + $0xb0] sm:$0xff]
    %v117 = vld [vmem:[#allocation6 + $0xb8] sm:$0xff]
    %v118 = vld [vmem:[#allocation6 + $0xc0] sm:$0xff]
    %v119 = vld [vmem:[#allocation6 + $0xc8] sm:$0xff]
    %v120 = vld [vmem:[#allocation6 + $0xd0] sm:$0xff]
    %v121 = vld [vmem:[#allocation6 + $0xd8] sm:$0xff]
    %v122 = vld [vmem:[#allocation6 + $0xe0] sm:$0xff]
    %v123 = vld [vmem:[#allocation6 + $0xe8] sm:$0xff]
    %v124 = vld [vmem:[#allocation6 + $0xf0] sm:$0xff]
    %v125 = vld [vmem:[#allocation6 + $0xf8] sm:$0xff]
    %v126 = vld [vmem:[#allocation6 + $0x100] sm:$0xff]
    %v127 = vld [vmem:[#allocation6 + $0x108] sm:$0xff]
    %v128 = vld [vmem:[#allocation6 + $0x110] sm:$0xff]
    %v129 = vld [vmem:[#allocation6 + $0x118] sm:$0xff]
    %v130 = vld [vmem:[#allocation6 + $0x120] sm:$0xff]
    %v131 = vld [vmem:[#allocation6 + $0x128] sm:$0xff]
    %v132 = vld [vmem:[#allocation6 + $0x130] sm:$0xff]
    %v133 = vld [vmem:[#allocation6 + $0x138] sm:$0xff]
    %v134 = vld [vmem:[#allocation6 + $0x140] sm:$0xff]
    %v135 = vld [vmem:[#allocation6 + $0x148] sm:$0xff]
    %v136 = vld [vmem:[#allocation6 + $0x150] sm:$0xff]
    %v137 = vld [vmem:[#allocation6 + $0x158] sm:$0xff]
    %v138 = vld [vmem:[#allocation6 + $0x160] sm:$0xff]
    %v139 = vld [vmem:[#allocation6 + $0x168] sm:$0xff]
    %v140 = vld [vmem:[#allocation6 + $0x170] sm:$0xff]
    %v141 = vld [vmem:[#allocation6 + $0x178] sm:$0xff]
    %v142 = vld [vmem:[#allocation9] sm:$0xff]
    %v143 = vld [vmem:[#allocation9 + $0x8] sm:$0xff]
    %v144 = vld [vmem:[#allocation9 + $0x10] sm:$0xff]
    %v145 = vld [vmem:[#allocation9 + $0x18] sm:$0xff]
    %v146 = vld [vmem:[#allocation9 + $0x20] sm:$0xff]
    %v147 = vld [vmem:[#allocation9 + $0x28] sm:$0xff]
    %v148 = vld [vmem:[#allocation9 + $0x30] sm:$0xff]
    %v149 = vld [vmem:[#allocation9 + $0x38] sm:$0xff]
    %v150 = vld [vmem:[#allocation9 + $0x40] sm:$0xff]
    %v151 = vld [vmem:[#allocation9 + $0x48] sm:$0xff]
    %v152 = vld [vmem:[#allocation9 + $0x50] sm:$0xff]
    %v153 = vld [vmem:[#allocation9 + $0x58] sm:$0xff]
    %v154 = vld [vmem:[#allocation9 + $0x60] sm:$0xff]
    %v155 = vld [vmem:[#allocation9 + $0x68] sm:$0xff]
    %v156 = vld [vmem:[#allocation9 + $0x70] sm:$0xff]
    %v157 = vld [vmem:[#allocation9 + $0x78] sm:$0xff]
    %v158 = vld [vmem:[#allocation9 + $0x80] sm:$0xff]
    %v159 = vld [vmem:[#allocation9 + $0x88] sm:$0xff]
    %v160 = vld [vmem:[#allocation9 + $0x90] sm:$0xff]
    %v161 = vld [vmem:[#allocation9 + $0x98] sm:$0xff]
    %v162 = vld [vmem:[#allocation9 + $0xa0] sm:$0xff]
    %v163 = vld [vmem:[#allocation9 + $0xa8] sm:$0xff]
    %v164 = vld [vmem:[#allocation9 + $0xb0] sm:$0xff]
    %v165 = vld [vmem:[#allocation9 + $0xb8] sm:$0xff]
    %v166 = vld [vmem:[#allocation9 + $0xc0] sm:$0xff]
    %v167 = vld [vmem:[#allocation9 + $0xc8] sm:$0xff]
    %v168 = vld [vmem:[#allocation9 + $0xd0] sm:$0xff]
    %v169 = vld [vmem:[#allocation9 + $0xd8] sm:$0xff]
    %v170 = vld [vmem:[#allocation9 + $0xe0] sm:$0xff]
    %v171 = vld [vmem:[#allocation9 + $0xe8] sm:$0xff]
    %v172 = vld [vmem:[#allocation9 + $0xf0] sm:$0xff]
    %v173 = vld [vmem:[#allocation9 + $0xf8] sm:$0xff]
    %v174 = vld [vmem:[#allocation9 + $0x100] sm:$0xff]
    %v175 = vld [vmem:[#allocation9 + $0x108] sm:$0xff]
    %v176 = vld [vmem:[#allocation9 + $0x110] sm:$0xff]
    %v177 = vld [vmem:[#allocation9 + $0x118] sm:$0xff]
    %v178 = vld [vmem:[#allocation9 + $0x120] sm:$0xff]
    %v179 = vld [vmem:[#allocation9 + $0x128] sm:$0xff]
    %v180 = vld [vmem:[#allocation9 + $0x130] sm:$0xff]
    %v181 = vld [vmem:[#allocation9 + $0x138] sm:$0xff]
    %v182 = vld [vmem:[#allocation9 + $0x140] sm:$0xff]
    %v183 = vld [vmem:[#allocation9 + $0x148] sm:$0xff]
    %v184 = vld [vmem:[#allocation9 + $0x150] sm:$0xff]
    %v185 = vld [vmem:[#allocation9 + $0x158] sm:$0xff]
    %v186 = vld [vmem:[#allocation9 + $0x160] sm:$0xff]
    %v187 = vld [vmem:[#allocation9 + $0x168] sm:$0xff]
    %v188 = vld [vmem:[#allocation9 + $0x170] sm:$0xff]
    %v189 = vld [vmem:[#allocation9 + $0x178] sm:$0xff]
    %v190 = vld [vmem:[#allocation9 + $0x180] sm:$0xff]
    %v191 = vld [vmem:[#allocation9 + $0x188] sm:$0xff]
    %v192 = vld [vmem:[#allocation9 + $0x190] sm:$0xff]
    %v193 = vld [vmem:[#allocation9 + $0x198] sm:$0xff]
    %v194 = vld [vmem:[#allocation9 + $0x1a0] sm:$0xff]
    %v195 = vld [vmem:[#allocation9 + $0x1a8] sm:$0xff]
    %v196 = vld [vmem:[#allocation9 + $0x1b0] sm:$0xff]
    %v197 = vld [vmem:[#allocation9 + $0x1b8] sm:$0xff]
    %v198 = vld [vmem:[#allocation9 + $0x1c0] sm:$0xff]
    %v199 = vld [vmem:[#allocation9 + $0x1c8] sm:$0xff]
    %v200 = vld [vmem:[#allocation9 + $0x1d0] sm:$0xff]
    %v201 = vld [vmem:[#allocation9 + $0x1d8] sm:$0xff]
    %v202 = vld [vmem:[#allocation9 + $0x1e0] sm:$0xff]
    %v203 = vld [vmem:[#allocation9 + $0x1e8] sm:$0xff]
    %v204 = vld [vmem:[#allocation9 + $0x1f0] sm:$0xff]
    %v205 = vld [vmem:[#allocation9 + $0x1f8] sm:$0xff]
    %v206 = vld [vmem:[#allocation9 + $0x200] sm:$0xff]
    %v207 = vld [vmem:[#allocation9 + $0x208] sm:$0xff]
    %v208 = vld [vmem:[#allocation9 + $0x210] sm:$0xff]
    %v209 = vld [vmem:[#allocation9 + $0x218] sm:$0xff]
    %v210 = vld [vmem:[#allocation9 + $0x220] sm:$0xff]
    %v211 = vld [vmem:[#allocation9 + $0x228] sm:$0xff]
    %v212 = vld [vmem:[#allocation9 + $0x230] sm:$0xff]
    %v213 = vld [vmem:[#allocation9 + $0x238] sm:$0xff]
    %v214 = vld [vmem:[#allocation9 + $0x240] sm:$0xff]
    %v215 = vld [vmem:[#allocation9 + $0x248] sm:$0xff]
    %v216 = vld [vmem:[#allocation9 + $0x250] sm:$0xff]
    %v217 = vld [vmem:[#allocation9 + $0x258] sm:$0xff]
    %v218 = vld [vmem:[#allocation9 + $0x260] sm:$0xff]
    %v219 = vld [vmem:[#allocation9 + $0x268] sm:$0xff]
    %v220 = vld [vmem:[#allocation9 + $0x270] sm:$0xff]
    %v221 = vld [vmem:[#allocation9 + $0x278] sm:$0xff]
    %v222 = vld [vmem:[#allocation9 + $0x280] sm:$0xff]
    %v223 = vld [vmem:[#allocation9 + $0x288] sm:$0xff]
    %v224 = vld [vmem:[#allocation9 + $0x290] sm:$0xff]
    %v225 = vld [vmem:[#allocation9 + $0x298] sm:$0xff]
    %v226 = vld [vmem:[#allocation9 + $0x2a0] sm:$0xff]
    %v227 = vld [vmem:[#allocation9 + $0x2a8] sm:$0xff]
    %v228 = vld [vmem:[#allocation9 + $0x2b0] sm:$0xff]
    %v229 = vld [vmem:[#allocation9 + $0x2b8] sm:$0xff]
    %v230 = vld [vmem:[#allocation9 + $0x2c0] sm:$0xff]
    %v231 = vld [vmem:[#allocation9 + $0x2c8] sm:$0xff]
    %v232 = vld [vmem:[#allocation9 + $0x2d0] sm:$0xff]
    %v233 = vld [vmem:[#allocation9 + $0x2d8] sm:$0xff]
    %v234 = vld [vmem:[#allocation9 + $0x2e0] sm:$0xff]
    %v235 = vld [vmem:[#allocation9 + $0x2e8] sm:$0xff]
    %v236 = vld [vmem:[#allocation9 + $0x2f0] sm:$0xff]
    %v237 = vld [vmem:[#allocation9 + $0x2f8] sm:$0xff]
    %v238 = vld [vmem:[#allocation9 + $0x300] sm:$0xff]
    %v239 = vld [vmem:[#allocation9 + $0x308] sm:$0xff]
    %v240 = vld [vmem:[#allocation9 + $0x310] sm:$0xff]
    %v241 = vld [vmem:[#allocation9 + $0x318] sm:$0xff]
    %v242 = vld [vmem:[#allocation9 + $0x320] sm:$0xff]
    %v243 = vld [vmem:[#allocation9 + $0x328] sm:$0xff]
    %v244 = vld [vmem:[#allocation9 + $0x330] sm:$0xff]
    %v245 = vld [vmem:[#allocation9 + $0x338] sm:$0xff]
    %v246 = vld [vmem:[#allocation9 + $0x340] sm:$0xff]
    %v247 = vld [vmem:[#allocation9 + $0x348] sm:$0xff]
    %v248 = vld [vmem:[#allocation9 + $0x350] sm:$0xff]
    %v249 = vld [vmem:[#allocation9 + $0x358] sm:$0xff]
    %v250 = vld [vmem:[#allocation9 + $0x360] sm:$0xff]
    %v251 = vld [vmem:[#allocation9 + $0x368] sm:$0xff]
    %v252 = vld [vmem:[#allocation9 + $0x370] sm:$0xff]
    %v253 = vld [vmem:[#allocation9 + $0x378] sm:$0xff]
    %v254 = vld [vmem:[#allocation9 + $0x380] sm:$0xff]
    %v255 = vld [vmem:[#allocation9 + $0x388] sm:$0xff]
    %v256 = vld [vmem:[#allocation9 + $0x390] sm:$0xff]
    %v257 = vld [vmem:[#allocation9 + $0x398] sm:$0xff]
    %v258 = vld [vmem:[#allocation9 + $0x3a0] sm:$0xff]
    %v259 = vld [vmem:[#allocation9 + $0x3a8] sm:$0xff]
    %v260 = vld [vmem:[#allocation9 + $0x3b0] sm:$0xff]
    %v261 = vld [vmem:[#allocation9 + $0x3b8] sm:$0xff]
    %v262 = vld [vmem:[#allocation9 + $0x3c0] sm:$0xff]
    %v263 = vld [vmem:[#allocation9 + $0x3c8] sm:$0xff]
    %v264 = vld [vmem:[#allocation9 + $0x3d0] sm:$0xff]
    %v265 = vld [vmem:[#allocation9 + $0x3d8] sm:$0xff]
    %v266 = vld [vmem:[#allocation9 + $0x3e0] sm:$0xff]
    %v267 = vld [vmem:[#allocation9 + $0x3e8] sm:$0xff]
    %v268 = vld [vmem:[#allocation9 + $0x3f0] sm:$0xff]
    %v269 = vld [vmem:[#allocation9 + $0x3f8] sm:$0xff]
    %v270 = vld [vmem:[#allocation9 + $0x400] sm:$0xff]
    %v271 = vld [vmem:[#allocation9 + $0x408] sm:$0xff]
    %v272 = vld [vmem:[#allocation9 + $0x410] sm:$0xff]
    %v273 = vld [vmem:[#allocation9 + $0x418] sm:$0xff]
    %v274 = vld [vmem:[#allocation9 + $0x420] sm:$0xff]
    %v275 = vld [vmem:[#allocation9 + $0x428] sm:$0xff]
    %v276 = vld [vmem:[#allocation9 + $0x430] sm:$0xff]
    %v277 = vld [vmem:[#allocation9 + $0x438] sm:$0xff]
    %v278 = vld [vmem:[#allocation9 + $0x440] sm:$0xff]
    %v279 = vld [vmem:[#allocation9 + $0x448] sm:$0xff]
    %v280 = vld [vmem:[#allocation9 + $0x450] sm:$0xff]
    %v281 = vld [vmem:[#allocation9 + $0x458] sm:$0xff]
    %v282 = vld [vmem:[#allocation9 + $0x460] sm:$0xff]
    %v283 = vld [vmem:[#allocation9 + $0x468] sm:$0xff]
    %v284 = vld [vmem:[#allocation9 + $0x470] sm:$0xff]
    %v285 = vld [vmem:[#allocation9 + $0x478] sm:$0xff]
    %v286 = vld [vmem:[#allocation9 + $0x480] sm:$0xff]
    %v287 = vld [vmem:[#allocation9 + $0x488] sm:$0xff]
    %v288 = vld [vmem:[#allocation9 + $0x490] sm:$0xff]
    %v289 = vld [vmem:[#allocation9 + $0x498] sm:$0xff]
    %v290 = vld [vmem:[#allocation9 + $0x4a0] sm:$0xff]
    %v291 = vld [vmem:[#allocation9 + $0x4a8] sm:$0xff]
    %v292 = vld [vmem:[#allocation9 + $0x4b0] sm:$0xff]
    %v293 = vld [vmem:[#allocation9 + $0x4b8] sm:$0xff]
    %v294 = vld [vmem:[#allocation9 + $0x4c0] sm:$0xff]
    %v295 = vld [vmem:[#allocation9 + $0x4c8] sm:$0xff]
    %v296 = vld [vmem:[#allocation9 + $0x4d0] sm:$0xff]
    %v297 = vld [vmem:[#allocation9 + $0x4d8] sm:$0xff]
    %v298 = vld [vmem:[#allocation9 + $0x4e0] sm:$0xff]
    %v299 = vld [vmem:[#allocation9 + $0x4e8] sm:$0xff]
    %v300 = vld [vmem:[#allocation9 + $0x4f0] sm:$0xff]
    %v301 = vld [vmem:[#allocation9 + $0x4f8] sm:$0xff]
    %v302 = vld [vmem:[#allocation9 + $0x500] sm:$0xff]
    %v303 = vld [vmem:[#allocation9 + $0x508] sm:$0xff]
    %v304 = vld [vmem:[#allocation9 + $0x510] sm:$0xff]
    %v305 = vld [vmem:[#allocation9 + $0x518] sm:$0xff]
    %v306 = vld [vmem:[#allocation9 + $0x520] sm:$0xff]
    %v307 = vld [vmem:[#allocation9 + $0x528] sm:$0xff]
    %v308 = vld [vmem:[#allocation9 + $0x530] sm:$0xff]
    %v309 = vld [vmem:[#allocation9 + $0x538] sm:$0xff]
    %v310 = vld [vmem:[#allocation9 + $0x540] sm:$0xff]
    %v311 = vld [vmem:[#allocation9 + $0x548] sm:$0xff]
    %v312 = vld [vmem:[#allocation9 + $0x550] sm:$0xff]
    %v313 = vld [vmem:[#allocation9 + $0x558] sm:$0xff]
    %v314 = vld [vmem:[#allocation9 + $0x560] sm:$0xff]
    %v315 = vld [vmem:[#allocation9 + $0x568] sm:$0xff]
    %v316 = vld [vmem:[#allocation9 + $0x570] sm:$0xff]
    %v317 = vld [vmem:[#allocation9 + $0x578] sm:$0xff]
    %v318 = vld [vmem:[#allocation9 + $0x580] sm:$0xff]
    %v319 = vld [vmem:[#allocation9 + $0x588] sm:$0xff]
    %v320 = vld [vmem:[#allocation9 + $0x590] sm:$0xff]
    %v321 = vld [vmem:[#allocation9 + $0x598] sm:$0xff]
    %v322 = vld [vmem:[#allocation9 + $0x5a0] sm:$0xff]
    %v323 = vld [vmem:[#allocation9 + $0x5a8] sm:$0xff]
    %v324 = vld [vmem:[#allocation9 + $0x5b0] sm:$0xff]
    %v325 = vld [vmem:[#allocation9 + $0x5b8] sm:$0xff]
    %v326 = vld [vmem:[#allocation9 + $0x5c0] sm:$0xff]
    %v327 = vld [vmem:[#allocation9 + $0x5c8] sm:$0xff]
    %v328 = vld [vmem:[#allocation9 + $0x5d0] sm:$0xff]
    %v329 = vld [vmem:[#allocation9 + $0x5d8] sm:$0xff]
    %v330 = vld [vmem:[#allocation9 + $0x5e0] sm:$0xff]
    %v331 = vld [vmem:[#allocation9 + $0x5e8] sm:$0xff]
    %v332 = vld [vmem:[#allocation9 + $0x5f0] sm:$0xff]
    %v333 = vld [vmem:[#allocation9 + $0x5f8] sm:$0xff]
    %v334 = vld [vmem:[#allocation9 + $0x600] sm:$0xff]
    %v335 = vld [vmem:[#allocation9 + $0x608] sm:$0xff]
    %v336 = vld [vmem:[#allocation9 + $0x610] sm:$0xff]
    %v337 = vld [vmem:[#allocation9 + $0x618] sm:$0xff]
    %v338 = vld [vmem:[#allocation9 + $0x620] sm:$0xff]
    %v339 = vld [vmem:[#allocation9 + $0x628] sm:$0xff]
    %v340 = vld [vmem:[#allocation9 + $0x630] sm:$0xff]
    %v341 = vld [vmem:[#allocation9 + $0x638] sm:$0xff]
    %v342 = vld [vmem:[#allocation9 + $0x640] sm:$0xff]
    %v343 = vld [vmem:[#allocation9 + $0x648] sm:$0xff]
    %v344 = vld [vmem:[#allocation9 + $0x650] sm:$0xff]
    %v345 = vld [vmem:[#allocation9 + $0x658] sm:$0xff]
    %v346 = vld [vmem:[#allocation9 + $0x660] sm:$0xff]
    %v347 = vld [vmem:[#allocation9 + $0x668] sm:$0xff]
    %v348 = vld [vmem:[#allocation9 + $0x670] sm:$0xff]
    %v349 = vld [vmem:[#allocation9 + $0x678] sm:$0xff]
    %v350 = vld [vmem:[#allocation9 + $0x680] sm:$0xff]
    %v351 = vld [vmem:[#allocation9 + $0x688] sm:$0xff]
    %v352 = vld [vmem:[#allocation9 + $0x690] sm:$0xff]
    %v353 = vld [vmem:[#allocation9 + $0x698] sm:$0xff]
    %v354 = vld [vmem:[#allocation9 + $0x6a0] sm:$0xff]
    %v355 = vld [vmem:[#allocation9 + $0x6a8] sm:$0xff]
    %v356 = vld [vmem:[#allocation9 + $0x6b0] sm:$0xff]
    %v357 = vld [vmem:[#allocation9 + $0x6b8] sm:$0xff]
    %v358 = vld [vmem:[#allocation9 + $0x6c0] sm:$0xff]
    %v359 = vld [vmem:[#allocation9 + $0x6c8] sm:$0xff]
    %v360 = vld [vmem:[#allocation9 + $0x6d0] sm:$0xff]
    %v361 = vld [vmem:[#allocation9 + $0x6d8] sm:$0xff]
    %v362 = vld [vmem:[#allocation9 + $0x6e0] sm:$0xff]
    %v363 = vld [vmem:[#allocation9 + $0x6e8] sm:$0xff]
    %v364 = vld [vmem:[#allocation9 + $0x6f0] sm:$0xff]
    %v365 = vld [vmem:[#allocation9 + $0x6f8] sm:$0xff]
    %v366 = vld [vmem:[#allocation9 + $0x700] sm:$0xff]
    %v367 = vld [vmem:[#allocation9 + $0x708] sm:$0xff]
    %v368 = vld [vmem:[#allocation9 + $0x710] sm:$0xff]
    %v369 = vld [vmem:[#allocation9 + $0x718] sm:$0xff]
    %v370 = vld [vmem:[#allocation9 + $0x720] sm:$0xff]
    %v371 = vld [vmem:[#allocation9 + $0x728] sm:$0xff]
    %v372 = vld [vmem:[#allocation9 + $0x730] sm:$0xff]
    %v373 = vld [vmem:[#allocation9 + $0x738] sm:$0xff]
    %v374 = vld [vmem:[#allocation9 + $0x740] sm:$0xff]
    %v375 = vld [vmem:[#allocation9 + $0x748] sm:$0xff]
    %v376 = vld [vmem:[#allocation9 + $0x750] sm:$0xff]
    %v377 = vld [vmem:[#allocation9 + $0x758] sm:$0xff]
    %v378 = vld [vmem:[#allocation9 + $0x760] sm:$0xff]
    %v379 = vld [vmem:[#allocation9 + $0x768] sm:$0xff]
    %v380 = vld [vmem:[#allocation9 + $0x770] sm:$0xff]
    %v381 = vld [vmem:[#allocation9 + $0x778] sm:$0xff]
    %v382 = vld [vmem:[#allocation9 + $0x780] sm:$0xff]
    %v383 = vld [vmem:[#allocation9 + $0x788] sm:$0xff]
    %v384 = vld [vmem:[#allocation9 + $0x790] sm:$0xff]
    %v385 = vld [vmem:[#allocation9 + $0x798] sm:$0xff]
    %v386 = vld [vmem:[#allocation9 + $0x7a0] sm:$0xff]
    %v387 = vld [vmem:[#allocation9 + $0x7a8] sm:$0xff]
    %v388 = vld [vmem:[#allocation9 + $0x7b0] sm:$0xff]
    %v389 = vld [vmem:[#allocation9 + $0x7b8] sm:$0xff]
    %v390 = vld [vmem:[#allocation9 + $0x7c0] sm:$0xff]
    %v391 = vld [vmem:[#allocation9 + $0x7c8] sm:$0xff]
    %v392 = vld [vmem:[#allocation9 + $0x7d0] sm:$0xff]
    %v393 = vld [vmem:[#allocation9 + $0x7d8] sm:$0xff]
    %v394 = vld [vmem:[#allocation9 + $0x7e0] sm:$0xff]
    %v395 = vld [vmem:[#allocation9 + $0x7e8] sm:$0xff]
    %v396 = vld [vmem:[#allocation9 + $0x7f0] sm:$0xff]
    %v397 = vld [vmem:[#allocation9 + $0x7f8] sm:$0xff]
    %v398 = vld [vmem:[#allocation9 + $0x800] sm:$0xff]
    %v399 = vld [vmem:[#allocation9 + $0x808] sm:$0xff]
    %v400 = vld [vmem:[#allocation9 + $0x810] sm:$0xff]
    %v401 = vld [vmem:[#allocation9 + $0x818] sm:$0xff]
    %v402 = vld [vmem:[#allocation9 + $0x820] sm:$0xff]
    %v403 = vld [vmem:[#allocation9 + $0x828] sm:$0xff]
    %v404 = vld [vmem:[#allocation9 + $0x830] sm:$0xff]
    %v405 = vld [vmem:[#allocation9 + $0x838] sm:$0xff]
    %v406 = vld [vmem:[#allocation9 + $0x840] sm:$0xff]
    %v407 = vld [vmem:[#allocation9 + $0x848] sm:$0xff]
    %v408 = vld [vmem:[#allocation9 + $0x850] sm:$0xff]
    %v409 = vld [vmem:[#allocation9 + $0x858] sm:$0xff]
    %v410 = vld [vmem:[#allocation9 + $0x860] sm:$0xff]
    %v411 = vld [vmem:[#allocation9 + $0x868] sm:$0xff]
    %v412 = vld [vmem:[#allocation9 + $0x870] sm:$0xff]
    %v413 = vld [vmem:[#allocation9 + $0x878] sm:$0xff]
    %v414 = vld [vmem:[#allocation9 + $0x880] sm:$0xff]
    %v415 = vld [vmem:[#allocation9 + $0x888] sm:$0xff]
    %v416 = vld [vmem:[#allocation9 + $0x890] sm:$0xff]
    %v417 = vld [vmem:[#allocation9 + $0x898] sm:$0xff]
    %v418 = vld [vmem:[#allocation9 + $0x8a0] sm:$0xff]
    %v419 = vld [vmem:[#allocation9 + $0x8a8] sm:$0xff]
    %v420 = vld [vmem:[#allocation9 + $0x8b0] sm:$0xff]
    %v421 = vld [vmem:[#allocation9 + $0x8b8] sm:$0xff]
    %v422 = vld [vmem:[#allocation9 + $0x8c0] sm:$0xff]
    %v423 = vld [vmem:[#allocation9 + $0x8c8] sm:$0xff]
    %v424 = vld [vmem:[#allocation9 + $0x8d0] sm:$0xff]
    %v425 = vld [vmem:[#allocation9 + $0x8d8] sm:$0xff]
    %v426 = vld [vmem:[#allocation9 + $0x8e0] sm:$0xff]
    %v427 = vld [vmem:[#allocation9 + $0x8e8] sm:$0xff]
    %v428 = vld [vmem:[#allocation9 + $0x8f0] sm:$0xff]
    %v429 = vld [vmem:[#allocation9 + $0x8f8] sm:$0xff]
    %v430 = vld [vmem:[#allocation9 + $0x900] sm:$0xff]
    %v431 = vld [vmem:[#allocation9 + $0x908] sm:$0xff]
    %v432 = vld [vmem:[#allocation9 + $0x910] sm:$0xff]
    %v433 = vld [vmem:[#allocation9 + $0x918] sm:$0xff]
    %v434 = vld [vmem:[#allocation9 + $0x920] sm:$0xff]
    %v435 = vld [vmem:[#allocation9 + $0x928] sm:$0xff]
    %v436 = vld [vmem:[#allocation9 + $0x930] sm:$0xff]
    %v437 = vld [vmem:[#allocation9 + $0x938] sm:$0xff]
    %v438 = vld [vmem:[#allocation9 + $0x940] sm:$0xff]
    %v439 = vld [vmem:[#allocation9 + $0x948] sm:$0xff]
    %v440 = vld [vmem:[#allocation9 + $0x950] sm:$0xff]
    %v441 = vld [vmem:[#allocation9 + $0x958] sm:$0xff]
    %v442 = vld [vmem:[#allocation9 + $0x960] sm:$0xff]
    %v443 = vld [vmem:[#allocation9 + $0x968] sm:$0xff]
    %v444 = vld [vmem:[#allocation9 + $0x970] sm:$0xff]
    %v445 = vld [vmem:[#allocation9 + $0x978] sm:$0xff]
    %v446 = vld [vmem:[#allocation9 + $0x980] sm:$0xff]
    %v447 = vld [vmem:[#allocation9 + $0x988] sm:$0xff]
    %v448 = vld [vmem:[#allocation9 + $0x990] sm:$0xff]
    %v449 = vld [vmem:[#allocation9 + $0x998] sm:$0xff]
    %v450 = vld [vmem:[#allocation9 + $0x9a0] sm:$0xff]
    %v451 = vld [vmem:[#allocation9 + $0x9a8] sm:$0xff]
    %v452 = vld [vmem:[#allocation9 + $0x9b0] sm:$0xff]
    %v453 = vld [vmem:[#allocation9 + $0x9b8] sm:$0xff]
    %v454 = vld [vmem:[#allocation9 + $0x9c0] sm:$0xff]
    %v455 = vld [vmem:[#allocation9 + $0x9c8] sm:$0xff]
    %v456 = vld [vmem:[#allocation9 + $0x9d0] sm:$0xff]
    %v457 = vld [vmem:[#allocation9 + $0x9d8] sm:$0xff]
    %v458 = vld [vmem:[#allocation9 + $0x9e0] sm:$0xff]
    %v459 = vld [vmem:[#allocation9 + $0x9e8] sm:$0xff]
    %v460 = vld [vmem:[#allocation9 + $0x9f0] sm:$0xff]
    %v461 = vld [vmem:[#allocation9 + $0x9f8] sm:$0xff]
    %v462 = vld [vmem:[#allocation9 + $0xa00] sm:$0xff]
    %v463 = vld [vmem:[#allocation9 + $0xa08] sm:$0xff]
    %v464 = vld [vmem:[#allocation9 + $0xa10] sm:$0xff]
    %v465 = vld [vmem:[#allocation9 + $0xa18] sm:$0xff]
    %v466 = vld [vmem:[#allocation9 + $0xa20] sm:$0xff]
    %v467 = vld [vmem:[#allocation9 + $0xa28] sm:$0xff]
    %v468 = vld [vmem:[#allocation9 + $0xa30] sm:$0xff]
    %v469 = vld [vmem:[#allocation9 + $0xa38] sm:$0xff]
    %v470 = vld [vmem:[#allocation9 + $0xa40] sm:$0xff]
    %v471 = vld [vmem:[#allocation9 + $0xa48] sm:$0xff]
    %v472 = vld [vmem:[#allocation9 + $0xa50] sm:$0xff]
    %v473 = vld [vmem:[#allocation9 + $0xa58] sm:$0xff]
    %v474 = vld [vmem:[#allocation9 + $0xa60] sm:$0xff]
    %v475 = vld [vmem:[#allocation9 + $0xa68] sm:$0xff]
    %v476 = vld [vmem:[#allocation9 + $0xa70] sm:$0xff]
    %v477 = vld [vmem:[#allocation9 + $0xa78] sm:$0xff]
    %v478 = vld [vmem:[#allocation9 + $0xa80] sm:$0xff]
    %v479 = vld [vmem:[#allocation9 + $0xa88] sm:$0xff]
    %v480 = vld [vmem:[#allocation9 + $0xa90] sm:$0xff]
    %v481 = vld [vmem:[#allocation9 + $0xa98] sm:$0xff]
    %v482 = vld [vmem:[#allocation9 + $0xaa0] sm:$0xff]
    %v483 = vld [vmem:[#allocation9 + $0xaa8] sm:$0xff]
    %v484 = vld [vmem:[#allocation9 + $0xab0] sm:$0xff]
    %v485 = vld [vmem:[#allocation9 + $0xab8] sm:$0xff]
    %v486 = vld [vmem:[#allocation9 + $0xac0] sm:$0xff]
    %v487 = vld [vmem:[#allocation9 + $0xac8] sm:$0xff]
    %v488 = vld [vmem:[#allocation9 + $0xad0] sm:$0xff]
    %v489 = vld [vmem:[#allocation9 + $0xad8] sm:$0xff]
    %v490 = vld [vmem:[#allocation9 + $0xae0] sm:$0xff]
    %v491 = vld [vmem:[#allocation9 + $0xae8] sm:$0xff]
    %v492 = vld [vmem:[#allocation9 + $0xaf0] sm:$0xff]
    %v493 = vld [vmem:[#allocation9 + $0xaf8] sm:$0xff]
    %v494 = vld [vmem:[#allocation9 + $0xb00] sm:$0xff]
    %v495 = vld [vmem:[#allocation9 + $0xb08] sm:$0xff]
    %v496 = vld [vmem:[#allocation9 + $0xb10] sm:$0xff]
    %v497 = vld [vmem:[#allocation9 + $0xb18] sm:$0xff]
    %v498 = vld [vmem:[#allocation9 + $0xb20] sm:$0xff]
    %v499 = vld [vmem:[#allocation9 + $0xb28] sm:$0xff]
    %v500 = vld [vmem:[#allocation9 + $0xb30] sm:$0xff]
    %v501 = vld [vmem:[#allocation9 + $0xb38] sm:$0xff]
    %v502 = vld [vmem:[#allocation9 + $0xb40] sm:$0xff]
    %v503 = vld [vmem:[#allocation9 + $0xb48] sm:$0xff]
    %v504 = vld [vmem:[#allocation9 + $0xb50] sm:$0xff]
    %v505 = vld [vmem:[#allocation9 + $0xb58] sm:$0xff]
    %v506 = vld [vmem:[#allocation9 + $0xb60] sm:$0xff]
    %v507 = vld [vmem:[#allocation9 + $0xb68] sm:$0xff]
    %v508 = vld [vmem:[#allocation9 + $0xb70] sm:$0xff]
    %v509 = vld [vmem:[#allocation9 + $0xb78] sm:$0xff]
    %v510 = vld [vmem:[#allocation9 + $0xb80] sm:$0xff]
    %v511 = vld [vmem:[#allocation9 + $0xb88] sm:$0xff]
    %v512 = vld [vmem:[#allocation9 + $0xb90] sm:$0xff]
    %v513 = vld [vmem:[#allocation9 + $0xb98] sm:$0xff]
    %v514 = vld [vmem:[#allocation9 + $0xba0] sm:$0xff]
    %v515 = vld [vmem:[#allocation9 + $0xba8] sm:$0xff]
    %v516 = vld [vmem:[#allocation9 + $0xbb0] sm:$0xff]
    %v517 = vld [vmem:[#allocation9 + $0xbb8] sm:$0xff]
    %v518 = vld [vmem:[#allocation9 + $0xbc0] sm:$0xff]
    %v519 = vld [vmem:[#allocation9 + $0xbc8] sm:$0xff]
    %v520 = vld [vmem:[#allocation9 + $0xbd0] sm:$0xff]
    %v521 = vld [vmem:[#allocation9 + $0xbd8] sm:$0xff]
    %v522 = vld [vmem:[#allocation9 + $0xbe0] sm:$0xff]
    %v523 = vld [vmem:[#allocation9 + $0xbe8] sm:$0xff]
    %v524 = vld [vmem:[#allocation9 + $0xbf0] sm:$0xff]
    %v525 = vld [vmem:[#allocation9 + $0xbf8] sm:$0xff]
    %v526 = vld [vmem:[#allocation9 + $0xc00] sm:$0xff]
    %v527 = vld [vmem:[#allocation9 + $0xc08] sm:$0xff]
    %v528 = vld [vmem:[#allocation9 + $0xc10] sm:$0xff]
    %v529 = vld [vmem:[#allocation9 + $0xc18] sm:$0xff]
    %v530 = vld [vmem:[#allocation9 + $0xc20] sm:$0xff]
    %v531 = vld [vmem:[#allocation9 + $0xc28] sm:$0xff]
    %v532 = vld [vmem:[#allocation9 + $0xc30] sm:$0xff]
    %v533 = vld [vmem:[#allocation9 + $0xc38] sm:$0xff]
    %v534 = vld [vmem:[#allocation9 + $0xc40] sm:$0xff]
    %v535 = vld [vmem:[#allocation9 + $0xc48] sm:$0xff]
    %v536 = vld [vmem:[#allocation9 + $0xc50] sm:$0xff]
    %v537 = vld [vmem:[#allocation9 + $0xc58] sm:$0xff]
    %v538 = vld [vmem:[#allocation9 + $0xc60] sm:$0xff]
    %v539 = vld [vmem:[#allocation9 + $0xc68] sm:$0xff]
    %v540 = vld [vmem:[#allocation9 + $0xc70] sm:$0xff]
    %v541 = vld [vmem:[#allocation9 + $0xc78] sm:$0xff]
    %v542 = vld [vmem:[#allocation9 + $0xc80] sm:$0xff]
    %v543 = vld [vmem:[#allocation9 + $0xc88] sm:$0xff]
    %v544 = vld [vmem:[#allocation9 + $0xc90] sm:$0xff]
    %v545 = vld [vmem:[#allocation9 + $0xc98] sm:$0xff]
    %v546 = vld [vmem:[#allocation9 + $0xca0] sm:$0xff]
    %v547 = vld [vmem:[#allocation9 + $0xca8] sm:$0xff]
    %v548 = vld [vmem:[#allocation9 + $0xcb0] sm:$0xff]
    %v549 = vld [vmem:[#allocation9 + $0xcb8] sm:$0xff]
    %v550 = vld [vmem:[#allocation9 + $0xcc0] sm:$0xff]
    %v551 = vld [vmem:[#allocation9 + $0xcc8] sm:$0xff]
    %v552 = vld [vmem:[#allocation9 + $0xcd0] sm:$0xff]
    %v553 = vld [vmem:[#allocation9 + $0xcd8] sm:$0xff]
    %v554 = vld [vmem:[#allocation9 + $0xce0] sm:$0xff]
    %v555 = vld [vmem:[#allocation9 + $0xce8] sm:$0xff]
    %v556 = vld [vmem:[#allocation9 + $0xcf0] sm:$0xff]
    %v557 = vld [vmem:[#allocation9 + $0xcf8] sm:$0xff]
    %v558 = vld [vmem:[#allocation9 + $0xd00] sm:$0xff]
    %v559 = vld [vmem:[#allocation9 + $0xd08] sm:$0xff]
    %v560 = vld [vmem:[#allocation9 + $0xd10] sm:$0xff]
    %v561 = vld [vmem:[#allocation9 + $0xd18] sm:$0xff]
    %v562 = vld [vmem:[#allocation9 + $0xd20] sm:$0xff]
    %v563 = vld [vmem:[#allocation9 + $0xd28] sm:$0xff]
    %v564 = vld [vmem:[#allocation9 + $0xd30] sm:$0xff]
    %v565 = vld [vmem:[#allocation9 + $0xd38] sm:$0xff]
    %v566 = vld [vmem:[#allocation9 + $0xd40] sm:$0xff]
    %v567 = vld [vmem:[#allocation9 + $0xd48] sm:$0xff]
    %v568 = vld [vmem:[#allocation9 + $0xd50] sm:$0xff]
    %v569 = vld [vmem:[#allocation9 + $0xd58] sm:$0xff]
    %v570 = vld [vmem:[#allocation9 + $0xd60] sm:$0xff]
    %v571 = vld [vmem:[#allocation9 + $0xd68] sm:$0xff]
    %v572 = vld [vmem:[#allocation9 + $0xd70] sm:$0xff]
    %v573 = vld [vmem:[#allocation9 + $0xd78] sm:$0xff]
    %v574 = vld [vmem:[#allocation9 + $0xd80] sm:$0xff]
    %v575 = vld [vmem:[#allocation9 + $0xd88] sm:$0xff]
    %v576 = vld [vmem:[#allocation9 + $0xd90] sm:$0xff]
    %v577 = vld [vmem:[#allocation9 + $0xd98] sm:$0xff]
    %v578 = vld [vmem:[#allocation9 + $0xda0] sm:$0xff]
    %v579 = vld [vmem:[#allocation9 + $0xda8] sm:$0xff]
    %v580 = vld [vmem:[#allocation9 + $0xdb0] sm:$0xff]
    %v581 = vld [vmem:[#allocation9 + $0xdb8] sm:$0xff]
    %v582 = vld [vmem:[#allocation9 + $0xdc0] sm:$0xff]
    %v583 = vld [vmem:[#allocation9 + $0xdc8] sm:$0xff]
    %v584 = vld [vmem:[#allocation9 + $0xdd0] sm:$0xff]
    %v585 = vld [vmem:[#allocation9 + $0xdd8] sm:$0xff]
    %v586 = vld [vmem:[#allocation9 + $0xde0] sm:$0xff]
    %v587 = vld [vmem:[#allocation9 + $0xde8] sm:$0xff]
    %v588 = vld [vmem:[#allocation9 + $0xdf0] sm:$0xff]
    %v589 = vld [vmem:[#allocation9 + $0xdf8] sm:$0xff]
    %v590 = vld [vmem:[#allocation9 + $0xe00] sm:$0xff]
    %v591 = vld [vmem:[#allocation9 + $0xe08] sm:$0xff]
    %v592 = vld [vmem:[#allocation9 + $0xe10] sm:$0xff]
    %v593 = vld [vmem:[#allocation9 + $0xe18] sm:$0xff]
    %v594 = vld [vmem:[#allocation9 + $0xe20] sm:$0xff]
    %v595 = vld [vmem:[#allocation9 + $0xe28] sm:$0xff]
    %v596 = vld [vmem:[#allocation9 + $0xe30] sm:$0xff]
    %v597 = vld [vmem:[#allocation9 + $0xe38] sm:$0xff]
    %v598 = vld [vmem:[#allocation9 + $0xe40] sm:$0xff]
    %v599 = vld [vmem:[#allocation9 + $0xe48] sm:$0xff]
    %v600 = vld [vmem:[#allocation9 + $0xe50] sm:$0xff]
    %v601 = vld [vmem:[#allocation9 + $0xe58] sm:$0xff]
    %v602 = vld [vmem:[#allocation9 + $0xe60] sm:$0xff]
    %v603 = vld [vmem:[#allocation9 + $0xe68] sm:$0xff]
    %v604 = vld [vmem:[#allocation9 + $0xe70] sm:$0xff]
    %v605 = vld [vmem:[#allocation9 + $0xe78] sm:$0xff]
    %v606 = vld [vmem:[#allocation9 + $0xe80] sm:$0xff]
    %v607 = vld [vmem:[#allocation9 + $0xe88] sm:$0xff]
    %v608 = vld [vmem:[#allocation9 + $0xe90] sm:$0xff]
    %v609 = vld [vmem:[#allocation9 + $0xe98] sm:$0xff]
    %v610 = vld [vmem:[#allocation9 + $0xea0] sm:$0xff]
    %v611 = vld [vmem:[#allocation9 + $0xea8] sm:$0xff]
    %v612 = vld [vmem:[#allocation9 + $0xeb0] sm:$0xff]
    %v613 = vld [vmem:[#allocation9 + $0xeb8] sm:$0xff]
    %v614 = vld [vmem:[#allocation9 + $0xec0] sm:$0xff]
    %v615 = vld [vmem:[#allocation9 + $0xec8] sm:$0xff]
    %v616 = vld [vmem:[#allocation9 + $0xed0] sm:$0xff]
    %v617 = vld [vmem:[#allocation9 + $0xed8] sm:$0xff]
    %v618 = vld [vmem:[#allocation9 + $0xee0] sm:$0xff]
    %v619 = vld [vmem:[#allocation9 + $0xee8] sm:$0xff]
    %v620 = vld [vmem:[#allocation9 + $0xef0] sm:$0xff]
    %v621 = vld [vmem:[#allocation9 + $0xef8] sm:$0xff]
    %v622 = vld [vmem:[#allocation9 + $0xf00] sm:$0xff]
    %v623 = vld [vmem:[#allocation9 + $0xf08] sm:$0xff]
    %v624 = vld [vmem:[#allocation9 + $0xf10] sm:$0xff]
    %v625 = vld [vmem:[#allocation9 + $0xf18] sm:$0xff]
    %v626 = vld [vmem:[#allocation9 + $0xf20] sm:$0xff]
    %v627 = vld [vmem:[#allocation9 + $0xf28] sm:$0xff]
    %v628 = vld [vmem:[#allocation9 + $0xf30] sm:$0xff]
    %v629 = vld [vmem:[#allocation9 + $0xf38] sm:$0xff]
    %v630 = vld [vmem:[#allocation9 + $0xf40] sm:$0xff]
    %v631 = vld [vmem:[#allocation9 + $0xf48] sm:$0xff]
    %v632 = vld [vmem:[#allocation9 + $0xf50] sm:$0xff]
    %v633 = vld [vmem:[#allocation9 + $0xf58] sm:$0xff]
    %v634 = vld [vmem:[#allocation9 + $0xf60] sm:$0xff]
    %v635 = vld [vmem:[#allocation9 + $0xf68] sm:$0xff]
    %v636 = vld [vmem:[#allocation9 + $0xf70] sm:$0xff]
    %v637 = vld [vmem:[#allocation9 + $0xf78] sm:$0xff]
    %v638 = vld [vmem:[#allocation9 + $0xf80] sm:$0xff]
    %v639 = vld [vmem:[#allocation9 + $0xf88] sm:$0xff]
    %v640 = vld [vmem:[#allocation9 + $0xf90] sm:$0xff]
    %v641 = vld [vmem:[#allocation9 + $0xf98] sm:$0xff]
    %v642 = vld [vmem:[#allocation9 + $0xfa0] sm:$0xff]
    %v643 = vld [vmem:[#allocation9 + $0xfa8] sm:$0xff]
    %v644 = vld [vmem:[#allocation9 + $0xfb0] sm:$0xff]
    %v645 = vld [vmem:[#allocation9 + $0xfb8] sm:$0xff]
    %v646 = vld [vmem:[#allocation9 + $0xfc0] sm:$0xff]
    %v647 = vld [vmem:[#allocation9 + $0xfc8] sm:$0xff]
    %v648 = vld [vmem:[#allocation9 + $0xfd0] sm:$0xff]
    %v649 = vld [vmem:[#allocation9 + $0xfd8] sm:$0xff]
    %v650 = vld [vmem:[#allocation9 + $0xfe0] sm:$0xff]
    %v651 = vld [vmem:[#allocation9 + $0xfe8] sm:$0xff]
    %v652 = vld [vmem:[#allocation9 + $0xff0] sm:$0xff]
    %v653 = vld [vmem:[#allocation9 + $0xff8] sm:$0xff]
    %v654 = vld [vmem:[#allocation9 + $0x1000] sm:$0xff]
    %v655 = vld [vmem:[#allocation9 + $0x1008] sm:$0xff]
    %v656 = vld [vmem:[#allocation9 + $0x1010] sm:$0xff]
    %v657 = vld [vmem:[#allocation9 + $0x1018] sm:$0xff]
    %v658 = vld [vmem:[#allocation9 + $0x1020] sm:$0xff]
    %v659 = vld [vmem:[#allocation9 + $0x1028] sm:$0xff]
    %v660 = vld [vmem:[#allocation9 + $0x1030] sm:$0xff]
    %v661 = vld [vmem:[#allocation9 + $0x1038] sm:$0xff]
    %v662 = vld [vmem:[#allocation9 + $0x1040] sm:$0xff]
    %v663 = vld [vmem:[#allocation9 + $0x1048] sm:$0xff]
    %v664 = vld [vmem:[#allocation9 + $0x1050] sm:$0xff]
    %v665 = vld [vmem:[#allocation9 + $0x1058] sm:$0xff]
    %v666 = vld [vmem:[#allocation9 + $0x1060] sm:$0xff]
    %v667 = vld [vmem:[#allocation9 + $0x1068] sm:$0xff]
    %v668 = vld [vmem:[#allocation9 + $0x1070] sm:$0xff]
    %v669 = vld [vmem:[#allocation9 + $0x1078] sm:$0xff]
    %v670 = vld [vmem:[#allocation9 + $0x1080] sm:$0xff]
    %v671 = vld [vmem:[#allocation9 + $0x1088] sm:$0xff]
    %v672 = vld [vmem:[#allocation9 + $0x1090] sm:$0xff]
    %v673 = vld [vmem:[#allocation9 + $0x1098] sm:$0xff]
    %v674 = vld [vmem:[#allocation9 + $0x10a0] sm:$0xff]
    %v675 = vld [vmem:[#allocation9 + $0x10a8] sm:$0xff]
    %v676 = vld [vmem:[#allocation9 + $0x10b0] sm:$0xff]
    %v677 = vld [vmem:[#allocation9 + $0x10b8] sm:$0xff]
    %v678 = vld [vmem:[#allocation9 + $0x10c0] sm:$0xff]
    %v679 = vld [vmem:[#allocation9 + $0x10c8] sm:$0xff]
    %v680 = vld [vmem:[#allocation9 + $0x10d0] sm:$0xff]
    %v681 = vld [vmem:[#allocation9 + $0x10d8] sm:$0xff]
    %v682 = vld [vmem:[#allocation9 + $0x10e0] sm:$0xff]
    %v683 = vld [vmem:[#allocation9 + $0x10e8] sm:$0xff]
    %v684 = vld [vmem:[#allocation9 + $0x10f0] sm:$0xff]
    %v685 = vld [vmem:[#allocation9 + $0x10f8] sm:$0xff]
    %v686 = vld [vmem:[#allocation9 + $0x1100] sm:$0xff]
    %v687 = vld [vmem:[#allocation9 + $0x1108] sm:$0xff]
    %v688 = vld [vmem:[#allocation9 + $0x1110] sm:$0xff]
    %v689 = vld [vmem:[#allocation9 + $0x1118] sm:$0xff]
    %v690 = vld [vmem:[#allocation9 + $0x1120] sm:$0xff]
    %v691 = vld [vmem:[#allocation9 + $0x1128] sm:$0xff]
    %v692 = vld [vmem:[#allocation9 + $0x1130] sm:$0xff]
    %v693 = vld [vmem:[#allocation9 + $0x1138] sm:$0xff]
    %v694 = vld [vmem:[#allocation9 + $0x1140] sm:$0xff]
    %v695 = vld [vmem:[#allocation9 + $0x1148] sm:$0xff]
    %v696 = vld [vmem:[#allocation9 + $0x1150] sm:$0xff]
    %v697 = vld [vmem:[#allocation9 + $0x1158] sm:$0xff]
    %v698 = vld [vmem:[#allocation9 + $0x1160] sm:$0xff]
    %v699 = vld [vmem:[#allocation9 + $0x1168] sm:$0xff]
    %v700 = vld [vmem:[#allocation9 + $0x1170] sm:$0xff]
    %v701 = vld [vmem:[#allocation9 + $0x1178] sm:$0xff]
    %v702 = vld [vmem:[#allocation9 + $0x1180] sm:$0xff]
    %v703 = vld [vmem:[#allocation9 + $0x1188] sm:$0xff]
    %v704 = vld [vmem:[#allocation9 + $0x1190] sm:$0xff]
    %v705 = vld [vmem:[#allocation9 + $0x1198] sm:$0xff]
    %v706 = vld [vmem:[#allocation9 + $0x11a0] sm:$0xff]
    %v707 = vld [vmem:[#allocation9 + $0x11a8] sm:$0xff]
    %v708 = vld [vmem:[#allocation9 + $0x11b0] sm:$0xff]
    %v709 = vld [vmem:[#allocation9 + $0x11b8] sm:$0xff]
    %v710 = vld [vmem:[#allocation9 + $0x11c0] sm:$0xff]
    %v711 = vld [vmem:[#allocation9 + $0x11c8] sm:$0xff]
    %v712 = vld [vmem:[#allocation9 + $0x11d0] sm:$0xff]
    %v713 = vld [vmem:[#allocation9 + $0x11d8] sm:$0xff]
    %v714 = vld [vmem:[#allocation9 + $0x11e0] sm:$0xff]
    %v715 = vld [vmem:[#allocation9 + $0x11e8] sm:$0xff]
    %v716 = vld [vmem:[#allocation9 + $0x11f0] sm:$0xff]
    %v717 = vld [vmem:[#allocation9 + $0x11f8] sm:$0xff]
    %v718 = vld [vmem:[#allocation9 + $0x1200] sm:$0xff]
    %v719 = vld [vmem:[#allocation9 + $0x1208] sm:$0xff]
    %v720 = vld [vmem:[#allocation9 + $0x1210] sm:$0xff]
    %v721 = vld [vmem:[#allocation9 + $0x1218] sm:$0xff]
    %v722 = vld [vmem:[#allocation9 + $0x1220] sm:$0xff]
    %v723 = vld [vmem:[#allocation9 + $0x1228] sm:$0xff]
    %v724 = vld [vmem:[#allocation9 + $0x1230] sm:$0xff]
    %v725 = vld [vmem:[#allocation9 + $0x1238] sm:$0xff]
    %v726 = vld [vmem:[#allocation9 + $0x1240] sm:$0xff]
    %v727 = vld [vmem:[#allocation9 + $0x1248] sm:$0xff]
    %v728 = vld [vmem:[#allocation9 + $0x1250] sm:$0xff]
    %v729 = vld [vmem:[#allocation9 + $0x1258] sm:$0xff]
    %v730 = vld [vmem:[#allocation9 + $0x1260] sm:$0xff]
    %v731 = vld [vmem:[#allocation9 + $0x1268] sm:$0xff]
    %v732 = vld [vmem:[#allocation9 + $0x1270] sm:$0xff]
    %v733 = vld [vmem:[#allocation9 + $0x1278] sm:$0xff]
    %v734 = vld [vmem:[#allocation9 + $0x1280] sm:$0xff]
    %v735 = vld [vmem:[#allocation9 + $0x1288] sm:$0xff]
    %v736 = vld [vmem:[#allocation9 + $0x1290] sm:$0xff]
    %v737 = vld [vmem:[#allocation9 + $0x1298] sm:$0xff]
    %v738 = vld [vmem:[#allocation9 + $0x12a0] sm:$0xff]
    %v739 = vld [vmem:[#allocation9 + $0x12a8] sm:$0xff]
    %v740 = vld [vmem:[#allocation9 + $0x12b0] sm:$0xff]
    %v741 = vld [vmem:[#allocation9 + $0x12b8] sm:$0xff]
    %v742 = vld [vmem:[#allocation9 + $0x12c0] sm:$0xff]
    %v743 = vld [vmem:[#allocation9 + $0x12c8] sm:$0xff]
    %v744 = vld [vmem:[#allocation9 + $0x12d0] sm:$0xff]
    %v745 = vld [vmem:[#allocation9 + $0x12d8] sm:$0xff]
    %v746 = vld [vmem:[#allocation9 + $0x12e0] sm:$0xff]
    %v747 = vld [vmem:[#allocation9 + $0x12e8] sm:$0xff]
    %v748 = vld [vmem:[#allocation9 + $0x12f0] sm:$0xff]
    %v749 = vld [vmem:[#allocation9 + $0x12f8] sm:$0xff]
    %v750 = vld [vmem:[#allocation9 + $0x1300] sm:$0xff]
    %v751 = vld [vmem:[#allocation9 + $0x1308] sm:$0xff]
    %v752 = vld [vmem:[#allocation9 + $0x1310] sm:$0xff]
    %v753 = vld [vmem:[#allocation9 + $0x1318] sm:$0xff]
    %v754 = vld [vmem:[#allocation9 + $0x1320] sm:$0xff]
    %v755 = vld [vmem:[#allocation9 + $0x1328] sm:$0xff]
    %v756 = vld [vmem:[#allocation9 + $0x1330] sm:$0xff]
    %v757 = vld [vmem:[#allocation9 + $0x1338] sm:$0xff]
    %v758 = vld [vmem:[#allocation9 + $0x1340] sm:$0xff]
    %v759 = vld [vmem:[#allocation9 + $0x1348] sm:$0xff]
    %v760 = vld [vmem:[#allocation9 + $0x1350] sm:$0xff]
    %v761 = vld [vmem:[#allocation9 + $0x1358] sm:$0xff]
    %v762 = vld [vmem:[#allocation9 + $0x1360] sm:$0xff]
    %v763 = vld [vmem:[#allocation9 + $0x1368] sm:$0xff]
    %v764 = vld [vmem:[#allocation9 + $0x1370] sm:$0xff]
    %v765 = vld [vmem:[#allocation9 + $0x1378] sm:$0xff]
    %v766 = vld [vmem:[#allocation9 + $0x1380] sm:$0xff]
    %v767 = vld [vmem:[#allocation9 + $0x1388] sm:$0xff]
    %v768 = vld [vmem:[#allocation9 + $0x1390] sm:$0xff]
    %v769 = vld [vmem:[#allocation9 + $0x1398] sm:$0xff]
    %v770 = vld [vmem:[#allocation9 + $0x13a0] sm:$0xff]
    %v771 = vld [vmem:[#allocation9 + $0x13a8] sm:$0xff]
    %v772 = vld [vmem:[#allocation9 + $0x13b0] sm:$0xff]
    %v773 = vld [vmem:[#allocation9 + $0x13b8] sm:$0xff]
    %v774 = vld [vmem:[#allocation9 + $0x13c0] sm:$0xff]
    %v775 = vld [vmem:[#allocation9 + $0x13c8] sm:$0xff]
    %v776 = vld [vmem:[#allocation9 + $0x13d0] sm:$0xff]
    %v777 = vld [vmem:[#allocation9 + $0x13d8] sm:$0xff]
    %v778 = vld [vmem:[#allocation9 + $0x13e0] sm:$0xff]
    %v779 = vld [vmem:[#allocation9 + $0x13e8] sm:$0xff]
    %v780 = vld [vmem:[#allocation9 + $0x13f0] sm:$0xff]
    %v781 = vld [vmem:[#allocation9 + $0x13f8] sm:$0xff]
    %v782 = vld [vmem:[#allocation9 + $0x1400] sm:$0xff]
    %v783 = vld [vmem:[#allocation9 + $0x1408] sm:$0xff]
    %v784 = vld [vmem:[#allocation9 + $0x1410] sm:$0xff]
    %v785 = vld [vmem:[#allocation9 + $0x1418] sm:$0xff]
    %v786 = vld [vmem:[#allocation9 + $0x1420] sm:$0xff]
    %v787 = vld [vmem:[#allocation9 + $0x1428] sm:$0xff]
    %v788 = vld [vmem:[#allocation9 + $0x1430] sm:$0xff]
    %v789 = vld [vmem:[#allocation9 + $0x1438] sm:$0xff]
    %v790 = vld [vmem:[#allocation9 + $0x1440] sm:$0xff]
    %v791 = vld [vmem:[#allocation9 + $0x1448] sm:$0xff]
    %v792 = vld [vmem:[#allocation9 + $0x1450] sm:$0xff]
    %v793 = vld [vmem:[#allocation9 + $0x1458] sm:$0xff]
    %v794 = vld [vmem:[#allocation9 + $0x1460] sm:$0xff]
    %v795 = vld [vmem:[#allocation9 + $0x1468] sm:$0xff]
    %v796 = vld [vmem:[#allocation9 + $0x1470] sm:$0xff]
    %v797 = vld [vmem:[#allocation9 + $0x1478] sm:$0xff]
    %v798 = vld [vmem:[#allocation9 + $0x1480] sm:$0xff]
    %v799 = vld [vmem:[#allocation9 + $0x1488] sm:$0xff]
    %v800 = vld [vmem:[#allocation9 + $0x1490] sm:$0xff]
    %v801 = vld [vmem:[#allocation9 + $0x1498] sm:$0xff]
    %v802 = vld [vmem:[#allocation9 + $0x14a0] sm:$0xff]
    %v803 = vld [vmem:[#allocation9 + $0x14a8] sm:$0xff]
    %v804 = vld [vmem:[#allocation9 + $0x14b0] sm:$0xff]
    %v805 = vld [vmem:[#allocation9 + $0x14b8] sm:$0xff]
    %v806 = vld [vmem:[#allocation9 + $0x14c0] sm:$0xff]
    %v807 = vld [vmem:[#allocation9 + $0x14c8] sm:$0xff]
    %v808 = vld [vmem:[#allocation9 + $0x14d0] sm:$0xff]
    %v809 = vld [vmem:[#allocation9 + $0x14d8] sm:$0xff]
    %v810 = vld [vmem:[#allocation9 + $0x14e0] sm:$0xff]
    %v811 = vld [vmem:[#allocation9 + $0x14e8] sm:$0xff]
    %v812 = vld [vmem:[#allocation9 + $0x14f0] sm:$0xff]
    %v813 = vld [vmem:[#allocation9 + $0x14f8] sm:$0xff]
    %v814 = vld [vmem:[#allocation9 + $0x1500] sm:$0xff]
    %v815 = vld [vmem:[#allocation9 + $0x1508] sm:$0xff]
    %v816 = vld [vmem:[#allocation9 + $0x1510] sm:$0xff]
    %v817 = vld [vmem:[#allocation9 + $0x1518] sm:$0xff]
    %v818 = vld [vmem:[#allocation9 + $0x1520] sm:$0xff]
    %v819 = vld [vmem:[#allocation9 + $0x1528] sm:$0xff]
    %v820 = vld [vmem:[#allocation9 + $0x1530] sm:$0xff]
    %v821 = vld [vmem:[#allocation9 + $0x1538] sm:$0xff]
    %v822 = vld [vmem:[#allocation9 + $0x1540] sm:$0xff]
    %v823 = vld [vmem:[#allocation9 + $0x1548] sm:$0xff]
    %v824 = vld [vmem:[#allocation9 + $0x1550] sm:$0xff]
    %v825 = vld [vmem:[#allocation9 + $0x1558] sm:$0xff]
    %v826 = vld [vmem:[#allocation9 + $0x1560] sm:$0xff]
    %v827 = vld [vmem:[#allocation9 + $0x1568] sm:$0xff]
    %v828 = vld [vmem:[#allocation9 + $0x1570] sm:$0xff]
    %v829 = vld [vmem:[#allocation9 + $0x1578] sm:$0xff]
    %v830 = vld [vmem:[#allocation9 + $0x1580] sm:$0xff]
    %v831 = vld [vmem:[#allocation9 + $0x1588] sm:$0xff]
    %v832 = vld [vmem:[#allocation9 + $0x1590] sm:$0xff]
    %v833 = vld [vmem:[#allocation9 + $0x1598] sm:$0xff]
    %v834 = vld [vmem:[#allocation9 + $0x15a0] sm:$0xff]
    %v835 = vld [vmem:[#allocation9 + $0x15a8] sm:$0xff]
    %v836 = vld [vmem:[#allocation9 + $0x15b0] sm:$0xff]
    %v837 = vld [vmem:[#allocation9 + $0x15b8] sm:$0xff]
    %v838 = vld [vmem:[#allocation9 + $0x15c0] sm:$0xff]
    %v839 = vld [vmem:[#allocation9 + $0x15c8] sm:$0xff]
    %v840 = vld [vmem:[#allocation9 + $0x15d0] sm:$0xff]
    %v841 = vld [vmem:[#allocation9 + $0x15d8] sm:$0xff]
    %v842 = vld [vmem:[#allocation9 + $0x15e0] sm:$0xff]
    %v843 = vld [vmem:[#allocation9 + $0x15e8] sm:$0xff]
    %v844 = vld [vmem:[#allocation9 + $0x15f0] sm:$0xff]
    %v845 = vld [vmem:[#allocation9 + $0x15f8] sm:$0xff]
    %v846 = vld [vmem:[#allocation9 + $0x1600] sm:$0xff]
    %v847 = vld [vmem:[#allocation9 + $0x1608] sm:$0xff]
    %v848 = vld [vmem:[#allocation9 + $0x1610] sm:$0xff]
    %v849 = vld [vmem:[#allocation9 + $0x1618] sm:$0xff]
    %v850 = vld [vmem:[#allocation9 + $0x1620] sm:$0xff]
    %v851 = vld [vmem:[#allocation9 + $0x1628] sm:$0xff]
    %v852 = vld [vmem:[#allocation9 + $0x1630] sm:$0xff]
    %v853 = vld [vmem:[#allocation9 + $0x1638] sm:$0xff]
    %v854 = vld [vmem:[#allocation9 + $0x1640] sm:$0xff]
    %v855 = vld [vmem:[#allocation9 + $0x1648] sm:$0xff]
    %v856 = vld [vmem:[#allocation9 + $0x1650] sm:$0xff]
    %v857 = vld [vmem:[#allocation9 + $0x1658] sm:$0xff]
    %v858 = vld [vmem:[#allocation9 + $0x1660] sm:$0xff]
    %v859 = vld [vmem:[#allocation9 + $0x1668] sm:$0xff]
    %v860 = vld [vmem:[#allocation9 + $0x1670] sm:$0xff]
    %v861 = vld [vmem:[#allocation9 + $0x1678] sm:$0xff]
    %v862 = vld [vmem:[#allocation9 + $0x1680] sm:$0xff]
    %v863 = vld [vmem:[#allocation9 + $0x1688] sm:$0xff]
    %v864 = vld [vmem:[#allocation9 + $0x1690] sm:$0xff]
    %v865 = vld [vmem:[#allocation9 + $0x1698] sm:$0xff]
    %v866 = vld [vmem:[#allocation9 + $0x16a0] sm:$0xff]
    %v867 = vld [vmem:[#allocation9 + $0x16a8] sm:$0xff]
    %v868 = vld [vmem:[#allocation9 + $0x16b0] sm:$0xff]
    %v869 = vld [vmem:[#allocation9 + $0x16b8] sm:$0xff]
    %v870 = vld [vmem:[#allocation9 + $0x16c0] sm:$0xff]
    %v871 = vld [vmem:[#allocation9 + $0x16c8] sm:$0xff]
    %v872 = vld [vmem:[#allocation9 + $0x16d0] sm:$0xff]
    %v873 = vld [vmem:[#allocation9 + $0x16d8] sm:$0xff]
    %v874 = vld [vmem:[#allocation9 + $0x16e0] sm:$0xff]
    %v875 = vld [vmem:[#allocation9 + $0x16e8] sm:$0xff]
    %v876 = vld [vmem:[#allocation9 + $0x16f0] sm:$0xff]
    %v877 = vld [vmem:[#allocation9 + $0x16f8] sm:$0xff]
    %v878 = vld [vmem:[#allocation9 + $0x1700] sm:$0xff]
    %v879 = vld [vmem:[#allocation9 + $0x1708] sm:$0xff]
    %v880 = vld [vmem:[#allocation9 + $0x1710] sm:$0xff]
    %v881 = vld [vmem:[#allocation9 + $0x1718] sm:$0xff]
    %v882 = vld [vmem:[#allocation9 + $0x1720] sm:$0xff]
    %v883 = vld [vmem:[#allocation9 + $0x1728] sm:$0xff]
    %v884 = vld [vmem:[#allocation9 + $0x1730] sm:$0xff]
    %v885 = vld [vmem:[#allocation9 + $0x1738] sm:$0xff]
    %v886 = vld [vmem:[#allocation9 + $0x1740] sm:$0xff]
    %v887 = vld [vmem:[#allocation9 + $0x1748] sm:$0xff]
    %v888 = vld [vmem:[#allocation9 + $0x1750] sm:$0xff]
    %v889 = vld [vmem:[#allocation9 + $0x1758] sm:$0xff]
    %v890 = vld [vmem:[#allocation9 + $0x1760] sm:$0xff]
    %v891 = vld [vmem:[#allocation9 + $0x1768] sm:$0xff]
    %v892 = vld [vmem:[#allocation9 + $0x1770] sm:$0xff]
    %v893 = vld [vmem:[#allocation9 + $0x1778] sm:$0xff]
    %v894 = vld [vmem:[#allocation9 + $0x1780] sm:$0xff]
    %v895 = vld [vmem:[#allocation9 + $0x1788] sm:$0xff]
    %v896 = vld [vmem:[#allocation9 + $0x1790] sm:$0xff]
    %v897 = vld [vmem:[#allocation9 + $0x1798] sm:$0xff]
    %v898 = vld [vmem:[#allocation9 + $0x17a0] sm:$0xff]
    %v899 = vld [vmem:[#allocation9 + $0x17a8] sm:$0xff]
    %v900 = vld [vmem:[#allocation9 + $0x17b0] sm:$0xff]
    %v901 = vld [vmem:[#allocation9 + $0x17b8] sm:$0xff]
    %v902 = vld [vmem:[#allocation9 + $0x17c0] sm:$0xff]
    %v903 = vld [vmem:[#allocation9 + $0x17c8] sm:$0xff]
    %v904 = vld [vmem:[#allocation9 + $0x17d0] sm:$0xff]
    %v905 = vld [vmem:[#allocation9 + $0x17d8] sm:$0xff]
    %v906 = vld [vmem:[#allocation9 + $0x17e0] sm:$0xff]
    %v907 = vld [vmem:[#allocation9 + $0x17e8] sm:$0xff]
    %v908 = vld [vmem:[#allocation9 + $0x17f0] sm:$0xff]
    %v909 = vld [vmem:[#allocation9 + $0x17f8] sm:$0xff]
    %v910 = vld [vmem:[#allocation11] sm:$0xff]
    %v912 = vlaneseq
    %v913 = vshrl.u32 %v912, 7
    %v914 = vsub.s32 0, %v913
    %v915 = vrot.slane %v910, %v914
    %v916 = vlaneseq
    %v917 = vshrl.u32 %v916, 7
    %v918 = vsub.s32 1, %v917
    %v919 = vrot.slane %v910, %v918
    %v920 = vlaneseq
    %v921 = vshrl.u32 %v920, 7
    %v922 = vsub.s32 2, %v921
    %v923 = vrot.slane %v910, %v922
    %v924 = vlaneseq
    %v925 = vshrl.u32 %v924, 7
    %v926 = vsub.s32 3, %v925
    %v927 = vrot.slane %v910, %v926
    %v928 = vlaneseq
    %v929 = vshrl.u32 %v928, 7
    %v930 = vsub.s32 4, %v929
    %v931 = vrot.slane %v910, %v930
    %v932 = vlaneseq
    %v933 = vshrl.u32 %v932, 7
    %v934 = vsub.s32 5, %v933
    %v935 = vrot.slane %v910, %v934
    %v936 = vlaneseq
    %v937 = vshrl.u32 %v936, 7
    %v938 = vsub.s32 6, %v937
    %v939 = vrot.slane %v910, %v938
    %v940 = vlaneseq
    %v941 = vshrl.u32 %v940, 7
    %v942 = vsub.s32 7, %v941
    %v943 = vrot.slane %v910, %v942
    %952 = vmatprep.subr.mxu0 %v263
    %953 = vmatpush1.msra.mxu0 %v262
    %954 = vmatprep.subr.mxu0 %v255
    %955 = vmatpush1.msra.mxu0 %v254
    %956 = vmatprep.subr.mxu0 %v247
    %957 = vmatpush1.msra.mxu0 %v246
    %958 = vmatprep.subr.mxu0 %v239
    %959 = vmatpush1.msra.mxu0 %v238
    %960 = vmatprep.subr.mxu0 %v231
    %961 = vmatpush1.msra.mxu0 %v230
    %962 = vmatprep.subr.mxu0 %v223
    %963 = vmatpush1.msra.mxu0 %v222
    %964 = vmatprep.subr.mxu0 %v215
    %965 = vmatpush1.msra.mxu0 %v214
    %966 = vmatprep.subr.mxu0 %v207
    %967 = vmatpush1.msra.mxu0 %v206
    %968 = vmatprep.subr.mxu0 %v199
    %969 = vmatpush1.msra.mxu0 %v198
    %970 = vmatprep.subr.mxu0 %v191
    %971 = vmatpush1.msra.mxu0 %v190
    %972 = vmatprep.subr.mxu0 %v183
    %973 = vmatpush1.msra.mxu0 %v182
    %974 = vmatprep.subr.mxu0 %v175
    %975 = vmatpush1.msra.mxu0 %v174
    %976 = vmatprep.subr.mxu0 %v167
    %977 = vmatpush1.msra.mxu0 %v166
    %978 = vmatprep.subr.mxu0 %v159
    %979 = vmatpush1.msra.mxu0 %v158
    %980 = vmatprep.subr.mxu0 %v151
    %981 = vmatpush1.msra.mxu0 %v150
    %982 = vmatprep.subr.mxu0 %v143
    %983 = vmatpush1.msra.mxu0 %v142
    %984 = vmatprep.subr.mxu0 %v391
    %985 = vmatpush2.msra.mxu0 %v390
    %986 = vmatprep.subr.mxu0 %v383
    %987 = vmatpush2.msra.mxu0 %v382
    %988 = vmatprep.subr.mxu0 %v375
    %989 = vmatpush2.msra.mxu0 %v374
    %990 = vmatprep.subr.mxu0 %v367
    %991 = vmatpush2.msra.mxu0 %v366
    %992 = vmatprep.subr.mxu0 %v359
    %993 = vmatpush2.msra.mxu0 %v358
    %994 = vmatprep.subr.mxu0 %v351
    %995 = vmatpush2.msra.mxu0 %v350
    %996 = vmatprep.subr.mxu0 %v343
    %997 = vmatpush2.msra.mxu0 %v342
    %998 = vmatprep.subr.mxu0 %v335
    %999 = vmatpush2.msra.mxu0 %v334
    %1000 = vmatprep.subr.mxu0 %v327
    %1001 = vmatpush2.msra.mxu0 %v326
    %1002 = vmatprep.subr.mxu0 %v319
    %1003 = vmatpush2.msra.mxu0 %v318
    %1004 = vmatprep.subr.mxu0 %v311
    %1005 = vmatpush2.msra.mxu0 %v310
    %1006 = vmatprep.subr.mxu0 %v303
    %1007 = vmatpush2.msra.mxu0 %v302
    %1008 = vmatprep.subr.mxu0 %v295
    %1009 = vmatpush2.msra.mxu0 %v294
    %1010 = vmatprep.subr.mxu0 %v287
    %1011 = vmatpush2.msra.mxu0 %v286
    %1012 = vmatprep.subr.mxu0 %v279
    %1013 = vmatpush2.msra.mxu0 %v278
    %1014 = vmatprep.subr.mxu0 %v271
    %1015 = vmatpush2.msra.mxu0 %v270
    %1016 = vmatprep.mubr.f32.mxu0 %v95
    %1017 = vmatmul.mubr.f32.gmra.mxu0 %v94
    %v1018 = vpop.f32.mrf.mxu0
    %v1019 = vadd.f32 %v915, %v1018
    %v1020 = vpop.f32.mrf.mxu0
    %v1021 = vadd.f32 %v919, %v1020
    %1022 = vmatprep.mubr.f32.mxu0 %v101
    %1023 = vmatmul.mubr.f32.gmra.mxu0 %v100
    %v1024 = vpop.f32.mrf.mxu0
    %v1025 = vadd.f32 %v915, %v1024
    %v1026 = vpop.f32.mrf.mxu0
    %v1027 = vadd.f32 %v919, %v1026
    %1028 = vmatprep.mubr.f32.mxu0 %v107
    %1029 = vmatmul.mubr.f32.gmra.mxu0 %v106
    %v1030 = vpop.f32.mrf.mxu0
    %v1031 = vadd.f32 %v915, %v1030
    %v1032 = vpop.f32.mrf.mxu0
    %v1033 = vadd.f32 %v919, %v1032
    %1034 = vmatprep.mubr.f32.mxu0 %v113
    %1035 = vmatmul.mubr.f32.gmra.mxu0 %v112
    %v1036 = vpop.f32.mrf.mxu0
    %v1037 = vadd.f32 %v915, %v1036
    %v1038 = vpop.f32.mrf.mxu0
    %v1039 = vadd.f32 %v919, %v1038
    %1040 = vmatprep.mubr.f32.mxu0 %v119
    %1041 = vmatmul.mubr.f32.gmra.mxu0 %v118
    %v1042 = vpop.f32.mrf.mxu0
    %v1043 = vadd.f32 %v915, %v1042
    %v1044 = vpop.f32.mrf.mxu0
    %v1045 = vadd.f32 %v919, %v1044
    %1046 = vmatprep.mubr.f32.mxu0 %v125
    %1047 = vmatmul.mubr.f32.gmra.mxu0 %v124
    %v1048 = vpop.f32.mrf.mxu0
    %v1049 = vadd.f32 %v915, %v1048
    %v1050 = vpop.f32.mrf.mxu0
    %v1051 = vadd.f32 %v919, %v1050
    %1052 = vmatprep.mubr.f32.mxu0 %v131
    %1053 = vmatmul.mubr.f32.gmra.mxu0 %v130
    %v1054 = vpop.f32.mrf.mxu0
    %v1055 = vadd.f32 %v915, %v1054
    %v1056 = vpop.f32.mrf.mxu0
    %v1057 = vadd.f32 %v919, %v1056
    %1058 = vmatprep.mubr.f32.mxu0 %v137
    %1059 = vmatmul.mubr.f32.gmra.mxu0 %v136
    %v1060 = vpop.f32.mrf.mxu0
    %v1061 = vadd.f32 %v915, %v1060
    %v1062 = vpop.f32.mrf.mxu0
    %v1063 = vadd.f32 %v919, %v1062
    %1064 = vdwg.mxu0
    %1065 = vmatprep.subr.mxu0 %v519
    %1066 = vmatpush1.msra.mxu0 %v518
    %1067 = vmatprep.subr.mxu0 %v511
    %1068 = vmatpush1.msra.mxu0 %v510
    %1069 = vmatprep.subr.mxu0 %v503
    %1070 = vmatpush1.msra.mxu0 %v502
    %1071 = vmatprep.subr.mxu0 %v495
    %1072 = vmatpush1.msra.mxu0 %v494
    %1073 = vmatprep.subr.mxu0 %v487
    %1074 = vmatpush1.msra.mxu0 %v486
    %1075 = vmatprep.subr.mxu0 %v479
    %1076 = vmatpush1.msra.mxu0 %v478
    %1077 = vmatprep.subr.mxu0 %v471
    %1078 = vmatpush1.msra.mxu0 %v470
    %1079 = vmatprep.subr.mxu0 %v463
    %1080 = vmatpush1.msra.mxu0 %v462
    %1081 = vmatprep.subr.mxu0 %v455
    %1082 = vmatpush1.msra.mxu0 %v454
    %1083 = vmatprep.subr.mxu0 %v447
    %1084 = vmatpush1.msra.mxu0 %v446
    %1085 = vmatprep.subr.mxu0 %v439
    %1086 = vmatpush1.msra.mxu0 %v438
    %1087 = vmatprep.subr.mxu0 %v431
    %1088 = vmatpush1.msra.mxu0 %v430
    %1089 = vmatprep.subr.mxu0 %v423
    %1090 = vmatpush1.msra.mxu0 %v422
    %1091 = vmatprep.subr.mxu0 %v415
    %1092 = vmatpush1.msra.mxu0 %v414
    %1093 = vmatprep.subr.mxu0 %v407
    %1094 = vmatpush1.msra.mxu0 %v406
    %1095 = vmatprep.subr.mxu0 %v399
    %1096 = vmatpush1.msra.mxu0 %v398
    %1097 = vmatprep.subr.mxu0 %v647
    %1098 = vmatpush2.msra.mxu0 %v646
    %1099 = vmatprep.subr.mxu0 %v639
    %1100 = vmatpush2.msra.mxu0 %v638
    %1101 = vmatprep.subr.mxu0 %v631
    %1102 = vmatpush2.msra.mxu0 %v630
    %1103 = vmatprep.subr.mxu0 %v623
    %1104 = vmatpush2.msra.mxu0 %v622
    %1105 = vmatprep.subr.mxu0 %v615
    %1106 = vmatpush2.msra.mxu0 %v614
    %1107 = vmatprep.subr.mxu0 %v607
    %1108 = vmatpush2.msra.mxu0 %v606
    %1109 = vmatprep.subr.mxu0 %v599
    %1110 = vmatpush2.msra.mxu0 %v598
    %1111 = vmatprep.subr.mxu0 %v591
    %1112 = vmatpush2.msra.mxu0 %v590
    %1113 = vmatprep.subr.mxu0 %v583
    %1114 = vmatpush2.msra.mxu0 %v582
    %1115 = vmatprep.subr.mxu0 %v575
    %1116 = vmatpush2.msra.mxu0 %v574
    %1117 = vmatprep.subr.mxu0 %v567
    %1118 = vmatpush2.msra.mxu0 %v566
    %1119 = vmatprep.subr.mxu0 %v559
    %1120 = vmatpush2.msra.mxu0 %v558
    %1121 = vmatprep.subr.mxu0 %v551
    %1122 = vmatpush2.msra.mxu0 %v550
    %1123 = vmatprep.subr.mxu0 %v543
    %1124 = vmatpush2.msra.mxu0 %v542
    %1125 = vmatprep.subr.mxu0 %v535
    %1126 = vmatpush2.msra.mxu0 %v534
    %1127 = vmatprep.subr.mxu0 %v527
    %1128 = vmatpush2.msra.mxu0 %v526
    %1129 = vmatprep.mubr.f32.mxu0 %v97
    %1130 = vmatmul.mubr.f32.gmra.mxu0 %v96
    %v1131 = vpop.f32.mrf.mxu0
    %v1132 = vadd.f32 %v1019, %v1131
    %v1133 = vpop.f32.mrf.mxu0
    %v1134 = vadd.f32 %v1021, %v1133
    %1135 = vmatprep.mubr.f32.mxu0 %v103
    %1136 = vmatmul.mubr.f32.gmra.mxu0 %v102
    %v1137 = vpop.f32.mrf.mxu0
    %v1138 = vadd.f32 %v1025, %v1137
    %v1139 = vpop.f32.mrf.mxu0
    %v1140 = vadd.f32 %v1027, %v1139
    %1141 = vmatprep.mubr.f32.mxu0 %v109
    %1142 = vmatmul.mubr.f32.gmra.mxu0 %v108
    %v1143 = vpop.f32.mrf.mxu0
    %v1144 = vadd.f32 %v1031, %v1143
    %v1145 = vpop.f32.mrf.mxu0
    %v1146 = vadd.f32 %v1033, %v1145
    %1147 = vmatprep.mubr.f32.mxu0 %v115
    %1148 = vmatmul.mubr.f32.gmra.mxu0 %v114
    %v1149 = vpop.f32.mrf.mxu0
    %v1150 = vadd.f32 %v1037, %v1149
    %v1151 = vpop.f32.mrf.mxu0
    %v1152 = vadd.f32 %v1039, %v1151
    %1153 = vmatprep.mubr.f32.mxu0 %v121
    %1154 = vmatmul.mubr.f32.gmra.mxu0 %v120
    %v1155 = vpop.f32.mrf.mxu0
    %v1156 = vadd.f32 %v1043, %v1155
    %v1157 = vpop.f32.mrf.mxu0
    %v1158 = vadd.f32 %v1045, %v1157
    %1159 = vmatprep.mubr.f32.mxu0 %v127
    %1160 = vmatmul.mubr.f32.gmra.mxu0 %v126
    %v1161 = vpop.f32.mrf.mxu0
    %v1162 = vadd.f32 %v1049, %v1161
    %v1163 = vpop.f32.mrf.mxu0
    %v1164 = vadd.f32 %v1051, %v1163
    %1165 = vmatprep.mubr.f32.mxu0 %v133
    %1166 = vmatmul.mubr.f32.gmra.mxu0 %v132
    %v1167 = vpop.f32.mrf.mxu0
    %v1168 = vadd.f32 %v1055, %v1167
    %v1169 = vpop.f32.mrf.mxu0
    %v1170 = vadd.f32 %v1057, %v1169
    %1171 = vmatprep.mubr.f32.mxu0 %v139
    %1172 = vmatmul.mubr.f32.gmra.mxu0 %v138
    %v1173 = vpop.f32.mrf.mxu0
    %v1174 = vadd.f32 %v1061, %v1173
    %v1175 = vpop.f32.mrf.mxu0
    %v1176 = vadd.f32 %v1063, %v1175
    %1177 = vdwg.mxu0
    %1178 = vmatprep.subr.mxu0 %v775
    %1179 = vmatpush1.msra.mxu0 %v774
    %1180 = vmatprep.subr.mxu0 %v767
    %1181 = vmatpush1.msra.mxu0 %v766
    %1182 = vmatprep.subr.mxu0 %v759
    %1183 = vmatpush1.msra.mxu0 %v758
    %1184 = vmatprep.subr.mxu0 %v751
    %1185 = vmatpush1.msra.mxu0 %v750
    %1186 = vmatprep.subr.mxu0 %v743
    %1187 = vmatpush1.msra.mxu0 %v742
    %1188 = vmatprep.subr.mxu0 %v735
    %1189 = vmatpush1.msra.mxu0 %v734
    %1190 = vmatprep.subr.mxu0 %v727
    %1191 = vmatpush1.msra.mxu0 %v726
    %1192 = vmatprep.subr.mxu0 %v719
    %1193 = vmatpush1.msra.mxu0 %v718
    %1194 = vmatprep.subr.mxu0 %v711
    %1195 = vmatpush1.msra.mxu0 %v710
    %1196 = vmatprep.subr.mxu0 %v703
    %1197 = vmatpush1.msra.mxu0 %v702
    %1198 = vmatprep.subr.mxu0 %v695
    %1199 = vmatpush1.msra.mxu0 %v694
    %1200 = vmatprep.subr.mxu0 %v687
    %1201 = vmatpush1.msra.mxu0 %v686
    %1202 = vmatprep.subr.mxu0 %v679
    %1203 = vmatpush1.msra.mxu0 %v678
    %1204 = vmatprep.subr.mxu0 %v671
    %1205 = vmatpush1.msra.mxu0 %v670
    %1206 = vmatprep.subr.mxu0 %v663
    %1207 = vmatpush1.msra.mxu0 %v662
    %1208 = vmatprep.subr.mxu0 %v655
    %1209 = vmatpush1.msra.mxu0 %v654
    %1210 = vmatprep.subr.mxu0 %v903
    %1211 = vmatpush2.msra.mxu0 %v902
    %1212 = vmatprep.subr.mxu0 %v895
    %1213 = vmatpush2.msra.mxu0 %v894
    %1214 = vmatprep.subr.mxu0 %v887
    %1215 = vmatpush2.msra.mxu0 %v886
    %1216 = vmatprep.subr.mxu0 %v879
    %1217 = vmatpush2.msra.mxu0 %v878
    %1218 = vmatprep.subr.mxu0 %v871
    %1219 = vmatpush2.msra.mxu0 %v870
    %1220 = vmatprep.subr.mxu0 %v863
    %1221 = vmatpush2.msra.mxu0 %v862
    %1222 = vmatprep.subr.mxu0 %v855
    %1223 = vmatpush2.msra.mxu0 %v854
    %1224 = vmatprep.subr.mxu0 %v847
    %1225 = vmatpush2.msra.mxu0 %v846
    %1226 = vmatprep.subr.mxu0 %v839
    %1227 = vmatpush2.msra.mxu0 %v838
    %1228 = vmatprep.subr.mxu0 %v831
    %1229 = vmatpush2.msra.mxu0 %v830
    %1230 = vmatprep.subr.mxu0 %v823
    %1231 = vmatpush2.msra.mxu0 %v822
    %1232 = vmatprep.subr.mxu0 %v815
    %1233 = vmatpush2.msra.mxu0 %v814
    %1234 = vmatprep.subr.mxu0 %v807
    %1235 = vmatpush2.msra.mxu0 %v806
    %1236 = vmatprep.subr.mxu0 %v799
    %1237 = vmatpush2.msra.mxu0 %v798
    %1238 = vmatprep.subr.mxu0 %v791
    %1239 = vmatpush2.msra.mxu0 %v790
    %1240 = vmatprep.subr.mxu0 %v783
    %1241 = vmatpush2.msra.mxu0 %v782
    %1242 = vmatprep.mubr.f32.mxu0 %v99
    %1243 = vmatmul.mubr.f32.gmra.mxu0 %v98
    %v1244 = vpop.f32.mrf.mxu0
    %v1245 = vadd.f32 %v1132, %v1244
    %v1246 = vpop.f32.mrf.mxu0
    %v1247 = vadd.f32 %v1134, %v1246
    %1248 = vmatprep.mubr.f32.mxu0 %v105
    %1249 = vmatmul.mubr.f32.gmra.mxu0 %v104
    %v1250 = vpop.f32.mrf.mxu0
    %v1251 = vadd.f32 %v1138, %v1250
    %v1252 = vpop.f32.mrf.mxu0
    %v1253 = vadd.f32 %v1140, %v1252
    %1254 = vmatprep.mubr.f32.mxu0 %v111
    %1255 = vmatmul.mubr.f32.gmra.mxu0 %v110
    %v1256 = vpop.f32.mrf.mxu0
    %v1257 = vadd.f32 %v1144, %v1256
    %v1258 = vpop.f32.mrf.mxu0
    %v1259 = vadd.f32 %v1146, %v1258
    %1260 = vmatprep.mubr.f32.mxu0 %v117
    %1261 = vmatmul.mubr.f32.gmra.mxu0 %v116
    %v1262 = vpop.f32.mrf.mxu0
    %v1263 = vadd.f32 %v1150, %v1262
    %v1264 = vpop.f32.mrf.mxu0
    %v1265 = vadd.f32 %v1152, %v1264
    %1266 = vmatprep.mubr.f32.mxu0 %v123
    %1267 = vmatmul.mubr.f32.gmra.mxu0 %v122
    %v1268 = vpop.f32.mrf.mxu0
    %v1269 = vadd.f32 %v1156, %v1268
    %v1270 = vpop.f32.mrf.mxu0
    %v1271 = vadd.f32 %v1158, %v1270
    %1272 = vmatprep.mubr.f32.mxu0 %v129
    %1273 = vmatmul.mubr.f32.gmra.mxu0 %v128
    %v1274 = vpop.f32.mrf.mxu0
    %v1275 = vadd.f32 %v1162, %v1274
    %v1276 = vpop.f32.mrf.mxu0
    %v1277 = vadd.f32 %v1164, %v1276
    %1278 = vmatprep.mubr.f32.mxu0 %v135
    %1279 = vmatmul.mubr.f32.gmra.mxu0 %v134
    %v1280 = vpop.f32.mrf.mxu0
    %v1281 = vadd.f32 %v1168, %v1280
    %v1282 = vpop.f32.mrf.mxu0
    %v1283 = vadd.f32 %v1170, %v1282
    %1284 = vmatprep.mubr.f32.mxu0 %v141
    %1285 = vmatmul.mubr.f32.gmra.mxu0 %v140
    %v1286 = vpop.f32.mrf.mxu0
    %v1287 = vadd.f32 %v1174, %v1286
    %v1288 = vpop.f32.mrf.mxu0
    %v1289 = vadd.f32 %v1176, %v1288
    %1290 = vdwg.mxu0
    %1291 = vmatprep.subr.mxu0 %v265
    %1292 = vmatpush1.msra.mxu0 %v264
    %1293 = vmatprep.subr.mxu0 %v257
    %1294 = vmatpush1.msra.mxu0 %v256
    %1295 = vmatprep.subr.mxu0 %v249
    %1296 = vmatpush1.msra.mxu0 %v248
    %1297 = vmatprep.subr.mxu0 %v241
    %1298 = vmatpush1.msra.mxu0 %v240
    %1299 = vmatprep.subr.mxu0 %v233
    %1300 = vmatpush1.msra.mxu0 %v232
    %1301 = vmatprep.subr.mxu0 %v225
    %1302 = vmatpush1.msra.mxu0 %v224
    %1303 = vmatprep.subr.mxu0 %v217
    %1304 = vmatpush1.msra.mxu0 %v216
    %1305 = vmatprep.subr.mxu0 %v209
    %1306 = vmatpush1.msra.mxu0 %v208
    %1307 = vmatprep.subr.mxu0 %v201
    %1308 = vmatpush1.msra.mxu0 %v200
    %1309 = vmatprep.subr.mxu0 %v193
    %1310 = vmatpush1.msra.mxu0 %v192
    %1311 = vmatprep.subr.mxu0 %v185
    %1312 = vmatpush1.msra.mxu0 %v184
    %1313 = vmatprep.subr.mxu0 %v177
    %1314 = vmatpush1.msra.mxu0 %v176
    %1315 = vmatprep.subr.mxu0 %v169
    %1316 = vmatpush1.msra.mxu0 %v168
    %1317 = vmatprep.subr.mxu0 %v161
    %1318 = vmatpush1.msra.mxu0 %v160
    %1319 = vmatprep.subr.mxu0 %v153
    %1320 = vmatpush1.msra.mxu0 %v152
    %1321 = vmatprep.subr.mxu0 %v145
    %1322 = vmatpush1.msra.mxu0 %v144
    %1323 = vmatprep.subr.mxu0 %v393
    %1324 = vmatpush2.msra.mxu0 %v392
    %1325 = vmatprep.subr.mxu0 %v385
    %1326 = vmatpush2.msra.mxu0 %v384
    %1327 = vmatprep.subr.mxu0 %v377
    %1328 = vmatpush2.msra.mxu0 %v376
    %1329 = vmatprep.subr.mxu0 %v369
    %1330 = vmatpush2.msra.mxu0 %v368
    %1331 = vmatprep.subr.mxu0 %v361
    %1332 = vmatpush2.msra.mxu0 %v360
    %1333 = vmatprep.subr.mxu0 %v353
    %1334 = vmatpush2.msra.mxu0 %v352
    %1335 = vmatprep.subr.mxu0 %v345
    %1336 = vmatpush2.msra.mxu0 %v344
    %1337 = vmatprep.subr.mxu0 %v337
    %1338 = vmatpush2.msra.mxu0 %v336
    %1339 = vmatprep.subr.mxu0 %v329
    %1340 = vmatpush2.msra.mxu0 %v328
    %1341 = vmatprep.subr.mxu0 %v321
    %1342 = vmatpush2.msra.mxu0 %v320
    %1343 = vmatprep.subr.mxu0 %v313
    %1344 = vmatpush2.msra.mxu0 %v312
    %1345 = vmatprep.subr.mxu0 %v305
    %1346 = vmatpush2.msra.mxu0 %v304
    %1347 = vmatprep.subr.mxu0 %v297
    %1348 = vmatpush2.msra.mxu0 %v296
    %1349 = vmatprep.subr.mxu0 %v289
    %1350 = vmatpush2.msra.mxu0 %v288
    %1351 = vmatprep.subr.mxu0 %v281
    %1352 = vmatpush2.msra.mxu0 %v280
    %1353 = vmatprep.subr.mxu0 %v273
    %1354 = vmatpush2.msra.mxu0 %v272
    %1355 = vmatprep.mubr.f32.mxu0 %v95
    %1356 = vmatmul.mubr.f32.gmra.mxu0 %v94
    %v1357 = vpop.f32.mrf.mxu0
    %v1358 = vadd.f32 %v923, %v1357
    %v1359 = vpop.f32.mrf.mxu0
    %v1360 = vadd.f32 %v927, %v1359
    %1361 = vmatprep.mubr.f32.mxu0 %v101
    %1362 = vmatmul.mubr.f32.gmra.mxu0 %v100
    %v1363 = vpop.f32.mrf.mxu0
    %v1364 = vadd.f32 %v923, %v1363
    %v1365 = vpop.f32.mrf.mxu0
    %v1366 = vadd.f32 %v927, %v1365
    %1367 = vmatprep.mubr.f32.mxu0 %v107
    %1368 = vmatmul.mubr.f32.gmra.mxu0 %v106
    %v1369 = vpop.f32.mrf.mxu0
    %v1370 = vadd.f32 %v923, %v1369
    %v1371 = vpop.f32.mrf.mxu0
    %v1372 = vadd.f32 %v927, %v1371
    %1373 = vmatprep.mubr.f32.mxu0 %v113
    %1374 = vmatmul.mubr.f32.gmra.mxu0 %v112
    %v1375 = vpop.f32.mrf.mxu0
    %v1376 = vadd.f32 %v923, %v1375
    %v1377 = vpop.f32.mrf.mxu0
    %v1378 = vadd.f32 %v927, %v1377
    %1379 = vmatprep.mubr.f32.mxu0 %v119
    %1380 = vmatmul.mubr.f32.gmra.mxu0 %v118
    %v1381 = vpop.f32.mrf.mxu0
    %v1382 = vadd.f32 %v923, %v1381
    %v1383 = vpop.f32.mrf.mxu0
    %v1384 = vadd.f32 %v927, %v1383
    %1385 = vmatprep.mubr.f32.mxu0 %v125
    %1386 = vmatmul.mubr.f32.gmra.mxu0 %v124
    %v1387 = vpop.f32.mrf.mxu0
    %v1388 = vadd.f32 %v923, %v1387
    %v1389 = vpop.f32.mrf.mxu0
    %v1390 = vadd.f32 %v927, %v1389
    %1391 = vmatprep.mubr.f32.mxu0 %v131
    %1392 = vmatmul.mubr.f32.gmra.mxu0 %v130
    %v1393 = vpop.f32.mrf.mxu0
    %v1394 = vadd.f32 %v923, %v1393
    %v1395 = vpop.f32.mrf.mxu0
    %v1396 = vadd.f32 %v927, %v1395
    %1397 = vmatprep.mubr.f32.mxu0 %v137
    %1398 = vmatmul.mubr.f32.gmra.mxu0 %v136
    %v1399 = vpop.f32.mrf.mxu0
    %v1400 = vadd.f32 %v923, %v1399
    %v1401 = vpop.f32.mrf.mxu0
    %v1402 = vadd.f32 %v927, %v1401
    %1403 = vdwg.mxu0
    %1404 = vmatprep.subr.mxu0 %v521
    %1405 = vmatpush1.msra.mxu0 %v520
    %1406 = vmatprep.subr.mxu0 %v513
    %1407 = vmatpush1.msra.mxu0 %v512
    %1408 = vmatprep.subr.mxu0 %v505
    %1409 = vmatpush1.msra.mxu0 %v504
    %1410 = vmatprep.subr.mxu0 %v497
    %1411 = vmatpush1.msra.mxu0 %v496
    %1412 = vmatprep.subr.mxu0 %v489
    %1413 = vmatpush1.msra.mxu0 %v488
    %1414 = vmatprep.subr.mxu0 %v481
    %1415 = vmatpush1.msra.mxu0 %v480
    %1416 = vmatprep.subr.mxu0 %v473
    %1417 = vmatpush1.msra.mxu0 %v472
    %1418 = vmatprep.subr.mxu0 %v465
    %1419 = vmatpush1.msra.mxu0 %v464
    %1420 = vmatprep.subr.mxu0 %v457
    %1421 = vmatpush1.msra.mxu0 %v456
    %1422 = vmatprep.subr.mxu0 %v449
    %1423 = vmatpush1.msra.mxu0 %v448
    %1424 = vmatprep.subr.mxu0 %v441
    %1425 = vmatpush1.msra.mxu0 %v440
    %1426 = vmatprep.subr.mxu0 %v433
    %1427 = vmatpush1.msra.mxu0 %v432
    %1428 = vmatprep.subr.mxu0 %v425
    %1429 = vmatpush1.msra.mxu0 %v424
    %1430 = vmatprep.subr.mxu0 %v417
    %1431 = vmatpush1.msra.mxu0 %v416
    %1432 = vmatprep.subr.mxu0 %v409
    %1433 = vmatpush1.msra.mxu0 %v408
    %1434 = vmatprep.subr.mxu0 %v401
    %1435 = vmatpush1.msra.mxu0 %v400
    %1436 = vmatprep.subr.mxu0 %v649
    %1437 = vmatpush2.msra.mxu0 %v648
    %1438 = vmatprep.subr.mxu0 %v641
    %1439 = vmatpush2.msra.mxu0 %v640
    %1440 = vmatprep.subr.mxu0 %v633
    %1441 = vmatpush2.msra.mxu0 %v632
    %1442 = vmatprep.subr.mxu0 %v625
    %1443 = vmatpush2.msra.mxu0 %v624
    %1444 = vmatprep.subr.mxu0 %v617
    %1445 = vmatpush2.msra.mxu0 %v616
    %1446 = vmatprep.subr.mxu0 %v609
    %1447 = vmatpush2.msra.mxu0 %v608
    %1448 = vmatprep.subr.mxu0 %v601
    %1449 = vmatpush2.msra.mxu0 %v600
    %1450 = vmatprep.subr.mxu0 %v593
    %1451 = vmatpush2.msra.mxu0 %v592
    %1452 = vmatprep.subr.mxu0 %v585
    %1453 = vmatpush2.msra.mxu0 %v584
    %1454 = vmatprep.subr.mxu0 %v577
    %1455 = vmatpush2.msra.mxu0 %v576
    %1456 = vmatprep.subr.mxu0 %v569
    %1457 = vmatpush2.msra.mxu0 %v568
    %1458 = vmatprep.subr.mxu0 %v561
    %1459 = vmatpush2.msra.mxu0 %v560
    %1460 = vmatprep.subr.mxu0 %v553
    %1461 = vmatpush2.msra.mxu0 %v552
    %1462 = vmatprep.subr.mxu0 %v545
    %1463 = vmatpush2.msra.mxu0 %v544
    %1464 = vmatprep.subr.mxu0 %v537
    %1465 = vmatpush2.msra.mxu0 %v536
    %1466 = vmatprep.subr.mxu0 %v529
    %1467 = vmatpush2.msra.mxu0 %v528
    %1468 = vmatprep.mubr.f32.mxu0 %v97
    %1469 = vmatmul.mubr.f32.gmra.mxu0 %v96
    %v1470 = vpop.f32.mrf.mxu0
    %v1471 = vadd.f32 %v1358, %v1470
    %v1472 = vpop.f32.mrf.mxu0
    %v1473 = vadd.f32 %v1360, %v1472
    %1474 = vmatprep.mubr.f32.mxu0 %v103
    %1475 = vmatmul.mubr.f32.gmra.mxu0 %v102
    %v1476 = vpop.f32.mrf.mxu0
    %v1477 = vadd.f32 %v1364, %v1476
    %v1478 = vpop.f32.mrf.mxu0
    %v1479 = vadd.f32 %v1366, %v1478
    %1480 = vmatprep.mubr.f32.mxu0 %v109
    %1481 = vmatmul.mubr.f32.gmra.mxu0 %v108
    %v1482 = vpop.f32.mrf.mxu0
    %v1483 = vadd.f32 %v1370, %v1482
    %v1484 = vpop.f32.mrf.mxu0
    %v1485 = vadd.f32 %v1372, %v1484
    %1486 = vmatprep.mubr.f32.mxu0 %v115
    %1487 = vmatmul.mubr.f32.gmra.mxu0 %v114
    %v1488 = vpop.f32.mrf.mxu0
    %v1489 = vadd.f32 %v1376, %v1488
    %v1490 = vpop.f32.mrf.mxu0
    %v1491 = vadd.f32 %v1378, %v1490
    %1492 = vmatprep.mubr.f32.mxu0 %v121
    %1493 = vmatmul.mubr.f32.gmra.mxu0 %v120
    %v1494 = vpop.f32.mrf.mxu0
    %v1495 = vadd.f32 %v1382, %v1494
    %v1496 = vpop.f32.mrf.mxu0
    %v1497 = vadd.f32 %v1384, %v1496
    %1498 = vmatprep.mubr.f32.mxu0 %v127
    %1499 = vmatmul.mubr.f32.gmra.mxu0 %v126
    %v1500 = vpop.f32.mrf.mxu0
    %v1501 = vadd.f32 %v1388, %v1500
    %v1502 = vpop.f32.mrf.mxu0
    %v1503 = vadd.f32 %v1390, %v1502
    %1504 = vmatprep.mubr.f32.mxu0 %v133
    %1505 = vmatmul.mubr.f32.gmra.mxu0 %v132
    %v1506 = vpop.f32.mrf.mxu0
    %v1507 = vadd.f32 %v1394, %v1506
    %v1508 = vpop.f32.mrf.mxu0
    %v1509 = vadd.f32 %v1396, %v1508
    %1510 = vmatprep.mubr.f32.mxu0 %v139
    %1511 = vmatmul.mubr.f32.gmra.mxu0 %v138
    %v1512 = vpop.f32.mrf.mxu0
    %v1513 = vadd.f32 %v1400, %v1512
    %v1514 = vpop.f32.mrf.mxu0
    %v1515 = vadd.f32 %v1402, %v1514
    %1516 = vdwg.mxu0
    %1517 = vmatprep.subr.mxu0 %v777
    %1518 = vmatpush1.msra.mxu0 %v776
    %1519 = vmatprep.subr.mxu0 %v769
    %1520 = vmatpush1.msra.mxu0 %v768
    %1521 = vmatprep.subr.mxu0 %v761
    %1522 = vmatpush1.msra.mxu0 %v760
    %1523 = vmatprep.subr.mxu0 %v753
    %1524 = vmatpush1.msra.mxu0 %v752
    %1525 = vmatprep.subr.mxu0 %v745
    %1526 = vmatpush1.msra.mxu0 %v744
    %1527 = vmatprep.subr.mxu0 %v737
    %1528 = vmatpush1.msra.mxu0 %v736
    %1529 = vmatprep.subr.mxu0 %v729
    %1530 = vmatpush1.msra.mxu0 %v728
    %1531 = vmatprep.subr.mxu0 %v721
    %1532 = vmatpush1.msra.mxu0 %v720
    %1533 = vmatprep.subr.mxu0 %v713
    %1534 = vmatpush1.msra.mxu0 %v712
    %1535 = vmatprep.subr.mxu0 %v705
    %1536 = vmatpush1.msra.mxu0 %v704
    %1537 = vmatprep.subr.mxu0 %v697
    %1538 = vmatpush1.msra.mxu0 %v696
    %1539 = vmatprep.subr.mxu0 %v689
    %1540 = vmatpush1.msra.mxu0 %v688
    %1541 = vmatprep.subr.mxu0 %v681
    %1542 = vmatpush1.msra.mxu0 %v680
    %1543 = vmatprep.subr.mxu0 %v673
    %1544 = vmatpush1.msra.mxu0 %v672
    %1545 = vmatprep.subr.mxu0 %v665
    %1546 = vmatpush1.msra.mxu0 %v664
    %1547 = vmatprep.subr.mxu0 %v657
    %1548 = vmatpush1.msra.mxu0 %v656
    %1549 = vmatprep.subr.mxu0 %v905
    %1550 = vmatpush2.msra.mxu0 %v904
    %1551 = vmatprep.subr.mxu0 %v897
    %1552 = vmatpush2.msra.mxu0 %v896
    %1553 = vmatprep.subr.mxu0 %v889
    %1554 = vmatpush2.msra.mxu0 %v888
    %1555 = vmatprep.subr.mxu0 %v881
    %1556 = vmatpush2.msra.mxu0 %v880
    %1557 = vmatprep.subr.mxu0 %v873
    %1558 = vmatpush2.msra.mxu0 %v872
    %1559 = vmatprep.subr.mxu0 %v865
    %1560 = vmatpush2.msra.mxu0 %v864
    %1561 = vmatprep.subr.mxu0 %v857
    %1562 = vmatpush2.msra.mxu0 %v856
    %1563 = vmatprep.subr.mxu0 %v849
    %1564 = vmatpush2.msra.mxu0 %v848
    %1565 = vmatprep.subr.mxu0 %v841
    %1566 = vmatpush2.msra.mxu0 %v840
    %1567 = vmatprep.subr.mxu0 %v833
    %1568 = vmatpush2.msra.mxu0 %v832
    %1569 = vmatprep.subr.mxu0 %v825
    %1570 = vmatpush2.msra.mxu0 %v824
    %1571 = vmatprep.subr.mxu0 %v817
    %1572 = vmatpush2.msra.mxu0 %v816
    %1573 = vmatprep.subr.mxu0 %v809
    %1574 = vmatpush2.msra.mxu0 %v808
    %1575 = vmatprep.subr.mxu0 %v801
    %1576 = vmatpush2.msra.mxu0 %v800
    %1577 = vmatprep.subr.mxu0 %v793
    %1578 = vmatpush2.msra.mxu0 %v792
    %1579 = vmatprep.subr.mxu0 %v785
    %1580 = vmatpush2.msra.mxu0 %v784
    %1581 = vmatprep.mubr.f32.mxu0 %v99
    %1582 = vmatmul.mubr.f32.gmra.mxu0 %v98
    %v1583 = vpop.f32.mrf.mxu0
    %v1584 = vadd.f32 %v1471, %v1583
    %v1585 = vpop.f32.mrf.mxu0
    %v1586 = vadd.f32 %v1473, %v1585
    %1587 = vmatprep.mubr.f32.mxu0 %v105
    %1588 = vmatmul.mubr.f32.gmra.mxu0 %v104
    %v1589 = vpop.f32.mrf.mxu0
    %v1590 = vadd.f32 %v1477, %v1589
    %v1591 = vpop.f32.mrf.mxu0
    %v1592 = vadd.f32 %v1479, %v1591
    %1593 = vmatprep.mubr.f32.mxu0 %v111
    %1594 = vmatmul.mubr.f32.gmra.mxu0 %v110
    %v1595 = vpop.f32.mrf.mxu0
    %v1596 = vadd.f32 %v1483, %v1595
    %v1597 = vpop.f32.mrf.mxu0
    %v1598 = vadd.f32 %v1485, %v1597
    %1599 = vmatprep.mubr.f32.mxu0 %v117
    %1600 = vmatmul.mubr.f32.gmra.mxu0 %v116
    %v1601 = vpop.f32.mrf.mxu0
    %v1602 = vadd.f32 %v1489, %v1601
    %v1603 = vpop.f32.mrf.mxu0
    %v1604 = vadd.f32 %v1491, %v1603
    %1605 = vmatprep.mubr.f32.mxu0 %v123
    %1606 = vmatmul.mubr.f32.gmra.mxu0 %v122
    %v1607 = vpop.f32.mrf.mxu0
    %v1608 = vadd.f32 %v1495, %v1607
    %v1609 = vpop.f32.mrf.mxu0
    %v1610 = vadd.f32 %v1497, %v1609
    %1611 = vmatprep.mubr.f32.mxu0 %v129
    %1612 = vmatmul.mubr.f32.gmra.mxu0 %v128
    %v1613 = vpop.f32.mrf.mxu0
    %v1614 = vadd.f32 %v1501, %v1613
    %v1615 = vpop.f32.mrf.mxu0
    %v1616 = vadd.f32 %v1503, %v1615
    %1617 = vmatprep.mubr.f32.mxu0 %v135
    %1618 = vmatmul.mubr.f32.gmra.mxu0 %v134
    %v1619 = vpop.f32.mrf.mxu0
    %v1620 = vadd.f32 %v1507, %v1619
    %v1621 = vpop.f32.mrf.mxu0
    %v1622 = vadd.f32 %v1509, %v1621
    %1623 = vmatprep.mubr.f32.mxu0 %v141
    %1624 = vmatmul.mubr.f32.gmra.mxu0 %v140
    %v1625 = vpop.f32.mrf.mxu0
    %v1626 = vadd.f32 %v1513, %v1625
    %v1627 = vpop.f32.mrf.mxu0
    %v1628 = vadd.f32 %v1515, %v1627
    %1629 = vdwg.mxu0
    %1630 = vmatprep.subr.mxu0 %v267
    %1631 = vmatpush1.msra.mxu0 %v266
    %1632 = vmatprep.subr.mxu0 %v259
    %1633 = vmatpush1.msra.mxu0 %v258
    %1634 = vmatprep.subr.mxu0 %v251
    %1635 = vmatpush1.msra.mxu0 %v250
    %1636 = vmatprep.subr.mxu0 %v243
    %1637 = vmatpush1.msra.mxu0 %v242
    %1638 = vmatprep.subr.mxu0 %v235
    %1639 = vmatpush1.msra.mxu0 %v234
    %1640 = vmatprep.subr.mxu0 %v227
    %1641 = vmatpush1.msra.mxu0 %v226
    %1642 = vmatprep.subr.mxu0 %v219
    %1643 = vmatpush1.msra.mxu0 %v218
    %1644 = vmatprep.subr.mxu0 %v211
    %1645 = vmatpush1.msra.mxu0 %v210
    %1646 = vmatprep.subr.mxu0 %v203
    %1647 = vmatpush1.msra.mxu0 %v202
    %1648 = vmatprep.subr.mxu0 %v195
    %1649 = vmatpush1.msra.mxu0 %v194
    %1650 = vmatprep.subr.mxu0 %v187
    %1651 = vmatpush1.msra.mxu0 %v186
    %1652 = vmatprep.subr.mxu0 %v179
    %1653 = vmatpush1.msra.mxu0 %v178
    %1654 = vmatprep.subr.mxu0 %v171
    %1655 = vmatpush1.msra.mxu0 %v170
    %1656 = vmatprep.subr.mxu0 %v163
    %1657 = vmatpush1.msra.mxu0 %v162
    %1658 = vmatprep.subr.mxu0 %v155
    %1659 = vmatpush1.msra.mxu0 %v154
    %1660 = vmatprep.subr.mxu0 %v147
    %1661 = vmatpush1.msra.mxu0 %v146
    %1662 = vmatprep.subr.mxu0 %v395
    %1663 = vmatpush2.msra.mxu0 %v394
    %1664 = vmatprep.subr.mxu0 %v387
    %1665 = vmatpush2.msra.mxu0 %v386
    %1666 = vmatprep.subr.mxu0 %v379
    %1667 = vmatpush2.msra.mxu0 %v378
    %1668 = vmatprep.subr.mxu0 %v371
    %1669 = vmatpush2.msra.mxu0 %v370
    %1670 = vmatprep.subr.mxu0 %v363
    %1671 = vmatpush2.msra.mxu0 %v362
    %1672 = vmatprep.subr.mxu0 %v355
    %1673 = vmatpush2.msra.mxu0 %v354
    %1674 = vmatprep.subr.mxu0 %v347
    %1675 = vmatpush2.msra.mxu0 %v346
    %1676 = vmatprep.subr.mxu0 %v339
    %1677 = vmatpush2.msra.mxu0 %v338
    %1678 = vmatprep.subr.mxu0 %v331
    %1679 = vmatpush2.msra.mxu0 %v330
    %1680 = vmatprep.subr.mxu0 %v323
    %1681 = vmatpush2.msra.mxu0 %v322
    %1682 = vmatprep.subr.mxu0 %v315
    %1683 = vmatpush2.msra.mxu0 %v314
    %1684 = vmatprep.subr.mxu0 %v307
    %1685 = vmatpush2.msra.mxu0 %v306
    %1686 = vmatprep.subr.mxu0 %v299
    %1687 = vmatpush2.msra.mxu0 %v298
    %1688 = vmatprep.subr.mxu0 %v291
    %1689 = vmatpush2.msra.mxu0 %v290
    %1690 = vmatprep.subr.mxu0 %v283
    %1691 = vmatpush2.msra.mxu0 %v282
    %1692 = vmatprep.subr.mxu0 %v275
    %1693 = vmatpush2.msra.mxu0 %v274
    %1694 = vmatprep.mubr.f32.mxu0 %v95
    %1695 = vmatmul.mubr.f32.gmra.mxu0 %v94
    %v1696 = vpop.f32.mrf.mxu0
    %v1697 = vadd.f32 %v931, %v1696
    %v1698 = vpop.f32.mrf.mxu0
    %v1699 = vadd.f32 %v935, %v1698
    %1700 = vmatprep.mubr.f32.mxu0 %v101
    %1701 = vmatmul.mubr.f32.gmra.mxu0 %v100
    %v1702 = vpop.f32.mrf.mxu0
    %v1703 = vadd.f32 %v931, %v1702
    %v1704 = vpop.f32.mrf.mxu0
    %v1705 = vadd.f32 %v935, %v1704
    %1706 = vmatprep.mubr.f32.mxu0 %v107
    %1707 = vmatmul.mubr.f32.gmra.mxu0 %v106
    %v1708 = vpop.f32.mrf.mxu0
    %v1709 = vadd.f32 %v931, %v1708
    %v1710 = vpop.f32.mrf.mxu0
    %v1711 = vadd.f32 %v935, %v1710
    %1712 = vmatprep.mubr.f32.mxu0 %v113
    %1713 = vmatmul.mubr.f32.gmra.mxu0 %v112
    %v1714 = vpop.f32.mrf.mxu0
    %v1715 = vadd.f32 %v931, %v1714
    %v1716 = vpop.f32.mrf.mxu0
    %v1717 = vadd.f32 %v935, %v1716
    %1718 = vmatprep.mubr.f32.mxu0 %v119
    %1719 = vmatmul.mubr.f32.gmra.mxu0 %v118
    %v1720 = vpop.f32.mrf.mxu0
    %v1721 = vadd.f32 %v931, %v1720
    %v1722 = vpop.f32.mrf.mxu0
    %v1723 = vadd.f32 %v935, %v1722
    %1724 = vmatprep.mubr.f32.mxu0 %v125
    %1725 = vmatmul.mubr.f32.gmra.mxu0 %v124
    %v1726 = vpop.f32.mrf.mxu0
    %v1727 = vadd.f32 %v931, %v1726
    %v1728 = vpop.f32.mrf.mxu0
    %v1729 = vadd.f32 %v935, %v1728
    %1730 = vmatprep.mubr.f32.mxu0 %v131
    %1731 = vmatmul.mubr.f32.gmra.mxu0 %v130
    %v1732 = vpop.f32.mrf.mxu0
    %v1733 = vadd.f32 %v931, %v1732
    %v1734 = vpop.f32.mrf.mxu0
    %v1735 = vadd.f32 %v935, %v1734
    %1736 = vmatprep.mubr.f32.mxu0 %v137
    %1737 = vmatmul.mubr.f32.gmra.mxu0 %v136
    %v1738 = vpop.f32.mrf.mxu0
    %v1739 = vadd.f32 %v931, %v1738
    %v1740 = vpop.f32.mrf.mxu0
    %v1741 = vadd.f32 %v935, %v1740
    %1742 = vdwg.mxu0
    %1743 = vmatprep.subr.mxu0 %v523
    %1744 = vmatpush1.msra.mxu0 %v522
    %1745 = vmatprep.subr.mxu0 %v515
    %1746 = vmatpush1.msra.mxu0 %v514
    %1747 = vmatprep.subr.mxu0 %v507
    %1748 = vmatpush1.msra.mxu0 %v506
    %1749 = vmatprep.subr.mxu0 %v499
    %1750 = vmatpush1.msra.mxu0 %v498
    %1751 = vmatprep.subr.mxu0 %v491
    %1752 = vmatpush1.msra.mxu0 %v490
    %1753 = vmatprep.subr.mxu0 %v483
    %1754 = vmatpush1.msra.mxu0 %v482
    %1755 = vmatprep.subr.mxu0 %v475
    %1756 = vmatpush1.msra.mxu0 %v474
    %1757 = vmatprep.subr.mxu0 %v467
    %1758 = vmatpush1.msra.mxu0 %v466
    %1759 = vmatprep.subr.mxu0 %v459
    %1760 = vmatpush1.msra.mxu0 %v458
    %1761 = vmatprep.subr.mxu0 %v451
    %1762 = vmatpush1.msra.mxu0 %v450
    %1763 = vmatprep.subr.mxu0 %v443
    %1764 = vmatpush1.msra.mxu0 %v442
    %1765 = vmatprep.subr.mxu0 %v435
    %1766 = vmatpush1.msra.mxu0 %v434
    %1767 = vmatprep.subr.mxu0 %v427
    %1768 = vmatpush1.msra.mxu0 %v426
    %1769 = vmatprep.subr.mxu0 %v419
    %1770 = vmatpush1.msra.mxu0 %v418
    %1771 = vmatprep.subr.mxu0 %v411
    %1772 = vmatpush1.msra.mxu0 %v410
    %1773 = vmatprep.subr.mxu0 %v403
    %1774 = vmatpush1.msra.mxu0 %v402
    %1775 = vmatprep.subr.mxu0 %v651
    %1776 = vmatpush2.msra.mxu0 %v650
    %1777 = vmatprep.subr.mxu0 %v643
    %1778 = vmatpush2.msra.mxu0 %v642
    %1779 = vmatprep.subr.mxu0 %v635
    %1780 = vmatpush2.msra.mxu0 %v634
    %1781 = vmatprep.subr.mxu0 %v627
    %1782 = vmatpush2.msra.mxu0 %v626
    %1783 = vmatprep.subr.mxu0 %v619
    %1784 = vmatpush2.msra.mxu0 %v618
    %1785 = vmatprep.subr.mxu0 %v611
    %1786 = vmatpush2.msra.mxu0 %v610
    %1787 = vmatprep.subr.mxu0 %v603
    %1788 = vmatpush2.msra.mxu0 %v602
    %1789 = vmatprep.subr.mxu0 %v595
    %1790 = vmatpush2.msra.mxu0 %v594
    %1791 = vmatprep.subr.mxu0 %v587
    %1792 = vmatpush2.msra.mxu0 %v586
    %1793 = vmatprep.subr.mxu0 %v579
    %1794 = vmatpush2.msra.mxu0 %v578
    %1795 = vmatprep.subr.mxu0 %v571
    %1796 = vmatpush2.msra.mxu0 %v570
    %1797 = vmatprep.subr.mxu0 %v563
    %1798 = vmatpush2.msra.mxu0 %v562
    %1799 = vmatprep.subr.mxu0 %v555
    %1800 = vmatpush2.msra.mxu0 %v554
    %1801 = vmatprep.subr.mxu0 %v547
    %1802 = vmatpush2.msra.mxu0 %v546
    %1803 = vmatprep.subr.mxu0 %v539
    %1804 = vmatpush2.msra.mxu0 %v538
    %1805 = vmatprep.subr.mxu0 %v531
    %1806 = vmatpush2.msra.mxu0 %v530
    %1807 = vmatprep.mubr.f32.mxu0 %v97
    %1808 = vmatmul.mubr.f32.gmra.mxu0 %v96
    %v1809 = vpop.f32.mrf.mxu0
    %v1810 = vadd.f32 %v1697, %v1809
    %v1811 = vpop.f32.mrf.mxu0
    %v1812 = vadd.f32 %v1699, %v1811
    %1813 = vmatprep.mubr.f32.mxu0 %v103
    %1814 = vmatmul.mubr.f32.gmra.mxu0 %v102
    %v1815 = vpop.f32.mrf.mxu0
    %v1816 = vadd.f32 %v1703, %v1815
    %v1817 = vpop.f32.mrf.mxu0
    %v1818 = vadd.f32 %v1705, %v1817
    %1819 = vmatprep.mubr.f32.mxu0 %v109
    %1820 = vmatmul.mubr.f32.gmra.mxu0 %v108
    %v1821 = vpop.f32.mrf.mxu0
    %v1822 = vadd.f32 %v1709, %v1821
    %v1823 = vpop.f32.mrf.mxu0
    %v1824 = vadd.f32 %v1711, %v1823
    %1825 = vmatprep.mubr.f32.mxu0 %v115
    %1826 = vmatmul.mubr.f32.gmra.mxu0 %v114
    %v1827 = vpop.f32.mrf.mxu0
    %v1828 = vadd.f32 %v1715, %v1827
    %v1829 = vpop.f32.mrf.mxu0
    %v1830 = vadd.f32 %v1717, %v1829
    %1831 = vmatprep.mubr.f32.mxu0 %v121
    %1832 = vmatmul.mubr.f32.gmra.mxu0 %v120
    %v1833 = vpop.f32.mrf.mxu0
    %v1834 = vadd.f32 %v1721, %v1833
    %v1835 = vpop.f32.mrf.mxu0
    %v1836 = vadd.f32 %v1723, %v1835
    %1837 = vmatprep.mubr.f32.mxu0 %v127
    %1838 = vmatmul.mubr.f32.gmra.mxu0 %v126
    %v1839 = vpop.f32.mrf.mxu0
    %v1840 = vadd.f32 %v1727, %v1839
    %v1841 = vpop.f32.mrf.mxu0
    %v1842 = vadd.f32 %v1729, %v1841
    %1843 = vmatprep.mubr.f32.mxu0 %v133
    %1844 = vmatmul.mubr.f32.gmra.mxu0 %v132
    %v1845 = vpop.f32.mrf.mxu0
    %v1846 = vadd.f32 %v1733, %v1845
    %v1847 = vpop.f32.mrf.mxu0
    %v1848 = vadd.f32 %v1735, %v1847
    %1849 = vmatprep.mubr.f32.mxu0 %v139
    %1850 = vmatmul.mubr.f32.gmra.mxu0 %v138
    %v1851 = vpop.f32.mrf.mxu0
    %v1852 = vadd.f32 %v1739, %v1851
    %v1853 = vpop.f32.mrf.mxu0
    %v1854 = vadd.f32 %v1741, %v1853
    %1855 = vdwg.mxu0
    %1856 = vmatprep.subr.mxu0 %v779
    %1857 = vmatpush1.msra.mxu0 %v778
    %1858 = vmatprep.subr.mxu0 %v771
    %1859 = vmatpush1.msra.mxu0 %v770
    %1860 = vmatprep.subr.mxu0 %v763
    %1861 = vmatpush1.msra.mxu0 %v762
    %1862 = vmatprep.subr.mxu0 %v755
    %1863 = vmatpush1.msra.mxu0 %v754
    %1864 = vmatprep.subr.mxu0 %v747
    %1865 = vmatpush1.msra.mxu0 %v746
    %1866 = vmatprep.subr.mxu0 %v739
    %1867 = vmatpush1.msra.mxu0 %v738
    %1868 = vmatprep.subr.mxu0 %v731
    %1869 = vmatpush1.msra.mxu0 %v730
    %1870 = vmatprep.subr.mxu0 %v723
    %1871 = vmatpush1.msra.mxu0 %v722
    %1872 = vmatprep.subr.mxu0 %v715
    %1873 = vmatpush1.msra.mxu0 %v714
    %1874 = vmatprep.subr.mxu0 %v707
    %1875 = vmatpush1.msra.mxu0 %v706
    %1876 = vmatprep.subr.mxu0 %v699
    %1877 = vmatpush1.msra.mxu0 %v698
    %1878 = vmatprep.subr.mxu0 %v691
    %1879 = vmatpush1.msra.mxu0 %v690
    %1880 = vmatprep.subr.mxu0 %v683
    %1881 = vmatpush1.msra.mxu0 %v682
    %1882 = vmatprep.subr.mxu0 %v675
    %1883 = vmatpush1.msra.mxu0 %v674
    %1884 = vmatprep.subr.mxu0 %v667
    %1885 = vmatpush1.msra.mxu0 %v666
    %1886 = vmatprep.subr.mxu0 %v659
    %1887 = vmatpush1.msra.mxu0 %v658
    %1888 = vmatprep.subr.mxu0 %v907
    %1889 = vmatpush2.msra.mxu0 %v906
    %1890 = vmatprep.subr.mxu0 %v899
    %1891 = vmatpush2.msra.mxu0 %v898
    %1892 = vmatprep.subr.mxu0 %v891
    %1893 = vmatpush2.msra.mxu0 %v890
    %1894 = vmatprep.subr.mxu0 %v883
    %1895 = vmatpush2.msra.mxu0 %v882
    %1896 = vmatprep.subr.mxu0 %v875
    %1897 = vmatpush2.msra.mxu0 %v874
    %1898 = vmatprep.subr.mxu0 %v867
    %1899 = vmatpush2.msra.mxu0 %v866
    %1900 = vmatprep.subr.mxu0 %v859
    %1901 = vmatpush2.msra.mxu0 %v858
    %1902 = vmatprep.subr.mxu0 %v851
    %1903 = vmatpush2.msra.mxu0 %v850
    %1904 = vmatprep.subr.mxu0 %v843
    %1905 = vmatpush2.msra.mxu0 %v842
    %1906 = vmatprep.subr.mxu0 %v835
    %1907 = vmatpush2.msra.mxu0 %v834
    %1908 = vmatprep.subr.mxu0 %v827
    %1909 = vmatpush2.msra.mxu0 %v826
    %1910 = vmatprep.subr.mxu0 %v819
    %1911 = vmatpush2.msra.mxu0 %v818
    %1912 = vmatprep.subr.mxu0 %v811
    %1913 = vmatpush2.msra.mxu0 %v810
    %1914 = vmatprep.subr.mxu0 %v803
    %1915 = vmatpush2.msra.mxu0 %v802
    %1916 = vmatprep.subr.mxu0 %v795
    %1917 = vmatpush2.msra.mxu0 %v794
    %1918 = vmatprep.subr.mxu0 %v787
    %1919 = vmatpush2.msra.mxu0 %v786
    %1920 = vmatprep.mubr.f32.mxu0 %v99
    %1921 = vmatmul.mubr.f32.gmra.mxu0 %v98
    %v1922 = vpop.f32.mrf.mxu0
    %v1923 = vadd.f32 %v1810, %v1922
    %v1924 = vpop.f32.mrf.mxu0
    %v1925 = vadd.f32 %v1812, %v1924
    %1926 = vmatprep.mubr.f32.mxu0 %v105
    %1927 = vmatmul.mubr.f32.gmra.mxu0 %v104
    %v1928 = vpop.f32.mrf.mxu0
    %v1929 = vadd.f32 %v1816, %v1928
    %v1930 = vpop.f32.mrf.mxu0
    %v1931 = vadd.f32 %v1818, %v1930
    %1932 = vmatprep.mubr.f32.mxu0 %v111
    %1933 = vmatmul.mubr.f32.gmra.mxu0 %v110
    %v1934 = vpop.f32.mrf.mxu0
    %v1935 = vadd.f32 %v1822, %v1934
    %v1936 = vpop.f32.mrf.mxu0
    %v1937 = vadd.f32 %v1824, %v1936
    %1938 = vmatprep.mubr.f32.mxu0 %v117
    %1939 = vmatmul.mubr.f32.gmra.mxu0 %v116
    %v1940 = vpop.f32.mrf.mxu0
    %v1941 = vadd.f32 %v1828, %v1940
    %v1942 = vpop.f32.mrf.mxu0
    %v1943 = vadd.f32 %v1830, %v1942
    %1944 = vmatprep.mubr.f32.mxu0 %v123
    %1945 = vmatmul.mubr.f32.gmra.mxu0 %v122
    %v1946 = vpop.f32.mrf.mxu0
    %v1947 = vadd.f32 %v1834, %v1946
    %v1948 = vpop.f32.mrf.mxu0
    %v1949 = vadd.f32 %v1836, %v1948
    %1950 = vmatprep.mubr.f32.mxu0 %v129
    %1951 = vmatmul.mubr.f32.gmra.mxu0 %v128
    %v1952 = vpop.f32.mrf.mxu0
    %v1953 = vadd.f32 %v1840, %v1952
    %v1954 = vpop.f32.mrf.mxu0
    %v1955 = vadd.f32 %v1842, %v1954
    %1956 = vmatprep.mubr.f32.mxu0 %v135
    %1957 = vmatmul.mubr.f32.gmra.mxu0 %v134
    %v1958 = vpop.f32.mrf.mxu0
    %v1959 = vadd.f32 %v1846, %v1958
    %v1960 = vpop.f32.mrf.mxu0
    %v1961 = vadd.f32 %v1848, %v1960
    %1962 = vmatprep.mubr.f32.mxu0 %v141
    %1963 = vmatmul.mubr.f32.gmra.mxu0 %v140
    %v1964 = vpop.f32.mrf.mxu0
    %v1965 = vadd.f32 %v1852, %v1964
    %v1966 = vpop.f32.mrf.mxu0
    %v1967 = vadd.f32 %v1854, %v1966
    %1968 = vdwg.mxu0
    %1969 = vmatprep.subr.mxu0 %v269
    %1970 = vmatpush1.msra.mxu0 %v268
    %1971 = vmatprep.subr.mxu0 %v261
    %1972 = vmatpush1.msra.mxu0 %v260
    %1973 = vmatprep.subr.mxu0 %v253
    %1974 = vmatpush1.msra.mxu0 %v252
    %1975 = vmatprep.subr.mxu0 %v245
    %1976 = vmatpush1.msra.mxu0 %v244
    %1977 = vmatprep.subr.mxu0 %v237
    %1978 = vmatpush1.msra.mxu0 %v236
    %1979 = vmatprep.subr.mxu0 %v229
    %1980 = vmatpush1.msra.mxu0 %v228
    %1981 = vmatprep.subr.mxu0 %v221
    %1982 = vmatpush1.msra.mxu0 %v220
    %1983 = vmatprep.subr.mxu0 %v213
    %1984 = vmatpush1.msra.mxu0 %v212
    %1985 = vmatprep.subr.mxu0 %v205
    %1986 = vmatpush1.msra.mxu0 %v204
    %1987 = vmatprep.subr.mxu0 %v197
    %1988 = vmatpush1.msra.mxu0 %v196
    %1989 = vmatprep.subr.mxu0 %v189
    %1990 = vmatpush1.msra.mxu0 %v188
    %1991 = vmatprep.subr.mxu0 %v181
    %1992 = vmatpush1.msra.mxu0 %v180
    %1993 = vmatprep.subr.mxu0 %v173
    %1994 = vmatpush1.msra.mxu0 %v172
    %1995 = vmatprep.subr.mxu0 %v165
    %1996 = vmatpush1.msra.mxu0 %v164
    %1997 = vmatprep.subr.mxu0 %v157
    %1998 = vmatpush1.msra.mxu0 %v156
    %1999 = vmatprep.subr.mxu0 %v149
    %2000 = vmatpush1.msra.mxu0 %v148
    %2001 = vmatprep.subr.mxu0 %v397
    %2002 = vmatpush2.msra.mxu0 %v396
    %2003 = vmatprep.subr.mxu0 %v389
    %2004 = vmatpush2.msra.mxu0 %v388
    %2005 = vmatprep.subr.mxu0 %v381
    %2006 = vmatpush2.msra.mxu0 %v380
    %2007 = vmatprep.subr.mxu0 %v373
    %2008 = vmatpush2.msra.mxu0 %v372
    %2009 = vmatprep.subr.mxu0 %v365
    %2010 = vmatpush2.msra.mxu0 %v364
    %2011 = vmatprep.subr.mxu0 %v357
    %2012 = vmatpush2.msra.mxu0 %v356
    %2013 = vmatprep.subr.mxu0 %v349
    %2014 = vmatpush2.msra.mxu0 %v348
    %2015 = vmatprep.subr.mxu0 %v341
    %2016 = vmatpush2.msra.mxu0 %v340
    %2017 = vmatprep.subr.mxu0 %v333
    %2018 = vmatpush2.msra.mxu0 %v332
    %2019 = vmatprep.subr.mxu0 %v325
    %2020 = vmatpush2.msra.mxu0 %v324
    %2021 = vmatprep.subr.mxu0 %v317
    %2022 = vmatpush2.msra.mxu0 %v316
    %2023 = vmatprep.subr.mxu0 %v309
    %2024 = vmatpush2.msra.mxu0 %v308
    %2025 = vmatprep.subr.mxu0 %v301
    %2026 = vmatpush2.msra.mxu0 %v300
    %2027 = vmatprep.subr.mxu0 %v293
    %2028 = vmatpush2.msra.mxu0 %v292
    %2029 = vmatprep.subr.mxu0 %v285
    %2030 = vmatpush2.msra.mxu0 %v284
    %2031 = vmatprep.subr.mxu0 %v277
    %2032 = vmatpush2.msra.mxu0 %v276
    %2033 = vmatprep.mubr.f32.mxu0 %v95
    %2034 = vmatmul.mubr.f32.gmra.mxu0 %v94
    %v2035 = vpop.f32.mrf.mxu0
    %v2036 = vadd.f32 %v939, %v2035
    %v2037 = vpop.f32.mrf.mxu0
    %v2038 = vadd.f32 %v943, %v2037
    %2039 = vmatprep.mubr.f32.mxu0 %v101
    %2040 = vmatmul.mubr.f32.gmra.mxu0 %v100
    %v2041 = vpop.f32.mrf.mxu0
    %v2042 = vadd.f32 %v939, %v2041
    %v2043 = vpop.f32.mrf.mxu0
    %v2044 = vadd.f32 %v943, %v2043
    %2045 = vmatprep.mubr.f32.mxu0 %v107
    %2046 = vmatmul.mubr.f32.gmra.mxu0 %v106
    %v2047 = vpop.f32.mrf.mxu0
    %v2048 = vadd.f32 %v939, %v2047
    %v2049 = vpop.f32.mrf.mxu0
    %v2050 = vadd.f32 %v943, %v2049
    %2051 = vmatprep.mubr.f32.mxu0 %v113
    %2052 = vmatmul.mubr.f32.gmra.mxu0 %v112
    %v2053 = vpop.f32.mrf.mxu0
    %v2054 = vadd.f32 %v939, %v2053
    %v2055 = vpop.f32.mrf.mxu0
    %v2056 = vadd.f32 %v943, %v2055
    %2057 = vmatprep.mubr.f32.mxu0 %v119
    %2058 = vmatmul.mubr.f32.gmra.mxu0 %v118
    %v2059 = vpop.f32.mrf.mxu0
    %v2060 = vadd.f32 %v939, %v2059
    %v2061 = vpop.f32.mrf.mxu0
    %v2062 = vadd.f32 %v943, %v2061
    %2063 = vmatprep.mubr.f32.mxu0 %v125
    %2064 = vmatmul.mubr.f32.gmra.mxu0 %v124
    %v2065 = vpop.f32.mrf.mxu0
    %v2066 = vadd.f32 %v939, %v2065
    %v2067 = vpop.f32.mrf.mxu0
    %v2068 = vadd.f32 %v943, %v2067
    %2069 = vmatprep.mubr.f32.mxu0 %v131
    %2070 = vmatmul.mubr.f32.gmra.mxu0 %v130
    %v2071 = vpop.f32.mrf.mxu0
    %v2072 = vadd.f32 %v939, %v2071
    %v2073 = vpop.f32.mrf.mxu0
    %v2074 = vadd.f32 %v943, %v2073
    %2075 = vmatprep.mubr.f32.mxu0 %v137
    %2076 = vmatmul.mubr.f32.gmra.mxu0 %v136
    %v2077 = vpop.f32.mrf.mxu0
    %v2078 = vadd.f32 %v939, %v2077
    %v2079 = vpop.f32.mrf.mxu0
    %v2080 = vadd.f32 %v943, %v2079
    %2081 = vdwg.mxu0
    %2082 = vmatprep.subr.mxu0 %v525
    %2083 = vmatpush1.msra.mxu0 %v524
    %2084 = vmatprep.subr.mxu0 %v517
    %2085 = vmatpush1.msra.mxu0 %v516
    %2086 = vmatprep.subr.mxu0 %v509
    %2087 = vmatpush1.msra.mxu0 %v508
    %2088 = vmatprep.subr.mxu0 %v501
    %2089 = vmatpush1.msra.mxu0 %v500
    %2090 = vmatprep.subr.mxu0 %v493
    %2091 = vmatpush1.msra.mxu0 %v492
    %2092 = vmatprep.subr.mxu0 %v485
    %2093 = vmatpush1.msra.mxu0 %v484
    %2094 = vmatprep.subr.mxu0 %v477
    %2095 = vmatpush1.msra.mxu0 %v476
    %2096 = vmatprep.subr.mxu0 %v469
    %2097 = vmatpush1.msra.mxu0 %v468
    %2098 = vmatprep.subr.mxu0 %v461
    %2099 = vmatpush1.msra.mxu0 %v460
    %2100 = vmatprep.subr.mxu0 %v453
    %2101 = vmatpush1.msra.mxu0 %v452
    %2102 = vmatprep.subr.mxu0 %v445
    %2103 = vmatpush1.msra.mxu0 %v444
    %2104 = vmatprep.subr.mxu0 %v437
    %2105 = vmatpush1.msra.mxu0 %v436
    %2106 = vmatprep.subr.mxu0 %v429
    %2107 = vmatpush1.msra.mxu0 %v428
    %2108 = vmatprep.subr.mxu0 %v421
    %2109 = vmatpush1.msra.mxu0 %v420
    %2110 = vmatprep.subr.mxu0 %v413
    %2111 = vmatpush1.msra.mxu0 %v412
    %2112 = vmatprep.subr.mxu0 %v405
    %2113 = vmatpush1.msra.mxu0 %v404
    %2114 = vmatprep.subr.mxu0 %v653
    %2115 = vmatpush2.msra.mxu0 %v652
    %2116 = vmatprep.subr.mxu0 %v645
    %2117 = vmatpush2.msra.mxu0 %v644
    %2118 = vmatprep.subr.mxu0 %v637
    %2119 = vmatpush2.msra.mxu0 %v636
    %2120 = vmatprep.subr.mxu0 %v629
    %2121 = vmatpush2.msra.mxu0 %v628
    %2122 = vmatprep.subr.mxu0 %v621
    %2123 = vmatpush2.msra.mxu0 %v620
    %2124 = vmatprep.subr.mxu0 %v613
    %2125 = vmatpush2.msra.mxu0 %v612
    %2126 = vmatprep.subr.mxu0 %v605
    %2127 = vmatpush2.msra.mxu0 %v604
    %2128 = vmatprep.subr.mxu0 %v597
    %2129 = vmatpush2.msra.mxu0 %v596
    %2130 = vmatprep.subr.mxu0 %v589
    %2131 = vmatpush2.msra.mxu0 %v588
    %2132 = vmatprep.subr.mxu0 %v581
    %2133 = vmatpush2.msra.mxu0 %v580
    %2134 = vmatprep.subr.mxu0 %v573
    %2135 = vmatpush2.msra.mxu0 %v572
    %2136 = vmatprep.subr.mxu0 %v565
    %2137 = vmatpush2.msra.mxu0 %v564
    %2138 = vmatprep.subr.mxu0 %v557
    %2139 = vmatpush2.msra.mxu0 %v556
    %2140 = vmatprep.subr.mxu0 %v549
    %2141 = vmatpush2.msra.mxu0 %v548
    %2142 = vmatprep.subr.mxu0 %v541
    %2143 = vmatpush2.msra.mxu0 %v540
    %2144 = vmatprep.subr.mxu0 %v533
    %2145 = vmatpush2.msra.mxu0 %v532
    %2146 = vmatprep.mubr.f32.mxu0 %v97
    %2147 = vmatmul.mubr.f32.gmra.mxu0 %v96
    %v2148 = vpop.f32.mrf.mxu0
    %v2149 = vadd.f32 %v2036, %v2148
    %v2150 = vpop.f32.mrf.mxu0
    %v2151 = vadd.f32 %v2038, %v2150
    %2152 = vmatprep.mubr.f32.mxu0 %v103
    %2153 = vmatmul.mubr.f32.gmra.mxu0 %v102
    %v2154 = vpop.f32.mrf.mxu0
    %v2155 = vadd.f32 %v2042, %v2154
    %v2156 = vpop.f32.mrf.mxu0
    %v2157 = vadd.f32 %v2044, %v2156
    %2158 = vmatprep.mubr.f32.mxu0 %v109
    %2159 = vmatmul.mubr.f32.gmra.mxu0 %v108
    %v2160 = vpop.f32.mrf.mxu0
    %v2161 = vadd.f32 %v2048, %v2160
    %v2162 = vpop.f32.mrf.mxu0
    %v2163 = vadd.f32 %v2050, %v2162
    %2164 = vmatprep.mubr.f32.mxu0 %v115
    %2165 = vmatmul.mubr.f32.gmra.mxu0 %v114
    %v2166 = vpop.f32.mrf.mxu0
    %v2167 = vadd.f32 %v2054, %v2166
    %v2168 = vpop.f32.mrf.mxu0
    %v2169 = vadd.f32 %v2056, %v2168
    %2170 = vmatprep.mubr.f32.mxu0 %v121
    %2171 = vmatmul.mubr.f32.gmra.mxu0 %v120
    %v2172 = vpop.f32.mrf.mxu0
    %v2173 = vadd.f32 %v2060, %v2172
    %v2174 = vpop.f32.mrf.mxu0
    %v2175 = vadd.f32 %v2062, %v2174
    %2176 = vmatprep.mubr.f32.mxu0 %v127
    %2177 = vmatmul.mubr.f32.gmra.mxu0 %v126
    %v2178 = vpop.f32.mrf.mxu0
    %v2179 = vadd.f32 %v2066, %v2178
    %v2180 = vpop.f32.mrf.mxu0
    %v2181 = vadd.f32 %v2068, %v2180
    %2182 = vmatprep.mubr.f32.mxu0 %v133
    %2183 = vmatmul.mubr.f32.gmra.mxu0 %v132
    %v2184 = vpop.f32.mrf.mxu0
    %v2185 = vadd.f32 %v2072, %v2184
    %v2186 = vpop.f32.mrf.mxu0
    %v2187 = vadd.f32 %v2074, %v2186
    %2188 = vmatprep.mubr.f32.mxu0 %v139
    %2189 = vmatmul.mubr.f32.gmra.mxu0 %v138
    %v2190 = vpop.f32.mrf.mxu0
    %v2191 = vadd.f32 %v2078, %v2190
    %v2192 = vpop.f32.mrf.mxu0
    %v2193 = vadd.f32 %v2080, %v2192
    %2194 = vdwg.mxu0
    %2195 = vmatprep.subr.mxu0 %v781
    %2196 = vmatpush1.msra.mxu0 %v780
    %2197 = vmatprep.subr.mxu0 %v773
    %2198 = vmatpush1.msra.mxu0 %v772
    %2199 = vmatprep.subr.mxu0 %v765
    %2200 = vmatpush1.msra.mxu0 %v764
    %2201 = vmatprep.subr.mxu0 %v757
    %2202 = vmatpush1.msra.mxu0 %v756
    %2203 = vmatprep.subr.mxu0 %v749
    %2204 = vmatpush1.msra.mxu0 %v748
    %2205 = vmatprep.subr.mxu0 %v741
    %2206 = vmatpush1.msra.mxu0 %v740
    %2207 = vmatprep.subr.mxu0 %v733
    %2208 = vmatpush1.msra.mxu0 %v732
    %2209 = vmatprep.subr.mxu0 %v725
    %2210 = vmatpush1.msra.mxu0 %v724
    %2211 = vmatprep.subr.mxu0 %v717
    %2212 = vmatpush1.msra.mxu0 %v716
    %2213 = vmatprep.subr.mxu0 %v709
    %2214 = vmatpush1.msra.mxu0 %v708
    %2215 = vmatprep.subr.mxu0 %v701
    %2216 = vmatpush1.msra.mxu0 %v700
    %2217 = vmatprep.subr.mxu0 %v693
    %2218 = vmatpush1.msra.mxu0 %v692
    %2219 = vmatprep.subr.mxu0 %v685
    %2220 = vmatpush1.msra.mxu0 %v684
    %2221 = vmatprep.subr.mxu0 %v677
    %2222 = vmatpush1.msra.mxu0 %v676
    %2223 = vmatprep.subr.mxu0 %v669
    %2224 = vmatpush1.msra.mxu0 %v668
    %2225 = vmatprep.subr.mxu0 %v661
    %2226 = vmatpush1.msra.mxu0 %v660
    %2227 = vmatprep.subr.mxu0 %v909
    %2228 = vmatpush2.msra.mxu0 %v908
    %2229 = vmatprep.subr.mxu0 %v901
    %2230 = vmatpush2.msra.mxu0 %v900
    %2231 = vmatprep.subr.mxu0 %v893
    %2232 = vmatpush2.msra.mxu0 %v892
    %2233 = vmatprep.subr.mxu0 %v885
    %2234 = vmatpush2.msra.mxu0 %v884
    %2235 = vmatprep.subr.mxu0 %v877
    %2236 = vmatpush2.msra.mxu0 %v876
    %2237 = vmatprep.subr.mxu0 %v869
    %2238 = vmatpush2.msra.mxu0 %v868
    %2239 = vmatprep.subr.mxu0 %v861
    %2240 = vmatpush2.msra.mxu0 %v860
    %2241 = vmatprep.subr.mxu0 %v853
    %2242 = vmatpush2.msra.mxu0 %v852
    %2243 = vmatprep.subr.mxu0 %v845
    %2244 = vmatpush2.msra.mxu0 %v844
    %2245 = vmatprep.subr.mxu0 %v837
    %2246 = vmatpush2.msra.mxu0 %v836
    %2247 = vmatprep.subr.mxu0 %v829
    %2248 = vmatpush2.msra.mxu0 %v828
    %2249 = vmatprep.subr.mxu0 %v821
    %2250 = vmatpush2.msra.mxu0 %v820
    %2251 = vmatprep.subr.mxu0 %v813
    %2252 = vmatpush2.msra.mxu0 %v812
    %2253 = vmatprep.subr.mxu0 %v805
    %2254 = vmatpush2.msra.mxu0 %v804
    %2255 = vmatprep.subr.mxu0 %v797
    %2256 = vmatpush2.msra.mxu0 %v796
    %2257 = vmatprep.subr.mxu0 %v789
    %2258 = vmatpush2.msra.mxu0 %v788
    %2259 = vmatprep.mubr.f32.mxu0 %v99
    %2260 = vmatmul.mubr.f32.gmra.mxu0 %v98
    %v2261 = vpop.f32.mrf.mxu0
    %v2262 = vadd.f32 %v2149, %v2261
    %v2263 = vpop.f32.mrf.mxu0
    %v2264 = vadd.f32 %v2151, %v2263
    %2265 = vmatprep.mubr.f32.mxu0 %v105
    %2266 = vmatmul.mubr.f32.gmra.mxu0 %v104
    %v2267 = vpop.f32.mrf.mxu0
    %v2268 = vadd.f32 %v2155, %v2267
    %v2269 = vpop.f32.mrf.mxu0
    %v2270 = vadd.f32 %v2157, %v2269
    %2271 = vmatprep.mubr.f32.mxu0 %v111
    %2272 = vmatmul.mubr.f32.gmra.mxu0 %v110
    %v2273 = vpop.f32.mrf.mxu0
    %v2274 = vadd.f32 %v2161, %v2273
    %v2275 = vpop.f32.mrf.mxu0
    %v2276 = vadd.f32 %v2163, %v2275
    %2277 = vmatprep.mubr.f32.mxu0 %v117
    %2278 = vmatmul.mubr.f32.gmra.mxu0 %v116
    %v2279 = vpop.f32.mrf.mxu0
    %v2280 = vadd.f32 %v2167, %v2279
    %v2281 = vpop.f32.mrf.mxu0
    %v2282 = vadd.f32 %v2169, %v2281
    %2283 = vmatprep.mubr.f32.mxu0 %v123
    %2284 = vmatmul.mubr.f32.gmra.mxu0 %v122
    %v2285 = vpop.f32.mrf.mxu0
    %v2286 = vadd.f32 %v2173, %v2285
    %v2287 = vpop.f32.mrf.mxu0
    %v2288 = vadd.f32 %v2175, %v2287
    %2289 = vmatprep.mubr.f32.mxu0 %v129
    %2290 = vmatmul.mubr.f32.gmra.mxu0 %v128
    %v2291 = vpop.f32.mrf.mxu0
    %v2292 = vadd.f32 %v2179, %v2291
    %v2293 = vpop.f32.mrf.mxu0
    %v2294 = vadd.f32 %v2181, %v2293
    %2295 = vmatprep.mubr.f32.mxu0 %v135
    %2296 = vmatmul.mubr.f32.gmra.mxu0 %v134
    %v2297 = vpop.f32.mrf.mxu0
    %v2298 = vadd.f32 %v2185, %v2297
    %v2299 = vpop.f32.mrf.mxu0
    %v2300 = vadd.f32 %v2187, %v2299
    %2301 = vmatprep.mubr.f32.mxu0 %v141
    %2302 = vmatmul.mubr.f32.gmra.mxu0 %v140
    %v2303 = vpop.f32.mrf.mxu0
    %v2304 = vadd.f32 %v2191, %v2303
    %v2305 = vpop.f32.mrf.mxu0
    %v2306 = vadd.f32 %v2193, %v2305
    %2307 = vdwg.mxu0
    %2308 = vst [vmem:[#allocation4] sm:$0xff] %v1245
    %2309 = vst [vmem:[#allocation4 + $0x8] sm:$0xff] %v1247
    %2310 = vst [vmem:[#allocation4 + $0x10] sm:$0xff] %v1584
    %2311 = vst [vmem:[#allocation4 + $0x18] sm:$0xff] %v1586
    %2312 = vst [vmem:[#allocation4 + $0x20] sm:$0xff] %v1923
    %2313 = vst [vmem:[#allocation4 + $0x28] sm:$0xff] %v1925
    %2314 = vst [vmem:[#allocation4 + $0x30] sm:$0xff] %v2262
    %2315 = vst [vmem:[#allocation4 + $0x38] sm:$0xff] %v2264
    %2316 = vst [vmem:[#allocation4 + $0x40] sm:$0xff] %v1251
    %2317 = vst [vmem:[#allocation4 + $0x48] sm:$0xff] %v1253
    %2318 = vst [vmem:[#allocation4 + $0x50] sm:$0xff] %v1590
    %2319 = vst [vmem:[#allocation4 + $0x58] sm:$0xff] %v1592
    %2320 = vst [vmem:[#allocation4 + $0x60] sm:$0xff] %v1929
    %2321 = vst [vmem:[#allocation4 + $0x68] sm:$0xff] %v1931
    %2322 = vst [vmem:[#allocation4 + $0x70] sm:$0xff] %v2268
    %2323 = vst [vmem:[#allocation4 + $0x78] sm:$0xff] %v2270
    %2324 = vst [vmem:[#allocation4 + $0x80] sm:$0xff] %v1257
    %2325 = vst [vmem:[#allocation4 + $0x88] sm:$0xff] %v1259
    %2326 = vst [vmem:[#allocation4 + $0x90] sm:$0xff] %v1596
    %2327 = vst [vmem:[#allocation4 + $0x98] sm:$0xff] %v1598
    %2328 = vst [vmem:[#allocation4 + $0xa0] sm:$0xff] %v1935
    %2329 = vst [vmem:[#allocation4 + $0xa8] sm:$0xff] %v1937
    %2330 = vst [vmem:[#allocation4 + $0xb0] sm:$0xff] %v2274
    %2331 = vst [vmem:[#allocation4 + $0xb8] sm:$0xff] %v2276
    %2332 = vst [vmem:[#allocation4 + $0xc0] sm:$0xff] %v1263
    %2333 = vst [vmem:[#allocation4 + $0xc8] sm:$0xff] %v1265
    %2334 = vst [vmem:[#allocation4 + $0xd0] sm:$0xff] %v1602
    %2335 = vst [vmem:[#allocation4 + $0xd8] sm:$0xff] %v1604
    %2336 = vst [vmem:[#allocation4 + $0xe0] sm:$0xff] %v1941
    %2337 = vst [vmem:[#allocation4 + $0xe8] sm:$0xff] %v1943
    %2338 = vst [vmem:[#allocation4 + $0xf0] sm:$0xff] %v2280
    %2339 = vst [vmem:[#allocation4 + $0xf8] sm:$0xff] %v2282
    %2340 = vst [vmem:[#allocation4 + $0x100] sm:$0xff] %v1269
    %2341 = vst [vmem:[#allocation4 + $0x108] sm:$0xff] %v1271
    %2342 = vst [vmem:[#allocation4 + $0x110] sm:$0xff] %v1608
    %2343 = vst [vmem:[#allocation4 + $0x118] sm:$0xff] %v1610
    %2344 = vst [vmem:[#allocation4 + $0x120] sm:$0xff] %v1947
    %2345 = vst [vmem:[#allocation4 + $0x128] sm:$0xff] %v1949
    %2346 = vst [vmem:[#allocation4 + $0x130] sm:$0xff] %v2286
    %2347 = vst [vmem:[#allocation4 + $0x138] sm:$0xff] %v2288
    %2348 = vst [vmem:[#allocation4 + $0x140] sm:$0xff] %v1275
    %2349 = vst [vmem:[#allocation4 + $0x148] sm:$0xff] %v1277
    %2350 = vst [vmem:[#allocation4 + $0x150] sm:$0xff] %v1614
    %2351 = vst [vmem:[#allocation4 + $0x158] sm:$0xff] %v1616
    %2352 = vst [vmem:[#allocation4 + $0x160] sm:$0xff] %v1953
    %2353 = vst [vmem:[#allocation4 + $0x168] sm:$0xff] %v1955
    %2354 = vst [vmem:[#allocation4 + $0x170] sm:$0xff] %v2292
    %2355 = vst [vmem:[#allocation4 + $0x178] sm:$0xff] %v2294
    %2356 = vst [vmem:[#allocation4 + $0x180] sm:$0xff] %v1281
    %2357 = vst [vmem:[#allocation4 + $0x188] sm:$0xff] %v1283
    %2358 = vst [vmem:[#allocation4 + $0x190] sm:$0xff] %v1620
    %2359 = vst [vmem:[#allocation4 + $0x198] sm:$0xff] %v1622
    %2360 = vst [vmem:[#allocation4 + $0x1a0] sm:$0xff] %v1959
    %2361 = vst [vmem:[#allocation4 + $0x1a8] sm:$0xff] %v1961
    %2362 = vst [vmem:[#allocation4 + $0x1b0] sm:$0xff] %v2298
    %2363 = vst [vmem:[#allocation4 + $0x1b8] sm:$0xff] %v2300
    %2364 = vst [vmem:[#allocation4 + $0x1c0] sm:$0xff] %v1287
    %2365 = vst [vmem:[#allocation4 + $0x1c8] sm:$0xff] %v1289
    %2366 = vst [vmem:[#allocation4 + $0x1d0] sm:$0xff] %v1626
    %2367 = vst [vmem:[#allocation4 + $0x1d8] sm:$0xff] %v1628
    %2368 = vst [vmem:[#allocation4 + $0x1e0] sm:$0xff] %v1965
    %2369 = vst [vmem:[#allocation4 + $0x1e8] sm:$0xff] %v1967
    %2370 = vst [vmem:[#allocation4 + $0x1f0] sm:$0xff] %v2304
    %2371 = vst [vmem:[#allocation4 + $0x1f8] sm:$0xff] %v2306
    %s2372 = smul.u32 8, 32
    %s2373 = smul.u32 %s2372, 8
    %s2374 = sshll.u32 %s2373, 4
    %2375 = dma.done [#allocation5], %s2374
    %v2376 = vld [vmem:[#allocation4] sm:$0xff]
    %v2377 = vld [vmem:[#allocation4 + $0x8] sm:$0xff]
    %v2378 = vld [vmem:[#allocation4 + $0x10] sm:$0xff]
    %v2379 = vld [vmem:[#allocation4 + $0x18] sm:$0xff]
    %v2380 = vld [vmem:[#allocation4 + $0x20] sm:$0xff]
    %v2381 = vld [vmem:[#allocation4 + $0x28] sm:$0xff]
    %v2382 = vld [vmem:[#allocation4 + $0x30] sm:$0xff]
    %v2383 = vld [vmem:[#allocation4 + $0x38] sm:$0xff]
    %v2384 = vld [vmem:[#allocation2] sm:$0xff]
    %v2385 = vld [vmem:[#allocation2 + $0x8] sm:$0xff]
    %v2386 = vld [vmem:[#allocation2 + $0x10] sm:$0xff]
    %v2387 = vld [vmem:[#allocation2 + $0x18] sm:$0xff]
    %v2388 = vld [vmem:[#allocation2 + $0x20] sm:$0xff]
    %v2389 = vld [vmem:[#allocation2 + $0x28] sm:$0xff]
    %v2390 = vld [vmem:[#allocation2 + $0x30] sm:$0xff]
    %v2391 = vld [vmem:[#allocation2 + $0x38] sm:$0xff]
    %v2392 = vld [vmem:[#allocation2 + $0x40] sm:$0xff]
    %v2393 = vld [vmem:[#allocation2 + $0x48] sm:$0xff]
    %v2394 = vld [vmem:[#allocation2 + $0x50] sm:$0xff]
    %v2395 = vld [vmem:[#allocation2 + $0x58] sm:$0xff]
    %v2396 = vld [vmem:[#allocation2 + $0x60] sm:$0xff]
    %v2397 = vld [vmem:[#allocation2 + $0x68] sm:$0xff]
    %v2398 = vld [vmem:[#allocation2 + $0x70] sm:$0xff]
    %v2399 = vld [vmem:[#allocation2 + $0x78] sm:$0xff]
    %v2400 = vld [vmem:[#allocation2 + $0x80] sm:$0xff]
    %v2401 = vld [vmem:[#allocation2 + $0x88] sm:$0xff]
    %v2402 = vld [vmem:[#allocation2 + $0x90] sm:$0xff]
    %v2403 = vld [vmem:[#allocation2 + $0x98] sm:$0xff]
    %v2404 = vld [vmem:[#allocation2 + $0xa0] sm:$0xff]
    %v2405 = vld [vmem:[#allocation2 + $0xa8] sm:$0xff]
    %v2406 = vld [vmem:[#allocation2 + $0xb0] sm:$0xff]
    %v2407 = vld [vmem:[#allocation2 + $0xb8] sm:$0xff]
    %v2408 = vld [vmem:[#allocation2 + $0xc0] sm:$0xff]
    %v2409 = vld [vmem:[#allocation2 + $0xc8] sm:$0xff]
    %v2410 = vld [vmem:[#allocation2 + $0xd0] sm:$0xff]
    %v2411 = vld [vmem:[#allocation2 + $0xd8] sm:$0xff]
    %v2412 = vld [vmem:[#allocation2 + $0xe0] sm:$0xff]
    %v2413 = vld [vmem:[#allocation2 + $0xe8] sm:$0xff]
    %v2414 = vld [vmem:[#allocation2 + $0xf0] sm:$0xff]
    %v2415 = vld [vmem:[#allocation2 + $0xf8] sm:$0xff]
    %v2416 = vld [vmem:[#allocation2 + $0x100] sm:$0xff]
    %v2417 = vld [vmem:[#allocation2 + $0x108] sm:$0xff]
    %v2418 = vld [vmem:[#allocation2 + $0x110] sm:$0xff]
    %v2419 = vld [vmem:[#allocation2 + $0x118] sm:$0xff]
    %v2420 = vld [vmem:[#allocation2 + $0x120] sm:$0xff]
    %v2421 = vld [vmem:[#allocation2 + $0x128] sm:$0xff]
    %v2422 = vld [vmem:[#allocation2 + $0x130] sm:$0xff]
    %v2423 = vld [vmem:[#allocation2 + $0x138] sm:$0xff]
    %v2424 = vld [vmem:[#allocation2 + $0x140] sm:$0xff]
    %v2425 = vld [vmem:[#allocation2 + $0x148] sm:$0xff]
    %v2426 = vld [vmem:[#allocation2 + $0x150] sm:$0xff]
    %v2427 = vld [vmem:[#allocation2 + $0x158] sm:$0xff]
    %v2428 = vld [vmem:[#allocation2 + $0x160] sm:$0xff]
    %v2429 = vld [vmem:[#allocation2 + $0x168] sm:$0xff]
    %v2430 = vld [vmem:[#allocation2 + $0x170] sm:$0xff]
    %v2431 = vld [vmem:[#allocation2 + $0x178] sm:$0xff]
    %v2432 = vld [vmem:[#allocation2 + $0x180] sm:$0xff]
    %v2433 = vld [vmem:[#allocation2 + $0x188] sm:$0xff]
    %v2434 = vld [vmem:[#allocation2 + $0x190] sm:$0xff]
    %v2435 = vld [vmem:[#allocation2 + $0x198] sm:$0xff]
    %v2436 = vld [vmem:[#allocation2 + $0x1a0] sm:$0xff]
    %v2437 = vld [vmem:[#allocation2 + $0x1a8] sm:$0xff]
    %v2438 = vld [vmem:[#allocation2 + $0x1b0] sm:$0xff]
    %v2439 = vld [vmem:[#allocation2 + $0x1b8] sm:$0xff]
    %v2440 = vld [vmem:[#allocation2 + $0x1c0] sm:$0xff]
    %v2441 = vld [vmem:[#allocation2 + $0x1c8] sm:$0xff]
    %v2442 = vld [vmem:[#allocation2 + $0x1d0] sm:$0xff]
    %v2443 = vld [vmem:[#allocation2 + $0x1d8] sm:$0xff]
    %v2444 = vld [vmem:[#allocation2 + $0x1e0] sm:$0xff]
    %v2445 = vld [vmem:[#allocation2 + $0x1e8] sm:$0xff]
    %v2446 = vld [vmem:[#allocation2 + $0x1f0] sm:$0xff]
    %v2447 = vld [vmem:[#allocation2 + $0x1f8] sm:$0xff]
    %v2448 = vld [vmem:[#allocation2 + $0x200] sm:$0xff]
    %v2449 = vld [vmem:[#allocation2 + $0x208] sm:$0xff]
    %v2450 = vld [vmem:[#allocation2 + $0x210] sm:$0xff]
    %v2451 = vld [vmem:[#allocation2 + $0x218] sm:$0xff]
    %v2452 = vld [vmem:[#allocation2 + $0x220] sm:$0xff]
    %v2453 = vld [vmem:[#allocation2 + $0x228] sm:$0xff]
    %v2454 = vld [vmem:[#allocation2 + $0x230] sm:$0xff]
    %v2455 = vld [vmem:[#allocation2 + $0x238] sm:$0xff]
    %v2456 = vld [vmem:[#allocation2 + $0x240] sm:$0xff]
    %v2457 = vld [vmem:[#allocation2 + $0x248] sm:$0xff]
    %v2458 = vld [vmem:[#allocation2 + $0x250] sm:$0xff]
    %v2459 = vld [vmem:[#allocation2 + $0x258] sm:$0xff]
    %v2460 = vld [vmem:[#allocation2 + $0x260] sm:$0xff]
    %v2461 = vld [vmem:[#allocation2 + $0x268] sm:$0xff]
    %v2462 = vld [vmem:[#allocation2 + $0x270] sm:$0xff]
    %v2463 = vld [vmem:[#allocation2 + $0x278] sm:$0xff]
    %v2464 = vld [vmem:[#allocation2 + $0x280] sm:$0xff]
    %v2465 = vld [vmem:[#allocation2 + $0x288] sm:$0xff]
    %v2466 = vld [vmem:[#allocation2 + $0x290] sm:$0xff]
    %v2467 = vld [vmem:[#allocation2 + $0x298] sm:$0xff]
    %v2468 = vld [vmem:[#allocation2 + $0x2a0] sm:$0xff]
    %v2469 = vld [vmem:[#allocation2 + $0x2a8] sm:$0xff]
    %v2470 = vld [vmem:[#allocation2 + $0x2b0] sm:$0xff]
    %v2471 = vld [vmem:[#allocation2 + $0x2b8] sm:$0xff]
    %v2472 = vld [vmem:[#allocation2 + $0x2c0] sm:$0xff]
    %v2473 = vld [vmem:[#allocation2 + $0x2c8] sm:$0xff]
    %v2474 = vld [vmem:[#allocation2 + $0x2d0] sm:$0xff]
    %v2475 = vld [vmem:[#allocation2 + $0x2d8] sm:$0xff]
    %v2476 = vld [vmem:[#allocation2 + $0x2e0] sm:$0xff]
    %v2477 = vld [vmem:[#allocation2 + $0x2e8] sm:$0xff]
    %v2478 = vld [vmem:[#allocation2 + $0x2f0] sm:$0xff]
    %v2479 = vld [vmem:[#allocation2 + $0x2f8] sm:$0xff]
    %v2480 = vld [vmem:[#allocation2 + $0x300] sm:$0xff]
    %v2481 = vld [vmem:[#allocation2 + $0x308] sm:$0xff]
    %v2482 = vld [vmem:[#allocation2 + $0x310] sm:$0xff]
    %v2483 = vld [vmem:[#allocation2 + $0x318] sm:$0xff]
    %v2484 = vld [vmem:[#allocation2 + $0x320] sm:$0xff]
    %v2485 = vld [vmem:[#allocation2 + $0x328] sm:$0xff]
    %v2486 = vld [vmem:[#allocation2 + $0x330] sm:$0xff]
    %v2487 = vld [vmem:[#allocation2 + $0x338] sm:$0xff]
    %v2488 = vld [vmem:[#allocation2 + $0x340] sm:$0xff]
    %v2489 = vld [vmem:[#allocation2 + $0x348] sm:$0xff]
    %v2490 = vld [vmem:[#allocation2 + $0x350] sm:$0xff]
    %v2491 = vld [vmem:[#allocation2 + $0x358] sm:$0xff]
    %v2492 = vld [vmem:[#allocation2 + $0x360] sm:$0xff]
    %v2493 = vld [vmem:[#allocation2 + $0x368] sm:$0xff]
    %v2494 = vld [vmem:[#allocation2 + $0x370] sm:$0xff]
    %v2495 = vld [vmem:[#allocation2 + $0x378] sm:$0xff]
    %v2496 = vld [vmem:[#allocation2 + $0x380] sm:$0xff]
    %v2497 = vld [vmem:[#allocation2 + $0x388] sm:$0xff]
    %v2498 = vld [vmem:[#allocation2 + $0x390] sm:$0xff]
    %v2499 = vld [vmem:[#allocation2 + $0x398] sm:$0xff]
    %v2500 = vld [vmem:[#allocation2 + $0x3a0] sm:$0xff]
    %v2501 = vld [vmem:[#allocation2 + $0x3a8] sm:$0xff]
    %v2502 = vld [vmem:[#allocation2 + $0x3b0] sm:$0xff]
    %v2503 = vld [vmem:[#allocation2 + $0x3b8] sm:$0xff]
    %v2504 = vld [vmem:[#allocation2 + $0x3c0] sm:$0xff]
    %v2505 = vld [vmem:[#allocation2 + $0x3c8] sm:$0xff]
    %v2506 = vld [vmem:[#allocation2 + $0x3d0] sm:$0xff]
    %v2507 = vld [vmem:[#allocation2 + $0x3d8] sm:$0xff]
    %v2508 = vld [vmem:[#allocation2 + $0x3e0] sm:$0xff]
    %v2509 = vld [vmem:[#allocation2 + $0x3e8] sm:$0xff]
    %v2510 = vld [vmem:[#allocation2 + $0x3f0] sm:$0xff]
    %v2511 = vld [vmem:[#allocation2 + $0x3f8] sm:$0xff]
    %v2512 = vld [vmem:[#allocation2 + $0x400] sm:$0xff]
    %v2513 = vld [vmem:[#allocation2 + $0x408] sm:$0xff]
    %v2514 = vld [vmem:[#allocation2 + $0x410] sm:$0xff]
    %v2515 = vld [vmem:[#allocation2 + $0x418] sm:$0xff]
    %v2516 = vld [vmem:[#allocation2 + $0x420] sm:$0xff]
    %v2517 = vld [vmem:[#allocation2 + $0x428] sm:$0xff]
    %v2518 = vld [vmem:[#allocation2 + $0x430] sm:$0xff]
    %v2519 = vld [vmem:[#allocation2 + $0x438] sm:$0xff]
    %v2520 = vld [vmem:[#allocation2 + $0x440] sm:$0xff]
    %v2521 = vld [vmem:[#allocation2 + $0x448] sm:$0xff]
    %v2522 = vld [vmem:[#allocation2 + $0x450] sm:$0xff]
    %v2523 = vld [vmem:[#allocation2 + $0x458] sm:$0xff]
    %v2524 = vld [vmem:[#allocation2 + $0x460] sm:$0xff]
    %v2525 = vld [vmem:[#allocation2 + $0x468] sm:$0xff]
    %v2526 = vld [vmem:[#allocation2 + $0x470] sm:$0xff]
    %v2527 = vld [vmem:[#allocation2 + $0x478] sm:$0xff]
    %v2528 = vld [vmem:[#allocation2 + $0x480] sm:$0xff]
    %v2529 = vld [vmem:[#allocation2 + $0x488] sm:$0xff]
    %v2530 = vld [vmem:[#allocation2 + $0x490] sm:$0xff]
    %v2531 = vld [vmem:[#allocation2 + $0x498] sm:$0xff]
    %v2532 = vld [vmem:[#allocation2 + $0x4a0] sm:$0xff]
    %v2533 = vld [vmem:[#allocation2 + $0x4a8] sm:$0xff]
    %v2534 = vld [vmem:[#allocation2 + $0x4b0] sm:$0xff]
    %v2535 = vld [vmem:[#allocation2 + $0x4b8] sm:$0xff]
    %v2536 = vld [vmem:[#allocation2 + $0x4c0] sm:$0xff]
    %v2537 = vld [vmem:[#allocation2 + $0x4c8] sm:$0xff]
    %v2538 = vld [vmem:[#allocation2 + $0x4d0] sm:$0xff]
    %v2539 = vld [vmem:[#allocation2 + $0x4d8] sm:$0xff]
    %v2540 = vld [vmem:[#allocation2 + $0x4e0] sm:$0xff]
    %v2541 = vld [vmem:[#allocation2 + $0x4e8] sm:$0xff]
    %v2542 = vld [vmem:[#allocation2 + $0x4f0] sm:$0xff]
    %v2543 = vld [vmem:[#allocation2 + $0x4f8] sm:$0xff]
    %v2544 = vld [vmem:[#allocation2 + $0x500] sm:$0xff]
    %v2545 = vld [vmem:[#allocation2 + $0x508] sm:$0xff]
    %v2546 = vld [vmem:[#allocation2 + $0x510] sm:$0xff]
    %v2547 = vld [vmem:[#allocation2 + $0x518] sm:$0xff]
    %v2548 = vld [vmem:[#allocation2 + $0x520] sm:$0xff]
    %v2549 = vld [vmem:[#allocation2 + $0x528] sm:$0xff]
    %v2550 = vld [vmem:[#allocation2 + $0x530] sm:$0xff]
    %v2551 = vld [vmem:[#allocation2 + $0x538] sm:$0xff]
    %v2552 = vld [vmem:[#allocation2 + $0x540] sm:$0xff]
    %v2553 = vld [vmem:[#allocation2 + $0x548] sm:$0xff]
    %v2554 = vld [vmem:[#allocation2 + $0x550] sm:$0xff]
    %v2555 = vld [vmem:[#allocation2 + $0x558] sm:$0xff]
    %v2556 = vld [vmem:[#allocation2 + $0x560] sm:$0xff]
    %v2557 = vld [vmem:[#allocation2 + $0x568] sm:$0xff]
    %v2558 = vld [vmem:[#allocation2 + $0x570] sm:$0xff]
    %v2559 = vld [vmem:[#allocation2 + $0x578] sm:$0xff]
    %v2560 = vld [vmem:[#allocation2 + $0x580] sm:$0xff]
    %v2561 = vld [vmem:[#allocation2 + $0x588] sm:$0xff]
    %v2562 = vld [vmem:[#allocation2 + $0x590] sm:$0xff]
    %v2563 = vld [vmem:[#allocation2 + $0x598] sm:$0xff]
    %v2564 = vld [vmem:[#allocation2 + $0x5a0] sm:$0xff]
    %v2565 = vld [vmem:[#allocation2 + $0x5a8] sm:$0xff]
    %v2566 = vld [vmem:[#allocation2 + $0x5b0] sm:$0xff]
    %v2567 = vld [vmem:[#allocation2 + $0x5b8] sm:$0xff]
    %v2568 = vld [vmem:[#allocation2 + $0x5c0] sm:$0xff]
    %v2569 = vld [vmem:[#allocation2 + $0x5c8] sm:$0xff]
    %v2570 = vld [vmem:[#allocation2 + $0x5d0] sm:$0xff]
    %v2571 = vld [vmem:[#allocation2 + $0x5d8] sm:$0xff]
    %v2572 = vld [vmem:[#allocation2 + $0x5e0] sm:$0xff]
    %v2573 = vld [vmem:[#allocation2 + $0x5e8] sm:$0xff]
    %v2574 = vld [vmem:[#allocation2 + $0x5f0] sm:$0xff]
    %v2575 = vld [vmem:[#allocation2 + $0x5f8] sm:$0xff]
    %v2576 = vld [vmem:[#allocation2 + $0x600] sm:$0xff]
    %v2577 = vld [vmem:[#allocation2 + $0x608] sm:$0xff]
    %v2578 = vld [vmem:[#allocation2 + $0x610] sm:$0xff]
    %v2579 = vld [vmem:[#allocation2 + $0x618] sm:$0xff]
    %v2580 = vld [vmem:[#allocation2 + $0x620] sm:$0xff]
    %v2581 = vld [vmem:[#allocation2 + $0x628] sm:$0xff]
    %v2582 = vld [vmem:[#allocation2 + $0x630] sm:$0xff]
    %v2583 = vld [vmem:[#allocation2 + $0x638] sm:$0xff]
    %v2584 = vld [vmem:[#allocation2 + $0x640] sm:$0xff]
    %v2585 = vld [vmem:[#allocation2 + $0x648] sm:$0xff]
    %v2586 = vld [vmem:[#allocation2 + $0x650] sm:$0xff]
    %v2587 = vld [vmem:[#allocation2 + $0x658] sm:$0xff]
    %v2588 = vld [vmem:[#allocation2 + $0x660] sm:$0xff]
    %v2589 = vld [vmem:[#allocation2 + $0x668] sm:$0xff]
    %v2590 = vld [vmem:[#allocation2 + $0x670] sm:$0xff]
    %v2591 = vld [vmem:[#allocation2 + $0x678] sm:$0xff]
    %v2592 = vld [vmem:[#allocation2 + $0x680] sm:$0xff]
    %v2593 = vld [vmem:[#allocation2 + $0x688] sm:$0xff]
    %v2594 = vld [vmem:[#allocation2 + $0x690] sm:$0xff]
    %v2595 = vld [vmem:[#allocation2 + $0x698] sm:$0xff]
    %v2596 = vld [vmem:[#allocation2 + $0x6a0] sm:$0xff]
    %v2597 = vld [vmem:[#allocation2 + $0x6a8] sm:$0xff]
    %v2598 = vld [vmem:[#allocation2 + $0x6b0] sm:$0xff]
    %v2599 = vld [vmem:[#allocation2 + $0x6b8] sm:$0xff]
    %v2600 = vld [vmem:[#allocation2 + $0x6c0] sm:$0xff]
    %v2601 = vld [vmem:[#allocation2 + $0x6c8] sm:$0xff]
    %v2602 = vld [vmem:[#allocation2 + $0x6d0] sm:$0xff]
    %v2603 = vld [vmem:[#allocation2 + $0x6d8] sm:$0xff]
    %v2604 = vld [vmem:[#allocation2 + $0x6e0] sm:$0xff]
    %v2605 = vld [vmem:[#allocation2 + $0x6e8] sm:$0xff]
    %v2606 = vld [vmem:[#allocation2 + $0x6f0] sm:$0xff]
    %v2607 = vld [vmem:[#allocation2 + $0x6f8] sm:$0xff]
    %v2608 = vld [vmem:[#allocation2 + $0x700] sm:$0xff]
    %v2609 = vld [vmem:[#allocation2 + $0x708] sm:$0xff]
    %v2610 = vld [vmem:[#allocation2 + $0x710] sm:$0xff]
    %v2611 = vld [vmem:[#allocation2 + $0x718] sm:$0xff]
    %v2612 = vld [vmem:[#allocation2 + $0x720] sm:$0xff]
    %v2613 = vld [vmem:[#allocation2 + $0x728] sm:$0xff]
    %v2614 = vld [vmem:[#allocation2 + $0x730] sm:$0xff]
    %v2615 = vld [vmem:[#allocation2 + $0x738] sm:$0xff]
    %v2616 = vld [vmem:[#allocation2 + $0x740] sm:$0xff]
    %v2617 = vld [vmem:[#allocation2 + $0x748] sm:$0xff]
    %v2618 = vld [vmem:[#allocation2 + $0x750] sm:$0xff]
    %v2619 = vld [vmem:[#allocation2 + $0x758] sm:$0xff]
    %v2620 = vld [vmem:[#allocation2 + $0x760] sm:$0xff]
    %v2621 = vld [vmem:[#allocation2 + $0x768] sm:$0xff]
    %v2622 = vld [vmem:[#allocation2 + $0x770] sm:$0xff]
    %v2623 = vld [vmem:[#allocation2 + $0x778] sm:$0xff]
    %v2624 = vld [vmem:[#allocation2 + $0x780] sm:$0xff]
    %v2625 = vld [vmem:[#allocation2 + $0x788] sm:$0xff]
    %v2626 = vld [vmem:[#allocation2 + $0x790] sm:$0xff]
    %v2627 = vld [vmem:[#allocation2 + $0x798] sm:$0xff]
    %v2628 = vld [vmem:[#allocation2 + $0x7a0] sm:$0xff]
    %v2629 = vld [vmem:[#allocation2 + $0x7a8] sm:$0xff]
    %v2630 = vld [vmem:[#allocation2 + $0x7b0] sm:$0xff]
    %v2631 = vld [vmem:[#allocation2 + $0x7b8] sm:$0xff]
    %v2632 = vld [vmem:[#allocation2 + $0x7c0] sm:$0xff]
    %v2633 = vld [vmem:[#allocation2 + $0x7c8] sm:$0xff]
    %v2634 = vld [vmem:[#allocation2 + $0x7d0] sm:$0xff]
    %v2635 = vld [vmem:[#allocation2 + $0x7d8] sm:$0xff]
    %v2636 = vld [vmem:[#allocation2 + $0x7e0] sm:$0xff]
    %v2637 = vld [vmem:[#allocation2 + $0x7e8] sm:$0xff]
    %v2638 = vld [vmem:[#allocation2 + $0x7f0] sm:$0xff]
    %v2639 = vld [vmem:[#allocation2 + $0x7f8] sm:$0xff]
    %2640 = vmatprep.subr.mxu0 %v2505
    %2641 = vmatpush1.msra.mxu0 %v2504
    %2642 = vmatprep.subr.mxu0 %v2497
    %2643 = vmatpush1.msra.mxu0 %v2496
    %2644 = vmatprep.subr.mxu0 %v2489
    %2645 = vmatpush1.msra.mxu0 %v2488
    %2646 = vmatprep.subr.mxu0 %v2481
    %2647 = vmatpush1.msra.mxu0 %v2480
    %2648 = vmatprep.subr.mxu0 %v2473
    %2649 = vmatpush1.msra.mxu0 %v2472
    %2650 = vmatprep.subr.mxu0 %v2465
    %2651 = vmatpush1.msra.mxu0 %v2464
    %2652 = vmatprep.subr.mxu0 %v2457
    %2653 = vmatpush1.msra.mxu0 %v2456
    %2654 = vmatprep.subr.mxu0 %v2449
    %2655 = vmatpush1.msra.mxu0 %v2448
    %2656 = vmatprep.subr.mxu0 %v2441
    %2657 = vmatpush1.msra.mxu0 %v2440
    %2658 = vmatprep.subr.mxu0 %v2433
    %2659 = vmatpush1.msra.mxu0 %v2432
    %2660 = vmatprep.subr.mxu0 %v2425
    %2661 = vmatpush1.msra.mxu0 %v2424
    %2662 = vmatprep.subr.mxu0 %v2417
    %2663 = vmatpush1.msra.mxu0 %v2416
    %2664 = vmatprep.subr.mxu0 %v2409
    %2665 = vmatpush1.msra.mxu0 %v2408
    %2666 = vmatprep.subr.mxu0 %v2401
    %2667 = vmatpush1.msra.mxu0 %v2400
    %2668 = vmatprep.subr.mxu0 %v2393
    %2669 = vmatpush1.msra.mxu0 %v2392
    %2670 = vmatprep.subr.mxu0 %v2385
    %2671 = vmatpush1.msra.mxu0 %v2384
    %2672 = vmatprep.subr.mxu0 %v2633
    %2673 = vmatpush2.msra.mxu0 %v2632
    %2674 = vmatprep.subr.mxu0 %v2625
    %2675 = vmatpush2.msra.mxu0 %v2624
    %2676 = vmatprep.subr.mxu0 %v2617
    %2677 = vmatpush2.msra.mxu0 %v2616
    %2678 = vmatprep.subr.mxu0 %v2609
    %2679 = vmatpush2.msra.mxu0 %v2608
    %2680 = vmatprep.subr.mxu0 %v2601
    %2681 = vmatpush2.msra.mxu0 %v2600
    %2682 = vmatprep.subr.mxu0 %v2593
    %2683 = vmatpush2.msra.mxu0 %v2592
    %2684 = vmatprep.subr.mxu0 %v2585
    %2685 = vmatpush2.msra.mxu0 %v2584
    %2686 = vmatprep.subr.mxu0 %v2577
    %2687 = vmatpush2.msra.mxu0 %v2576
    %2688 = vmatprep.subr.mxu0 %v2569
    %2689 = vmatpush2.msra.mxu0 %v2568
    %2690 = vmatprep.subr.mxu0 %v2561
    %2691 = vmatpush2.msra.mxu0 %v2560
    %2692 = vmatprep.subr.mxu0 %v2553
    %2693 = vmatpush2.msra.mxu0 %v2552
    %2694 = vmatprep.subr.mxu0 %v2545
    %2695 = vmatpush2.msra.mxu0 %v2544
    %2696 = vmatprep.subr.mxu0 %v2537
    %2697 = vmatpush2.msra.mxu0 %v2536
    %2698 = vmatprep.subr.mxu0 %v2529
    %2699 = vmatpush2.msra.mxu0 %v2528
    %2700 = vmatprep.subr.mxu0 %v2521
    %2701 = vmatpush2.msra.mxu0 %v2520
    %2702 = vmatprep.subr.mxu0 %v2513
    %2703 = vmatpush2.msra.mxu0 %v2512
    %2704 = vmatprep.mubr.f32.mxu0 0.0
    %2705 = vmatmul.mubr.f32.gmra.mxu0 0.0
    %v2706 = vpop.f32.mrf.mxu0
    %v2707 = vadd.f32 0.0, %v2706
    %v2708 = vpop.f32.mrf.mxu0
    %v2709 = vadd.f32 0.0, %v2708
    %2710 = vdwg.mxu0
    %2711 = vmatprep.subr.mxu0 %v2507
    %2712 = vmatpush1.msra.mxu0 %v2506
    %2713 = vmatprep.subr.mxu0 %v2499
    %2714 = vmatpush1.msra.mxu0 %v2498
    %2715 = vmatprep.subr.mxu0 %v2491
    %2716 = vmatpush1.msra.mxu0 %v2490
    %2717 = vmatprep.subr.mxu0 %v2483
    %2718 = vmatpush1.msra.mxu0 %v2482
    %2719 = vmatprep.subr.mxu0 %v2475
    %2720 = vmatpush1.msra.mxu0 %v2474
    %2721 = vmatprep.subr.mxu0 %v2467
    %2722 = vmatpush1.msra.mxu0 %v2466
    %2723 = vmatprep.subr.mxu0 %v2459
    %2724 = vmatpush1.msra.mxu0 %v2458
    %2725 = vmatprep.subr.mxu0 %v2451
    %2726 = vmatpush1.msra.mxu0 %v2450
    %2727 = vmatprep.subr.mxu0 %v2443
    %2728 = vmatpush1.msra.mxu0 %v2442
    %2729 = vmatprep.subr.mxu0 %v2435
    %2730 = vmatpush1.msra.mxu0 %v2434
    %2731 = vmatprep.subr.mxu0 %v2427
    %2732 = vmatpush1.msra.mxu0 %v2426
    %2733 = vmatprep.subr.mxu0 %v2419
    %2734 = vmatpush1.msra.mxu0 %v2418
    %2735 = vmatprep.subr.mxu0 %v2411
    %2736 = vmatpush1.msra.mxu0 %v2410
    %2737 = vmatprep.subr.mxu0 %v2403
    %2738 = vmatpush1.msra.mxu0 %v2402
    %2739 = vmatprep.subr.mxu0 %v2395
    %2740 = vmatpush1.msra.mxu0 %v2394
    %2741 = vmatprep.subr.mxu0 %v2387
    %2742 = vmatpush1.msra.mxu0 %v2386
    %2743 = vmatprep.subr.mxu0 %v2635
    %2744 = vmatpush2.msra.mxu0 %v2634
    %2745 = vmatprep.subr.mxu0 %v2627
    %2746 = vmatpush2.msra.mxu0 %v2626
    %2747 = vmatprep.subr.mxu0 %v2619
    %2748 = vmatpush2.msra.mxu0 %v2618
    %2749 = vmatprep.subr.mxu0 %v2611
    %2750 = vmatpush2.msra.mxu0 %v2610
    %2751 = vmatprep.subr.mxu0 %v2603
    %2752 = vmatpush2.msra.mxu0 %v2602
    %2753 = vmatprep.subr.mxu0 %v2595
    %2754 = vmatpush2.msra.mxu0 %v2594
    %2755 = vmatprep.subr.mxu0 %v2587
    %2756 = vmatpush2.msra.mxu0 %v2586
    %2757 = vmatprep.subr.mxu0 %v2579
    %2758 = vmatpush2.msra.mxu0 %v2578
    %2759 = vmatprep.subr.mxu0 %v2571
    %2760 = vmatpush2.msra.mxu0 %v2570
    %2761 = vmatprep.subr.mxu0 %v2563
    %2762 = vmatpush2.msra.mxu0 %v2562
    %2763 = vmatprep.subr.mxu0 %v2555
    %2764 = vmatpush2.msra.mxu0 %v2554
    %2765 = vmatprep.subr.mxu0 %v2547
    %2766 = vmatpush2.msra.mxu0 %v2546
    %2767 = vmatprep.subr.mxu0 %v2539
    %2768 = vmatpush2.msra.mxu0 %v2538
    %2769 = vmatprep.subr.mxu0 %v2531
    %2770 = vmatpush2.msra.mxu0 %v2530
    %2771 = vmatprep.subr.mxu0 %v2523
    %2772 = vmatpush2.msra.mxu0 %v2522
    %2773 = vmatprep.subr.mxu0 %v2515
    %2774 = vmatpush2.msra.mxu0 %v2514
    %2775 = vmatprep.mubr.f32.mxu0 0.0
    %2776 = vmatmul.mubr.f32.gmra.mxu0 0.0
    %v2777 = vpop.f32.mrf.mxu0
    %v2778 = vadd.f32 0.0, %v2777
    %v2779 = vpop.f32.mrf.mxu0
    %v2780 = vadd.f32 0.0, %v2779
    %2781 = vdwg.mxu0
    %2782 = vmatprep.subr.mxu0 %v2509
    %2783 = vmatpush1.msra.mxu0 %v2508
    %2784 = vmatprep.subr.mxu0 %v2501
    %2785 = vmatpush1.msra.mxu0 %v2500
    %2786 = vmatprep.subr.mxu0 %v2493
    %2787 = vmatpush1.msra.mxu0 %v2492
    %2788 = vmatprep.subr.mxu0 %v2485
    %2789 = vmatpush1.msra.mxu0 %v2484
    %2790 = vmatprep.subr.mxu0 %v2477
    %2791 = vmatpush1.msra.mxu0 %v2476
    %2792 = vmatprep.subr.mxu0 %v2469
    %2793 = vmatpush1.msra.mxu0 %v2468
    %2794 = vmatprep.subr.mxu0 %v2461
    %2795 = vmatpush1.msra.mxu0 %v2460
    %2796 = vmatprep.subr.mxu0 %v2453
    %2797 = vmatpush1.msra.mxu0 %v2452
    %2798 = vmatprep.subr.mxu0 %v2445
    %2799 = vmatpush1.msra.mxu0 %v2444
    %2800 = vmatprep.subr.mxu0 %v2437
    %2801 = vmatpush1.msra.mxu0 %v2436
    %2802 = vmatprep.subr.mxu0 %v2429
    %2803 = vmatpush1.msra.mxu0 %v2428
    %2804 = vmatprep.subr.mxu0 %v2421
    %2805 = vmatpush1.msra.mxu0 %v2420
    %2806 = vmatprep.subr.mxu0 %v2413
    %2807 = vmatpush1.msra.mxu0 %v2412
    %2808 = vmatprep.subr.mxu0 %v2405
    %2809 = vmatpush1.msra.mxu0 %v2404
    %2810 = vmatprep.subr.mxu0 %v2397
    %2811 = vmatpush1.msra.mxu0 %v2396
    %2812 = vmatprep.subr.mxu0 %v2389
    %2813 = vmatpush1.msra.mxu0 %v2388
    %2814 = vmatprep.subr.mxu0 %v2637
    %2815 = vmatpush2.msra.mxu0 %v2636
    %2816 = vmatprep.subr.mxu0 %v2629
    %2817 = vmatpush2.msra.mxu0 %v2628
    %2818 = vmatprep.subr.mxu0 %v2621
    %2819 = vmatpush2.msra.mxu0 %v2620
    %2820 = vmatprep.subr.mxu0 %v2613
    %2821 = vmatpush2.msra.mxu0 %v2612
    %2822 = vmatprep.subr.mxu0 %v2605
    %2823 = vmatpush2.msra.mxu0 %v2604
    %2824 = vmatprep.subr.mxu0 %v2597
    %2825 = vmatpush2.msra.mxu0 %v2596
    %2826 = vmatprep.subr.mxu0 %v2589
    %2827 = vmatpush2.msra.mxu0 %v2588
    %2828 = vmatprep.subr.mxu0 %v2581
    %2829 = vmatpush2.msra.mxu0 %v2580
    %2830 = vmatprep.subr.mxu0 %v2573
    %2831 = vmatpush2.msra.mxu0 %v2572
    %2832 = vmatprep.subr.mxu0 %v2565
    %2833 = vmatpush2.msra.mxu0 %v2564
    %2834 = vmatprep.subr.mxu0 %v2557
    %2835 = vmatpush2.msra.mxu0 %v2556
    %2836 = vmatprep.subr.mxu0 %v2549
    %2837 = vmatpush2.msra.mxu0 %v2548
    %2838 = vmatprep.subr.mxu0 %v2541
    %2839 = vmatpush2.msra.mxu0 %v2540
    %2840 = vmatprep.subr.mxu0 %v2533
    %2841 = vmatpush2.msra.mxu0 %v2532
    %2842 = vmatprep.subr.mxu0 %v2525
    %2843 = vmatpush2.msra.mxu0 %v2524
    %2844 = vmatprep.subr.mxu0 %v2517
    %2845 = vmatpush2.msra.mxu0 %v2516
    %2846 = vmatprep.mubr.f32.mxu0 0.0
    %2847 = vmatmul.mubr.f32.gmra.mxu0 0.0
    %v2848 = vpop.f32.mrf.mxu0
    %v2849 = vadd.f32 0.0, %v2848
    %v2850 = vpop.f32.mrf.mxu0
    %v2851 = vadd.f32 0.0, %v2850
    %2852 = vdwg.mxu0
    %2853 = vmatprep.subr.mxu0 %v2511
    %2854 = vmatpush1.msra.mxu0 %v2510
    %2855 = vmatprep.subr.mxu0 %v2503
    %2856 = vmatpush1.msra.mxu0 %v2502
    %2857 = vmatprep.subr.mxu0 %v2495
    %2858 = vmatpush1.msra.mxu0 %v2494
    %2859 = vmatprep.subr.mxu0 %v2487
    %2860 = vmatpush1.msra.mxu0 %v2486
    %2861 = vmatprep.subr.mxu0 %v2479
    %2862 = vmatpush1.msra.mxu0 %v2478
    %2863 = vmatprep.subr.mxu0 %v2471
    %2864 = vmatpush1.msra.mxu0 %v2470
    %2865 = vmatprep.subr.mxu0 %v2463
    %2866 = vmatpush1.msra.mxu0 %v2462
    %2867 = vmatprep.subr.mxu0 %v2455
    %2868 = vmatpush1.msra.mxu0 %v2454
    %2869 = vmatprep.subr.mxu0 %v2447
    %2870 = vmatpush1.msra.mxu0 %v2446
    %2871 = vmatprep.subr.mxu0 %v2439
    %2872 = vmatpush1.msra.mxu0 %v2438
    %2873 = vmatprep.subr.mxu0 %v2431
    %2874 = vmatpush1.msra.mxu0 %v2430
    %2875 = vmatprep.subr.mxu0 %v2423
    %2876 = vmatpush1.msra.mxu0 %v2422
    %2877 = vmatprep.subr.mxu0 %v2415
    %2878 = vmatpush1.msra.mxu0 %v2414
    %2879 = vmatprep.subr.mxu0 %v2407
    %2880 = vmatpush1.msra.mxu0 %v2406
    %2881 = vmatprep.subr.mxu0 %v2399
    %2882 = vmatpush1.msra.mxu0 %v2398
    %2883 = vmatprep.subr.mxu0 %v2391
    %2884 = vmatpush1.msra.mxu0 %v2390
    %2885 = vmatprep.subr.mxu0 %v2639
    %2886 = vmatpush2.msra.mxu0 %v2638
    %2887 = vmatprep.subr.mxu0 %v2631
    %2888 = vmatpush2.msra.mxu0 %v2630
    %2889 = vmatprep.subr.mxu0 %v2623
    %2890 = vmatpush2.msra.mxu0 %v2622
    %2891 = vmatprep.subr.mxu0 %v2615
    %2892 = vmatpush2.msra.mxu0 %v2614
    %2893 = vmatprep.subr.mxu0 %v2607
    %2894 = vmatpush2.msra.mxu0 %v2606
    %2895 = vmatprep.subr.mxu0 %v2599
    %2896 = vmatpush2.msra.mxu0 %v2598
    %2897 = vmatprep.subr.mxu0 %v2591
    %2898 = vmatpush2.msra.mxu0 %v2590
    %2899 = vmatprep.subr.mxu0 %v2583
    %2900 = vmatpush2.msra.mxu0 %v2582
    %2901 = vmatprep.subr.mxu0 %v2575
    %2902 = vmatpush2.msra.mxu0 %v2574
    %2903 = vmatprep.subr.mxu0 %v2567
    %2904 = vmatpush2.msra.mxu0 %v2566
    %2905 = vmatprep.subr.mxu0 %v2559
    %2906 = vmatpush2.msra.mxu0 %v2558
    %2907 = vmatprep.subr.mxu0 %v2551
    %2908 = vmatpush2.msra.mxu0 %v2550
    %2909 = vmatprep.subr.mxu0 %v2543
    %2910 = vmatpush2.msra.mxu0 %v2542
    %2911 = vmatprep.subr.mxu0 %v2535
    %2912 = vmatpush2.msra.mxu0 %v2534
    %2913 = vmatprep.subr.mxu0 %v2527
    %2914 = vmatpush2.msra.mxu0 %v2526
    %2915 = vmatprep.subr.mxu0 %v2519
    %2916 = vmatpush2.msra.mxu0 %v2518
    %2917 = vmatprep.mubr.f32.mxu0 0.0
    %2918 = vmatmul.mubr.f32.gmra.mxu0 0.0
    %v2919 = vpop.f32.mrf.mxu0
    %v2920 = vadd.f32 0.0, %v2919
    %v2921 = vpop.f32.mrf.mxu0
    %v2922 = vadd.f32 0.0, %v2921
    %2923 = vdwg.mxu0
    %v2924 = vadd.f32 %v2376, %v2707
    %v2925 = vadd.f32 %v2377, %v2709
    %v2926 = vadd.f32 %v2378, %v2778
    %v2927 = vadd.f32 %v2379, %v2780
    %v2928 = vadd.f32 %v2380, %v2849
    %v2929 = vadd.f32 %v2381, %v2851
    %v2930 = vadd.f32 %v2382, %v2920
    %v2931 = vadd.f32 %v2383, %v2922
    %v2932 = vxor.u32 %v2924, 2147483648
    %v2933 = vxor.u32 %v2925, 2147483648
    %v2934 = vxor.u32 %v2926, 2147483648
    %v2935 = vxor.u32 %v2927, 2147483648
    %v2936 = vxor.u32 %v2928, 2147483648
    %v2937 = vxor.u32 %v2929, 2147483648
    %v2938 = vmul.f32 %v2932, 1.442695
    %v2939 = vpow.pop %v2938
    %v2940 = vmul.f32 %v2933, 1.442695
    %v2941 = vpow.pop %v2940
    %v2942 = vmul.f32 %v2934, 1.442695
    %v2943 = vpow.pop %v2942
    %v2944 = vmul.f32 %v2935, 1.442695
    %v2945 = vpow.pop %v2944
    %v2946 = vmul.f32 %v2936, 1.442695
    %v2947 = vpow.pop %v2946
    %v2948 = vmul.f32 %v2937, 1.442695
    %v2949 = vpow.pop %v2948
    %v2950 = vadd.f32 %v2939, 1.0
    %v2951 = vadd.f32 %v2941, 1.0
    %v2952 = vadd.f32 %v2943, 1.0
    %v2953 = vadd.f32 %v2945, 1.0
    %v2954 = vadd.f32 %v2947, 1.0
    %v2955 = vadd.f32 %v2949, 1.0
    %v2956 = vrcp.pop %v2950
    %v2957 = vmul.f32 1.0, %v2956
    %v2958 = vrcp.pop %v2951
    %v2959 = vmul.f32 1.0, %v2958
    %v2960 = vrcp.pop %v2952
    %v2961 = vmul.f32 1.0, %v2960
    %v2962 = vrcp.pop %v2953
    %v2963 = vmul.f32 1.0, %v2962
    %v2964 = vrcp.pop %v2954
    %v2965 = vmul.f32 1.0, %v2964
    %v2966 = vrcp.pop %v2955
    %v2967 = vmul.f32 1.0, %v2966
    %v2968 = vtanh.pop %v2930
    %v2969 = vtanh.pop %v2931
    %v2970 = vmul.f32 %v2961, 0.0
    %v2971 = vmul.f32 %v2963, 0.0
    %v2972 = vmul.f32 %v2957, %v2968
    %v2973 = vmul.f32 %v2959, %v2969
    %v2974 = vadd.f32 %v2970, %v2972
    %v2975 = vadd.f32 %v2971, %v2973
    %v2976 = vtanh.pop %v2974
    %v2977 = vtanh.pop %v2975
    %v2978 = vmul.f32 %v2965, %v2976
    %v2979 = vmul.f32 %v2967, %v2977
    %v2980 = vld [vmem:[#allocation4 + $0x40] sm:$0xff]
    %v2981 = vld [vmem:[#allocation4 + $0x48] sm:$0xff]
    %v2982 = vld [vmem:[#allocation4 + $0x50] sm:$0xff]
    %v2983 = vld [vmem:[#allocation4 + $0x58] sm:$0xff]
    %v2984 = vld [vmem:[#allocation4 + $0x60] sm:$0xff]
    %v2985 = vld [vmem:[#allocation4 + $0x68] sm:$0xff]
    %v2986 = vld [vmem:[#allocation4 + $0x70] sm:$0xff]
    %v2987 = vld [vmem:[#allocation4 + $0x78] sm:$0xff]
    %2988 = vmatprep.subr.mxu0 %v2505
    %2989 = vmatpush1.msra.mxu0 %v2504
    %2990 = vmatprep.subr.mxu0 %v2497
    %2991 = vmatpush1.msra.mxu0 %v2496
    %2992 = vmatprep.subr.mxu0 %v2489
    %2993 = vmatpush1.msra.mxu0 %v2488
    %2994 = vmatprep.subr.mxu0 %v2481
    %2995 = vmatpush1.msra.mxu0 %v2480
    %2996 = vmatprep.subr.mxu0 %v2473
    %2997 = vmatpush1.msra.mxu0 %v2472
    %2998 = vmatprep.subr.mxu0 %v2465
    %2999 = vmatpush1.msra.mxu0 %v2464
    %3000 = vmatprep.subr.mxu0 %v2457
    %3001 = vmatpush1.msra.mxu0 %v2456
    %3002 = vmatprep.subr.mxu0 %v2449
    %3003 = vmatpush1.msra.mxu0 %v2448
    %3004 = vmatprep.subr.mxu0 %v2441
    %3005 = vmatpush1.msra.mxu0 %v2440
    %3006 = vmatprep.subr.mxu0 %v2433
    %3007 = vmatpush1.msra.mxu0 %v2432
    %3008 = vmatprep.subr.mxu0 %v2425
    %3009 = vmatpush1.msra.mxu0 %v2424
    %3010 = vmatprep.subr.mxu0 %v2417
    %3011 = vmatpush1.msra.mxu0 %v2416
    %3012 = vmatprep.subr.mxu0 %v2409
    %3013 = vmatpush1.msra.mxu0 %v2408
    %3014 = vmatprep.subr.mxu0 %v2401
    %3015 = vmatpush1.msra.mxu0 %v2400
    %3016 = vmatprep.subr.mxu0 %v2393
    %3017 = vmatpush1.msra.mxu0 %v2392
    %3018 = vmatprep.subr.mxu0 %v2385
    %3019 = vmatpush1.msra.mxu0 %v2384
    %3020 = vmatprep.subr.mxu0 %v2633
    %3021 = vmatpush2.msra.mxu0 %v2632
    %3022 = vmatprep.subr.mxu0 %v2625
    %3023 = vmatpush2.msra.mxu0 %v2624
    %3024 = vmatprep.subr.mxu0 %v2617
    %3025 = vmatpush2.msra.mxu0 %v2616
    %3026 = vmatprep.subr.mxu0 %v2609
    %3027 = vmatpush2.msra.mxu0 %v2608
    %3028 = vmatprep.subr.mxu0 %v2601
    %3029 = vmatpush2.msra.mxu0 %v2600
    %3030 = vmatprep.subr.mxu0 %v2593
    %3031 = vmatpush2.msra.mxu0 %v2592
    %3032 = vmatprep.subr.mxu0 %v2585
    %3033 = vmatpush2.msra.mxu0 %v2584
    %3034 = vmatprep.subr.mxu0 %v2577
    %3035 = vmatpush2.msra.mxu0 %v2576
    %3036 = vmatprep.subr.mxu0 %v2569
    %3037 = vmatpush2.msra.mxu0 %v2568
    %3038 = vmatprep.subr.mxu0 %v2561
    %3039 = vmatpush2.msra.mxu0 %v2560
    %3040 = vmatprep.subr.mxu0 %v2553
    %3041 = vmatpush2.msra.mxu0 %v2552
    %3042 = vmatprep.subr.mxu0 %v2545
    %3043 = vmatpush2.msra.mxu0 %v2544
    %3044 = vmatprep.subr.mxu0 %v2537
    %3045 = vmatpush2.msra.mxu0 %v2536
    %3046 = vmatprep.subr.mxu0 %v2529
    %3047 = vmatpush2.msra.mxu0 %v2528
    %3048 = vmatprep.subr.mxu0 %v2521
    %3049 = vmatpush2.msra.mxu0 %v2520
    %3050 = vmatprep.subr.mxu0 %v2513
    %3051 = vmatpush2.msra.mxu0 %v2512
    %3052 = vmatprep.mubr.f32.mxu0 %v2979
    %3053 = vmatmul.mubr.f32.gmra.mxu0 %v2978
    %v3054 = vpop.f32.mrf.mxu0
    %v3055 = vadd.f32 0.0, %v3054
    %v3056 = vpop.f32.mrf.mxu0
    %v3057 = vadd.f32 0.0, %v3056
    %3058 = vdwg.mxu0
    %3059 = vmatprep.subr.mxu0 %v2507
    %3060 = vmatpush1.msra.mxu0 %v2506
    %3061 = vmatprep.subr.mxu0 %v2499
    %3062 = vmatpush1.msra.mxu0 %v2498
    %3063 = vmatprep.subr.mxu0 %v2491
    %3064 = vmatpush1.msra.mxu0 %v2490
    %3065 = vmatprep.subr.mxu0 %v2483
    %3066 = vmatpush1.msra.mxu0 %v2482
    %3067 = vmatprep.subr.mxu0 %v2475
    %3068 = vmatpush1.msra.mxu0 %v2474
    %3069 = vmatprep.subr.mxu0 %v2467
    %3070 = vmatpush1.msra.mxu0 %v2466
    %3071 = vmatprep.subr.mxu0 %v2459
    %3072 = vmatpush1.msra.mxu0 %v2458
    %3073 = vmatprep.subr.mxu0 %v2451
    %3074 = vmatpush1.msra.mxu0 %v2450
    %3075 = vmatprep.subr.mxu0 %v2443
    %3076 = vmatpush1.msra.mxu0 %v2442
    %3077 = vmatprep.subr.mxu0 %v2435
    %3078 = vmatpush1.msra.mxu0 %v2434
    %3079 = vmatprep.subr.mxu0 %v2427
    %3080 = vmatpush1.msra.mxu0 %v2426
    %3081 = vmatprep.subr.mxu0 %v2419
    %3082 = vmatpush1.msra.mxu0 %v2418
    %3083 = vmatprep.subr.mxu0 %v2411
    %3084 = vmatpush1.msra.mxu0 %v2410
    %3085 = vmatprep.subr.mxu0 %v2403
    %3086 = vmatpush1.msra.mxu0 %v2402
    %3087 = vmatprep.subr.mxu0 %v2395
    %3088 = vmatpush1.msra.mxu0 %v2394
    %3089 = vmatprep.subr.mxu0 %v2387
    %3090 = vmatpush1.msra.mxu0 %v2386
    %3091 = vmatprep.subr.mxu0 %v2635
    %3092 = vmatpush2.msra.mxu0 %v2634
    %3093 = vmatprep.subr.mxu0 %v2627
    %3094 = vmatpush2.msra.mxu0 %v2626
    %3095 = vmatprep.subr.mxu0 %v2619
    %3096 = vmatpush2.msra.mxu0 %v2618
    %3097 = vmatprep.subr.mxu0 %v2611
    %3098 = vmatpush2.msra.mxu0 %v2610
    %3099 = vmatprep.subr.mxu0 %v2603
    %3100 = vmatpush2.msra.mxu0 %v2602
    %3101 = vmatprep.subr.mxu0 %v2595
    %3102 = vmatpush2.msra.mxu0 %v2594
    %3103 = vmatprep.subr.mxu0 %v2587
    %3104 = vmatpush2.msra.mxu0 %v2586
    %3105 = vmatprep.subr.mxu0 %v2579
    %3106 = vmatpush2.msra.mxu0 %v2578
    %3107 = vmatprep.subr.mxu0 %v2571
    %3108 = vmatpush2.msra.mxu0 %v2570
    %3109 = vmatprep.subr.mxu0 %v2563
    %3110 = vmatpush2.msra.mxu0 %v2562
    %3111 = vmatprep.subr.mxu0 %v2555
    %3112 = vmatpush2.msra.mxu0 %v2554
    %3113 = vmatprep.subr.mxu0 %v2547
    %3114 = vmatpush2.msra.mxu0 %v2546
    %3115 = vmatprep.subr.mxu0 %v2539
    %3116 = vmatpush2.msra.mxu0 %v2538
    %3117 = vmatprep.subr.mxu0 %v2531
    %3118 = vmatpush2.msra.mxu0 %v2530
    %3119 = vmatprep.subr.mxu0 %v2523
    %3120 = vmatpush2.msra.mxu0 %v2522
    %3121 = vmatprep.subr.mxu0 %v2515
    %3122 = vmatpush2.msra.mxu0 %v2514
    %3123 = vmatprep.mubr.f32.mxu0 %v2979
    %3124 = vmatmul.mubr.f32.gmra.mxu0 %v2978
    %v3125 = vpop.f32.mrf.mxu0
    %v3126 = vadd.f32 0.0, %v3125
    %v3127 = vpop.f32.mrf.mxu0
    %v3128 = vadd.f32 0.0, %v3127
    %3129 = vdwg.mxu0
    %3130 = vmatprep.subr.mxu0 %v2509
    %3131 = vmatpush1.msra.mxu0 %v2508
    %3132 = vmatprep.subr.mxu0 %v2501
    %3133 = vmatpush1.msra.mxu0 %v2500
    %3134 = vmatprep.subr.mxu0 %v2493
    %3135 = vmatpush1.msra.mxu0 %v2492
    %3136 = vmatprep.subr.mxu0 %v2485
    %3137 = vmatpush1.msra.mxu0 %v2484
    %3138 = vmatprep.subr.mxu0 %v2477
    %3139 = vmatpush1.msra.mxu0 %v2476
    %3140 = vmatprep.subr.mxu0 %v2469
    %3141 = vmatpush1.msra.mxu0 %v2468
    %3142 = vmatprep.subr.mxu0 %v2461
    %3143 = vmatpush1.msra.mxu0 %v2460
    %3144 = vmatprep.subr.mxu0 %v2453
    %3145 = vmatpush1.msra.mxu0 %v2452
    %3146 = vmatprep.subr.mxu0 %v2445
    %3147 = vmatpush1.msra.mxu0 %v2444
    %3148 = vmatprep.subr.mxu0 %v2437
    %3149 = vmatpush1.msra.mxu0 %v2436
    %3150 = vmatprep.subr.mxu0 %v2429
    %3151 = vmatpush1.msra.mxu0 %v2428
    %3152 = vmatprep.subr.mxu0 %v2421
    %3153 = vmatpush1.msra.mxu0 %v2420
    %3154 = vmatprep.subr.mxu0 %v2413
    %3155 = vmatpush1.msra.mxu0 %v2412
    %3156 = vmatprep.subr.mxu0 %v2405
    %3157 = vmatpush1.msra.mxu0 %v2404
    %3158 = vmatprep.subr.mxu0 %v2397
    %3159 = vmatpush1.msra.mxu0 %v2396
    %3160 = vmatprep.subr.mxu0 %v2389
    %3161 = vmatpush1.msra.mxu0 %v2388
    %3162 = vmatprep.subr.mxu0 %v2637
    %3163 = vmatpush2.msra.mxu0 %v2636
    %3164 = vmatprep.subr.mxu0 %v2629
    %3165 = vmatpush2.msra.mxu0 %v2628
    %3166 = vmatprep.subr.mxu0 %v2621
    %3167 = vmatpush2.msra.mxu0 %v2620
    %3168 = vmatprep.subr.mxu0 %v2613
    %3169 = vmatpush2.msra.mxu0 %v2612
    %3170 = vmatprep.subr.mxu0 %v2605
    %3171 = vmatpush2.msra.mxu0 %v2604
    %3172 = vmatprep.subr.mxu0 %v2597
    %3173 = vmatpush2.msra.mxu0 %v2596
    %3174 = vmatprep.subr.mxu0 %v2589
    %3175 = vmatpush2.msra.mxu0 %v2588
    %3176 = vmatprep.subr.mxu0 %v2581
    %3177 = vmatpush2.msra.mxu0 %v2580
    %3178 = vmatprep.subr.mxu0 %v2573
    %3179 = vmatpush2.msra.mxu0 %v2572
    %3180 = vmatprep.subr.mxu0 %v2565
    %3181 = vmatpush2.msra.mxu0 %v2564
    %3182 = vmatprep.subr.mxu0 %v2557
    %3183 = vmatpush2.msra.mxu0 %v2556
    %3184 = vmatprep.subr.mxu0 %v2549
    %3185 = vmatpush2.msra.mxu0 %v2548
    %3186 = vmatprep.subr.mxu0 %v2541
    %3187 = vmatpush2.msra.mxu0 %v2540
    %3188 = vmatprep.subr.mxu0 %v2533
    %3189 = vmatpush2.msra.mxu0 %v2532
    %3190 = vmatprep.subr.mxu0 %v2525
    %3191 = vmatpush2.msra.mxu0 %v2524
    %3192 = vmatprep.subr.mxu0 %v2517
    %3193 = vmatpush2.msra.mxu0 %v2516
    %3194 = vmatprep.mubr.f32.mxu0 %v2979
    %3195 = vmatmul.mubr.f32.gmra.mxu0 %v2978
    %v3196 = vpop.f32.mrf.mxu0
    %v3197 = vadd.f32 0.0, %v3196
    %v3198 = vpop.f32.mrf.mxu0
    %v3199 = vadd.f32 0.0, %v3198
    %3200 = vdwg.mxu0
    %3201 = vmatprep.subr.mxu0 %v2511
    %3202 = vmatpush1.msra.mxu0 %v2510
    %3203 = vmatprep.subr.mxu0 %v2503
    %3204 = vmatpush1.msra.mxu0 %v2502
    %3205 = vmatprep.subr.mxu0 %v2495
    %3206 = vmatpush1.msra.mxu0 %v2494
    %3207 = vmatprep.subr.mxu0 %v2487
    %3208 = vmatpush1.msra.mxu0 %v2486
    %3209 = vmatprep.subr.mxu0 %v2479
    %3210 = vmatpush1.msra.mxu0 %v2478
    %3211 = vmatprep.subr.mxu0 %v2471
    %3212 = vmatpush1.msra.mxu0 %v2470
    %3213 = vmatprep.subr.mxu0 %v2463
    %3214 = vmatpush1.msra.mxu0 %v2462
    %3215 = vmatprep.subr.mxu0 %v2455
    %3216 = vmatpush1.msra.mxu0 %v2454
    %3217 = vmatprep.subr.mxu0 %v2447
    %3218 = vmatpush1.msra.mxu0 %v2446
    %3219 = vmatprep.subr.mxu0 %v2439
    %3220 = vmatpush1.msra.mxu0 %v2438
    %3221 = vmatprep.subr.mxu0 %v2431
    %3222 = vmatpush1.msra.mxu0 %v2430
    %3223 = vmatprep.subr.mxu0 %v2423
    %3224 = vmatpush1.msra.mxu0 %v2422
    %3225 = vmatprep.subr.mxu0 %v2415
    %3226 = vmatpush1.msra.mxu0 %v2414
    %3227 = vmatprep.subr.mxu0 %v2407
    %3228 = vmatpush1.msra.mxu0 %v2406
    %3229 = vmatprep.subr.mxu0 %v2399
    %3230 = vmatpush1.msra.mxu0 %v2398
    %3231 = vmatprep.subr.mxu0 %v2391
    %3232 = vmatpush1.msra.mxu0 %v2390
    %3233 = vmatprep.subr.mxu0 %v2639
    %3234 = vmatpush2.msra.mxu0 %v2638
    %3235 = vmatprep.subr.mxu0 %v2631
    %3236 = vmatpush2.msra.mxu0 %v2630
    %3237 = vmatprep.subr.mxu0 %v2623
    %3238 = vmatpush2.msra.mxu0 %v2622
    %3239 = vmatprep.subr.mxu0 %v2615
    %3240 = vmatpush2.msra.mxu0 %v2614
    %3241 = vmatprep.subr.mxu0 %v2607
    %3242 = vmatpush2.msra.mxu0 %v2606
    %3243 = vmatprep.subr.mxu0 %v2599
    %3244 = vmatpush2.msra.mxu0 %v2598
    %3245 = vmatprep.subr.mxu0 %v2591
    %3246 = vmatpush2.msra.mxu0 %v2590
    %3247 = vmatprep.subr.mxu0 %v2583
    %3248 = vmatpush2.msra.mxu0 %v2582
    %3249 = vmatprep.subr.mxu0 %v2575
    %3250 = vmatpush2.msra.mxu0 %v2574
    %3251 = vmatprep.subr.mxu0 %v2567
    %3252 = vmatpush2.msra.mxu0 %v2566
    %3253 = vmatprep.subr.mxu0 %v2559
    %3254 = vmatpush2.msra.mxu0 %v2558
    %3255 = vmatprep.subr.mxu0 %v2551
    %3256 = vmatpush2.msra.mxu0 %v2550
    %3257 = vmatprep.subr.mxu0 %v2543
    %3258 = vmatpush2.msra.mxu0 %v2542
    %3259 = vmatprep.subr.mxu0 %v2535
    %3260 = vmatpush2.msra.mxu0 %v2534
    %3261 = vmatprep.subr.mxu0 %v2527
    %3262 = vmatpush2.msra.mxu0 %v2526
    %3263 = vmatprep.subr.mxu0 %v2519
    %3264 = vmatpush2.msra.mxu0 %v2518
    %3265 = vmatprep.mubr.f32.mxu0 %v2979
    %3266 = vmatmul.mubr.f32.gmra.mxu0 %v2978
    %v3267 = vpop.f32.mrf.mxu0
    %v3268 = vadd.f32 0.0, %v3267
    %v3269 = vpop.f32.mrf.mxu0
    %v3270 = vadd.f32 0.0, %v3269
    %3271 = vdwg.mxu0
    %v3272 = vadd.f32 %v2980, %v3055
    %v3273 = vadd.f32 %v2981, %v3057
    %v3274 = vadd.f32 %v2982, %v3126
    %v3275 = vadd.f32 %v2983, %v3128
    %v3276 = vadd.f32 %v2984, %v3197
    %v3277 = vadd.f32 %v2985, %v3199
    %v3278 = vadd.f32 %v2986, %v3268
    %v3279 = vadd.f32 %v2987, %v3270
    %v3280 = vxor.u32 %v3272, 2147483648
    %v3281 = vxor.u32 %v3273, 2147483648
    %v3282 = vxor.u32 %v3274, 2147483648
    %v3283 = vxor.u32 %v3275, 2147483648
    %v3284 = vxor.u32 %v3276, 2147483648
    %v3285 = vxor.u32 %v3277, 2147483648
    %v3286 = vmul.f32 %v3280, 1.442695
    %v3287 = vpow.pop %v3286
    %v3288 = vmul.f32 %v3281, 1.442695
    %v3289 = vpow.pop %v3288
    %v3290 = vmul.f32 %v3282, 1.442695
    %v3291 = vpow.pop %v3290
    %v3292 = vmul.f32 %v3283, 1.442695
    %v3293 = vpow.pop %v3292
    %v3294 = vmul.f32 %v3284, 1.442695
    %v3295 = vpow.pop %v3294
    %v3296 = vmul.f32 %v3285, 1.442695
    %v3297 = vpow.pop %v3296
    %v3298 = vadd.f32 %v3287, 1.0
    %v3299 = vadd.f32 %v3289, 1.0
    %v3300 = vadd.f32 %v3291, 1.0
    %v3301 = vadd.f32 %v3293, 1.0
    %v3302 = vadd.f32 %v3295, 1.0
    %v3303 = vadd.f32 %v3297, 1.0
    %v3304 = vrcp.pop %v3298
    %v3305 = vmul.f32 1.0, %v3304
    %v3306 = vrcp.pop %v3299
    %v3307 = vmul.f32 1.0, %v3306
    %v3308 = vrcp.pop %v3300
    %v3309 = vmul.f32 1.0, %v3308
    %v3310 = vrcp.pop %v3301
    %v3311 = vmul.f32 1.0, %v3310
    %v3312 = vrcp.pop %v3302
    %v3313 = vmul.f32 1.0, %v3312
    %v3314 = vrcp.pop %v3303
    %v3315 = vmul.f32 1.0, %v3314
    %v3316 = vtanh.pop %v3278
    %v3317 = vtanh.pop %v3279
    %v3318 = vmul.f32 %v3309, %v2974
    %v3319 = vmul.f32 %v3311, %v2975
    %v3320 = vmul.f32 %v3305, %v3316
    %v3321 = vmul.f32 %v3307, %v3317
    %v3322 = vadd.f32 %v3318, %v3320
    %v3323 = vadd.f32 %v3319, %v3321
    %v3324 = vtanh.pop %v3322
    %v3325 = vtanh.pop %v3323
    %v3326 = vmul.f32 %v3313, %v3324
    %v3327 = vmul.f32 %v3315, %v3325
    %v3328 = vmax.f32 %v2978, %v3326
    %v3329 = vmax.f32 %v2979, %v3327
    %v3330 = vld [vmem:[#allocation4 + $0x80] sm:$0xff]
    %v3331 = vld [vmem:[#allocation4 + $0x88] sm:$0xff]
    %v3332 = vld [vmem:[#allocation4 + $0x90] sm:$0xff]
    %v3333 = vld [vmem:[#allocation4 + $0x98] sm:$0xff]
    %v3334 = vld [vmem:[#allocation4 + $0xa0] sm:$0xff]
    %v3335 = vld [vmem:[#allocation4 + $0xa8] sm:$0xff]
    %v3336 = vld [vmem:[#allocation4 + $0xb0] sm:$0xff]
    %v3337 = vld [vmem:[#allocation4 + $0xb8] sm:$0xff]
    %3338 = vmatprep.subr.mxu0 %v2505
    %3339 = vmatpush1.msra.mxu0 %v2504
    %3340 = vmatprep.subr.mxu0 %v2497
    %3341 = vmatpush1.msra.mxu0 %v2496
    %3342 = vmatprep.subr.mxu0 %v2489
    %3343 = vmatpush1.msra.mxu0 %v2488
    %3344 = vmatprep.subr.mxu0 %v2481
    %3345 = vmatpush1.msra.mxu0 %v2480
    %3346 = vmatprep.subr.mxu0 %v2473
    %3347 = vmatpush1.msra.mxu0 %v2472
    %3348 = vmatprep.subr.mxu0 %v2465
    %3349 = vmatpush1.msra.mxu0 %v2464
    %3350 = vmatprep.subr.mxu0 %v2457
    %3351 = vmatpush1.msra.mxu0 %v2456
    %3352 = vmatprep.subr.mxu0 %v2449
    %3353 = vmatpush1.msra.mxu0 %v2448
    %3354 = vmatprep.subr.mxu0 %v2441
    %3355 = vmatpush1.msra.mxu0 %v2440
    %3356 = vmatprep.subr.mxu0 %v2433
    %3357 = vmatpush1.msra.mxu0 %v2432
    %3358 = vmatprep.subr.mxu0 %v2425
    %3359 = vmatpush1.msra.mxu0 %v2424
    %3360 = vmatprep.subr.mxu0 %v2417
    %3361 = vmatpush1.msra.mxu0 %v2416
    %3362 = vmatprep.subr.mxu0 %v2409
    %3363 = vmatpush1.msra.mxu0 %v2408
    %3364 = vmatprep.subr.mxu0 %v2401
    %3365 = vmatpush1.msra.mxu0 %v2400
    %3366 = vmatprep.subr.mxu0 %v2393
    %3367 = vmatpush1.msra.mxu0 %v2392
    %3368 = vmatprep.subr.mxu0 %v2385
    %3369 = vmatpush1.msra.mxu0 %v2384
    %3370 = vmatprep.subr.mxu0 %v2633
    %3371 = vmatpush2.msra.mxu0 %v2632
    %3372 = vmatprep.subr.mxu0 %v2625
    %3373 = vmatpush2.msra.mxu0 %v2624
    %3374 = vmatprep.subr.mxu0 %v2617
    %3375 = vmatpush2.msra.mxu0 %v2616
    %3376 = vmatprep.subr.mxu0 %v2609
    %3377 = vmatpush2.msra.mxu0 %v2608
    %3378 = vmatprep.subr.mxu0 %v2601
    %3379 = vmatpush2.msra.mxu0 %v2600
    %3380 = vmatprep.subr.mxu0 %v2593
    %3381 = vmatpush2.msra.mxu0 %v2592
    %3382 = vmatprep.subr.mxu0 %v2585
    %3383 = vmatpush2.msra.mxu0 %v2584
    %3384 = vmatprep.subr.mxu0 %v2577
    %3385 = vmatpush2.msra.mxu0 %v2576
    %3386 = vmatprep.subr.mxu0 %v2569
    %3387 = vmatpush2.msra.mxu0 %v2568
    %3388 = vmatprep.subr.mxu0 %v2561
    %3389 = vmatpush2.msra.mxu0 %v2560
    %3390 = vmatprep.subr.mxu0 %v2553
    %3391 = vmatpush2.msra.mxu0 %v2552
    %3392 = vmatprep.subr.mxu0 %v2545
    %3393 = vmatpush2.msra.mxu0 %v2544
    %3394 = vmatprep.subr.mxu0 %v2537
    %3395 = vmatpush2.msra.mxu0 %v2536
    %3396 = vmatprep.subr.mxu0 %v2529
    %3397 = vmatpush2.msra.mxu0 %v2528
    %3398 = vmatprep.subr.mxu0 %v2521
    %3399 = vmatpush2.msra.mxu0 %v2520
    %3400 = vmatprep.subr.mxu0 %v2513
    %3401 = vmatpush2.msra.mxu0 %v2512
    %3402 = vmatprep.mubr.f32.mxu0 %v3327
    %3403 = vmatmul.mubr.f32.gmra.mxu0 %v3326
    %v3404 = vpop.f32.mrf.mxu0
    %v3405 = vadd.f32 0.0, %v3404
    %v3406 = vpop.f32.mrf.mxu0
    %v3407 = vadd.f32 0.0, %v3406
    %3408 = vdwg.mxu0
    %3409 = vmatprep.subr.mxu0 %v2507
    %3410 = vmatpush1.msra.mxu0 %v2506
    %3411 = vmatprep.subr.mxu0 %v2499
    %3412 = vmatpush1.msra.mxu0 %v2498
    %3413 = vmatprep.subr.mxu0 %v2491
    %3414 = vmatpush1.msra.mxu0 %v2490
    %3415 = vmatprep.subr.mxu0 %v2483
    %3416 = vmatpush1.msra.mxu0 %v2482
    %3417 = vmatprep.subr.mxu0 %v2475
    %3418 = vmatpush1.msra.mxu0 %v2474
    %3419 = vmatprep.subr.mxu0 %v2467
    %3420 = vmatpush1.msra.mxu0 %v2466
    %3421 = vmatprep.subr.mxu0 %v2459
    %3422 = vmatpush1.msra.mxu0 %v2458
    %3423 = vmatprep.subr.mxu0 %v2451
    %3424 = vmatpush1.msra.mxu0 %v2450
    %3425 = vmatprep.subr.mxu0 %v2443
    %3426 = vmatpush1.msra.mxu0 %v2442
    %3427 = vmatprep.subr.mxu0 %v2435
    %3428 = vmatpush1.msra.mxu0 %v2434
    %3429 = vmatprep.subr.mxu0 %v2427
    %3430 = vmatpush1.msra.mxu0 %v2426
    %3431 = vmatprep.subr.mxu0 %v2419
    %3432 = vmatpush1.msra.mxu0 %v2418
    %3433 = vmatprep.subr.mxu0 %v2411
    %3434 = vmatpush1.msra.mxu0 %v2410
    %3435 = vmatprep.subr.mxu0 %v2403
    %3436 = vmatpush1.msra.mxu0 %v2402
    %3437 = vmatprep.subr.mxu0 %v2395
    %3438 = vmatpush1.msra.mxu0 %v2394
    %3439 = vmatprep.subr.mxu0 %v2387
    %3440 = vmatpush1.msra.mxu0 %v2386
    %3441 = vmatprep.subr.mxu0 %v2635
    %3442 = vmatpush2.msra.mxu0 %v2634
    %3443 = vmatprep.subr.mxu0 %v2627
    %3444 = vmatpush2.msra.mxu0 %v2626
    %3445 = vmatprep.subr.mxu0 %v2619
    %3446 = vmatpush2.msra.mxu0 %v2618
    %3447 = vmatprep.subr.mxu0 %v2611
    %3448 = vmatpush2.msra.mxu0 %v2610
    %3449 = vmatprep.subr.mxu0 %v2603
    %3450 = vmatpush2.msra.mxu0 %v2602
    %3451 = vmatprep.subr.mxu0 %v2595
    %3452 = vmatpush2.msra.mxu0 %v2594
    %3453 = vmatprep.subr.mxu0 %v2587
    %3454 = vmatpush2.msra.mxu0 %v2586
    %3455 = vmatprep.subr.mxu0 %v2579
    %3456 = vmatpush2.msra.mxu0 %v2578
    %3457 = vmatprep.subr.mxu0 %v2571
    %3458 = vmatpush2.msra.mxu0 %v2570
    %3459 = vmatprep.subr.mxu0 %v2563
    %3460 = vmatpush2.msra.mxu0 %v2562
    %3461 = vmatprep.subr.mxu0 %v2555
    %3462 = vmatpush2.msra.mxu0 %v2554
    %3463 = vmatprep.subr.mxu0 %v2547
    %3464 = vmatpush2.msra.mxu0 %v2546
    %3465 = vmatprep.subr.mxu0 %v2539
    %3466 = vmatpush2.msra.mxu0 %v2538
    %3467 = vmatprep.subr.mxu0 %v2531
    %3468 = vmatpush2.msra.mxu0 %v2530
    %3469 = vmatprep.subr.mxu0 %v2523
    %3470 = vmatpush2.msra.mxu0 %v2522
    %3471 = vmatprep.subr.mxu0 %v2515
    %3472 = vmatpush2.msra.mxu0 %v2514
    %3473 = vmatprep.mubr.f32.mxu0 %v3327
    %3474 = vmatmul.mubr.f32.gmra.mxu0 %v3326
    %v3475 = vpop.f32.mrf.mxu0
    %v3476 = vadd.f32 0.0, %v3475
    %v3477 = vpop.f32.mrf.mxu0
    %v3478 = vadd.f32 0.0, %v3477
    %3479 = vdwg.mxu0
    %3480 = vmatprep.subr.mxu0 %v2509
    %3481 = vmatpush1.msra.mxu0 %v2508
    %3482 = vmatprep.subr.mxu0 %v2501
    %3483 = vmatpush1.msra.mxu0 %v2500
    %3484 = vmatprep.subr.mxu0 %v2493
    %3485 = vmatpush1.msra.mxu0 %v2492
    %3486 = vmatprep.subr.mxu0 %v2485
    %3487 = vmatpush1.msra.mxu0 %v2484
    %3488 = vmatprep.subr.mxu0 %v2477
    %3489 = vmatpush1.msra.mxu0 %v2476
    %3490 = vmatprep.subr.mxu0 %v2469
    %3491 = vmatpush1.msra.mxu0 %v2468
    %3492 = vmatprep.subr.mxu0 %v2461
    %3493 = vmatpush1.msra.mxu0 %v2460
    %3494 = vmatprep.subr.mxu0 %v2453
    %3495 = vmatpush1.msra.mxu0 %v2452
    %3496 = vmatprep.subr.mxu0 %v2445
    %3497 = vmatpush1.msra.mxu0 %v2444
    %3498 = vmatprep.subr.mxu0 %v2437
    %3499 = vmatpush1.msra.mxu0 %v2436
    %3500 = vmatprep.subr.mxu0 %v2429
    %3501 = vmatpush1.msra.mxu0 %v2428
    %3502 = vmatprep.subr.mxu0 %v2421
    %3503 = vmatpush1.msra.mxu0 %v2420
    %3504 = vmatprep.subr.mxu0 %v2413
    %3505 = vmatpush1.msra.mxu0 %v2412
    %3506 = vmatprep.subr.mxu0 %v2405
    %3507 = vmatpush1.msra.mxu0 %v2404
    %3508 = vmatprep.subr.mxu0 %v2397
    %3509 = vmatpush1.msra.mxu0 %v2396
    %3510 = vmatprep.subr.mxu0 %v2389
    %3511 = vmatpush1.msra.mxu0 %v2388
    %3512 = vmatprep.subr.mxu0 %v2637
    %3513 = vmatpush2.msra.mxu0 %v2636
    %3514 = vmatprep.subr.mxu0 %v2629
    %3515 = vmatpush2.msra.mxu0 %v2628
    %3516 = vmatprep.subr.mxu0 %v2621
    %3517 = vmatpush2.msra.mxu0 %v2620
    %3518 = vmatprep.subr.mxu0 %v2613
    %3519 = vmatpush2.msra.mxu0 %v2612
    %3520 = vmatprep.subr.mxu0 %v2605
    %3521 = vmatpush2.msra.mxu0 %v2604
    %3522 = vmatprep.subr.mxu0 %v2597
    %3523 = vmatpush2.msra.mxu0 %v2596
    %3524 = vmatprep.subr.mxu0 %v2589
    %3525 = vmatpush2.msra.mxu0 %v2588
    %3526 = vmatprep.subr.mxu0 %v2581
    %3527 = vmatpush2.msra.mxu0 %v2580
    %3528 = vmatprep.subr.mxu0 %v2573
    %3529 = vmatpush2.msra.mxu0 %v2572
    %3530 = vmatprep.subr.mxu0 %v2565
    %3531 = vmatpush2.msra.mxu0 %v2564
    %3532 = vmatprep.subr.mxu0 %v2557
    %3533 = vmatpush2.msra.mxu0 %v2556
    %3534 = vmatprep.subr.mxu0 %v2549
    %3535 = vmatpush2.msra.mxu0 %v2548
    %3536 = vmatprep.subr.mxu0 %v2541
    %3537 = vmatpush2.msra.mxu0 %v2540
    %3538 = vmatprep.subr.mxu0 %v2533
    %3539 = vmatpush2.msra.mxu0 %v2532
    %3540 = vmatprep.subr.mxu0 %v2525
    %3541 = vmatpush2.msra.mxu0 %v2524
    %3542 = vmatprep.subr.mxu0 %v2517
    %3543 = vmatpush2.msra.mxu0 %v2516
    %3544 = vmatprep.mubr.f32.mxu0 %v3327
    %3545 = vmatmul.mubr.f32.gmra.mxu0 %v3326
    %v3546 = vpop.f32.mrf.mxu0
    %v3547 = vadd.f32 0.0, %v3546
    %v3548 = vpop.f32.mrf.mxu0
    %v3549 = vadd.f32 0.0, %v3548
    %3550 = vdwg.mxu0
    %3551 = vmatprep.subr.mxu0 %v2511
    %3552 = vmatpush1.msra.mxu0 %v2510
    %3553 = vmatprep.subr.mxu0 %v2503
    %3554 = vmatpush1.msra.mxu0 %v2502
    %3555 = vmatprep.subr.mxu0 %v2495
    %3556 = vmatpush1.msra.mxu0 %v2494
    %3557 = vmatprep.subr.mxu0 %v2487
    %3558 = vmatpush1.msra.mxu0 %v2486
    %3559 = vmatprep.subr.mxu0 %v2479
    %3560 = vmatpush1.msra.mxu0 %v2478
    %3561 = vmatprep.subr.mxu0 %v2471
    %3562 = vmatpush1.msra.mxu0 %v2470
    %3563 = vmatprep.subr.mxu0 %v2463
    %3564 = vmatpush1.msra.mxu0 %v2462
    %3565 = vmatprep.subr.mxu0 %v2455
    %3566 = vmatpush1.msra.mxu0 %v2454
    %3567 = vmatprep.subr.mxu0 %v2447
    %3568 = vmatpush1.msra.mxu0 %v2446
    %3569 = vmatprep.subr.mxu0 %v2439
    %3570 = vmatpush1.msra.mxu0 %v2438
    %3571 = vmatprep.subr.mxu0 %v2431
    %3572 = vmatpush1.msra.mxu0 %v2430
    %3573 = vmatprep.subr.mxu0 %v2423
    %3574 = vmatpush1.msra.mxu0 %v2422
    %3575 = vmatprep.subr.mxu0 %v2415
    %3576 = vmatpush1.msra.mxu0 %v2414
    %3577 = vmatprep.subr.mxu0 %v2407
    %3578 = vmatpush1.msra.mxu0 %v2406
    %3579 = vmatprep.subr.mxu0 %v2399
    %3580 = vmatpush1.msra.mxu0 %v2398
    %3581 = vmatprep.subr.mxu0 %v2391
    %3582 = vmatpush1.msra.mxu0 %v2390
    %3583 = vmatprep.subr.mxu0 %v2639
    %3584 = vmatpush2.msra.mxu0 %v2638
    %3585 = vmatprep.subr.mxu0 %v2631
    %3586 = vmatpush2.msra.mxu0 %v2630
    %3587 = vmatprep.subr.mxu0 %v2623
    %3588 = vmatpush2.msra.mxu0 %v2622
    %3589 = vmatprep.subr.mxu0 %v2615
    %3590 = vmatpush2.msra.mxu0 %v2614
    %3591 = vmatprep.subr.mxu0 %v2607
    %3592 = vmatpush2.msra.mxu0 %v2606
    %3593 = vmatprep.subr.mxu0 %v2599
    %3594 = vmatpush2.msra.mxu0 %v2598
    %3595 = vmatprep.subr.mxu0 %v2591
    %3596 = vmatpush2.msra.mxu0 %v2590
    %3597 = vmatprep.subr.mxu0 %v2583
    %3598 = vmatpush2.msra.mxu0 %v2582
    %3599 = vmatprep.subr.mxu0 %v2575
    %3600 = vmatpush2.msra.mxu0 %v2574
    %3601 = vmatprep.subr.mxu0 %v2567
    %3602 = vmatpush2.msra.mxu0 %v2566
    %3603 = vmatprep.subr.mxu0 %v2559
    %3604 = vmatpush2.msra.mxu0 %v2558
    %3605 = vmatprep.subr.mxu0 %v2551
    %3606 = vmatpush2.msra.mxu0 %v2550
    %3607 = vmatprep.subr.mxu0 %v2543
    %3608 = vmatpush2.msra.mxu0 %v2542
    %3609 = vmatprep.subr.mxu0 %v2535
    %3610 = vmatpush2.msra.mxu0 %v2534
    %3611 = vmatprep.subr.mxu0 %v2527
    %3612 = vmatpush2.msra.mxu0 %v2526
    %3613 = vmatprep.subr.mxu0 %v2519
    %3614 = vmatpush2.msra.mxu0 %v2518
    %3615 = vmatprep.mubr.f32.mxu0 %v3327
    %3616 = vmatmul.mubr.f32.gmra.mxu0 %v3326
    %v3617 = vpop.f32.mrf.mxu0
    %v3618 = vadd.f32 0.0, %v3617
    %v3619 = vpop.f32.mrf.mxu0
    %v3620 = vadd.f32 0.0, %v3619
    %3621 = vdwg.mxu0
    %v3622 = vadd.f32 %v3330, %v3405
    %v3623 = vadd.f32 %v3331, %v3407
    %v3624 = vadd.f32 %v3332, %v3476
    %v3625 = vadd.f32 %v3333, %v3478
    %v3626 = vadd.f32 %v3334, %v3547
    %v3627 = vadd.f32 %v3335, %v3549
    %v3628 = vadd.f32 %v3336, %v3618
    %v3629 = vadd.f32 %v3337, %v3620
    %v3630 = vxor.u32 %v3622, 2147483648
    %v3631 = vxor.u32 %v3623, 2147483648
    %v3632 = vxor.u32 %v3624, 2147483648
    %v3633 = vxor.u32 %v3625, 2147483648
    %v3634 = vxor.u32 %v3626, 2147483648
    %v3635 = vxor.u32 %v3627, 2147483648
    %v3636 = vmul.f32 %v3630, 1.442695
    %v3637 = vpow.pop %v3636
    %v3638 = vmul.f32 %v3631, 1.442695
    %v3639 = vpow.pop %v3638
    %v3640 = vmul.f32 %v3632, 1.442695
    %v3641 = vpow.pop %v3640
    %v3642 = vmul.f32 %v3633, 1.442695
    %v3643 = vpow.pop %v3642
    %v3644 = vmul.f32 %v3634, 1.442695
    %v3645 = vpow.pop %v3644
    %v3646 = vmul.f32 %v3635, 1.442695
    %v3647 = vpow.pop %v3646
    %v3648 = vadd.f32 %v3637, 1.0
    %v3649 = vadd.f32 %v3639, 1.0
    %v3650 = vadd.f32 %v3641, 1.0
    %v3651 = vadd.f32 %v3643, 1.0
    %v3652 = vadd.f32 %v3645, 1.0
    %v3653 = vadd.f32 %v3647, 1.0
    %v3654 = vrcp.pop %v3648
    %v3655 = vmul.f32 1.0, %v3654
    %v3656 = vrcp.pop %v3649
    %v3657 = vmul.f32 1.0, %v3656
    %v3658 = vrcp.pop %v3650
    %v3659 = vmul.f32 1.0, %v3658
    %v3660 = vrcp.pop %v3651
    %v3661 = vmul.f32 1.0, %v3660
    %v3662 = vrcp.pop %v3652
    %v3663 = vmul.f32 1.0, %v3662
    %v3664 = vrcp.pop %v3653
    %v3665 = vmul.f32 1.0, %v3664
    %v3666 = vtanh.pop %v3628
    %v3667 = vtanh.pop %v3629
    %v3668 = vmul.f32 %v3659, %v3322
    %v3669 = vmul.f32 %v3661, %v3323
    %v3670 = vmul.f32 %v3655, %v3666
    %v3671 = vmul.f32 %v3657, %v3667
    %v3672 = vadd.f32 %v3668, %v3670
    %v3673 = vadd.f32 %v3669, %v3671
    %v3674 = vtanh.pop %v3672
    %v3675 = vtanh.pop %v3673
    %v3676 = vmul.f32 %v3663, %v3674
    %v3677 = vmul.f32 %v3665, %v3675
    %v3678 = vmax.f32 %v3328, %v3676
    %v3679 = vmax.f32 %v3329, %v3677
    %v3680 = vld [vmem:[#allocation4 + $0xc0] sm:$0xff]
    %v3681 = vld [vmem:[#allocation4 + $0xc8] sm:$0xff]
    %v3682 = vld [vmem:[#allocation4 + $0xd0] sm:$0xff]
    %v3683 = vld [vmem:[#allocation4 + $0xd8] sm:$0xff]
    %v3684 = vld [vmem:[#allocation4 + $0xe0] sm:$0xff]
    %v3685 = vld [vmem:[#allocation4 + $0xe8] sm:$0xff]
    %v3686 = vld [vmem:[#allocation4 + $0xf0] sm:$0xff]
    %v3687 = vld [vmem:[#allocation4 + $0xf8] sm:$0xff]
    %3688 = vmatprep.subr.mxu0 %v2505
    %3689 = vmatpush1.msra.mxu0 %v2504
    %3690 = vmatprep.subr.mxu0 %v2497
    %3691 = vmatpush1.msra.mxu0 %v2496
    %3692 = vmatprep.subr.mxu0 %v2489
    %3693 = vmatpush1.msra.mxu0 %v2488
    %3694 = vmatprep.subr.mxu0 %v2481
    %3695 = vmatpush1.msra.mxu0 %v2480
    %3696 = vmatprep.subr.mxu0 %v2473
    %3697 = vmatpush1.msra.mxu0 %v2472
    %3698 = vmatprep.subr.mxu0 %v2465
    %3699 = vmatpush1.msra.mxu0 %v2464
    %3700 = vmatprep.subr.mxu0 %v2457
    %3701 = vmatpush1.msra.mxu0 %v2456
    %3702 = vmatprep.subr.mxu0 %v2449
    %3703 = vmatpush1.msra.mxu0 %v2448
    %3704 = vmatprep.subr.mxu0 %v2441
    %3705 = vmatpush1.msra.mxu0 %v2440
    %3706 = vmatprep.subr.mxu0 %v2433
    %3707 = vmatpush1.msra.mxu0 %v2432
    %3708 = vmatprep.subr.mxu0 %v2425
    %3709 = vmatpush1.msra.mxu0 %v2424
    %3710 = vmatprep.subr.mxu0 %v2417
    %3711 = vmatpush1.msra.mxu0 %v2416
    %3712 = vmatprep.subr.mxu0 %v2409
    %3713 = vmatpush1.msra.mxu0 %v2408
    %3714 = vmatprep.subr.mxu0 %v2401
    %3715 = vmatpush1.msra.mxu0 %v2400
    %3716 = vmatprep.subr.mxu0 %v2393
    %3717 = vmatpush1.msra.mxu0 %v2392
    %3718 = vmatprep.subr.mxu0 %v2385
    %3719 = vmatpush1.msra.mxu0 %v2384
    %3720 = vmatprep.subr.mxu0 %v2633
    %3721 = vmatpush2.msra.mxu0 %v2632
    %3722 = vmatprep.subr.mxu0 %v2625
    %3723 = vmatpush2.msra.mxu0 %v2624
    %3724 = vmatprep.subr.mxu0 %v2617
    %3725 = vmatpush2.msra.mxu0 %v2616
    %3726 = vmatprep.subr.mxu0 %v2609
    %3727 = vmatpush2.msra.mxu0 %v2608
    %3728 = vmatprep.subr.mxu0 %v2601
    %3729 = vmatpush2.msra.mxu0 %v2600
    %3730 = vmatprep.subr.mxu0 %v2593
    %3731 = vmatpush2.msra.mxu0 %v2592
    %3732 = vmatprep.subr.mxu0 %v2585
    %3733 = vmatpush2.msra.mxu0 %v2584
    %3734 = vmatprep.subr.mxu0 %v2577
    %3735 = vmatpush2.msra.mxu0 %v2576
    %3736 = vmatprep.subr.mxu0 %v2569
    %3737 = vmatpush2.msra.mxu0 %v2568
    %3738 = vmatprep.subr.mxu0 %v2561
    %3739 = vmatpush2.msra.mxu0 %v2560
    %3740 = vmatprep.subr.mxu0 %v2553
    %3741 = vmatpush2.msra.mxu0 %v2552
    %3742 = vmatprep.subr.mxu0 %v2545
    %3743 = vmatpush2.msra.mxu0 %v2544
    %3744 = vmatprep.subr.mxu0 %v2537
    %3745 = vmatpush2.msra.mxu0 %v2536
    %3746 = vmatprep.subr.mxu0 %v2529
    %3747 = vmatpush2.msra.mxu0 %v2528
    %3748 = vmatprep.subr.mxu0 %v2521
    %3749 = vmatpush2.msra.mxu0 %v2520
    %3750 = vmatprep.subr.mxu0 %v2513
    %3751 = vmatpush2.msra.mxu0 %v2512
    %3752 = vmatprep.mubr.f32.mxu0 %v3677
    %3753 = vmatmul.mubr.f32.gmra.mxu0 %v3676
    %v3754 = vpop.f32.mrf.mxu0
    %v3755 = vadd.f32 0.0, %v3754
    %v3756 = vpop.f32.mrf.mxu0
    %v3757 = vadd.f32 0.0, %v3756
    %3758 = vdwg.mxu0
    %3759 = vmatprep.subr.mxu0 %v2507
    %3760 = vmatpush1.msra.mxu0 %v2506
    %3761 = vmatprep.subr.mxu0 %v2499
    %3762 = vmatpush1.msra.mxu0 %v2498
    %3763 = vmatprep.subr.mxu0 %v2491
    %3764 = vmatpush1.msra.mxu0 %v2490
    %3765 = vmatprep.subr.mxu0 %v2483
    %3766 = vmatpush1.msra.mxu0 %v2482
    %3767 = vmatprep.subr.mxu0 %v2475
    %3768 = vmatpush1.msra.mxu0 %v2474
    %3769 = vmatprep.subr.mxu0 %v2467
    %3770 = vmatpush1.msra.mxu0 %v2466
    %3771 = vmatprep.subr.mxu0 %v2459
    %3772 = vmatpush1.msra.mxu0 %v2458
    %3773 = vmatprep.subr.mxu0 %v2451
    %3774 = vmatpush1.msra.mxu0 %v2450
    %3775 = vmatprep.subr.mxu0 %v2443
    %3776 = vmatpush1.msra.mxu0 %v2442
    %3777 = vmatprep.subr.mxu0 %v2435
    %3778 = vmatpush1.msra.mxu0 %v2434
    %3779 = vmatprep.subr.mxu0 %v2427
    %3780 = vmatpush1.msra.mxu0 %v2426
    %3781 = vmatprep.subr.mxu0 %v2419
    %3782 = vmatpush1.msra.mxu0 %v2418
    %3783 = vmatprep.subr.mxu0 %v2411
    %3784 = vmatpush1.msra.mxu0 %v2410
    %3785 = vmatprep.subr.mxu0 %v2403
    %3786 = vmatpush1.msra.mxu0 %v2402
    %3787 = vmatprep.subr.mxu0 %v2395
    %3788 = vmatpush1.msra.mxu0 %v2394
    %3789 = vmatprep.subr.mxu0 %v2387
    %3790 = vmatpush1.msra.mxu0 %v2386
    %3791 = vmatprep.subr.mxu0 %v2635
    %3792 = vmatpush2.msra.mxu0 %v2634
    %3793 = vmatprep.subr.mxu0 %v2627
    %3794 = vmatpush2.msra.mxu0 %v2626
    %3795 = vmatprep.subr.mxu0 %v2619
    %3796 = vmatpush2.msra.mxu0 %v2618
    %3797 = vmatprep.subr.mxu0 %v2611
    %3798 = vmatpush2.msra.mxu0 %v2610
    %3799 = vmatprep.subr.mxu0 %v2603
    %3800 = vmatpush2.msra.mxu0 %v2602
    %3801 = vmatprep.subr.mxu0 %v2595
    %3802 = vmatpush2.msra.mxu0 %v2594
    %3803 = vmatprep.subr.mxu0 %v2587
    %3804 = vmatpush2.msra.mxu0 %v2586
    %3805 = vmatprep.subr.mxu0 %v2579
    %3806 = vmatpush2.msra.mxu0 %v2578
    %3807 = vmatprep.subr.mxu0 %v2571
    %3808 = vmatpush2.msra.mxu0 %v2570
    %3809 = vmatprep.subr.mxu0 %v2563
    %3810 = vmatpush2.msra.mxu0 %v2562
    %3811 = vmatprep.subr.mxu0 %v2555
    %3812 = vmatpush2.msra.mxu0 %v2554
    %3813 = vmatprep.subr.mxu0 %v2547
    %3814 = vmatpush2.msra.mxu0 %v2546
    %3815 = vmatprep.subr.mxu0 %v2539
    %3816 = vmatpush2.msra.mxu0 %v2538
    %3817 = vmatprep.subr.mxu0 %v2531
    %3818 = vmatpush2.msra.mxu0 %v2530
    %3819 = vmatprep.subr.mxu0 %v2523
    %3820 = vmatpush2.msra.mxu0 %v2522
    %3821 = vmatprep.subr.mxu0 %v2515
    %3822 = vmatpush2.msra.mxu0 %v2514
    %3823 = vmatprep.mubr.f32.mxu0 %v3677
    %3824 = vmatmul.mubr.f32.gmra.mxu0 %v3676
    %v3825 = vpop.f32.mrf.mxu0
    %v3826 = vadd.f32 0.0, %v3825
    %v3827 = vpop.f32.mrf.mxu0
    %v3828 = vadd.f32 0.0, %v3827
    %3829 = vdwg.mxu0
    %3830 = vmatprep.subr.mxu0 %v2509
    %3831 = vmatpush1.msra.mxu0 %v2508
    %3832 = vmatprep.subr.mxu0 %v2501
    %3833 = vmatpush1.msra.mxu0 %v2500
    %3834 = vmatprep.subr.mxu0 %v2493
    %3835 = vmatpush1.msra.mxu0 %v2492
    %3836 = vmatprep.subr.mxu0 %v2485
    %3837 = vmatpush1.msra.mxu0 %v2484
    %3838 = vmatprep.subr.mxu0 %v2477
    %3839 = vmatpush1.msra.mxu0 %v2476
    %3840 = vmatprep.subr.mxu0 %v2469
    %3841 = vmatpush1.msra.mxu0 %v2468
    %3842 = vmatprep.subr.mxu0 %v2461
    %3843 = vmatpush1.msra.mxu0 %v2460
    %3844 = vmatprep.subr.mxu0 %v2453
    %3845 = vmatpush1.msra.mxu0 %v2452
    %3846 = vmatprep.subr.mxu0 %v2445
    %3847 = vmatpush1.msra.mxu0 %v2444
    %3848 = vmatprep.subr.mxu0 %v2437
    %3849 = vmatpush1.msra.mxu0 %v2436
    %3850 = vmatprep.subr.mxu0 %v2429
    %3851 = vmatpush1.msra.mxu0 %v2428
    %3852 = vmatprep.subr.mxu0 %v2421
    %3853 = vmatpush1.msra.mxu0 %v2420
    %3854 = vmatprep.subr.mxu0 %v2413
    %3855 = vmatpush1.msra.mxu0 %v2412
    %3856 = vmatprep.subr.mxu0 %v2405
    %3857 = vmatpush1.msra.mxu0 %v2404
    %3858 = vmatprep.subr.mxu0 %v2397
    %3859 = vmatpush1.msra.mxu0 %v2396
    %3860 = vmatprep.subr.mxu0 %v2389
    %3861 = vmatpush1.msra.mxu0 %v2388
    %3862 = vmatprep.subr.mxu0 %v2637
    %3863 = vmatpush2.msra.mxu0 %v2636
    %3864 = vmatprep.subr.mxu0 %v2629
    %3865 = vmatpush2.msra.mxu0 %v2628
    %3866 = vmatprep.subr.mxu0 %v2621
    %3867 = vmatpush2.msra.mxu0 %v2620
    %3868 = vmatprep.subr.mxu0 %v2613
    %3869 = vmatpush2.msra.mxu0 %v2612
    %3870 = vmatprep.subr.mxu0 %v2605
    %3871 = vmatpush2.msra.mxu0 %v2604
    %3872 = vmatprep.subr.mxu0 %v2597
    %3873 = vmatpush2.msra.mxu0 %v2596
    %3874 = vmatprep.subr.mxu0 %v2589
    %3875 = vmatpush2.msra.mxu0 %v2588
    %3876 = vmatprep.subr.mxu0 %v2581
    %3877 = vmatpush2.msra.mxu0 %v2580
    %3878 = vmatprep.subr.mxu0 %v2573
    %3879 = vmatpush2.msra.mxu0 %v2572
    %3880 = vmatprep.subr.mxu0 %v2565
    %3881 = vmatpush2.msra.mxu0 %v2564
    %3882 = vmatprep.subr.mxu0 %v2557
    %3883 = vmatpush2.msra.mxu0 %v2556
    %3884 = vmatprep.subr.mxu0 %v2549
    %3885 = vmatpush2.msra.mxu0 %v2548
    %3886 = vmatprep.subr.mxu0 %v2541
    %3887 = vmatpush2.msra.mxu0 %v2540
    %3888 = vmatprep.subr.mxu0 %v2533
    %3889 = vmatpush2.msra.mxu0 %v2532
    %3890 = vmatprep.subr.mxu0 %v2525
    %3891 = vmatpush2.msra.mxu0 %v2524
    %3892 = vmatprep.subr.mxu0 %v2517
    %3893 = vmatpush2.msra.mxu0 %v2516
    %3894 = vmatprep.mubr.f32.mxu0 %v3677
    %3895 = vmatmul.mubr.f32.gmra.mxu0 %v3676
    %v3896 = vpop.f32.mrf.mxu0
    %v3897 = vadd.f32 0.0, %v3896
    %v3898 = vpop.f32.mrf.mxu0
    %v3899 = vadd.f32 0.0, %v3898
    %3900 = vdwg.mxu0
    %3901 = vmatprep.subr.mxu0 %v2511
    %3902 = vmatpush1.msra.mxu0 %v2510
    %3903 = vmatprep.subr.mxu0 %v2503
    %3904 = vmatpush1.msra.mxu0 %v2502
    %3905 = vmatprep.subr.mxu0 %v2495
    %3906 = vmatpush1.msra.mxu0 %v2494
    %3907 = vmatprep.subr.mxu0 %v2487
    %3908 = vmatpush1.msra.mxu0 %v2486
    %3909 = vmatprep.subr.mxu0 %v2479
    %3910 = vmatpush1.msra.mxu0 %v2478
    %3911 = vmatprep.subr.mxu0 %v2471
    %3912 = vmatpush1.msra.mxu0 %v2470
    %3913 = vmatprep.subr.mxu0 %v2463
    %3914 = vmatpush1.msra.mxu0 %v2462
    %3915 = vmatprep.subr.mxu0 %v2455
    %3916 = vmatpush1.msra.mxu0 %v2454
    %3917 = vmatprep.subr.mxu0 %v2447
    %3918 = vmatpush1.msra.mxu0 %v2446
    %3919 = vmatprep.subr.mxu0 %v2439
    %3920 = vmatpush1.msra.mxu0 %v2438
    %3921 = vmatprep.subr.mxu0 %v2431
    %3922 = vmatpush1.msra.mxu0 %v2430
    %3923 = vmatprep.subr.mxu0 %v2423
    %3924 = vmatpush1.msra.mxu0 %v2422
    %3925 = vmatprep.subr.mxu0 %v2415
    %3926 = vmatpush1.msra.mxu0 %v2414
    %3927 = vmatprep.subr.mxu0 %v2407
    %3928 = vmatpush1.msra.mxu0 %v2406
    %3929 = vmatprep.subr.mxu0 %v2399
    %3930 = vmatpush1.msra.mxu0 %v2398
    %3931 = vmatprep.subr.mxu0 %v2391
    %3932 = vmatpush1.msra.mxu0 %v2390
    %3933 = vmatprep.subr.mxu0 %v2639
    %3934 = vmatpush2.msra.mxu0 %v2638
    %3935 = vmatprep.subr.mxu0 %v2631
    %3936 = vmatpush2.msra.mxu0 %v2630
    %3937 = vmatprep.subr.mxu0 %v2623
    %3938 = vmatpush2.msra.mxu0 %v2622
    %3939 = vmatprep.subr.mxu0 %v2615
    %3940 = vmatpush2.msra.mxu0 %v2614
    %3941 = vmatprep.subr.mxu0 %v2607
    %3942 = vmatpush2.msra.mxu0 %v2606
    %3943 = vmatprep.subr.mxu0 %v2599
    %3944 = vmatpush2.msra.mxu0 %v2598
    %3945 = vmatprep.subr.mxu0 %v2591
    %3946 = vmatpush2.msra.mxu0 %v2590
    %3947 = vmatprep.subr.mxu0 %v2583
    %3948 = vmatpush2.msra.mxu0 %v2582
    %3949 = vmatprep.subr.mxu0 %v2575
    %3950 = vmatpush2.msra.mxu0 %v2574
    %3951 = vmatprep.subr.mxu0 %v2567
    %3952 = vmatpush2.msra.mxu0 %v2566
    %3953 = vmatprep.subr.mxu0 %v2559
    %3954 = vmatpush2.msra.mxu0 %v2558
    %3955 = vmatprep.subr.mxu0 %v2551
    %3956 = vmatpush2.msra.mxu0 %v2550
    %3957 = vmatprep.subr.mxu0 %v2543
    %3958 = vmatpush2.msra.mxu0 %v2542
    %3959 = vmatprep.subr.mxu0 %v2535
    %3960 = vmatpush2.msra.mxu0 %v2534
    %3961 = vmatprep.subr.mxu0 %v2527
    %3962 = vmatpush2.msra.mxu0 %v2526
    %3963 = vmatprep.subr.mxu0 %v2519
    %3964 = vmatpush2.msra.mxu0 %v2518
    %3965 = vmatprep.mubr.f32.mxu0 %v3677
    %3966 = vmatmul.mubr.f32.gmra.mxu0 %v3676
    %v3967 = vpop.f32.mrf.mxu0
    %v3968 = vadd.f32 0.0, %v3967
    %v3969 = vpop.f32.mrf.mxu0
    %v3970 = vadd.f32 0.0, %v3969
    %3971 = vdwg.mxu0
    %v3972 = vadd.f32 %v3680, %v3755
    %v3973 = vadd.f32 %v3681, %v3757
    %v3974 = vadd.f32 %v3682, %v3826
    %v3975 = vadd.f32 %v3683, %v3828
    %v3976 = vadd.f32 %v3684, %v3897
    %v3977 = vadd.f32 %v3685, %v3899
    %v3978 = vadd.f32 %v3686, %v3968
    %v3979 = vadd.f32 %v3687, %v3970
    %v3980 = vxor.u32 %v3972, 2147483648
    %v3981 = vxor.u32 %v3973, 2147483648
    %v3982 = vxor.u32 %v3974, 2147483648
    %v3983 = vxor.u32 %v3975, 2147483648
    %v3984 = vxor.u32 %v3976, 2147483648
    %v3985 = vxor.u32 %v3977, 2147483648
    %v3986 = vmul.f32 %v3980, 1.442695
    %v3987 = vpow.pop %v3986
    %v3988 = vmul.f32 %v3981, 1.442695
    %v3989 = vpow.pop %v3988
    %v3990 = vmul.f32 %v3982, 1.442695
    %v3991 = vpow.pop %v3990
    %v3992 = vmul.f32 %v3983, 1.442695
    %v3993 = vpow.pop %v3992
    %v3994 = vmul.f32 %v3984, 1.442695
    %v3995 = vpow.pop %v3994
    %v3996 = vmul.f32 %v3985, 1.442695
    %v3997 = vpow.pop %v3996
    %v3998 = vadd.f32 %v3987, 1.0
    %v3999 = vadd.f32 %v3989, 1.0
    %v4000 = vadd.f32 %v3991, 1.0
    %v4001 = vadd.f32 %v3993, 1.0
    %v4002 = vadd.f32 %v3995, 1.0
    %v4003 = vadd.f32 %v3997, 1.0
    %v4004 = vrcp.pop %v3998
    %v4005 = vmul.f32 1.0, %v4004
    %v4006 = vrcp.pop %v3999
    %v4007 = vmul.f32 1.0, %v4006
    %v4008 = vrcp.pop %v4000
    %v4009 = vmul.f32 1.0, %v4008
    %v4010 = vrcp.pop %v4001
    %v4011 = vmul.f32 1.0, %v4010
    %v4012 = vrcp.pop %v4002
    %v4013 = vmul.f32 1.0, %v4012
    %v4014 = vrcp.pop %v4003
    %v4015 = vmul.f32 1.0, %v4014
    %v4016 = vtanh.pop %v3978
    %v4017 = vtanh.pop %v3979
    %v4018 = vmul.f32 %v4009, %v3672
    %v4019 = vmul.f32 %v4011, %v3673
    %v4020 = vmul.f32 %v4005, %v4016
    %v4021 = vmul.f32 %v4007, %v4017
    %v4022 = vadd.f32 %v4018, %v4020
    %v4023 = vadd.f32 %v4019, %v4021
    %v4024 = vtanh.pop %v4022
    %v4025 = vtanh.pop %v4023
    %v4026 = vmul.f32 %v4013, %v4024
    %v4027 = vmul.f32 %v4015, %v4025
    %v4028 = vmax.f32 %v3678, %v4026
    %v4029 = vmax.f32 %v3679, %v4027
    %v4030 = vld [vmem:[#allocation4 + $0x100] sm:$0xff]
    %v4031 = vld [vmem:[#allocation4 + $0x108] sm:$0xff]
    %v4032 = vld [vmem:[#allocation4 + $0x110] sm:$0xff]
    %v4033 = vld [vmem:[#allocation4 + $0x118] sm:$0xff]
    %v4034 = vld [vmem:[#allocation4 + $0x120] sm:$0xff]
    %v4035 = vld [vmem:[#allocation4 + $0x128] sm:$0xff]
    %v4036 = vld [vmem:[#allocation4 + $0x130] sm:$0xff]
    %v4037 = vld [vmem:[#allocation4 + $0x138] sm:$0xff]
    %4038 = vmatprep.subr.mxu0 %v2505
    %4039 = vmatpush1.msra.mxu0 %v2504
    %4040 = vmatprep.subr.mxu0 %v2497
    %4041 = vmatpush1.msra.mxu0 %v2496
    %4042 = vmatprep.subr.mxu0 %v2489
    %4043 = vmatpush1.msra.mxu0 %v2488
    %4044 = vmatprep.subr.mxu0 %v2481
    %4045 = vmatpush1.msra.mxu0 %v2480
    %4046 = vmatprep.subr.mxu0 %v2473
    %4047 = vmatpush1.msra.mxu0 %v2472
    %4048 = vmatprep.subr.mxu0 %v2465
    %4049 = vmatpush1.msra.mxu0 %v2464
    %4050 = vmatprep.subr.mxu0 %v2457
    %4051 = vmatpush1.msra.mxu0 %v2456
    %4052 = vmatprep.subr.mxu0 %v2449
    %4053 = vmatpush1.msra.mxu0 %v2448
    %4054 = vmatprep.subr.mxu0 %v2441
    %4055 = vmatpush1.msra.mxu0 %v2440
    %4056 = vmatprep.subr.mxu0 %v2433
    %4057 = vmatpush1.msra.mxu0 %v2432
    %4058 = vmatprep.subr.mxu0 %v2425
    %4059 = vmatpush1.msra.mxu0 %v2424
    %4060 = vmatprep.subr.mxu0 %v2417
    %4061 = vmatpush1.msra.mxu0 %v2416
    %4062 = vmatprep.subr.mxu0 %v2409
    %4063 = vmatpush1.msra.mxu0 %v2408
    %4064 = vmatprep.subr.mxu0 %v2401
    %4065 = vmatpush1.msra.mxu0 %v2400
    %4066 = vmatprep.subr.mxu0 %v2393
    %4067 = vmatpush1.msra.mxu0 %v2392
    %4068 = vmatprep.subr.mxu0 %v2385
    %4069 = vmatpush1.msra.mxu0 %v2384
    %4070 = vmatprep.subr.mxu0 %v2633
    %4071 = vmatpush2.msra.mxu0 %v2632
    %4072 = vmatprep.subr.mxu0 %v2625
    %4073 = vmatpush2.msra.mxu0 %v2624
    %4074 = vmatprep.subr.mxu0 %v2617
    %4075 = vmatpush2.msra.mxu0 %v2616
    %4076 = vmatprep.subr.mxu0 %v2609
    %4077 = vmatpush2.msra.mxu0 %v2608
    %4078 = vmatprep.subr.mxu0 %v2601
    %4079 = vmatpush2.msra.mxu0 %v2600
    %4080 = vmatprep.subr.mxu0 %v2593
    %4081 = vmatpush2.msra.mxu0 %v2592
    %4082 = vmatprep.subr.mxu0 %v2585
    %4083 = vmatpush2.msra.mxu0 %v2584
    %4084 = vmatprep.subr.mxu0 %v2577
    %4085 = vmatpush2.msra.mxu0 %v2576
    %4086 = vmatprep.subr.mxu0 %v2569
    %4087 = vmatpush2.msra.mxu0 %v2568
    %4088 = vmatprep.subr.mxu0 %v2561
    %4089 = vmatpush2.msra.mxu0 %v2560
    %4090 = vmatprep.subr.mxu0 %v2553
    %4091 = vmatpush2.msra.mxu0 %v2552
    %4092 = vmatprep.subr.mxu0 %v2545
    %4093 = vmatpush2.msra.mxu0 %v2544
    %4094 = vmatprep.subr.mxu0 %v2537
    %4095 = vmatpush2.msra.mxu0 %v2536
    %4096 = vmatprep.subr.mxu0 %v2529
    %4097 = vmatpush2.msra.mxu0 %v2528
    %4098 = vmatprep.subr.mxu0 %v2521
    %4099 = vmatpush2.msra.mxu0 %v2520
    %4100 = vmatprep.subr.mxu0 %v2513
    %4101 = vmatpush2.msra.mxu0 %v2512
    %4102 = vmatprep.mubr.f32.mxu0 %v4027
    %4103 = vmatmul.mubr.f32.gmra.mxu0 %v4026
    %v4104 = vpop.f32.mrf.mxu0
    %v4105 = vadd.f32 0.0, %v4104
    %v4106 = vpop.f32.mrf.mxu0
    %v4107 = vadd.f32 0.0, %v4106
    %4108 = vdwg.mxu0
    %4109 = vmatprep.subr.mxu0 %v2507
    %4110 = vmatpush1.msra.mxu0 %v2506
    %4111 = vmatprep.subr.mxu0 %v2499
    %4112 = vmatpush1.msra.mxu0 %v2498
    %4113 = vmatprep.subr.mxu0 %v2491
    %4114 = vmatpush1.msra.mxu0 %v2490
    %4115 = vmatprep.subr.mxu0 %v2483
    %4116 = vmatpush1.msra.mxu0 %v2482
    %4117 = vmatprep.subr.mxu0 %v2475
    %4118 = vmatpush1.msra.mxu0 %v2474
    %4119 = vmatprep.subr.mxu0 %v2467
    %4120 = vmatpush1.msra.mxu0 %v2466
    %4121 = vmatprep.subr.mxu0 %v2459
    %4122 = vmatpush1.msra.mxu0 %v2458
    %4123 = vmatprep.subr.mxu0 %v2451
    %4124 = vmatpush1.msra.mxu0 %v2450
    %4125 = vmatprep.subr.mxu0 %v2443
    %4126 = vmatpush1.msra.mxu0 %v2442
    %4127 = vmatprep.subr.mxu0 %v2435
    %4128 = vmatpush1.msra.mxu0 %v2434
    %4129 = vmatprep.subr.mxu0 %v2427
    %4130 = vmatpush1.msra.mxu0 %v2426
    %4131 = vmatprep.subr.mxu0 %v2419
    %4132 = vmatpush1.msra.mxu0 %v2418
    %4133 = vmatprep.subr.mxu0 %v2411
    %4134 = vmatpush1.msra.mxu0 %v2410
    %4135 = vmatprep.subr.mxu0 %v2403
    %4136 = vmatpush1.msra.mxu0 %v2402
    %4137 = vmatprep.subr.mxu0 %v2395
    %4138 = vmatpush1.msra.mxu0 %v2394
    %4139 = vmatprep.subr.mxu0 %v2387
    %4140 = vmatpush1.msra.mxu0 %v2386
    %4141 = vmatprep.subr.mxu0 %v2635
    %4142 = vmatpush2.msra.mxu0 %v2634
    %4143 = vmatprep.subr.mxu0 %v2627
    %4144 = vmatpush2.msra.mxu0 %v2626
    %4145 = vmatprep.subr.mxu0 %v2619
    %4146 = vmatpush2.msra.mxu0 %v2618
    %4147 = vmatprep.subr.mxu0 %v2611
    %4148 = vmatpush2.msra.mxu0 %v2610
    %4149 = vmatprep.subr.mxu0 %v2603
    %4150 = vmatpush2.msra.mxu0 %v2602
    %4151 = vmatprep.subr.mxu0 %v2595
    %4152 = vmatpush2.msra.mxu0 %v2594
    %4153 = vmatprep.subr.mxu0 %v2587
    %4154 = vmatpush2.msra.mxu0 %v2586
    %4155 = vmatprep.subr.mxu0 %v2579
    %4156 = vmatpush2.msra.mxu0 %v2578
    %4157 = vmatprep.subr.mxu0 %v2571
    %4158 = vmatpush2.msra.mxu0 %v2570
    %4159 = vmatprep.subr.mxu0 %v2563
    %4160 = vmatpush2.msra.mxu0 %v2562
    %4161 = vmatprep.subr.mxu0 %v2555
    %4162 = vmatpush2.msra.mxu0 %v2554
    %4163 = vmatprep.subr.mxu0 %v2547
    %4164 = vmatpush2.msra.mxu0 %v2546
    %4165 = vmatprep.subr.mxu0 %v2539
    %4166 = vmatpush2.msra.mxu0 %v2538
    %4167 = vmatprep.subr.mxu0 %v2531
    %4168 = vmatpush2.msra.mxu0 %v2530
    %4169 = vmatprep.subr.mxu0 %v2523
    %4170 = vmatpush2.msra.mxu0 %v2522
    %4171 = vmatprep.subr.mxu0 %v2515
    %4172 = vmatpush2.msra.mxu0 %v2514
    %4173 = vmatprep.mubr.f32.mxu0 %v4027
    %4174 = vmatmul.mubr.f32.gmra.mxu0 %v4026
    %v4175 = vpop.f32.mrf.mxu0
    %v4176 = vadd.f32 0.0, %v4175
    %v4177 = vpop.f32.mrf.mxu0
    %v4178 = vadd.f32 0.0, %v4177
    %4179 = vdwg.mxu0
    %4180 = vmatprep.subr.mxu0 %v2509
    %4181 = vmatpush1.msra.mxu0 %v2508
    %4182 = vmatprep.subr.mxu0 %v2501
    %4183 = vmatpush1.msra.mxu0 %v2500
    %4184 = vmatprep.subr.mxu0 %v2493
    %4185 = vmatpush1.msra.mxu0 %v2492
    %4186 = vmatprep.subr.mxu0 %v2485
    %4187 = vmatpush1.msra.mxu0 %v2484
    %4188 = vmatprep.subr.mxu0 %v2477
    %4189 = vmatpush1.msra.mxu0 %v2476
    %4190 = vmatprep.subr.mxu0 %v2469
    %4191 = vmatpush1.msra.mxu0 %v2468
    %4192 = vmatprep.subr.mxu0 %v2461
    %4193 = vmatpush1.msra.mxu0 %v2460
    %4194 = vmatprep.subr.mxu0 %v2453
    %4195 = vmatpush1.msra.mxu0 %v2452
    %4196 = vmatprep.subr.mxu0 %v2445
    %4197 = vmatpush1.msra.mxu0 %v2444
    %4198 = vmatprep.subr.mxu0 %v2437
    %4199 = vmatpush1.msra.mxu0 %v2436
    %4200 = vmatprep.subr.mxu0 %v2429
    %4201 = vmatpush1.msra.mxu0 %v2428
    %4202 = vmatprep.subr.mxu0 %v2421
    %4203 = vmatpush1.msra.mxu0 %v2420
    %4204 = vmatprep.subr.mxu0 %v2413
    %4205 = vmatpush1.msra.mxu0 %v2412
    %4206 = vmatprep.subr.mxu0 %v2405
    %4207 = vmatpush1.msra.mxu0 %v2404
    %4208 = vmatprep.subr.mxu0 %v2397
    %4209 = vmatpush1.msra.mxu0 %v2396
    %4210 = vmatprep.subr.mxu0 %v2389
    %4211 = vmatpush1.msra.mxu0 %v2388
    %4212 = vmatprep.subr.mxu0 %v2637
    %4213 = vmatpush2.msra.mxu0 %v2636
    %4214 = vmatprep.subr.mxu0 %v2629
    %4215 = vmatpush2.msra.mxu0 %v2628
    %4216 = vmatprep.subr.mxu0 %v2621
    %4217 = vmatpush2.msra.mxu0 %v2620
    %4218 = vmatprep.subr.mxu0 %v2613
    %4219 = vmatpush2.msra.mxu0 %v2612
    %4220 = vmatprep.subr.mxu0 %v2605
    %4221 = vmatpush2.msra.mxu0 %v2604
    %4222 = vmatprep.subr.mxu0 %v2597
    %4223 = vmatpush2.msra.mxu0 %v2596
    %4224 = vmatprep.subr.mxu0 %v2589
    %4225 = vmatpush2.msra.mxu0 %v2588
    %4226 = vmatprep.subr.mxu0 %v2581
    %4227 = vmatpush2.msra.mxu0 %v2580
    %4228 = vmatprep.subr.mxu0 %v2573
    %4229 = vmatpush2.msra.mxu0 %v2572
    %4230 = vmatprep.subr.mxu0 %v2565
    %4231 = vmatpush2.msra.mxu0 %v2564
    %4232 = vmatprep.subr.mxu0 %v2557
    %4233 = vmatpush2.msra.mxu0 %v2556
    %4234 = vmatprep.subr.mxu0 %v2549
    %4235 = vmatpush2.msra.mxu0 %v2548
    %4236 = vmatprep.subr.mxu0 %v2541
    %4237 = vmatpush2.msra.mxu0 %v2540
    %4238 = vmatprep.subr.mxu0 %v2533
    %4239 = vmatpush2.msra.mxu0 %v2532
    %4240 = vmatprep.subr.mxu0 %v2525
    %4241 = vmatpush2.msra.mxu0 %v2524
    %4242 = vmatprep.subr.mxu0 %v2517
    %4243 = vmatpush2.msra.mxu0 %v2516
    %4244 = vmatprep.mubr.f32.mxu0 %v4027
    %4245 = vmatmul.mubr.f32.gmra.mxu0 %v4026
    %v4246 = vpop.f32.mrf.mxu0
    %v4247 = vadd.f32 0.0, %v4246
    %v4248 = vpop.f32.mrf.mxu0
    %v4249 = vadd.f32 0.0, %v4248
    %4250 = vdwg.mxu0
    %4251 = vmatprep.subr.mxu0 %v2511
    %4252 = vmatpush1.msra.mxu0 %v2510
    %4253 = vmatprep.subr.mxu0 %v2503
    %4254 = vmatpush1.msra.mxu0 %v2502
    %4255 = vmatprep.subr.mxu0 %v2495
    %4256 = vmatpush1.msra.mxu0 %v2494
    %4257 = vmatprep.subr.mxu0 %v2487
    %4258 = vmatpush1.msra.mxu0 %v2486
    %4259 = vmatprep.subr.mxu0 %v2479
    %4260 = vmatpush1.msra.mxu0 %v2478
    %4261 = vmatprep.subr.mxu0 %v2471
    %4262 = vmatpush1.msra.mxu0 %v2470
    %4263 = vmatprep.subr.mxu0 %v2463
    %4264 = vmatpush1.msra.mxu0 %v2462
    %4265 = vmatprep.subr.mxu0 %v2455
    %4266 = vmatpush1.msra.mxu0 %v2454
    %4267 = vmatprep.subr.mxu0 %v2447
    %4268 = vmatpush1.msra.mxu0 %v2446
    %4269 = vmatprep.subr.mxu0 %v2439
    %4270 = vmatpush1.msra.mxu0 %v2438
    %4271 = vmatprep.subr.mxu0 %v2431
    %4272 = vmatpush1.msra.mxu0 %v2430
    %4273 = vmatprep.subr.mxu0 %v2423
    %4274 = vmatpush1.msra.mxu0 %v2422
    %4275 = vmatprep.subr.mxu0 %v2415
    %4276 = vmatpush1.msra.mxu0 %v2414
    %4277 = vmatprep.subr.mxu0 %v2407
    %4278 = vmatpush1.msra.mxu0 %v2406
    %4279 = vmatprep.subr.mxu0 %v2399
    %4280 = vmatpush1.msra.mxu0 %v2398
    %4281 = vmatprep.subr.mxu0 %v2391
    %4282 = vmatpush1.msra.mxu0 %v2390
    %4283 = vmatprep.subr.mxu0 %v2639
    %4284 = vmatpush2.msra.mxu0 %v2638
    %4285 = vmatprep.subr.mxu0 %v2631
    %4286 = vmatpush2.msra.mxu0 %v2630
    %4287 = vmatprep.subr.mxu0 %v2623
    %4288 = vmatpush2.msra.mxu0 %v2622
    %4289 = vmatprep.subr.mxu0 %v2615
    %4290 = vmatpush2.msra.mxu0 %v2614
    %4291 = vmatprep.subr.mxu0 %v2607
    %4292 = vmatpush2.msra.mxu0 %v2606
    %4293 = vmatprep.subr.mxu0 %v2599
    %4294 = vmatpush2.msra.mxu0 %v2598
    %4295 = vmatprep.subr.mxu0 %v2591
    %4296 = vmatpush2.msra.mxu0 %v2590
    %4297 = vmatprep.subr.mxu0 %v2583
    %4298 = vmatpush2.msra.mxu0 %v2582
    %4299 = vmatprep.subr.mxu0 %v2575
    %4300 = vmatpush2.msra.mxu0 %v2574
    %4301 = vmatprep.subr.mxu0 %v2567
    %4302 = vmatpush2.msra.mxu0 %v2566
    %4303 = vmatprep.subr.mxu0 %v2559
    %4304 = vmatpush2.msra.mxu0 %v2558
    %4305 = vmatprep.subr.mxu0 %v2551
    %4306 = vmatpush2.msra.mxu0 %v2550
    %4307 = vmatprep.subr.mxu0 %v2543
    %4308 = vmatpush2.msra.mxu0 %v2542
    %4309 = vmatprep.subr.mxu0 %v2535
    %4310 = vmatpush2.msra.mxu0 %v2534
    %4311 = vmatprep.subr.mxu0 %v2527
    %4312 = vmatpush2.msra.mxu0 %v2526
    %4313 = vmatprep.subr.mxu0 %v2519
    %4314 = vmatpush2.msra.mxu0 %v2518
    %4315 = vmatprep.mubr.f32.mxu0 %v4027
    %4316 = vmatmul.mubr.f32.gmra.mxu0 %v4026
    %v4317 = vpop.f32.mrf.mxu0
    %v4318 = vadd.f32 0.0, %v4317
    %v4319 = vpop.f32.mrf.mxu0
    %v4320 = vadd.f32 0.0, %v4319
    %4321 = vdwg.mxu0
    %v4322 = vadd.f32 %v4030, %v4105
    %v4323 = vadd.f32 %v4031, %v4107
    %v4324 = vadd.f32 %v4032, %v4176
    %v4325 = vadd.f32 %v4033, %v4178
    %v4326 = vadd.f32 %v4034, %v4247
    %v4327 = vadd.f32 %v4035, %v4249
    %v4328 = vadd.f32 %v4036, %v4318
    %v4329 = vadd.f32 %v4037, %v4320
    %v4330 = vxor.u32 %v4322, 2147483648
    %v4331 = vxor.u32 %v4323, 2147483648
    %v4332 = vxor.u32 %v4324, 2147483648
    %v4333 = vxor.u32 %v4325, 2147483648
    %v4334 = vxor.u32 %v4326, 2147483648
    %v4335 = vxor.u32 %v4327, 2147483648
    %v4336 = vmul.f32 %v4330, 1.442695
    %v4337 = vpow.pop %v4336
    %v4338 = vmul.f32 %v4331, 1.442695
    %v4339 = vpow.pop %v4338
    %v4340 = vmul.f32 %v4332, 1.442695
    %v4341 = vpow.pop %v4340
    %v4342 = vmul.f32 %v4333, 1.442695
    %v4343 = vpow.pop %v4342
    %v4344 = vmul.f32 %v4334, 1.442695
    %v4345 = vpow.pop %v4344
    %v4346 = vmul.f32 %v4335, 1.442695
    %v4347 = vpow.pop %v4346
    %v4348 = vadd.f32 %v4337, 1.0
    %v4349 = vadd.f32 %v4339, 1.0
    %v4350 = vadd.f32 %v4341, 1.0
    %v4351 = vadd.f32 %v4343, 1.0
    %v4352 = vadd.f32 %v4345, 1.0
    %v4353 = vadd.f32 %v4347, 1.0
    %v4354 = vrcp.pop %v4348
    %v4355 = vmul.f32 1.0, %v4354
    %v4356 = vrcp.pop %v4349
    %v4357 = vmul.f32 1.0, %v4356
    %v4358 = vrcp.pop %v4350
    %v4359 = vmul.f32 1.0, %v4358
    %v4360 = vrcp.pop %v4351
    %v4361 = vmul.f32 1.0, %v4360
    %v4362 = vrcp.pop %v4352
    %v4363 = vmul.f32 1.0, %v4362
    %v4364 = vrcp.pop %v4353
    %v4365 = vmul.f32 1.0, %v4364
    %v4366 = vtanh.pop %v4328
    %v4367 = vtanh.pop %v4329
    %v4368 = vmul.f32 %v4359, %v4022
    %v4369 = vmul.f32 %v4361, %v4023
    %v4370 = vmul.f32 %v4355, %v4366
    %v4371 = vmul.f32 %v4357, %v4367
    %v4372 = vadd.f32 %v4368, %v4370
    %v4373 = vadd.f32 %v4369, %v4371
    %v4374 = vtanh.pop %v4372
    %v4375 = vtanh.pop %v4373
    %v4376 = vmul.f32 %v4363, %v4374
    %v4377 = vmul.f32 %v4365, %v4375
    %v4378 = vmax.f32 %v4028, %v4376
    %v4379 = vmax.f32 %v4029, %v4377
    %v4380 = vld [vmem:[#allocation4 + $0x140] sm:$0xff]
    %v4381 = vld [vmem:[#allocation4 + $0x148] sm:$0xff]
    %v4382 = vld [vmem:[#allocation4 + $0x150] sm:$0xff]
    %v4383 = vld [vmem:[#allocation4 + $0x158] sm:$0xff]
    %v4384 = vld [vmem:[#allocation4 + $0x160] sm:$0xff]
    %v4385 = vld [vmem:[#allocation4 + $0x168] sm:$0xff]
    %v4386 = vld [vmem:[#allocation4 + $0x170] sm:$0xff]
    %v4387 = vld [vmem:[#allocation4 + $0x178] sm:$0xff]
    %4388 = vmatprep.subr.mxu0 %v2505
    %4389 = vmatpush1.msra.mxu0 %v2504
    %4390 = vmatprep.subr.mxu0 %v2497
    %4391 = vmatpush1.msra.mxu0 %v2496
    %4392 = vmatprep.subr.mxu0 %v2489
    %4393 = vmatpush1.msra.mxu0 %v2488
    %4394 = vmatprep.subr.mxu0 %v2481
    %4395 = vmatpush1.msra.mxu0 %v2480
    %4396 = vmatprep.subr.mxu0 %v2473
    %4397 = vmatpush1.msra.mxu0 %v2472
    %4398 = vmatprep.subr.mxu0 %v2465
    %4399 = vmatpush1.msra.mxu0 %v2464
    %4400 = vmatprep.subr.mxu0 %v2457
    %4401 = vmatpush1.msra.mxu0 %v2456
    %4402 = vmatprep.subr.mxu0 %v2449
    %4403 = vmatpush1.msra.mxu0 %v2448
    %4404 = vmatprep.subr.mxu0 %v2441
    %4405 = vmatpush1.msra.mxu0 %v2440
    %4406 = vmatprep.subr.mxu0 %v2433
    %4407 = vmatpush1.msra.mxu0 %v2432
    %4408 = vmatprep.subr.mxu0 %v2425
    %4409 = vmatpush1.msra.mxu0 %v2424
    %4410 = vmatprep.subr.mxu0 %v2417
    %4411 = vmatpush1.msra.mxu0 %v2416
    %4412 = vmatprep.subr.mxu0 %v2409
    %4413 = vmatpush1.msra.mxu0 %v2408
    %4414 = vmatprep.subr.mxu0 %v2401
    %4415 = vmatpush1.msra.mxu0 %v2400
    %4416 = vmatprep.subr.mxu0 %v2393
    %4417 = vmatpush1.msra.mxu0 %v2392
    %4418 = vmatprep.subr.mxu0 %v2385
    %4419 = vmatpush1.msra.mxu0 %v2384
    %4420 = vmatprep.subr.mxu0 %v2633
    %4421 = vmatpush2.msra.mxu0 %v2632
    %4422 = vmatprep.subr.mxu0 %v2625
    %4423 = vmatpush2.msra.mxu0 %v2624
    %4424 = vmatprep.subr.mxu0 %v2617
    %4425 = vmatpush2.msra.mxu0 %v2616
    %4426 = vmatprep.subr.mxu0 %v2609
    %4427 = vmatpush2.msra.mxu0 %v2608
    %4428 = vmatprep.subr.mxu0 %v2601
    %4429 = vmatpush2.msra.mxu0 %v2600
    %4430 = vmatprep.subr.mxu0 %v2593
    %4431 = vmatpush2.msra.mxu0 %v2592
    %4432 = vmatprep.subr.mxu0 %v2585
    %4433 = vmatpush2.msra.mxu0 %v2584
    %4434 = vmatprep.subr.mxu0 %v2577
    %4435 = vmatpush2.msra.mxu0 %v2576
    %4436 = vmatprep.subr.mxu0 %v2569
    %4437 = vmatpush2.msra.mxu0 %v2568
    %4438 = vmatprep.subr.mxu0 %v2561
    %4439 = vmatpush2.msra.mxu0 %v2560
    %4440 = vmatprep.subr.mxu0 %v2553
    %4441 = vmatpush2.msra.mxu0 %v2552
    %4442 = vmatprep.subr.mxu0 %v2545
    %4443 = vmatpush2.msra.mxu0 %v2544
    %4444 = vmatprep.subr.mxu0 %v2537
    %4445 = vmatpush2.msra.mxu0 %v2536
    %4446 = vmatprep.subr.mxu0 %v2529
    %4447 = vmatpush2.msra.mxu0 %v2528
    %4448 = vmatprep.subr.mxu0 %v2521
    %4449 = vmatpush2.msra.mxu0 %v2520
    %4450 = vmatprep.subr.mxu0 %v2513
    %4451 = vmatpush2.msra.mxu0 %v2512
    %4452 = vmatprep.mubr.f32.mxu0 %v4377
    %4453 = vmatmul.mubr.f32.gmra.mxu0 %v4376
    %v4454 = vpop.f32.mrf.mxu0
    %v4455 = vadd.f32 0.0, %v4454
    %v4456 = vpop.f32.mrf.mxu0
    %v4457 = vadd.f32 0.0, %v4456
    %4458 = vdwg.mxu0
    %4459 = vmatprep.subr.mxu0 %v2507
    %4460 = vmatpush1.msra.mxu0 %v2506
    %4461 = vmatprep.subr.mxu0 %v2499
    %4462 = vmatpush1.msra.mxu0 %v2498
    %4463 = vmatprep.subr.mxu0 %v2491
    %4464 = vmatpush1.msra.mxu0 %v2490
    %4465 = vmatprep.subr.mxu0 %v2483
    %4466 = vmatpush1.msra.mxu0 %v2482
    %4467 = vmatprep.subr.mxu0 %v2475
    %4468 = vmatpush1.msra.mxu0 %v2474
    %4469 = vmatprep.subr.mxu0 %v2467
    %4470 = vmatpush1.msra.mxu0 %v2466
    %4471 = vmatprep.subr.mxu0 %v2459
    %4472 = vmatpush1.msra.mxu0 %v2458
    %4473 = vmatprep.subr.mxu0 %v2451
    %4474 = vmatpush1.msra.mxu0 %v2450
    %4475 = vmatprep.subr.mxu0 %v2443
    %4476 = vmatpush1.msra.mxu0 %v2442
    %4477 = vmatprep.subr.mxu0 %v2435
    %4478 = vmatpush1.msra.mxu0 %v2434
    %4479 = vmatprep.subr.mxu0 %v2427
    %4480 = vmatpush1.msra.mxu0 %v2426
    %4481 = vmatprep.subr.mxu0 %v2419
    %4482 = vmatpush1.msra.mxu0 %v2418
    %4483 = vmatprep.subr.mxu0 %v2411
    %4484 = vmatpush1.msra.mxu0 %v2410
    %4485 = vmatprep.subr.mxu0 %v2403
    %4486 = vmatpush1.msra.mxu0 %v2402
    %4487 = vmatprep.subr.mxu0 %v2395
    %4488 = vmatpush1.msra.mxu0 %v2394
    %4489 = vmatprep.subr.mxu0 %v2387
    %4490 = vmatpush1.msra.mxu0 %v2386
    %4491 = vmatprep.subr.mxu0 %v2635
    %4492 = vmatpush2.msra.mxu0 %v2634
    %4493 = vmatprep.subr.mxu0 %v2627
    %4494 = vmatpush2.msra.mxu0 %v2626
    %4495 = vmatprep.subr.mxu0 %v2619
    %4496 = vmatpush2.msra.mxu0 %v2618
    %4497 = vmatprep.subr.mxu0 %v2611
    %4498 = vmatpush2.msra.mxu0 %v2610
    %4499 = vmatprep.subr.mxu0 %v2603
    %4500 = vmatpush2.msra.mxu0 %v2602
    %4501 = vmatprep.subr.mxu0 %v2595
    %4502 = vmatpush2.msra.mxu0 %v2594
    %4503 = vmatprep.subr.mxu0 %v2587
    %4504 = vmatpush2.msra.mxu0 %v2586
    %4505 = vmatprep.subr.mxu0 %v2579
    %4506 = vmatpush2.msra.mxu0 %v2578
    %4507 = vmatprep.subr.mxu0 %v2571
    %4508 = vmatpush2.msra.mxu0 %v2570
    %4509 = vmatprep.subr.mxu0 %v2563
    %4510 = vmatpush2.msra.mxu0 %v2562
    %4511 = vmatprep.subr.mxu0 %v2555
    %4512 = vmatpush2.msra.mxu0 %v2554
    %4513 = vmatprep.subr.mxu0 %v2547
    %4514 = vmatpush2.msra.mxu0 %v2546
    %4515 = vmatprep.subr.mxu0 %v2539
    %4516 = vmatpush2.msra.mxu0 %v2538
    %4517 = vmatprep.subr.mxu0 %v2531
    %4518 = vmatpush2.msra.mxu0 %v2530
    %4519 = vmatprep.subr.mxu0 %v2523
    %4520 = vmatpush2.msra.mxu0 %v2522
    %4521 = vmatprep.subr.mxu0 %v2515
    %4522 = vmatpush2.msra.mxu0 %v2514
    %4523 = vmatprep.mubr.f32.mxu0 %v4377
    %4524 = vmatmul.mubr.f32.gmra.mxu0 %v4376
    %v4525 = vpop.f32.mrf.mxu0
    %v4526 = vadd.f32 0.0, %v4525
    %v4527 = vpop.f32.mrf.mxu0
    %v4528 = vadd.f32 0.0, %v4527
    %4529 = vdwg.mxu0
    %4530 = vmatprep.subr.mxu0 %v2509
    %4531 = vmatpush1.msra.mxu0 %v2508
    %4532 = vmatprep.subr.mxu0 %v2501
    %4533 = vmatpush1.msra.mxu0 %v2500
    %4534 = vmatprep.subr.mxu0 %v2493
    %4535 = vmatpush1.msra.mxu0 %v2492
    %4536 = vmatprep.subr.mxu0 %v2485
    %4537 = vmatpush1.msra.mxu0 %v2484
    %4538 = vmatprep.subr.mxu0 %v2477
    %4539 = vmatpush1.msra.mxu0 %v2476
    %4540 = vmatprep.subr.mxu0 %v2469
    %4541 = vmatpush1.msra.mxu0 %v2468
    %4542 = vmatprep.subr.mxu0 %v2461
    %4543 = vmatpush1.msra.mxu0 %v2460
    %4544 = vmatprep.subr.mxu0 %v2453
    %4545 = vmatpush1.msra.mxu0 %v2452
    %4546 = vmatprep.subr.mxu0 %v2445
    %4547 = vmatpush1.msra.mxu0 %v2444
    %4548 = vmatprep.subr.mxu0 %v2437
    %4549 = vmatpush1.msra.mxu0 %v2436
    %4550 = vmatprep.subr.mxu0 %v2429
    %4551 = vmatpush1.msra.mxu0 %v2428
    %4552 = vmatprep.subr.mxu0 %v2421
    %4553 = vmatpush1.msra.mxu0 %v2420
    %4554 = vmatprep.subr.mxu0 %v2413
    %4555 = vmatpush1.msra.mxu0 %v2412
    %4556 = vmatprep.subr.mxu0 %v2405
    %4557 = vmatpush1.msra.mxu0 %v2404
    %4558 = vmatprep.subr.mxu0 %v2397
    %4559 = vmatpush1.msra.mxu0 %v2396
    %4560 = vmatprep.subr.mxu0 %v2389
    %4561 = vmatpush1.msra.mxu0 %v2388
    %4562 = vmatprep.subr.mxu0 %v2637
    %4563 = vmatpush2.msra.mxu0 %v2636
    %4564 = vmatprep.subr.mxu0 %v2629
    %4565 = vmatpush2.msra.mxu0 %v2628
    %4566 = vmatprep.subr.mxu0 %v2621
    %4567 = vmatpush2.msra.mxu0 %v2620
    %4568 = vmatprep.subr.mxu0 %v2613
    %4569 = vmatpush2.msra.mxu0 %v2612
    %4570 = vmatprep.subr.mxu0 %v2605
    %4571 = vmatpush2.msra.mxu0 %v2604
    %4572 = vmatprep.subr.mxu0 %v2597
    %4573 = vmatpush2.msra.mxu0 %v2596
    %4574 = vmatprep.subr.mxu0 %v2589
    %4575 = vmatpush2.msra.mxu0 %v2588
    %4576 = vmatprep.subr.mxu0 %v2581
    %4577 = vmatpush2.msra.mxu0 %v2580
    %4578 = vmatprep.subr.mxu0 %v2573
    %4579 = vmatpush2.msra.mxu0 %v2572
    %4580 = vmatprep.subr.mxu0 %v2565
    %4581 = vmatpush2.msra.mxu0 %v2564
    %4582 = vmatprep.subr.mxu0 %v2557
    %4583 = vmatpush2.msra.mxu0 %v2556
    %4584 = vmatprep.subr.mxu0 %v2549
    %4585 = vmatpush2.msra.mxu0 %v2548
    %4586 = vmatprep.subr.mxu0 %v2541
    %4587 = vmatpush2.msra.mxu0 %v2540
    %4588 = vmatprep.subr.mxu0 %v2533
    %4589 = vmatpush2.msra.mxu0 %v2532
    %4590 = vmatprep.subr.mxu0 %v2525
    %4591 = vmatpush2.msra.mxu0 %v2524
    %4592 = vmatprep.subr.mxu0 %v2517
    %4593 = vmatpush2.msra.mxu0 %v2516
    %4594 = vmatprep.mubr.f32.mxu0 %v4377
    %4595 = vmatmul.mubr.f32.gmra.mxu0 %v4376
    %v4596 = vpop.f32.mrf.mxu0
    %v4597 = vadd.f32 0.0, %v4596
    %v4598 = vpop.f32.mrf.mxu0
    %v4599 = vadd.f32 0.0, %v4598
    %4600 = vdwg.mxu0
    %4601 = vmatprep.subr.mxu0 %v2511
    %4602 = vmatpush1.msra.mxu0 %v2510
    %4603 = vmatprep.subr.mxu0 %v2503
    %4604 = vmatpush1.msra.mxu0 %v2502
    %4605 = vmatprep.subr.mxu0 %v2495
    %4606 = vmatpush1.msra.mxu0 %v2494
    %4607 = vmatprep.subr.mxu0 %v2487
    %4608 = vmatpush1.msra.mxu0 %v2486
    %4609 = vmatprep.subr.mxu0 %v2479
    %4610 = vmatpush1.msra.mxu0 %v2478
    %4611 = vmatprep.subr.mxu0 %v2471
    %4612 = vmatpush1.msra.mxu0 %v2470
    %4613 = vmatprep.subr.mxu0 %v2463
    %4614 = vmatpush1.msra.mxu0 %v2462
    %4615 = vmatprep.subr.mxu0 %v2455
    %4616 = vmatpush1.msra.mxu0 %v2454
    %4617 = vmatprep.subr.mxu0 %v2447
    %4618 = vmatpush1.msra.mxu0 %v2446
    %4619 = vmatprep.subr.mxu0 %v2439
    %4620 = vmatpush1.msra.mxu0 %v2438
    %4621 = vmatprep.subr.mxu0 %v2431
    %4622 = vmatpush1.msra.mxu0 %v2430
    %4623 = vmatprep.subr.mxu0 %v2423
    %4624 = vmatpush1.msra.mxu0 %v2422
    %4625 = vmatprep.subr.mxu0 %v2415
    %4626 = vmatpush1.msra.mxu0 %v2414
    %4627 = vmatprep.subr.mxu0 %v2407
    %4628 = vmatpush1.msra.mxu0 %v2406
    %4629 = vmatprep.subr.mxu0 %v2399
    %4630 = vmatpush1.msra.mxu0 %v2398
    %4631 = vmatprep.subr.mxu0 %v2391
    %4632 = vmatpush1.msra.mxu0 %v2390
    %4633 = vmatprep.subr.mxu0 %v2639
    %4634 = vmatpush2.msra.mxu0 %v2638
    %4635 = vmatprep.subr.mxu0 %v2631
    %4636 = vmatpush2.msra.mxu0 %v2630
    %4637 = vmatprep.subr.mxu0 %v2623
    %4638 = vmatpush2.msra.mxu0 %v2622
    %4639 = vmatprep.subr.mxu0 %v2615
    %4640 = vmatpush2.msra.mxu0 %v2614
    %4641 = vmatprep.subr.mxu0 %v2607
    %4642 = vmatpush2.msra.mxu0 %v2606
    %4643 = vmatprep.subr.mxu0 %v2599
    %4644 = vmatpush2.msra.mxu0 %v2598
    %4645 = vmatprep.subr.mxu0 %v2591
    %4646 = vmatpush2.msra.mxu0 %v2590
    %4647 = vmatprep.subr.mxu0 %v2583
    %4648 = vmatpush2.msra.mxu0 %v2582
    %4649 = vmatprep.subr.mxu0 %v2575
    %4650 = vmatpush2.msra.mxu0 %v2574
    %4651 = vmatprep.subr.mxu0 %v2567
    %4652 = vmatpush2.msra.mxu0 %v2566
    %4653 = vmatprep.subr.mxu0 %v2559
    %4654 = vmatpush2.msra.mxu0 %v2558
    %4655 = vmatprep.subr.mxu0 %v2551
    %4656 = vmatpush2.msra.mxu0 %v2550
    %4657 = vmatprep.subr.mxu0 %v2543
    %4658 = vmatpush2.msra.mxu0 %v2542
    %4659 = vmatprep.subr.mxu0 %v2535
    %4660 = vmatpush2.msra.mxu0 %v2534
    %4661 = vmatprep.subr.mxu0 %v2527
    %4662 = vmatpush2.msra.mxu0 %v2526
    %4663 = vmatprep.subr.mxu0 %v2519
    %4664 = vmatpush2.msra.mxu0 %v2518
    %4665 = vmatprep.mubr.f32.mxu0 %v4377
    %4666 = vmatmul.mubr.f32.gmra.mxu0 %v4376
    %v4667 = vpop.f32.mrf.mxu0
    %v4668 = vadd.f32 0.0, %v4667
    %v4669 = vpop.f32.mrf.mxu0
    %v4670 = vadd.f32 0.0, %v4669
    %4671 = vdwg.mxu0
    %v4672 = vadd.f32 %v4380, %v4455
    %v4673 = vadd.f32 %v4381, %v4457
    %v4674 = vadd.f32 %v4382, %v4526
    %v4675 = vadd.f32 %v4383, %v4528
    %v4676 = vadd.f32 %v4384, %v4597
    %v4677 = vadd.f32 %v4385, %v4599
    %v4678 = vadd.f32 %v4386, %v4668
    %v4679 = vadd.f32 %v4387, %v4670
    %v4680 = vxor.u32 %v4672, 2147483648
    %v4681 = vxor.u32 %v4673, 2147483648
    %v4682 = vxor.u32 %v4674, 2147483648
    %v4683 = vxor.u32 %v4675, 2147483648
    %v4684 = vxor.u32 %v4676, 2147483648
    %v4685 = vxor.u32 %v4677, 2147483648
    %v4686 = vmul.f32 %v4680, 1.442695
    %v4687 = vpow.pop %v4686
    %v4688 = vmul.f32 %v4681, 1.442695
    %v4689 = vpow.pop %v4688
    %v4690 = vmul.f32 %v4682, 1.442695
    %v4691 = vpow.pop %v4690
    %v4692 = vmul.f32 %v4683, 1.442695
    %v4693 = vpow.pop %v4692
    %v4694 = vmul.f32 %v4684, 1.442695
    %v4695 = vpow.pop %v4694
    %v4696 = vmul.f32 %v4685, 1.442695
    %v4697 = vpow.pop %v4696
    %v4698 = vadd.f32 %v4687, 1.0
    %v4699 = vadd.f32 %v4689, 1.0
    %v4700 = vadd.f32 %v4691, 1.0
    %v4701 = vadd.f32 %v4693, 1.0
    %v4702 = vadd.f32 %v4695, 1.0
    %v4703 = vadd.f32 %v4697, 1.0
    %v4704 = vrcp.pop %v4698
    %v4705 = vmul.f32 1.0, %v4704
    %v4706 = vrcp.pop %v4699
    %v4707 = vmul.f32 1.0, %v4706
    %v4708 = vrcp.pop %v4700
    %v4709 = vmul.f32 1.0, %v4708
    %v4710 = vrcp.pop %v4701
    %v4711 = vmul.f32 1.0, %v4710
    %v4712 = vrcp.pop %v4702
    %v4713 = vmul.f32 1.0, %v4712
    %v4714 = vrcp.pop %v4703
    %v4715 = vmul.f32 1.0, %v4714
    %v4716 = vtanh.pop %v4678
    %v4717 = vtanh.pop %v4679
    %v4718 = vmul.f32 %v4709, %v4372
    %v4719 = vmul.f32 %v4711, %v4373
    %v4720 = vmul.f32 %v4705, %v4716
    %v4721 = vmul.f32 %v4707, %v4717
    %v4722 = vadd.f32 %v4718, %v4720
    %v4723 = vadd.f32 %v4719, %v4721
    %v4724 = vtanh.pop %v4722
    %v4725 = vtanh.pop %v4723
    %v4726 = vmul.f32 %v4713, %v4724
    %v4727 = vmul.f32 %v4715, %v4725
    %v4728 = vmax.f32 %v4378, %v4726
    %v4729 = vmax.f32 %v4379, %v4727
    %v4730 = vld [vmem:[#allocation4 + $0x180] sm:$0xff]
    %v4731 = vld [vmem:[#allocation4 + $0x188] sm:$0xff]
    %v4732 = vld [vmem:[#allocation4 + $0x190] sm:$0xff]
    %v4733 = vld [vmem:[#allocation4 + $0x198] sm:$0xff]
    %v4734 = vld [vmem:[#allocation4 + $0x1a0] sm:$0xff]
    %v4735 = vld [vmem:[#allocation4 + $0x1a8] sm:$0xff]
    %v4736 = vld [vmem:[#allocation4 + $0x1b0] sm:$0xff]
    %v4737 = vld [vmem:[#allocation4 + $0x1b8] sm:$0xff]
    %4738 = vmatprep.subr.mxu0 %v2505
    %4739 = vmatpush1.msra.mxu0 %v2504
    %4740 = vmatprep.subr.mxu0 %v2497
    %4741 = vmatpush1.msra.mxu0 %v2496
    %4742 = vmatprep.subr.mxu0 %v2489
    %4743 = vmatpush1.msra.mxu0 %v2488
    %4744 = vmatprep.subr.mxu0 %v2481
    %4745 = vmatpush1.msra.mxu0 %v2480
    %4746 = vmatprep.subr.mxu0 %v2473
    %4747 = vmatpush1.msra.mxu0 %v2472
    %4748 = vmatprep.subr.mxu0 %v2465
    %4749 = vmatpush1.msra.mxu0 %v2464
    %4750 = vmatprep.subr.mxu0 %v2457
    %4751 = vmatpush1.msra.mxu0 %v2456
    %4752 = vmatprep.subr.mxu0 %v2449
    %4753 = vmatpush1.msra.mxu0 %v2448
    %4754 = vmatprep.subr.mxu0 %v2441
    %4755 = vmatpush1.msra.mxu0 %v2440
    %4756 = vmatprep.subr.mxu0 %v2433
    %4757 = vmatpush1.msra.mxu0 %v2432
    %4758 = vmatprep.subr.mxu0 %v2425
    %4759 = vmatpush1.msra.mxu0 %v2424
    %4760 = vmatprep.subr.mxu0 %v2417
    %4761 = vmatpush1.msra.mxu0 %v2416
    %4762 = vmatprep.subr.mxu0 %v2409
    %4763 = vmatpush1.msra.mxu0 %v2408
    %4764 = vmatprep.subr.mxu0 %v2401
    %4765 = vmatpush1.msra.mxu0 %v2400
    %4766 = vmatprep.subr.mxu0 %v2393
    %4767 = vmatpush1.msra.mxu0 %v2392
    %4768 = vmatprep.subr.mxu0 %v2385
    %4769 = vmatpush1.msra.mxu0 %v2384
    %4770 = vmatprep.subr.mxu0 %v2633
    %4771 = vmatpush2.msra.mxu0 %v2632
    %4772 = vmatprep.subr.mxu0 %v2625
    %4773 = vmatpush2.msra.mxu0 %v2624
    %4774 = vmatprep.subr.mxu0 %v2617
    %4775 = vmatpush2.msra.mxu0 %v2616
    %4776 = vmatprep.subr.mxu0 %v2609
    %4777 = vmatpush2.msra.mxu0 %v2608
    %4778 = vmatprep.subr.mxu0 %v2601
    %4779 = vmatpush2.msra.mxu0 %v2600
    %4780 = vmatprep.subr.mxu0 %v2593
    %4781 = vmatpush2.msra.mxu0 %v2592
    %4782 = vmatprep.subr.mxu0 %v2585
    %4783 = vmatpush2.msra.mxu0 %v2584
    %4784 = vmatprep.subr.mxu0 %v2577
    %4785 = vmatpush2.msra.mxu0 %v2576
    %4786 = vmatprep.subr.mxu0 %v2569
    %4787 = vmatpush2.msra.mxu0 %v2568
    %4788 = vmatprep.subr.mxu0 %v2561
    %4789 = vmatpush2.msra.mxu0 %v2560
    %4790 = vmatprep.subr.mxu0 %v2553
    %4791 = vmatpush2.msra.mxu0 %v2552
    %4792 = vmatprep.subr.mxu0 %v2545
    %4793 = vmatpush2.msra.mxu0 %v2544
    %4794 = vmatprep.subr.mxu0 %v2537
    %4795 = vmatpush2.msra.mxu0 %v2536
    %4796 = vmatprep.subr.mxu0 %v2529
    %4797 = vmatpush2.msra.mxu0 %v2528
    %4798 = vmatprep.subr.mxu0 %v2521
    %4799 = vmatpush2.msra.mxu0 %v2520
    %4800 = vmatprep.subr.mxu0 %v2513
    %4801 = vmatpush2.msra.mxu0 %v2512
    %4802 = vmatprep.mubr.f32.mxu0 %v4727
    %4803 = vmatmul.mubr.f32.gmra.mxu0 %v4726
    %v4804 = vpop.f32.mrf.mxu0
    %v4805 = vadd.f32 0.0, %v4804
    %v4806 = vpop.f32.mrf.mxu0
    %v4807 = vadd.f32 0.0, %v4806
    %4808 = vdwg.mxu0
    %4809 = vmatprep.subr.mxu0 %v2507
    %4810 = vmatpush1.msra.mxu0 %v2506
    %4811 = vmatprep.subr.mxu0 %v2499
    %4812 = vmatpush1.msra.mxu0 %v2498
    %4813 = vmatprep.subr.mxu0 %v2491
    %4814 = vmatpush1.msra.mxu0 %v2490
    %4815 = vmatprep.subr.mxu0 %v2483
    %4816 = vmatpush1.msra.mxu0 %v2482
    %4817 = vmatprep.subr.mxu0 %v2475
    %4818 = vmatpush1.msra.mxu0 %v2474
    %4819 = vmatprep.subr.mxu0 %v2467
    %4820 = vmatpush1.msra.mxu0 %v2466
    %4821 = vmatprep.subr.mxu0 %v2459
    %4822 = vmatpush1.msra.mxu0 %v2458
    %4823 = vmatprep.subr.mxu0 %v2451
    %4824 = vmatpush1.msra.mxu0 %v2450
    %4825 = vmatprep.subr.mxu0 %v2443
    %4826 = vmatpush1.msra.mxu0 %v2442
    %4827 = vmatprep.subr.mxu0 %v2435
    %4828 = vmatpush1.msra.mxu0 %v2434
    %4829 = vmatprep.subr.mxu0 %v2427
    %4830 = vmatpush1.msra.mxu0 %v2426
    %4831 = vmatprep.subr.mxu0 %v2419
    %4832 = vmatpush1.msra.mxu0 %v2418
    %4833 = vmatprep.subr.mxu0 %v2411
    %4834 = vmatpush1.msra.mxu0 %v2410
    %4835 = vmatprep.subr.mxu0 %v2403
    %4836 = vmatpush1.msra.mxu0 %v2402
    %4837 = vmatprep.subr.mxu0 %v2395
    %4838 = vmatpush1.msra.mxu0 %v2394
    %4839 = vmatprep.subr.mxu0 %v2387
    %4840 = vmatpush1.msra.mxu0 %v2386
    %4841 = vmatprep.subr.mxu0 %v2635
    %4842 = vmatpush2.msra.mxu0 %v2634
    %4843 = vmatprep.subr.mxu0 %v2627
    %4844 = vmatpush2.msra.mxu0 %v2626
    %4845 = vmatprep.subr.mxu0 %v2619
    %4846 = vmatpush2.msra.mxu0 %v2618
    %4847 = vmatprep.subr.mxu0 %v2611
    %4848 = vmatpush2.msra.mxu0 %v2610
    %4849 = vmatprep.subr.mxu0 %v2603
    %4850 = vmatpush2.msra.mxu0 %v2602
    %4851 = vmatprep.subr.mxu0 %v2595
    %4852 = vmatpush2.msra.mxu0 %v2594
    %4853 = vmatprep.subr.mxu0 %v2587
    %4854 = vmatpush2.msra.mxu0 %v2586
    %4855 = vmatprep.subr.mxu0 %v2579
    %4856 = vmatpush2.msra.mxu0 %v2578
    %4857 = vmatprep.subr.mxu0 %v2571
    %4858 = vmatpush2.msra.mxu0 %v2570
    %4859 = vmatprep.subr.mxu0 %v2563
    %4860 = vmatpush2.msra.mxu0 %v2562
    %4861 = vmatprep.subr.mxu0 %v2555
    %4862 = vmatpush2.msra.mxu0 %v2554
    %4863 = vmatprep.subr.mxu0 %v2547
    %4864 = vmatpush2.msra.mxu0 %v2546
    %4865 = vmatprep.subr.mxu0 %v2539
    %4866 = vmatpush2.msra.mxu0 %v2538
    %4867 = vmatprep.subr.mxu0 %v2531
    %4868 = vmatpush2.msra.mxu0 %v2530
    %4869 = vmatprep.subr.mxu0 %v2523
    %4870 = vmatpush2.msra.mxu0 %v2522
    %4871 = vmatprep.subr.mxu0 %v2515
    %4872 = vmatpush2.msra.mxu0 %v2514
    %4873 = vmatprep.mubr.f32.mxu0 %v4727
    %4874 = vmatmul.mubr.f32.gmra.mxu0 %v4726
    %v4875 = vpop.f32.mrf.mxu0
    %v4876 = vadd.f32 0.0, %v4875
    %v4877 = vpop.f32.mrf.mxu0
    %v4878 = vadd.f32 0.0, %v4877
    %4879 = vdwg.mxu0
    %4880 = vmatprep.subr.mxu0 %v2509
    %4881 = vmatpush1.msra.mxu0 %v2508
    %4882 = vmatprep.subr.mxu0 %v2501
    %4883 = vmatpush1.msra.mxu0 %v2500
    %4884 = vmatprep.subr.mxu0 %v2493
    %4885 = vmatpush1.msra.mxu0 %v2492
    %4886 = vmatprep.subr.mxu0 %v2485
    %4887 = vmatpush1.msra.mxu0 %v2484
    %4888 = vmatprep.subr.mxu0 %v2477
    %4889 = vmatpush1.msra.mxu0 %v2476
    %4890 = vmatprep.subr.mxu0 %v2469
    %4891 = vmatpush1.msra.mxu0 %v2468
    %4892 = vmatprep.subr.mxu0 %v2461
    %4893 = vmatpush1.msra.mxu0 %v2460
    %4894 = vmatprep.subr.mxu0 %v2453
    %4895 = vmatpush1.msra.mxu0 %v2452
    %4896 = vmatprep.subr.mxu0 %v2445
    %4897 = vmatpush1.msra.mxu0 %v2444
    %4898 = vmatprep.subr.mxu0 %v2437
    %4899 = vmatpush1.msra.mxu0 %v2436
    %4900 = vmatprep.subr.mxu0 %v2429
    %4901 = vmatpush1.msra.mxu0 %v2428
    %4902 = vmatprep.subr.mxu0 %v2421
    %4903 = vmatpush1.msra.mxu0 %v2420
    %4904 = vmatprep.subr.mxu0 %v2413
    %4905 = vmatpush1.msra.mxu0 %v2412
    %4906 = vmatprep.subr.mxu0 %v2405
    %4907 = vmatpush1.msra.mxu0 %v2404
    %4908 = vmatprep.subr.mxu0 %v2397
    %4909 = vmatpush1.msra.mxu0 %v2396
    %4910 = vmatprep.subr.mxu0 %v2389
    %4911 = vmatpush1.msra.mxu0 %v2388
    %4912 = vmatprep.subr.mxu0 %v2637
    %4913 = vmatpush2.msra.mxu0 %v2636
    %4914 = vmatprep.subr.mxu0 %v2629
    %4915 = vmatpush2.msra.mxu0 %v2628
    %4916 = vmatprep.subr.mxu0 %v2621
    %4917 = vmatpush2.msra.mxu0 %v2620
    %4918 = vmatprep.subr.mxu0 %v2613
    %4919 = vmatpush2.msra.mxu0 %v2612
    %4920 = vmatprep.subr.mxu0 %v2605
    %4921 = vmatpush2.msra.mxu0 %v2604
    %4922 = vmatprep.subr.mxu0 %v2597
    %4923 = vmatpush2.msra.mxu0 %v2596
    %4924 = vmatprep.subr.mxu0 %v2589
    %4925 = vmatpush2.msra.mxu0 %v2588
    %4926 = vmatprep.subr.mxu0 %v2581
    %4927 = vmatpush2.msra.mxu0 %v2580
    %4928 = vmatprep.subr.mxu0 %v2573
    %4929 = vmatpush2.msra.mxu0 %v2572
    %4930 = vmatprep.subr.mxu0 %v2565
    %4931 = vmatpush2.msra.mxu0 %v2564
    %4932 = vmatprep.subr.mxu0 %v2557
    %4933 = vmatpush2.msra.mxu0 %v2556
    %4934 = vmatprep.subr.mxu0 %v2549
    %4935 = vmatpush2.msra.mxu0 %v2548
    %4936 = vmatprep.subr.mxu0 %v2541
    %4937 = vmatpush2.msra.mxu0 %v2540
    %4938 = vmatprep.subr.mxu0 %v2533
    %4939 = vmatpush2.msra.mxu0 %v2532
    %4940 = vmatprep.subr.mxu0 %v2525
    %4941 = vmatpush2.msra.mxu0 %v2524
    %4942 = vmatprep.subr.mxu0 %v2517
    %4943 = vmatpush2.msra.mxu0 %v2516
    %4944 = vmatprep.mubr.f32.mxu0 %v4727
    %4945 = vmatmul.mubr.f32.gmra.mxu0 %v4726
    %v4946 = vpop.f32.mrf.mxu0
    %v4947 = vadd.f32 0.0, %v4946
    %v4948 = vpop.f32.mrf.mxu0
    %v4949 = vadd.f32 0.0, %v4948
    %4950 = vdwg.mxu0
    %4951 = vmatprep.subr.mxu0 %v2511
    %4952 = vmatpush1.msra.mxu0 %v2510
    %4953 = vmatprep.subr.mxu0 %v2503
    %4954 = vmatpush1.msra.mxu0 %v2502
    %4955 = vmatprep.subr.mxu0 %v2495
    %4956 = vmatpush1.msra.mxu0 %v2494
    %4957 = vmatprep.subr.mxu0 %v2487
    %4958 = vmatpush1.msra.mxu0 %v2486
    %4959 = vmatprep.subr.mxu0 %v2479
    %4960 = vmatpush1.msra.mxu0 %v2478
    %4961 = vmatprep.subr.mxu0 %v2471
    %4962 = vmatpush1.msra.mxu0 %v2470
    %4963 = vmatprep.subr.mxu0 %v2463
    %4964 = vmatpush1.msra.mxu0 %v2462
    %4965 = vmatprep.subr.mxu0 %v2455
    %4966 = vmatpush1.msra.mxu0 %v2454
    %4967 = vmatprep.subr.mxu0 %v2447
    %4968 = vmatpush1.msra.mxu0 %v2446
    %4969 = vmatprep.subr.mxu0 %v2439
    %4970 = vmatpush1.msra.mxu0 %v2438
    %4971 = vmatprep.subr.mxu0 %v2431
    %4972 = vmatpush1.msra.mxu0 %v2430
    %4973 = vmatprep.subr.mxu0 %v2423
    %4974 = vmatpush1.msra.mxu0 %v2422
    %4975 = vmatprep.subr.mxu0 %v2415
    %4976 = vmatpush1.msra.mxu0 %v2414
    %4977 = vmatprep.subr.mxu0 %v2407
    %4978 = vmatpush1.msra.mxu0 %v2406
    %4979 = vmatprep.subr.mxu0 %v2399
    %4980 = vmatpush1.msra.mxu0 %v2398
    %4981 = vmatprep.subr.mxu0 %v2391
    %4982 = vmatpush1.msra.mxu0 %v2390
    %4983 = vmatprep.subr.mxu0 %v2639
    %4984 = vmatpush2.msra.mxu0 %v2638
    %4985 = vmatprep.subr.mxu0 %v2631
    %4986 = vmatpush2.msra.mxu0 %v2630
    %4987 = vmatprep.subr.mxu0 %v2623
    %4988 = vmatpush2.msra.mxu0 %v2622
    %4989 = vmatprep.subr.mxu0 %v2615
    %4990 = vmatpush2.msra.mxu0 %v2614
    %4991 = vmatprep.subr.mxu0 %v2607
    %4992 = vmatpush2.msra.mxu0 %v2606
    %4993 = vmatprep.subr.mxu0 %v2599
    %4994 = vmatpush2.msra.mxu0 %v2598
    %4995 = vmatprep.subr.mxu0 %v2591
    %4996 = vmatpush2.msra.mxu0 %v2590
    %4997 = vmatprep.subr.mxu0 %v2583
    %4998 = vmatpush2.msra.mxu0 %v2582
    %4999 = vmatprep.subr.mxu0 %v2575
    %5000 = vmatpush2.msra.mxu0 %v2574
    %5001 = vmatprep.subr.mxu0 %v2567
    %5002 = vmatpush2.msra.mxu0 %v2566
    %5003 = vmatprep.subr.mxu0 %v2559
    %5004 = vmatpush2.msra.mxu0 %v2558
    %5005 = vmatprep.subr.mxu0 %v2551
    %5006 = vmatpush2.msra.mxu0 %v2550
    %5007 = vmatprep.subr.mxu0 %v2543
    %5008 = vmatpush2.msra.mxu0 %v2542
    %5009 = vmatprep.subr.mxu0 %v2535
    %5010 = vmatpush2.msra.mxu0 %v2534
    %5011 = vmatprep.subr.mxu0 %v2527
    %5012 = vmatpush2.msra.mxu0 %v2526
    %5013 = vmatprep.subr.mxu0 %v2519
    %5014 = vmatpush2.msra.mxu0 %v2518
    %5015 = vmatprep.mubr.f32.mxu0 %v4727
    %5016 = vmatmul.mubr.f32.gmra.mxu0 %v4726
    %v5017 = vpop.f32.mrf.mxu0
    %v5018 = vadd.f32 0.0, %v5017
    %v5019 = vpop.f32.mrf.mxu0
    %v5020 = vadd.f32 0.0, %v5019
    %5021 = vdwg.mxu0
    %v5022 = vadd.f32 %v4730, %v4805
    %v5023 = vadd.f32 %v4731, %v4807
    %v5024 = vadd.f32 %v4732, %v4876
    %v5025 = vadd.f32 %v4733, %v4878
    %v5026 = vadd.f32 %v4734, %v4947
    %v5027 = vadd.f32 %v4735, %v4949
    %v5028 = vadd.f32 %v4736, %v5018
    %v5029 = vadd.f32 %v4737, %v5020
    %v5030 = vxor.u32 %v5022, 2147483648
    %v5031 = vxor.u32 %v5023, 2147483648
    %v5032 = vxor.u32 %v5024, 2147483648
    %v5033 = vxor.u32 %v5025, 2147483648
    %v5034 = vxor.u32 %v5026, 2147483648
    %v5035 = vxor.u32 %v5027, 2147483648
    %v5036 = vmul.f32 %v5030, 1.442695
    %v5037 = vpow.pop %v5036
    %v5038 = vmul.f32 %v5031, 1.442695
    %v5039 = vpow.pop %v5038
    %v5040 = vmul.f32 %v5032, 1.442695
    %v5041 = vpow.pop %v5040
    %v5042 = vmul.f32 %v5033, 1.442695
    %v5043 = vpow.pop %v5042
    %v5044 = vmul.f32 %v5034, 1.442695
    %v5045 = vpow.pop %v5044
    %v5046 = vmul.f32 %v5035, 1.442695
    %v5047 = vpow.pop %v5046
    %v5048 = vadd.f32 %v5037, 1.0
    %v5049 = vadd.f32 %v5039, 1.0
    %v5050 = vadd.f32 %v5041, 1.0
    %v5051 = vadd.f32 %v5043, 1.0
    %v5052 = vadd.f32 %v5045, 1.0
    %v5053 = vadd.f32 %v5047, 1.0
    %v5054 = vrcp.pop %v5048
    %v5055 = vmul.f32 1.0, %v5054
    %v5056 = vrcp.pop %v5049
    %v5057 = vmul.f32 1.0, %v5056
    %v5058 = vrcp.pop %v5050
    %v5059 = vmul.f32 1.0, %v5058
    %v5060 = vrcp.pop %v5051
    %v5061 = vmul.f32 1.0, %v5060
    %v5062 = vrcp.pop %v5052
    %v5063 = vmul.f32 1.0, %v5062
    %v5064 = vrcp.pop %v5053
    %v5065 = vmul.f32 1.0, %v5064
    %v5066 = vtanh.pop %v5028
    %v5067 = vtanh.pop %v5029
    %v5068 = vmul.f32 %v5059, %v4722
    %v5069 = vmul.f32 %v5061, %v4723
    %v5070 = vmul.f32 %v5055, %v5066
    %v5071 = vmul.f32 %v5057, %v5067
    %v5072 = vadd.f32 %v5068, %v5070
    %v5073 = vadd.f32 %v5069, %v5071
    %v5074 = vtanh.pop %v5072
    %v5075 = vtanh.pop %v5073
    %v5076 = vmul.f32 %v5063, %v5074
    %v5077 = vmul.f32 %v5065, %v5075
    %v5078 = vmax.f32 %v4728, %v5076
    %v5079 = vmax.f32 %v4729, %v5077
    %v5080 = vld [vmem:[#allocation4 + $0x1c0] sm:$0xff]
    %v5081 = vld [vmem:[#allocation4 + $0x1c8] sm:$0xff]
    %v5082 = vld [vmem:[#allocation4 + $0x1d0] sm:$0xff]
    %v5083 = vld [vmem:[#allocation4 + $0x1d8] sm:$0xff]
    %v5084 = vld [vmem:[#allocation4 + $0x1e0] sm:$0xff]
    %v5085 = vld [vmem:[#allocation4 + $0x1e8] sm:$0xff]
    %v5086 = vld [vmem:[#allocation4 + $0x1f0] sm:$0xff]
    %v5087 = vld [vmem:[#allocation4 + $0x1f8] sm:$0xff]
    %5088 = vmatprep.subr.mxu0 %v2505
    %5089 = vmatpush1.msra.mxu0 %v2504
    %5090 = vmatprep.subr.mxu0 %v2497
    %5091 = vmatpush1.msra.mxu0 %v2496
    %5092 = vmatprep.subr.mxu0 %v2489
    %5093 = vmatpush1.msra.mxu0 %v2488
    %5094 = vmatprep.subr.mxu0 %v2481
    %5095 = vmatpush1.msra.mxu0 %v2480
    %5096 = vmatprep.subr.mxu0 %v2473
    %5097 = vmatpush1.msra.mxu0 %v2472
    %5098 = vmatprep.subr.mxu0 %v2465
    %5099 = vmatpush1.msra.mxu0 %v2464
    %5100 = vmatprep.subr.mxu0 %v2457
    %5101 = vmatpush1.msra.mxu0 %v2456
    %5102 = vmatprep.subr.mxu0 %v2449
    %5103 = vmatpush1.msra.mxu0 %v2448
    %5104 = vmatprep.subr.mxu0 %v2441
    %5105 = vmatpush1.msra.mxu0 %v2440
    %5106 = vmatprep.subr.mxu0 %v2433
    %5107 = vmatpush1.msra.mxu0 %v2432
    %5108 = vmatprep.subr.mxu0 %v2425
    %5109 = vmatpush1.msra.mxu0 %v2424
    %5110 = vmatprep.subr.mxu0 %v2417
    %5111 = vmatpush1.msra.mxu0 %v2416
    %5112 = vmatprep.subr.mxu0 %v2409
    %5113 = vmatpush1.msra.mxu0 %v2408
    %5114 = vmatprep.subr.mxu0 %v2401
    %5115 = vmatpush1.msra.mxu0 %v2400
    %5116 = vmatprep.subr.mxu0 %v2393
    %5117 = vmatpush1.msra.mxu0 %v2392
    %5118 = vmatprep.subr.mxu0 %v2385
    %5119 = vmatpush1.msra.mxu0 %v2384
    %5120 = vmatprep.subr.mxu0 %v2633
    %5121 = vmatpush2.msra.mxu0 %v2632
    %5122 = vmatprep.subr.mxu0 %v2625
    %5123 = vmatpush2.msra.mxu0 %v2624
    %5124 = vmatprep.subr.mxu0 %v2617
    %5125 = vmatpush2.msra.mxu0 %v2616
    %5126 = vmatprep.subr.mxu0 %v2609
    %5127 = vmatpush2.msra.mxu0 %v2608
    %5128 = vmatprep.subr.mxu0 %v2601
    %5129 = vmatpush2.msra.mxu0 %v2600
    %5130 = vmatprep.subr.mxu0 %v2593
    %5131 = vmatpush2.msra.mxu0 %v2592
    %5132 = vmatprep.subr.mxu0 %v2585
    %5133 = vmatpush2.msra.mxu0 %v2584
    %5134 = vmatprep.subr.mxu0 %v2577
    %5135 = vmatpush2.msra.mxu0 %v2576
    %5136 = vmatprep.subr.mxu0 %v2569
    %5137 = vmatpush2.msra.mxu0 %v2568
    %5138 = vmatprep.subr.mxu0 %v2561
    %5139 = vmatpush2.msra.mxu0 %v2560
    %5140 = vmatprep.subr.mxu0 %v2553
    %5141 = vmatpush2.msra.mxu0 %v2552
    %5142 = vmatprep.subr.mxu0 %v2545
    %5143 = vmatpush2.msra.mxu0 %v2544
    %5144 = vmatprep.subr.mxu0 %v2537
    %5145 = vmatpush2.msra.mxu0 %v2536
    %5146 = vmatprep.subr.mxu0 %v2529
    %5147 = vmatpush2.msra.mxu0 %v2528
    %5148 = vmatprep.subr.mxu0 %v2521
    %5149 = vmatpush2.msra.mxu0 %v2520
    %5150 = vmatprep.subr.mxu0 %v2513
    %5151 = vmatpush2.msra.mxu0 %v2512
    %5152 = vmatprep.mubr.f32.mxu0 %v5077
    %5153 = vmatmul.mubr.f32.gmra.mxu0 %v5076
    %v5154 = vpop.f32.mrf.mxu0
    %v5155 = vadd.f32 0.0, %v5154
    %v5156 = vpop.f32.mrf.mxu0
    %v5157 = vadd.f32 0.0, %v5156
    %5158 = vdwg.mxu0
    %5159 = vmatprep.subr.mxu0 %v2507
    %5160 = vmatpush1.msra.mxu0 %v2506
    %5161 = vmatprep.subr.mxu0 %v2499
    %5162 = vmatpush1.msra.mxu0 %v2498
    %5163 = vmatprep.subr.mxu0 %v2491
    %5164 = vmatpush1.msra.mxu0 %v2490
    %5165 = vmatprep.subr.mxu0 %v2483
    %5166 = vmatpush1.msra.mxu0 %v2482
    %5167 = vmatprep.subr.mxu0 %v2475
    %5168 = vmatpush1.msra.mxu0 %v2474
    %5169 = vmatprep.subr.mxu0 %v2467
    %5170 = vmatpush1.msra.mxu0 %v2466
    %5171 = vmatprep.subr.mxu0 %v2459
    %5172 = vmatpush1.msra.mxu0 %v2458
    %5173 = vmatprep.subr.mxu0 %v2451
    %5174 = vmatpush1.msra.mxu0 %v2450
    %5175 = vmatprep.subr.mxu0 %v2443
    %5176 = vmatpush1.msra.mxu0 %v2442
    %5177 = vmatprep.subr.mxu0 %v2435
    %5178 = vmatpush1.msra.mxu0 %v2434
    %5179 = vmatprep.subr.mxu0 %v2427
    %5180 = vmatpush1.msra.mxu0 %v2426
    %5181 = vmatprep.subr.mxu0 %v2419
    %5182 = vmatpush1.msra.mxu0 %v2418
    %5183 = vmatprep.subr.mxu0 %v2411
    %5184 = vmatpush1.msra.mxu0 %v2410
    %5185 = vmatprep.subr.mxu0 %v2403
    %5186 = vmatpush1.msra.mxu0 %v2402
    %5187 = vmatprep.subr.mxu0 %v2395
    %5188 = vmatpush1.msra.mxu0 %v2394
    %5189 = vmatprep.subr.mxu0 %v2387
    %5190 = vmatpush1.msra.mxu0 %v2386
    %5191 = vmatprep.subr.mxu0 %v2635
    %5192 = vmatpush2.msra.mxu0 %v2634
    %5193 = vmatprep.subr.mxu0 %v2627
    %5194 = vmatpush2.msra.mxu0 %v2626
    %5195 = vmatprep.subr.mxu0 %v2619
    %5196 = vmatpush2.msra.mxu0 %v2618
    %5197 = vmatprep.subr.mxu0 %v2611
    %5198 = vmatpush2.msra.mxu0 %v2610
    %5199 = vmatprep.subr.mxu0 %v2603
    %5200 = vmatpush2.msra.mxu0 %v2602
    %5201 = vmatprep.subr.mxu0 %v2595
    %5202 = vmatpush2.msra.mxu0 %v2594
    %5203 = vmatprep.subr.mxu0 %v2587
    %5204 = vmatpush2.msra.mxu0 %v2586
    %5205 = vmatprep.subr.mxu0 %v2579
    %5206 = vmatpush2.msra.mxu0 %v2578
    %5207 = vmatprep.subr.mxu0 %v2571
    %5208 = vmatpush2.msra.mxu0 %v2570
    %5209 = vmatprep.subr.mxu0 %v2563
    %5210 = vmatpush2.msra.mxu0 %v2562
    %5211 = vmatprep.subr.mxu0 %v2555
    %5212 = vmatpush2.msra.mxu0 %v2554
    %5213 = vmatprep.subr.mxu0 %v2547
    %5214 = vmatpush2.msra.mxu0 %v2546
    %5215 = vmatprep.subr.mxu0 %v2539
    %5216 = vmatpush2.msra.mxu0 %v2538
    %5217 = vmatprep.subr.mxu0 %v2531
    %5218 = vmatpush2.msra.mxu0 %v2530
    %5219 = vmatprep.subr.mxu0 %v2523
    %5220 = vmatpush2.msra.mxu0 %v2522
    %5221 = vmatprep.subr.mxu0 %v2515
    %5222 = vmatpush2.msra.mxu0 %v2514
    %5223 = vmatprep.mubr.f32.mxu0 %v5077
    %5224 = vmatmul.mubr.f32.gmra.mxu0 %v5076
    %v5225 = vpop.f32.mrf.mxu0
    %v5226 = vadd.f32 0.0, %v5225
    %v5227 = vpop.f32.mrf.mxu0
    %v5228 = vadd.f32 0.0, %v5227
    %5229 = vdwg.mxu0
    %5230 = vmatprep.subr.mxu0 %v2509
    %5231 = vmatpush1.msra.mxu0 %v2508
    %5232 = vmatprep.subr.mxu0 %v2501
    %5233 = vmatpush1.msra.mxu0 %v2500
    %5234 = vmatprep.subr.mxu0 %v2493
    %5235 = vmatpush1.msra.mxu0 %v2492
    %5236 = vmatprep.subr.mxu0 %v2485
    %5237 = vmatpush1.msra.mxu0 %v2484
    %5238 = vmatprep.subr.mxu0 %v2477
    %5239 = vmatpush1.msra.mxu0 %v2476
    %5240 = vmatprep.subr.mxu0 %v2469
    %5241 = vmatpush1.msra.mxu0 %v2468
    %5242 = vmatprep.subr.mxu0 %v2461
    %5243 = vmatpush1.msra.mxu0 %v2460
    %5244 = vmatprep.subr.mxu0 %v2453
    %5245 = vmatpush1.msra.mxu0 %v2452
    %5246 = vmatprep.subr.mxu0 %v2445
    %5247 = vmatpush1.msra.mxu0 %v2444
    %5248 = vmatprep.subr.mxu0 %v2437
    %5249 = vmatpush1.msra.mxu0 %v2436
    %5250 = vmatprep.subr.mxu0 %v2429
    %5251 = vmatpush1.msra.mxu0 %v2428
    %5252 = vmatprep.subr.mxu0 %v2421
    %5253 = vmatpush1.msra.mxu0 %v2420
    %5254 = vmatprep.subr.mxu0 %v2413
    %5255 = vmatpush1.msra.mxu0 %v2412
    %5256 = vmatprep.subr.mxu0 %v2405
    %5257 = vmatpush1.msra.mxu0 %v2404
    %5258 = vmatprep.subr.mxu0 %v2397
    %5259 = vmatpush1.msra.mxu0 %v2396
    %5260 = vmatprep.subr.mxu0 %v2389
    %5261 = vmatpush1.msra.mxu0 %v2388
    %5262 = vmatprep.subr.mxu0 %v2637
    %5263 = vmatpush2.msra.mxu0 %v2636
    %5264 = vmatprep.subr.mxu0 %v2629
    %5265 = vmatpush2.msra.mxu0 %v2628
    %5266 = vmatprep.subr.mxu0 %v2621
    %5267 = vmatpush2.msra.mxu0 %v2620
    %5268 = vmatprep.subr.mxu0 %v2613
    %5269 = vmatpush2.msra.mxu0 %v2612
    %5270 = vmatprep.subr.mxu0 %v2605
    %5271 = vmatpush2.msra.mxu0 %v2604
    %5272 = vmatprep.subr.mxu0 %v2597
    %5273 = vmatpush2.msra.mxu0 %v2596
    %5274 = vmatprep.subr.mxu0 %v2589
    %5275 = vmatpush2.msra.mxu0 %v2588
    %5276 = vmatprep.subr.mxu0 %v2581
    %5277 = vmatpush2.msra.mxu0 %v2580
    %5278 = vmatprep.subr.mxu0 %v2573
    %5279 = vmatpush2.msra.mxu0 %v2572
    %5280 = vmatprep.subr.mxu0 %v2565
    %5281 = vmatpush2.msra.mxu0 %v2564
    %5282 = vmatprep.subr.mxu0 %v2557
    %5283 = vmatpush2.msra.mxu0 %v2556
    %5284 = vmatprep.subr.mxu0 %v2549
    %5285 = vmatpush2.msra.mxu0 %v2548
    %5286 = vmatprep.subr.mxu0 %v2541
    %5287 = vmatpush2.msra.mxu0 %v2540
    %5288 = vmatprep.subr.mxu0 %v2533
    %5289 = vmatpush2.msra.mxu0 %v2532
    %5290 = vmatprep.subr.mxu0 %v2525
    %5291 = vmatpush2.msra.mxu0 %v2524
    %5292 = vmatprep.subr.mxu0 %v2517
    %5293 = vmatpush2.msra.mxu0 %v2516
    %5294 = vmatprep.mubr.f32.mxu0 %v5077
    %5295 = vmatmul.mubr.f32.gmra.mxu0 %v5076
    %v5296 = vpop.f32.mrf.mxu0
    %v5297 = vadd.f32 0.0, %v5296
    %v5298 = vpop.f32.mrf.mxu0
    %v5299 = vadd.f32 0.0, %v5298
    %5300 = vdwg.mxu0
    %5301 = vmatprep.subr.mxu0 %v2511
    %5302 = vmatpush1.msra.mxu0 %v2510
    %5303 = vmatprep.subr.mxu0 %v2503
    %5304 = vmatpush1.msra.mxu0 %v2502
    %5305 = vmatprep.subr.mxu0 %v2495
    %5306 = vmatpush1.msra.mxu0 %v2494
    %5307 = vmatprep.subr.mxu0 %v2487
    %5308 = vmatpush1.msra.mxu0 %v2486
    %5309 = vmatprep.subr.mxu0 %v2479
    %5310 = vmatpush1.msra.mxu0 %v2478
    %5311 = vmatprep.subr.mxu0 %v2471
    %5312 = vmatpush1.msra.mxu0 %v2470
    %5313 = vmatprep.subr.mxu0 %v2463
    %5314 = vmatpush1.msra.mxu0 %v2462
    %5315 = vmatprep.subr.mxu0 %v2455
    %5316 = vmatpush1.msra.mxu0 %v2454
    %5317 = vmatprep.subr.mxu0 %v2447
    %5318 = vmatpush1.msra.mxu0 %v2446
    %5319 = vmatprep.subr.mxu0 %v2439
    %5320 = vmatpush1.msra.mxu0 %v2438
    %5321 = vmatprep.subr.mxu0 %v2431
    %5322 = vmatpush1.msra.mxu0 %v2430
    %5323 = vmatprep.subr.mxu0 %v2423
    %5324 = vmatpush1.msra.mxu0 %v2422
    %5325 = vmatprep.subr.mxu0 %v2415
    %5326 = vmatpush1.msra.mxu0 %v2414
    %5327 = vmatprep.subr.mxu0 %v2407
    %5328 = vmatpush1.msra.mxu0 %v2406
    %5329 = vmatprep.subr.mxu0 %v2399
    %5330 = vmatpush1.msra.mxu0 %v2398
    %5331 = vmatprep.subr.mxu0 %v2391
    %5332 = vmatpush1.msra.mxu0 %v2390
    %5333 = vmatprep.subr.mxu0 %v2639
    %5334 = vmatpush2.msra.mxu0 %v2638
    %5335 = vmatprep.subr.mxu0 %v2631
    %5336 = vmatpush2.msra.mxu0 %v2630
    %5337 = vmatprep.subr.mxu0 %v2623
    %5338 = vmatpush2.msra.mxu0 %v2622
    %5339 = vmatprep.subr.mxu0 %v2615
    %5340 = vmatpush2.msra.mxu0 %v2614
    %5341 = vmatprep.subr.mxu0 %v2607
    %5342 = vmatpush2.msra.mxu0 %v2606
    %5343 = vmatprep.subr.mxu0 %v2599
    %5344 = vmatpush2.msra.mxu0 %v2598
    %5345 = vmatprep.subr.mxu0 %v2591
    %5346 = vmatpush2.msra.mxu0 %v2590
    %5347 = vmatprep.subr.mxu0 %v2583
    %5348 = vmatpush2.msra.mxu0 %v2582
    %5349 = vmatprep.subr.mxu0 %v2575
    %5350 = vmatpush2.msra.mxu0 %v2574
    %5351 = vmatprep.subr.mxu0 %v2567
    %5352 = vmatpush2.msra.mxu0 %v2566
    %5353 = vmatprep.subr.mxu0 %v2559
    %5354 = vmatpush2.msra.mxu0 %v2558
    %5355 = vmatprep.subr.mxu0 %v2551
    %5356 = vmatpush2.msra.mxu0 %v2550
    %5357 = vmatprep.subr.mxu0 %v2543
    %5358 = vmatpush2.msra.mxu0 %v2542
    %5359 = vmatprep.subr.mxu0 %v2535
    %5360 = vmatpush2.msra.mxu0 %v2534
    %5361 = vmatprep.subr.mxu0 %v2527
    %5362 = vmatpush2.msra.mxu0 %v2526
    %5363 = vmatprep.subr.mxu0 %v2519
    %5364 = vmatpush2.msra.mxu0 %v2518
    %5365 = vmatprep.mubr.f32.mxu0 %v5077
    %5366 = vmatmul.mubr.f32.gmra.mxu0 %v5076
    %v5367 = vpop.f32.mrf.mxu0
    %v5368 = vadd.f32 0.0, %v5367
    %v5369 = vpop.f32.mrf.mxu0
    %v5370 = vadd.f32 0.0, %v5369
    %5371 = vdwg.mxu0
    %v5372 = vadd.f32 %v5080, %v5155
    %v5373 = vadd.f32 %v5081, %v5157
    %v5374 = vadd.f32 %v5082, %v5226
    %v5375 = vadd.f32 %v5083, %v5228
    %v5376 = vadd.f32 %v5084, %v5297
    %v5377 = vadd.f32 %v5085, %v5299
    %v5378 = vadd.f32 %v5086, %v5368
    %v5379 = vadd.f32 %v5087, %v5370
    %v5380 = vxor.u32 %v5372, 2147483648
    %v5381 = vxor.u32 %v5373, 2147483648
    %v5382 = vxor.u32 %v5374, 2147483648
    %v5383 = vxor.u32 %v5375, 2147483648
    %v5384 = vxor.u32 %v5376, 2147483648
    %v5385 = vxor.u32 %v5377, 2147483648
    %v5386 = vmul.f32 %v5380, 1.442695
    %v5387 = vpow.pop %v5386
    %v5388 = vmul.f32 %v5381, 1.442695
    %v5389 = vpow.pop %v5388
    %v5390 = vmul.f32 %v5382, 1.442695
    %v5391 = vpow.pop %v5390
    %v5392 = vmul.f32 %v5383, 1.442695
    %v5393 = vpow.pop %v5392
    %v5394 = vmul.f32 %v5384, 1.442695
    %v5395 = vpow.pop %v5394
    %v5396 = vmul.f32 %v5385, 1.442695
    %v5397 = vpow.pop %v5396
    %v5398 = vadd.f32 %v5387, 1.0
    %v5399 = vadd.f32 %v5389, 1.0
    %v5400 = vadd.f32 %v5391, 1.0
    %v5401 = vadd.f32 %v5393, 1.0
    %v5402 = vadd.f32 %v5395, 1.0
    %v5403 = vadd.f32 %v5397, 1.0
    %v5404 = vrcp.pop %v5398
    %v5405 = vmul.f32 1.0, %v5404
    %v5406 = vrcp.pop %v5399
    %v5407 = vmul.f32 1.0, %v5406
    %v5408 = vrcp.pop %v5400
    %v5409 = vmul.f32 1.0, %v5408
    %v5410 = vrcp.pop %v5401
    %v5411 = vmul.f32 1.0, %v5410
    %v5412 = vrcp.pop %v5402
    %v5413 = vmul.f32 1.0, %v5412
    %v5414 = vrcp.pop %v5403
    %v5415 = vmul.f32 1.0, %v5414
    %v5416 = vtanh.pop %v5378
    %v5417 = vtanh.pop %v5379
    %v5418 = vmul.f32 %v5409, %v5072
    %v5419 = vmul.f32 %v5411, %v5073
    %v5420 = vmul.f32 %v5405, %v5416
    %v5421 = vmul.f32 %v5407, %v5417
    %v5422 = vadd.f32 %v5418, %v5420
    %v5423 = vadd.f32 %v5419, %v5421
    %v5424 = vtanh.pop %v5422
    %v5425 = vtanh.pop %v5423
    %v5426 = vmul.f32 %v5413, %v5424
    %v5427 = vmul.f32 %v5415, %v5425
    %v5428 = vmax.f32 %v5078, %v5426
    %v5429 = vmax.f32 %v5079, %v5427
    %s5430 = smul.u32 256, 1
    %s5431 = sshll.u32 %s5430, 4
    %5432 = dma.done %s82, %s5431
    %v5433 = vld [vmem:[#allocation3] sm:$0xff]
    %v5434 = vld [vmem:[#allocation3 + $0x8] sm:$0xff]
    %v5435 = vld [vmem:[#allocation3 + $0x10] sm:$0xff]
    %v5436 = vld [vmem:[#allocation3 + $0x18] sm:$0xff]
    %v5437 = vld [vmem:[#allocation3 + $0x20] sm:$0xff]
    %v5438 = vld [vmem:[#allocation3 + $0x28] sm:$0xff]
    %v5439 = vld [vmem:[#allocation3 + $0x30] sm:$0xff]
    %v5440 = vld [vmem:[#allocation3 + $0x38] sm:$0xff]
    %v5441 = vld [vmem:[#allocation3 + $0x40] sm:$0xff]
    %v5442 = vld [vmem:[#allocation3 + $0x48] sm:$0xff]
    %v5443 = vld [vmem:[#allocation3 + $0x50] sm:$0xff]
    %v5444 = vld [vmem:[#allocation3 + $0x58] sm:$0xff]
    %v5445 = vld [vmem:[#allocation3 + $0x60] sm:$0xff]
    %v5446 = vld [vmem:[#allocation3 + $0x68] sm:$0xff]
    %v5447 = vld [vmem:[#allocation3 + $0x70] sm:$0xff]
    %v5448 = vld [vmem:[#allocation3 + $0x78] sm:$0xff]
    %v5449 = vld [vmem:[#allocation3 + $0x80] sm:$0xff]
    %v5450 = vld [vmem:[#allocation3 + $0x88] sm:$0xff]
    %v5451 = vld [vmem:[#allocation3 + $0x90] sm:$0xff]
    %v5452 = vld [vmem:[#allocation3 + $0x98] sm:$0xff]
    %v5453 = vld [vmem:[#allocation3 + $0xa0] sm:$0xff]
    %v5454 = vld [vmem:[#allocation3 + $0xa8] sm:$0xff]
    %v5455 = vld [vmem:[#allocation3 + $0xb0] sm:$0xff]
    %v5456 = vld [vmem:[#allocation3 + $0xb8] sm:$0xff]
    %v5457 = vld [vmem:[#allocation3 + $0xc0] sm:$0xff]
    %v5458 = vld [vmem:[#allocation3 + $0xc8] sm:$0xff]
    %v5459 = vld [vmem:[#allocation3 + $0xd0] sm:$0xff]
    %v5460 = vld [vmem:[#allocation3 + $0xd8] sm:$0xff]
    %v5461 = vld [vmem:[#allocation3 + $0xe0] sm:$0xff]
    %v5462 = vld [vmem:[#allocation3 + $0xe8] sm:$0xff]
    %v5463 = vld [vmem:[#allocation3 + $0xf0] sm:$0xff]
    %v5464 = vld [vmem:[#allocation3 + $0xf8] sm:$0xff]
    %v5465 = vld [vmem:[#allocation12] sm:$0x1]
    %v5467 = vlaneseq
    %v5468 = vshrl.u32 %v5467, 7
    %v5469 = vsub.s32 0, %v5468
    %v5470 = vrot.slane %v5465, %v5469
    %5472 = vmatprep.subr.mxu0 0.0
    %5473 = vmatpush1.msra.mxu0 %v5448
    %5474 = vmatprep.subr.mxu0 0.0
    %5475 = vmatpush1.msra.mxu0 %v5447
    %5476 = vmatprep.subr.mxu0 0.0
    %5477 = vmatpush1.msra.mxu0 %v5446
    %5478 = vmatprep.subr.mxu0 0.0
    %5479 = vmatpush1.msra.mxu0 %v5445
    %5480 = vmatprep.subr.mxu0 0.0
    %5481 = vmatpush1.msra.mxu0 %v5444
    %5482 = vmatprep.subr.mxu0 0.0
    %5483 = vmatpush1.msra.mxu0 %v5443
    %5484 = vmatprep.subr.mxu0 0.0
    %5485 = vmatpush1.msra.mxu0 %v5442
    %5486 = vmatprep.subr.mxu0 0.0
    %5487 = vmatpush1.msra.mxu0 %v5441
    %5488 = vmatprep.subr.mxu0 0.0
    %5489 = vmatpush1.msra.mxu0 %v5440
    %5490 = vmatprep.subr.mxu0 0.0
    %5491 = vmatpush1.msra.mxu0 %v5439
    %5492 = vmatprep.subr.mxu0 0.0
    %5493 = vmatpush1.msra.mxu0 %v5438
    %5494 = vmatprep.subr.mxu0 0.0
    %5495 = vmatpush1.msra.mxu0 %v5437
    %5496 = vmatprep.subr.mxu0 0.0
    %5497 = vmatpush1.msra.mxu0 %v5436
    %5498 = vmatprep.subr.mxu0 0.0
    %5499 = vmatpush1.msra.mxu0 %v5435
    %5500 = vmatprep.subr.mxu0 0.0
    %5501 = vmatpush1.msra.mxu0 %v5434
    %5502 = vmatprep.subr.mxu0 0.0
    %5503 = vmatpush1.msra.mxu0 %v5433
    %5504 = vmatprep.subr.mxu0 0.0
    %5505 = vmatpush2.msra.mxu0 %v5464
    %5506 = vmatprep.subr.mxu0 0.0
    %5507 = vmatpush2.msra.mxu0 %v5463
    %5508 = vmatprep.subr.mxu0 0.0
    %5509 = vmatpush2.msra.mxu0 %v5462
    %5510 = vmatprep.subr.mxu0 0.0
    %5511 = vmatpush2.msra.mxu0 %v5461
    %5512 = vmatprep.subr.mxu0 0.0
    %5513 = vmatpush2.msra.mxu0 %v5460
    %5514 = vmatprep.subr.mxu0 0.0
    %5515 = vmatpush2.msra.mxu0 %v5459
    %5516 = vmatprep.subr.mxu0 0.0
    %5517 = vmatpush2.msra.mxu0 %v5458
    %5518 = vmatprep.subr.mxu0 0.0
    %5519 = vmatpush2.msra.mxu0 %v5457
    %5520 = vmatprep.subr.mxu0 0.0
    %5521 = vmatpush2.msra.mxu0 %v5456
    %5522 = vmatprep.subr.mxu0 0.0
    %5523 = vmatpush2.msra.mxu0 %v5455
    %5524 = vmatprep.subr.mxu0 0.0
    %5525 = vmatpush2.msra.mxu0 %v5454
    %5526 = vmatprep.subr.mxu0 0.0
    %5527 = vmatpush2.msra.mxu0 %v5453
    %5528 = vmatprep.subr.mxu0 0.0
    %5529 = vmatpush2.msra.mxu0 %v5452
    %5530 = vmatprep.subr.mxu0 0.0
    %5531 = vmatpush2.msra.mxu0 %v5451
    %5532 = vmatprep.subr.mxu0 0.0
    %5533 = vmatpush2.msra.mxu0 %v5450
    %5534 = vmatprep.subr.mxu0 0.0
    %5535 = vmatpush2.msra.mxu0 %v5449
    %5536 = vmatprep.mubr.f32.mxu0 %v5429
    %5537 = vmatmul.mubr.f32.gmra.mxu0 %v5428
    %v5538 = vpop.f32.mrf.mxu0
    %v5539 = vadd.f32 %v5470, %v5538
    %v5540 = vpop.f32.mrf.mxu0
    %5541 = vdwg.mxu0
    %v5542 = vlaneseq
    %v5543 = vand.u32 %v5542, 127
    %vm5544 = vcmp.lt.s32.totalorder %v5543, 2
    %v5545 = vsel %vm5544, %v5539, -inf
    %5546 = vmax.xlane.f32.xlu0 %v5545
    %v5547 = vpop.xlane.xlu0 %5546
    %v5548 = vsub.f32 %v5539, %v5547
    %v5549 = vmul.f32 %v5548, 1.442695
    %v5550 = vpow.pop %v5549
    %v5551 = vsel %vm5544, %v5550, 0.0
    %5552 = vadd.xlane.f32.xlu0 %v5551
    %v5553 = vpop.xlane.xlu0 %5552
    %v5554 = vlog2.pop %v5553
    %v5555 = vmul.f32 %v5554, 0.6931472
    %v5556 = vsub.f32 %v5548, %v5555
    %5557 = vst [vmem:[#allocation14] sm:$0xff] %v5556
    // Predicated region
    $region42: #{tpu_custom_call.1} parent=1 // pred_check
      _
    $region43: #{tpu_custom_call.1} parent=1 // pred_check_branch
      %5559 = sbr.rel (0) target = $region45
    $region44: #{tpu_custom_call.1} parent=1 // pred_region
      %s5561 = ssub.s32 128, 128
      %5562 = vsyncadd [#allocation8], %s5561
      %s5564 = sshll.u32 [#allocation14], 4
      %s5565 = int_to_ptr.vmem [resolvable:$true] %s5564
      %5567 = dma.vmem_to_hbm [thread:$0]  %s5565, 128, %s6, [#allocation8]
    $region45: #{tpu_custom_call.1} parent=1 // pred_fallthru
      _
    // Predicated region
    $region46: #{tpu_custom_call.1} parent=1 // pred_check
      _
    $region47: #{tpu_custom_call.1} parent=1 // pred_check_branch
      %5569 = sbr.rel (0) target = $region49
    $region48: #{tpu_custom_call.1} parent=1 // pred_region
      %5570 = dma.done [#allocation8], 128
    $region49: #{tpu_custom_call.1} parent=1 // pred_fallthru
      _
    %5571 = vsyncpa [#allocation7], 1
    %5572 = vsyncpa [#allocation10], 1
    %5573 = vsyncpa [#allocation13], 1
    %5574 = vsyncpa [#allocation8], 1
  %5575 = vsyncmov [#allocation5]
  %s5576 = vpop.sfrf %5575
  %p5577 = scmp.eq.s32.totalorder %s5576, 0
  %p5578 = pneg %p5577
  %5580 = shalt.err (%p5578)
  %s5581 = scalar_lea.sflag [#allocation5], 1
  %5582 = vsyncmov %s5581
  %s5583 = vpop.sfrf %5582
  %p5584 = scmp.eq.s32.totalorder %s5583, 0
  %p5585 = pneg %p5584
  %5587 = shalt.err (%p5585)

</llo_original>
